<compile_context>
chip_gen: v7x
topology: tpu7x:2x2x1
jax: 0.10.0
libtpu: 0.0.40
codegen_flags: <defaults>
</compile_context>

<pallas_src>
import functools
from typing import NamedTuple

import jax
import jax.numpy as jnp
from jax import lax
from jax.experimental import pallas as pl
from jax.experimental.pallas import tpu as pltpu

LANE = 128        # lane width: feature / contraction dims padded to multiples of this
SUBLANE = 8       # sublane width: dst-row tiles are multiples of this
COMPUTE_DTYPE = jnp.bfloat16   # MXU input dtype; accumulation is always f32


def _round_up(n, m):
    return (n + m - 1) // m * m


def _pad2d(x, rows, cols):
    r, c = x.shape
    return jnp.pad(x, ((0, rows - r), (0, cols - c)))


def _vmem_limit(working_set_bytes):
    # v5e scoped default is 16 MiB, v6e/v7x 32 MiB (64 MiB physical on v7x): be explicit and
    # derive the limit from the actual double-buffered working set (tiles keep it well < 40 MiB).
    return int(min(max(int(working_set_bytes * 1.5), 16 * 2 ** 20), 100 * 2 ** 20))


class _LayerPlan(NamedTuple):
    td: int
    ts: int
    n_dst_pad: int
    n_src_pad: int
    f_in_pad: int
    f_out_pad: int
    project_first: bool


def _layer_plan(n_dst, n_src, f_in, f_out, td_max, ts_max):
    """Static tiling + reassociation plan for one layer (all Python ints)."""
    td_max = max(SUBLANE, _round_up(td_max, SUBLANE))
    ts_max = max(LANE, _round_up(ts_max, LANE))
    td = min(td_max, _round_up(n_dst, SUBLANE))
    ts = min(ts_max, _round_up(n_src, LANE))          # contraction dim padded to LANE
    n_dst_pad = _round_up(n_dst, td)
    n_src_pad = _round_up(n_src, ts)
    f_in_pad = _round_up(f_in, LANE)
    f_out_pad = _round_up(f_out, LANE)
    # Reassociation decision on PADDED dims (MXU-work proxy):
    #   aggregate-first: acc += A@X (K=f_in_pad), finalize (acc/deg)@W_l
    #   project-first  : H = X@W_l once, acc += A@H (K=f_out_pad)
    agg_cost = n_dst_pad * n_src_pad * f_in_pad + n_dst_pad * f_in_pad * f_out_pad
    proj_cost = n_src_pad * f_in_pad * f_out_pad + n_dst_pad * n_src_pad * f_out_pad
    return _LayerPlan(td, ts, n_dst_pad, n_src_pad, f_in_pad, f_out_pad, proj_cost < agg_cost)


# ------------------------------ Pallas kernels ------------------------------ #

def _make_layer_kernel(*, project_first, is_last, out_valid, compute_dtype):
    """One SAGEConv layer, tiled over grid = (dst_tiles, src_tiles).

    src axis is an 'arbitrary' reduction into an f32 VMEM accumulator; dst axis is 'parallel'.
    aggregate-first: acc += A_counts @ X ; finalize out = ((acc * 1/deg) @ W_l) + b + X_dst @ W_r
    project-first  : acc += A_counts @ H ; finalize out =  (acc * 1/deg)        + b + X_dst @ W_r
    Last layer additionally emits a masked, fused log_softmax.
    """

    def kernel(*refs):
        if project_first:
            (a_ref, stream_ref, invdeg_ref, bl_ref, xdst_ref, wr_ref,
             x1_ref, aux_ref, acc_ref) = refs
            wl_ref = None
        else:
            (a_ref, stream_ref, invdeg_ref, wl_ref, bl_ref, xdst_ref, wr_ref,
             x1_ref, aux_ref, acc_ref) = refs

        k = pl.program_id(1)

        @pl.when(k == 0)
        def _():
            acc_ref[...] = jnp.zeros_like(acc_ref)

        # MXU: bf16 x bf16 -> f32 accumulate.
        acc_ref[...] += jnp.dot(a_ref[...], stream_ref[...],
                                preferred_element_type=jnp.float32)

        @pl.when(k == pl.num_programs(1) - 1)
        def _():
            agg = acc_ref[...] * invdeg_ref[...]          # exact mean: f32 row scale
            if not project_first:
                agg = jnp.dot(agg.astype(compute_dtype), wl_ref[...],
                              preferred_element_type=jnp.float32)
            out = agg + bl_ref[...] + jnp.dot(xdst_ref[...], wr_ref[...],
                                              preferred_element_type=jnp.float32)
            if is_last:
                x1_ref[...] = out.astype(x1_ref.dtype)    # structures: raw conv output
                # Fused log_softmax, masked to the valid class lanes (rest is lane padding).
                lane = lax.broadcasted_iota(jnp.int32, out.shape, 1)
                valid = lane < out_valid
                z = jnp.where(valid, out, jnp.float32(-1e30))
                m = jnp.max(z, axis=-1, keepdims=True)
                e = jnp.where(valid, jnp.exp(z - m), 0.0)
                lse = jnp.log(jnp.sum(e, axis=-1, keepdims=True))
                aux_ref[...] = ((z - m) - lse).astype(aux_ref.dtype)
            else:
                x1_ref[...] = jnp.maximum(out, 0.0).astype(x1_ref.dtype)   # structures: relu
                aux_ref[...] = out.astype(aux_ref.dtype)  # next-layer x (dropout == id in eval)

    return kernel


def _proj_kernel(x_ref, w_ref, h_ref):
    # H = X @ W_l, computed once per layer (project-first path), tiled over src rows.
    h_ref[...] = jnp.dot(x_ref[...], w_ref[...],
                         preferred_element_type=jnp.float32).astype(h_ref.dtype)


# ------------------------------ layer driver -------------------------------- #

def _run_layer(x_src, x_dst, counts, inv_deg, w_l_p, b_l_p, w_r_p, *,
               plan, is_last, out_valid, compute_dtype):
    td, ts = plan.td, plan.ts
    f_in_pad, f_out_pad = plan.f_in_pad, plan.f_out_pad
    n_dst_pad, n_src_pad = plan.n_dst_pad, plan.n_src_pad
    grid = (n_dst_pad // td, n_src_pad // ts)

    if plan.project_first:
        # Pre-project once (NOT per dst tile): H = X @ W_l, streamed instead of X.
        proj_est = 2 * (ts * f_in_pad * 2 + f_in_pad * f_out_pad * 2 + ts * f_out_pad * 2)
        stream = pl.pallas_call(
            _proj_kernel,
            out_shape=jax.ShapeDtypeStruct((n_src_pad, f_out_pad), compute_dtype),
            grid=(n_src_pad // ts,),
            in_specs=[pl.BlockSpec((ts, f_in_pad), lambda i: (i, 0)),
                      pl.BlockSpec((f_in_pad, f_out_pad), lambda i: (0, 0))],
            out_specs=pl.BlockSpec((ts, f_out_pad), lambda i: (i, 0)),
            compiler_params=pltpu.CompilerParams(
                dimension_semantics=("parallel",),
                vmem_limit_bytes=_vmem_limit(proj_est)),
        )(x_src, w_l_p)
        f_stream_pad = f_out_pad
        f_acc_pad = f_out_pad
        inputs = (counts, stream, inv_deg, b_l_p, x_dst, w_r_p)
        in_specs = [
            pl.BlockSpec((td, ts), lambda i, k: (i, k)),             # A counts tile
            pl.BlockSpec((ts, f_stream_pad), lambda i, k: (k, 0)),   # streamed H
            pl.BlockSpec((td, 1), lambda i, k: (i, 0)),              # 1/deg (f32)
            pl.BlockSpec((1, f_out_pad), lambda i, k: (0, 0)),       # bias
            pl.BlockSpec((td, f_in_pad), lambda i, k: (i, 0)),       # X_dst
            pl.BlockSpec((f_in_pad, f_out_pad), lambda i, k: (0, 0)),  # W_r
        ]
    else:
        f_stream_pad = f_in_pad
        f_acc_pad = f_in_pad
        inputs = (counts, x_src, inv_deg, w_l_p, b_l_p, x_dst, w_r_p)
        in_specs = [
            pl.BlockSpec((td, ts), lambda i, k: (i, k)),             # A counts tile
            pl.BlockSpec((ts, f_stream_pad), lambda i, k: (k, 0)),   # streamed X
            pl.BlockSpec((td, 1), lambda i, k: (i, 0)),              # 1/deg (f32)
            pl.BlockSpec((f_in_pad, f_out_pad), lambda i, k: (0, 0)),  # W_l
            pl.BlockSpec((1, f_out_pad), lambda i, k: (0, 0)),       # bias
            pl.BlockSpec((td, f_in_pad), lambda i, k: (i, 0)),       # X_dst
            pl.BlockSpec((f_in_pad, f_out_pad), lambda i, k: (0, 0)),  # W_r
        ]

    aux_dtype = jnp.float32 if is_last else compute_dtype
    out_shape = (jax.ShapeDtypeStruct((n_dst_pad, f_out_pad), jnp.float32),   # structures tensor
                 jax.ShapeDtypeStruct((n_dst_pad, f_out_pad), aux_dtype))     # next x / log-probs
    out_specs = (pl.BlockSpec((td, f_out_pad), lambda i, k: (i, 0)),
                 pl.BlockSpec((td, f_out_pad), lambda i, k: (i, 0)))

    # Double-buffered tiles + weights + outputs + f32 accumulator scratch.
    est = (2 * td * ts * 2                                    # A counts tile (bf16)
           + 2 * ts * f_stream_pad * 2                        # streamed X / H tile
           + 2 * td * 4                                       # 1/deg
           + 2 * 2 * f_in_pad * f_out_pad * 2                 # W_l + W_r
           + 2 * f_out_pad * 4                                # bias
           + 2 * td * f_in_pad * 2                            # X_dst tile
           + 2 * td * f_out_pad * (4 + (4 if is_last else 2))  # the two outputs
           + td * f_acc_pad * 4)                              # accumulator scratch

    kernel = _make_layer_kernel(project_first=plan.project_first, is_last=is_last,
                                out_valid=out_valid, compute_dtype=compute_dtype)

    x1, aux = pl.pallas_call(
        kernel,
        out_shape=out_shape,
        grid=grid,
        in_specs=in_specs,
        out_specs=out_specs,
        scratch_shapes=[pltpu.VMEM((td, f_acc_pad), jnp.float32)],
        compiler_params=pltpu.CompilerParams(
            dimension_semantics=("parallel", "arbitrary"),   # dst tiles megacore-shardable
            vmem_limit_bytes=_vmem_limit(est)),
    )(*inputs)
    return x1, aux


# ------------------------------ forward (jitted) ----------------------------- #

def _sage_forward_impl(x, edge_indices, params, *, sizes, td_max, ts_max, compute_dtype):
    num_layers = len(params)
    x1_list = []
    log_probs = None
    x_cur = x                                   # logical rows == n_src of the current layer
    for i in range(num_layers):
        w_l, b_l, w_r = params[i]
        edge_index = edge_indices[i]
        n_src, n_dst = sizes[i]
        f_in, f_out = w_l.shape
        plan = _layer_plan(n_dst, n_src, f_in, f_out, td_max, ts_max)

        # Dense adjacency as exact edge counts (bf16-exact for sampled degrees <= 256);
        # mean normalization is applied in-kernel as an f32 row scale (exact mean).
        # TODO(synk): int8 counts on v5e/v6e / fp8 on v7x to halve A traffic, and a CSR +
        # scalar-prefetch gather to drop HBM traffic from O(n_dst*n_src) to O(E) at scale.
        src_idx, dst_idx = edge_index[0], edge_index[1]
        counts_f32 = jnp.zeros((plan.n_dst_pad, plan.n_src_pad),
                               jnp.float32).at[dst_idx, src_idx].add(1.0)
        deg = jnp.sum(counts_f32, axis=-1, keepdims=True)
        inv_deg = 1.0 / jnp.maximum(deg, 1.0)
        counts = counts_f32.astype(compute_dtype)

        x_src = _pad2d(x_cur, plan.n_src_pad, plan.f_in_pad).astype(compute_dtype)
        x_dst = _pad2d(x_cur[:n_dst], plan.n_dst_pad, plan.f_in_pad).astype(compute_dtype)
        w_l_p = _pad2d(w_l, plan.f_in_pad, plan.f_out_pad).astype(compute_dtype)
        w_r_p = _pad2d(w_r, plan.f_in_pad, plan.f_out_pad).astype(compute_dtype)
        b_l_p = _pad2d(b_l.reshape(1, -1), 1, plan.f_out_pad).astype(jnp.float32)

        is_last = i == num_layers - 1
        x1, aux = _run_layer(x_src, x_dst, counts, inv_deg, w_l_p, b_l_p, w_r_p,
                             plan=plan, is_last=is_last, out_valid=f_out,
                             compute_dtype=compute_dtype)

        x1_list.append(x1[:n_dst, :f_out])
        if is_last:
            log_probs = aux[:n_dst, :f_out]
        else:
            x_cur = aux[:n_dst]                 # pre-relu conv output; padded lanes are zero

    return log_probs, tuple(x1_list)


_sage_forward_jit = functools.partial(
    jax.jit, static_argnames=("sizes", "td_max", "ts_max", "compute_dtype"))(_sage_forward_impl)


def sage_forward(x, adjs, params, *, td_max=256, ts_max=2048, compute_dtype=COMPUTE_DTYPE):
    """Mirrors SAGE.forward (eval mode). adjs = [(edge_index, (n_src, n_dst)), ...]."""
    sizes = tuple((int(s[0]), int(s[1])) for _, s in adjs)
    edge_indices = tuple(ei for ei, _ in adjs)
    params_t = tuple(tuple(p) for p in params)
    log_probs, x1s = _sage_forward_jit(x, edge_indices, params_t,
                                       sizes=sizes, td_max=int(td_max), ts_max=int(ts_max),
                                       compute_dtype=compute_dtype)
    structures = [(x1, ei) for x1, ei in zip(x1s, edge_indices)]
    return log_probs, structures


# ------------------------------ references ---------------------------------- #

def _ref_forward_matched(x, adjs, params, td_max, ts_max, compute_dtype=COMPUTE_DTYPE):
    """Golden model: module math with the kernel's dtype/association policy (pure JAX)."""
    num_layers = len(params)
    structures = []
    for i, ((edge_index, size), (w_l, b_l, w_r)) in enumerate(zip(adjs, params)):
        n_src, n_dst = size
        f_in, f_out = w_l.shape
        plan = _layer_plan(n_dst, n_src, f_in, f_out, td_max, ts_max)
        src, dst = edge_index[0], edge_index[1]
        counts = jnp.zeros((n_dst, n_src), jnp.float32).at[dst, src].add(1.0)
        inv_deg = 1.0 / jnp.maximum(jnp.sum(counts, axis=-1, keepdims=True), 1.0)
        counts_c = counts.astype(compute_dtype)
        x_c = x.astype(compute_dtype)
        w_l_c = w_l.astype(compute_dtype)
        w_r_c = w_r.astype(compute_dtype)
        if plan.project_first:
            h = jnp.dot(x_c, w_l_c, preferred_element_type=jnp.float32).astype(compute_dtype)
            lin_agg = jnp.dot(counts_c, h, preferred_element_type=jnp.float32) * inv_deg
        else:
            agg = jnp.dot(counts_c, x_c, preferred_element_type=jnp.float32) * inv_deg
            lin_agg = jnp.dot(agg.astype(compute_dtype), w_l_c,
                              preferred_element_type=jnp.float32)
        out = lin_agg + b_l.reshape(1, -1) + jnp.dot(x_c[:n_dst], w_r_c,
                                                     preferred_element_type=jnp.float32)
        x1 = out if i == num_layers - 1 else jnp.maximum(out, 0.0)
        structures.append(x1)
        x = out
    return jax.nn.log_softmax(x, axis=-1), structures


def _ref_forward_f32(x, adjs, params):
    """Exact f32 module reference (scatter-mean path), independent of the kernel math."""
    for (edge_index, size), (w_l, b_l, w_r) in zip(adjs, params):
        n_src, n_dst = size
        src, dst = edge_index[0], edge_index[1]
        x_target = x[:n_dst]
        summed = jnp.zeros((n_dst, x.shape[1]), jnp.float32).at[dst].add(x[src])
        cnt = jnp.zeros((n_dst, 1), jnp.float32).at[dst].add(1.0)
        agg = summed / jnp.maximum(cnt, 1.0)
        x = agg @ w_l + b_l.reshape(1, -1) + x_target @ w_r
    return jax.nn.log_softmax(x, axis=-1)


# --------------------------------- main -------------------------------------- #

if __name__ == "__main__":
    in_channels, hidden_channels, out_channels, num_layers = 16, 160, 8, 3
    # bipartite node counts per hop (outermost -> innermost), like NeighborSampler
    n_nodes = [1024, 768, 512, 256]
    n_edges = [4096, 2048, 1024]
    # small tiles so the toy run exercises multi-tile dst/src grids AND both reassociation
    # paths (layer 2 picks project-first); production defaults are td_max=256, ts_max=2048.
    td_max, ts_max = 128, 256

    key = jax.random.PRNGKey(0)
    key, kx = jax.random.split(key)
    x = jax.random.normal(kx, (n_nodes[0], in_channels), dtype=jnp.float32)

    # adjs: one (edge_index, size) per layer; size = (num_src, num_dst)
    adjs = []
    for i in range(num_layers):
        key, ks, kd = jax.random.split(key, 3)
        src = jax.random.randint(ks, (n_edges[i],), 0, n_nodes[i], dtype=jnp.int32)
        dst = jax.random.randint(kd, (n_edges[i],), 0, n_nodes[i + 1], dtype=jnp.int32)
        edge_index = jnp.stack([src, dst], axis=0)
        adjs.append((edge_index, (n_nodes[i], n_nodes[i + 1])))

    # Deterministic parameter init (SAGEConv: lin_l has bias, lin_r has none).
    dims = [in_channels] + [hidden_channels] * (num_layers - 1) + [out_channels]
    params = []
    for i in range(num_layers):
        f_in, f_out = dims[i], dims[i + 1]
        key, k1, k2, k3 = jax.random.split(key, 4)
        scale = 1.0 / jnp.sqrt(jnp.float32(f_in))
        w_l = jax.random.normal(k1, (f_in, f_out), dtype=jnp.float32) * scale
        w_r = jax.random.normal(k2, (f_in, f_out), dtype=jnp.float32) * scale
        b_l = jax.random.normal(k3, (f_out,), dtype=jnp.float32) * 0.1
        params.append((w_l, b_l, w_r))

    log_probs, structures = sage_forward(x, adjs, params, td_max=td_max, ts_max=ts_max)
    jax.block_until_ready(log_probs)
    for x1, _ in structures:
        jax.block_until_ready(x1)

    # silent correctness checks
    assert log_probs.shape == (n_nodes[-1], out_channels)
    for i, (x1, _) in enumerate(structures):
        assert x1.shape == (n_nodes[i + 1], dims[i + 1])

    # 1) tight check vs a dtype/association-matched pure-JAX golden model
    ref_logp, ref_structs = _ref_forward_matched(x, adjs, params, td_max, ts_max)
    assert bool(jnp.allclose(log_probs, ref_logp, atol=1e-2, rtol=1e-2))
    for i, (x1, _) in enumerate(structures):
        assert bool(jnp.allclose(x1, ref_structs[i], atol=1e-2, rtol=1e-2))

    # 2) coarse semantic cross-check vs the exact f32 scatter-mean reference (bf16 noise only)
    ref_f32 = _ref_forward_f32(x, adjs, params)
    assert bool(jnp.max(jnp.abs(log_probs - ref_f32)) < 0.25)

    print("KERNEL_OK")
</pallas_src>

<mosaic_0001>
module attributes {stable_mosaic.version = 11 : i64} {
  func.func private @main(%arg0: i32) attributes {dimension_semantics = [#tpu.dimension_semantics<core_parallel>], iteration_bounds = array<i64: 2>, tpu.core_type = #tpu.core_type<sc_scalar_subcore>, window_params = []} {
    return
  }
}

module attributes {stable_mosaic.version = 11 : i64} {
  func.func private @main(%arg0: i32) attributes {dimension_semantics = [#tpu.dimension_semantics<core_parallel>], iteration_bounds = array<i64: 2>, tpu.core_type = #tpu.core_type<sc_scalar_subcore>, window_params = []} {
    return
  }
}

module attributes {stable_mosaic.version = 11 : i64} {
  func.func @kernel(%arg0: i32, %arg1: i32, %arg2: memref<128x256xbf16, #tpu.memory_space<vmem>>, %arg3: memref<256x128xbf16, #tpu.memory_space<vmem>>, %arg4: memref<128x1xf32, #tpu.memory_space<vmem>>, %arg5: memref<128x256xbf16, #tpu.memory_space<vmem>>, %arg6: memref<1x256xf32, #tpu.memory_space<vmem>>, %arg7: memref<128x128xbf16, #tpu.memory_space<vmem>>, %arg8: memref<128x256xbf16, #tpu.memory_space<vmem>>, %arg9: memref<128x256xf32, #tpu.memory_space<vmem>>, %arg10: memref<128x256xbf16, #tpu.memory_space<vmem>>, %arg11: memref<128x128xf32, #tpu.memory_space<vmem>>) attributes {dimension_semantics = [#tpu.dimension_semantics<parallel>, #tpu.dimension_semantics<arbitrary>], iteration_bounds = array<i64: 6, 4>, scalar_prefetch = 0 : i64, scratch_operands = 1 : i64, tpu.core_type = #tpu.core_type<tc>, window_params = [{transform_indices = @transform_0, window_bounds = array<i64: 128, 256>}, {transform_indices = @transform_1, window_bounds = array<i64: 256, 128>}, {transform_indices = @transform_2, window_bounds = array<i64: 128, 1>}, {pipeline_mode = #tpu.pipeline_mode<synchronous>, transform_indices = @transform_3, window_bounds = array<i64: 128, 256>}, {pipeline_mode = #tpu.pipeline_mode<synchronous>, transform_indices = @transform_4, window_bounds = array<i64: 1, 256>}, {transform_indices = @transform_5, window_bounds = array<i64: 128, 128>}, {pipeline_mode = #tpu.pipeline_mode<synchronous>, transform_indices = @transform_6, window_bounds = array<i64: 128, 256>}, {transform_indices = @transform_7, window_bounds = array<i64: 128, 256>}, {transform_indices = @transform_8, window_bounds = array<i64: 128, 256>}]} {
    %c0_i32 = arith.constant 0 : i32
    %0 = arith.cmpi eq, %arg1, %c0_i32 : i32
    %1 = arith.extui %0 : i1 to i32
    %c0_i32_0 = arith.constant 0 : i32
    %2 = arith.cmpi ne, %1, %c0_i32_0 : i32
    scf.if %2 {
      %cst_9 = arith.constant 0.000000e+00 : f32
      %12 = vector.broadcast %cst_9 : f32 to vector<128x128xf32>
      %c0_10 = arith.constant 0 : index
      %c0_11 = arith.constant 0 : index
      %13 = vector.load %arg11[%c0_10, %c0_11] : memref<128x128xf32, #tpu.memory_space<vmem>>, vector<128x128xf32>
      tpu.vector_store %arg11[%c0_10, %c0_11], %12 {strides = array<i32>} : memref<128x128xf32, #tpu.memory_space<vmem>>, vector<128x128xf32>,
    } else {
    }
    %c0 = arith.constant 0 : index
    %c0_1 = arith.constant 0 : index
    %3 = vector.load %arg11[%c0, %c0_1] : memref<128x128xf32, #tpu.memory_space<vmem>>, vector<128x128xf32>
    %c0_2 = arith.constant 0 : index
    %c0_3 = arith.constant 0 : index
    %4 = vector.load %arg2[%c0_2, %c0_3] : memref<128x256xbf16, #tpu.memory_space<vmem>>, vector<128x256xbf16>
    %c0_4 = arith.constant 0 : index
    %c0_5 = arith.constant 0 : index
    %5 = vector.load %arg3[%c0_4, %c0_5] : memref<256x128xbf16, #tpu.memory_space<vmem>>, vector<256x128xbf16>
    %cst = arith.constant dense<0.000000e+00> : vector<128x128xf32>
    %6 = tpu.matmul %4, %5, %cst {dimension_numbers = #tpu.dot_dimension_numbers<[1], [0], [0], [1], [0, 0, 1, 1], [], []>} : vector<128x256xbf16>, vector<256x128xbf16>, vector<128x128xf32> -> vector<128x128xf32>
    %7 = arith.addf %3, %6 : vector<128x128xf32>
    %c0_6 = arith.constant 0 : index
    %c0_7 = arith.constant 0 : index
    %8 = vector.load %arg11[%c0_6, %c0_7] : memref<128x128xf32, #tpu.memory_space<vmem>>, vector<128x128xf32>
    tpu.vector_store %arg11[%c0_6, %c0_7], %7 {strides = array<i32>} : memref<128x128xf32, #tpu.memory_space<vmem>>, vector<128x128xf32>,
    %c3_i32 = arith.constant 3 : i32
    %9 = arith.cmpi eq, %arg1, %c3_i32 : i32
    %10 = arith.extui %9 : i1 to i32
    %c0_i32_8 = arith.constant 0 : i32
    %11 = arith.cmpi ne, %10, %c0_i32_8 : i32
    scf.if %11 {
      %c0_9 = arith.constant 0 : index
      %c0_10 = arith.constant 0 : index
      %12 = vector.load %arg11[%c0_9, %c0_10] : memref<128x128xf32, #tpu.memory_space<vmem>>, vector<128x128xf32>
      %c0_11 = arith.constant 0 : index
      %c0_12 = arith.constant 0 : index
      %13 = vector.load %arg4[%c0_11, %c0_12] : memref<128x1xf32, #tpu.memory_space<vmem>>, vector<128x1xf32>
      %14 = vector.broadcast %13 : vector<128x1xf32> to vector<128x128xf32>
      %15 = arith.mulf %12, %14 : vector<128x128xf32>
      %16 = arith.truncf %15 : vector<128x128xf32> to vector<128x128xbf16>
      %c0_13 = arith.constant 0 : index
      %c0_14 = arith.constant 0 : index
      %17 = vector.load %arg5[%c0_13, %c0_14] : memref<128x256xbf16, #tpu.memory_space<vmem>>, vector<128x256xbf16>
      %cst_15 = arith.constant dense<0.000000e+00> : vector<128x256xf32>
      %18 = tpu.matmul %16, %17, %cst_15 {dimension_numbers = #tpu.dot_dimension_numbers<[1], [0], [0], [1], [0, 0, 1, 1], [], []>} : vector<128x128xbf16>, vector<128x256xbf16>, vector<128x256xf32> -> vector<128x256xf32>
      %c0_16 = arith.constant 0 : index
      %c0_17 = arith.constant 0 : index
      %19 = vector.load %arg6[%c0_16, %c0_17] : memref<1x256xf32, #tpu.memory_space<vmem>>, vector<1x256xf32>
      %20 = vector.broadcast %19 : vector<1x256xf32> to vector<128x256xf32>
      %21 = arith.addf %18, %20 : vector<128x256xf32>
      %c0_18 = arith.constant 0 : index
      %c0_19 = arith.constant 0 : index
      %22 = vector.load %arg7[%c0_18, %c0_19] : memref<128x128xbf16, #tpu.memory_space<vmem>>, vector<128x128xbf16>
      %c0_20 = arith.constant 0 : index
      %c0_21 = arith.constant 0 : index
      %23 = vector.load %arg8[%c0_20, %c0_21] : memref<128x256xbf16, #tpu.memory_space<vmem>>, vector<128x256xbf16>
      %cst_22 = arith.constant dense<0.000000e+00> : vector<128x256xf32>
      %24 = tpu.matmul %22, %23, %cst_22 {dimension_numbers = #tpu.dot_dimension_numbers<[1], [0], [0], [1], [0, 0, 1, 1], [], []>} : vector<128x128xbf16>, vector<128x256xbf16>, vector<128x256xf32> -> vector<128x256xf32>
      %25 = arith.addf %21, %24 : vector<128x256xf32>
      %cst_23 = arith.constant 0.000000e+00 : f32
      %26 = vector.broadcast %cst_23 : f32 to vector<128x256xf32>
      %27 = arith.maximumf %25, %26 : vector<128x256xf32>
      %c0_24 = arith.constant 0 : index
      %c0_25 = arith.constant 0 : index
      %28 = vector.load %arg9[%c0_24, %c0_25] : memref<128x256xf32, #tpu.memory_space<vmem>>, vector<128x256xf32>
      tpu.vector_store %arg9[%c0_24, %c0_25], %27 {strides = array<i32>} : memref<128x256xf32, #tpu.memory_space<vmem>>, vector<128x256xf32>,
      %29 = arith.truncf %25 : vector<128x256xf32> to vector<128x256xbf16>
      %c0_26 = arith.constant 0 : index
      %c0_27 = arith.constant 0 : index
      %30 = vector.load %arg10[%c0_26, %c0_27] : memref<128x256xbf16, #tpu.memory_space<vmem>>, vector<128x256xbf16>
      tpu.vector_store %arg10[%c0_26, %c0_27], %29 {strides = array<i32>} : memref<128x256xbf16, #tpu.memory_space<vmem>>, vector<128x256xbf16>,
    } else {
    }
    return
  }
  func.func @transform_0(%arg0: i32, %arg1: i32) -> (i32, i32) {
    %c0_i32 = arith.constant 0 : i32
    return %arg0, %arg1 : i32, i32
  }
  func.func @transform_1(%arg0: i32, %arg1: i32) -> (i32, i32) {
    %c0_i32 = arith.constant 0 : i32
    %c0_i32_0 = arith.constant 0 : i32
    return %arg1, %c0_i32 : i32, i32
  }
  func.func @transform_2(%arg0: i32, %arg1: i32) -> (i32, i32) {
    %c0_i32 = arith.constant 0 : i32
    %c0_i32_0 = arith.constant 0 : i32
    return %arg0, %c0_i32 : i32, i32
  }
  func.func @transform_3(%arg0: i32, %arg1: i32) -> (i32, i32) {
    %c0_i32 = arith.constant 0 : i32
    %c0_i32_0 = arith.constant 0 : i32
    %c0_i32_1 = arith.constant 0 : i32
    return %c0_i32, %c0_i32_0 : i32, i32
  }
  func.func @transform_4(%arg0: i32, %arg1: i32) -> (i32, i32) {
    %c0_i32 = arith.constant 0 : i32
    %c0_i32_0 = arith.constant 0 : i32
    %c0_i32_1 = arith.constant 0 : i32
    return %c0_i32, %c0_i32_0 : i32, i32
  }
  func.func @transform_5(%arg0: i32, %arg1: i32) -> (i32, i32) {
    %c0_i32 = arith.constant 0 : i32
    %c0_i32_0 = arith.constant 0 : i32
    return %arg0, %c0_i32 : i32, i32
  }
  func.func @transform_6(%arg0: i32, %arg1: i32) -> (i32, i32) {
    %c0_i32 = arith.constant 0 : i32
    %c0_i32_0 = arith.constant 0 : i32
    %c0_i32_1 = arith.constant 0 : i32
    return %c0_i32, %c0_i32_0 : i32, i32
  }
  func.func @transform_7(%arg0: i32, %arg1: i32) -> (i32, i32) {
    %c0_i32 = arith.constant 0 : i32
    %c0_i32_0 = arith.constant 0 : i32
    return %arg0, %c0_i32 : i32, i32
  }
  func.func @transform_8(%arg0: i32, %arg1: i32) -> (i32, i32) {
    %c0_i32 = arith.constant 0 : i32
    %c0_i32_0 = arith.constant 0 : i32
    return %arg0, %c0_i32 : i32, i32
  }
}

module attributes {stable_mosaic.version = 11 : i64} {
  func.func @_proj_kernel(%arg0: i32, %arg1: memref<256x256xbf16, #tpu.memory_space<vmem>>, %arg2: memref<256x128xbf16, #tpu.memory_space<vmem>>, %arg3: memref<256x128xbf16, #tpu.memory_space<vmem>>) attributes {dimension_semantics = [#tpu.dimension_semantics<parallel>], iteration_bounds = array<i64: 2>, scalar_prefetch = 0 : i64, scratch_operands = 0 : i64, tpu.core_type = #tpu.core_type<tc>, window_params = [{transform_indices = @transform_0, window_bounds = array<i64: 256, 256>}, {pipeline_mode = #tpu.pipeline_mode<synchronous>, transform_indices = @transform_1, window_bounds = array<i64: 256, 128>}, {transform_indices = @transform_2, window_bounds = array<i64: 256, 128>}]} {
    %c0 = arith.constant 0 : index
    %c0_0 = arith.constant 0 : index
    %0 = vector.load %arg1[%c0, %c0_0] : memref<256x256xbf16, #tpu.memory_space<vmem>>, vector<256x256xbf16>
    %c0_1 = arith.constant 0 : index
    %c0_2 = arith.constant 0 : index
    %1 = vector.load %arg2[%c0_1, %c0_2] : memref<256x128xbf16, #tpu.memory_space<vmem>>, vector<256x128xbf16>
    %cst = arith.constant dense<0.000000e+00> : vector<256x128xf32>
    %2 = tpu.matmul %0, %1, %cst {dimension_numbers = #tpu.dot_dimension_numbers<[1], [0], [0], [1], [0, 0, 1, 1], [], []>} : vector<256x256xbf16>, vector<256x128xbf16>, vector<256x128xf32> -> vector<256x128xf32>
    %3 = arith.truncf %2 : vector<256x128xf32> to vector<256x128xbf16>
    %c0_3 = arith.constant 0 : index
    %c0_4 = arith.constant 0 : index
    %4 = vector.load %arg3[%c0_3, %c0_4] : memref<256x128xbf16, #tpu.memory_space<vmem>>, vector<256x128xbf16>
    tpu.vector_store %arg3[%c0_3, %c0_4], %3 {strides = array<i32>} : memref<256x128xbf16, #tpu.memory_space<vmem>>, vector<256x128xbf16>,
    return
  }
  func.func @transform_0(%arg0: i32) -> (i32, i32) {
    %c0_i32 = arith.constant 0 : i32
    %c0_i32_0 = arith.constant 0 : i32
    return %arg0, %c0_i32 : i32, i32
  }
  func.func @transform_1(%arg0: i32) -> (i32, i32) {
    %c0_i32 = arith.constant 0 : i32
    %c0_i32_0 = arith.constant 0 : i32
    %c0_i32_1 = arith.constant 0 : i32
    return %c0_i32, %c0_i32_0 : i32, i32
  }
  func.func @transform_2(%arg0: i32) -> (i32, i32) {
    %c0_i32 = arith.constant 0 : i32
    %c0_i32_0 = arith.constant 0 : i32
    return %arg0, %c0_i32 : i32, i32
  }
}

module attributes {stable_mosaic.version = 11 : i64} {
  func.func @kernel(%arg0: i32, %arg1: i32, %arg2: memref<128x256xbf16, #tpu.memory_space<vmem>>, %arg3: memref<256x256xbf16, #tpu.memory_space<vmem>>, %arg4: memref<128x1xf32, #tpu.memory_space<vmem>>, %arg5: memref<256x256xbf16, #tpu.memory_space<vmem>>, %arg6: memref<1x256xf32, #tpu.memory_space<vmem>>, %arg7: memref<128x256xbf16, #tpu.memory_space<vmem>>, %arg8: memref<256x256xbf16, #tpu.memory_space<vmem>>, %arg9: memref<128x256xf32, #tpu.memory_space<vmem>>, %arg10: memref<128x256xbf16, #tpu.memory_space<vmem>>, %arg11: memref<128x256xf32, #tpu.memory_space<vmem>>) attributes {dimension_semantics = [#tpu.dimension_semantics<parallel>, #tpu.dimension_semantics<arbitrary>], iteration_bounds = array<i64: 4, 3>, scalar_prefetch = 0 : i64, scratch_operands = 1 : i64, tpu.core_type = #tpu.core_type<tc>, window_params = [{transform_indices = @transform_0, window_bounds = array<i64: 128, 256>}, {transform_indices = @transform_1, window_bounds = array<i64: 256, 256>}, {transform_indices = @transform_2, window_bounds = array<i64: 128, 1>}, {pipeline_mode = #tpu.pipeline_mode<synchronous>, transform_indices = @transform_3, window_bounds = array<i64: 256, 256>}, {pipeline_mode = #tpu.pipeline_mode<synchronous>, transform_indices = @transform_4, window_bounds = array<i64: 1, 256>}, {transform_indices = @transform_5, window_bounds = array<i64: 128, 256>}, {pipeline_mode = #tpu.pipeline_mode<synchronous>, transform_indices = @transform_6, window_bounds = array<i64: 256, 256>}, {transform_indices = @transform_7, window_bounds = array<i64: 128, 256>}, {transform_indices = @transform_8, window_bounds = array<i64: 128, 256>}]} {
    %c0_i32 = arith.constant 0 : i32
    %0 = arith.cmpi eq, %arg1, %c0_i32 : i32
    %1 = arith.extui %0 : i1 to i32
    %c0_i32_0 = arith.constant 0 : i32
    %2 = arith.cmpi ne, %1, %c0_i32_0 : i32
    scf.if %2 {
      %cst_9 = arith.constant 0.000000e+00 : f32
      %12 = vector.broadcast %cst_9 : f32 to vector<128x256xf32>
      %c0_10 = arith.constant 0 : index
      %c0_11 = arith.constant 0 : index
      %13 = vector.load %arg11[%c0_10, %c0_11] : memref<128x256xf32, #tpu.memory_space<vmem>>, vector<128x256xf32>
      tpu.vector_store %arg11[%c0_10, %c0_11], %12 {strides = array<i32>} : memref<128x256xf32, #tpu.memory_space<vmem>>, vector<128x256xf32>,
    } else {
    }
    %c0 = arith.constant 0 : index
    %c0_1 = arith.constant 0 : index
    %3 = vector.load %arg11[%c0, %c0_1] : memref<128x256xf32, #tpu.memory_space<vmem>>, vector<128x256xf32>
    %c0_2 = arith.constant 0 : index
    %c0_3 = arith.constant 0 : index
    %4 = vector.load %arg2[%c0_2, %c0_3] : memref<128x256xbf16, #tpu.memory_space<vmem>>, vector<128x256xbf16>
    %c0_4 = arith.constant 0 : index
    %c0_5 = arith.constant 0 : index
    %5 = vector.load %arg3[%c0_4, %c0_5] : memref<256x256xbf16, #tpu.memory_space<vmem>>, vector<256x256xbf16>
    %cst = arith.constant dense<0.000000e+00> : vector<128x256xf32>
    %6 = tpu.matmul %4, %5, %cst {dimension_numbers = #tpu.dot_dimension_numbers<[1], [0], [0], [1], [0, 0, 1, 1], [], []>} : vector<128x256xbf16>, vector<256x256xbf16>, vector<128x256xf32> -> vector<128x256xf32>
    %7 = arith.addf %3, %6 : vector<128x256xf32>
    %c0_6 = arith.constant 0 : index
    %c0_7 = arith.constant 0 : index
    %8 = vector.load %arg11[%c0_6, %c0_7] : memref<128x256xf32, #tpu.memory_space<vmem>>, vector<128x256xf32>
    tpu.vector_store %arg11[%c0_6, %c0_7], %7 {strides = array<i32>} : memref<128x256xf32, #tpu.memory_space<vmem>>, vector<128x256xf32>,
    %c2_i32 = arith.constant 2 : i32
    %9 = arith.cmpi eq, %arg1, %c2_i32 : i32
    %10 = arith.extui %9 : i1 to i32
    %c0_i32_8 = arith.constant 0 : i32
    %11 = arith.cmpi ne, %10, %c0_i32_8 : i32
    scf.if %11 {
      %c0_9 = arith.constant 0 : index
      %c0_10 = arith.constant 0 : index
      %12 = vector.load %arg11[%c0_9, %c0_10] : memref<128x256xf32, #tpu.memory_space<vmem>>, vector<128x256xf32>
      %c0_11 = arith.constant 0 : index
      %c0_12 = arith.constant 0 : index
      %13 = vector.load %arg4[%c0_11, %c0_12] : memref<128x1xf32, #tpu.memory_space<vmem>>, vector<128x1xf32>
      %14 = vector.broadcast %13 : vector<128x1xf32> to vector<128x256xf32>
      %15 = arith.mulf %12, %14 : vector<128x256xf32>
      %16 = arith.truncf %15 : vector<128x256xf32> to vector<128x256xbf16>
      %c0_13 = arith.constant 0 : index
      %c0_14 = arith.constant 0 : index
      %17 = vector.load %arg5[%c0_13, %c0_14] : memref<256x256xbf16, #tpu.memory_space<vmem>>, vector<256x256xbf16>
      %cst_15 = arith.constant dense<0.000000e+00> : vector<128x256xf32>
      %18 = tpu.matmul %16, %17, %cst_15 {dimension_numbers = #tpu.dot_dimension_numbers<[1], [0], [0], [1], [0, 0, 1, 1], [], []>} : vector<128x256xbf16>, vector<256x256xbf16>, vector<128x256xf32> -> vector<128x256xf32>
      %c0_16 = arith.constant 0 : index
      %c0_17 = arith.constant 0 : index
      %19 = vector.load %arg6[%c0_16, %c0_17] : memref<1x256xf32, #tpu.memory_space<vmem>>, vector<1x256xf32>
      %20 = vector.broadcast %19 : vector<1x256xf32> to vector<128x256xf32>
      %21 = arith.addf %18, %20 : vector<128x256xf32>
      %c0_18 = arith.constant 0 : index
      %c0_19 = arith.constant 0 : index
      %22 = vector.load %arg7[%c0_18, %c0_19] : memref<128x256xbf16, #tpu.memory_space<vmem>>, vector<128x256xbf16>
      %c0_20 = arith.constant 0 : index
      %c0_21 = arith.constant 0 : index
      %23 = vector.load %arg8[%c0_20, %c0_21] : memref<256x256xbf16, #tpu.memory_space<vmem>>, vector<256x256xbf16>
      %cst_22 = arith.constant dense<0.000000e+00> : vector<128x256xf32>
      %24 = tpu.matmul %22, %23, %cst_22 {dimension_numbers = #tpu.dot_dimension_numbers<[1], [0], [0], [1], [0, 0, 1, 1], [], []>} : vector<128x256xbf16>, vector<256x256xbf16>, vector<128x256xf32> -> vector<128x256xf32>
      %25 = arith.addf %21, %24 : vector<128x256xf32>
      %cst_23 = arith.constant 0.000000e+00 : f32
      %26 = vector.broadcast %cst_23 : f32 to vector<128x256xf32>
      %27 = arith.maximumf %25, %26 : vector<128x256xf32>
      %c0_24 = arith.constant 0 : index
      %c0_25 = arith.constant 0 : index
      %28 = vector.load %arg9[%c0_24, %c0_25] : memref<128x256xf32, #tpu.memory_space<vmem>>, vector<128x256xf32>
      tpu.vector_store %arg9[%c0_24, %c0_25], %27 {strides = array<i32>} : memref<128x256xf32, #tpu.memory_space<vmem>>, vector<128x256xf32>,
      %29 = arith.truncf %25 : vector<128x256xf32> to vector<128x256xbf16>
      %c0_26 = arith.constant 0 : index
      %c0_27 = arith.constant 0 : index
      %30 = vector.load %arg10[%c0_26, %c0_27] : memref<128x256xbf16, #tpu.memory_space<vmem>>, vector<128x256xbf16>
      tpu.vector_store %arg10[%c0_26, %c0_27], %29 {strides = array<i32>} : memref<128x256xbf16, #tpu.memory_space<vmem>>, vector<128x256xbf16>,
    } else {
    }
    return
  }
  func.func @transform_0(%arg0: i32, %arg1: i32) -> (i32, i32) {
    %c0_i32 = arith.constant 0 : i32
    return %arg0, %arg1 : i32, i32
  }
  func.func @transform_1(%arg0: i32, %arg1: i32) -> (i32, i32) {
    %c0_i32 = arith.constant 0 : i32
    %c0_i32_0 = arith.constant 0 : i32
    return %arg1, %c0_i32 : i32, i32
  }
  func.func @transform_2(%arg0: i32, %arg1: i32) -> (i32, i32) {
    %c0_i32 = arith.constant 0 : i32
    %c0_i32_0 = arith.constant 0 : i32
    return %arg0, %c0_i32 : i32, i32
  }
  func.func @transform_3(%arg0: i32, %arg1: i32) -> (i32, i32) {
    %c0_i32 = arith.constant 0 : i32
    %c0_i32_0 = arith.constant 0 : i32
    %c0_i32_1 = arith.constant 0 : i32
    return %c0_i32, %c0_i32_0 : i32, i32
  }
  func.func @transform_4(%arg0: i32, %arg1: i32) -> (i32, i32) {
    %c0_i32 = arith.constant 0 : i32
    %c0_i32_0 = arith.constant 0 : i32
    %c0_i32_1 = arith.constant 0 : i32
    return %c0_i32, %c0_i32_0 : i32, i32
  }
  func.func @transform_5(%arg0: i32, %arg1: i32) -> (i32, i32) {
    %c0_i32 = arith.constant 0 : i32
    %c0_i32_0 = arith.constant 0 : i32
    return %arg0, %c0_i32 : i32, i32
  }
  func.func @transform_6(%arg0: i32, %arg1: i32) -> (i32, i32) {
    %c0_i32 = arith.constant 0 : i32
    %c0_i32_0 = arith.constant 0 : i32
    %c0_i32_1 = arith.constant 0 : i32
    return %c0_i32, %c0_i32_0 : i32, i32
  }
  func.func @transform_7(%arg0: i32, %arg1: i32) -> (i32, i32) {
    %c0_i32 = arith.constant 0 : i32
    %c0_i32_0 = arith.constant 0 : i32
    return %arg0, %c0_i32 : i32, i32
  }
  func.func @transform_8(%arg0: i32, %arg1: i32) -> (i32, i32) {
    %c0_i32 = arith.constant 0 : i32
    %c0_i32_0 = arith.constant 0 : i32
    return %arg0, %c0_i32 : i32, i32
  }
}

module attributes {stable_mosaic.version = 11 : i64} {
  func.func @kernel(%arg0: i32, %arg1: i32, %arg2: memref<128x256xbf16, #tpu.memory_space<vmem>>, %arg3: memref<256x128xbf16, #tpu.memory_space<vmem>>, %arg4: memref<128x1xf32, #tpu.memory_space<vmem>>, %arg5: memref<1x128xf32, #tpu.memory_space<vmem>>, %arg6: memref<128x256xbf16, #tpu.memory_space<vmem>>, %arg7: memref<256x128xbf16, #tpu.memory_space<vmem>>, %arg8: memref<128x128xf32, #tpu.memory_space<vmem>>, %arg9: memref<128x128xf32, #tpu.memory_space<vmem>>, %arg10: memref<128x128xf32, #tpu.memory_space<vmem>>) attributes {dimension_semantics = [#tpu.dimension_semantics<parallel>, #tpu.dimension_semantics<arbitrary>], iteration_bounds = array<i64: 2, 2>, scalar_prefetch = 0 : i64, scratch_operands = 1 : i64, tpu.core_type = #tpu.core_type<tc>, window_params = [{transform_indices = @transform_0, window_bounds = array<i64: 128, 256>}, {transform_indices = @transform_1, window_bounds = array<i64: 256, 128>}, {transform_indices = @transform_2, window_bounds = array<i64: 128, 1>}, {pipeline_mode = #tpu.pipeline_mode<synchronous>, transform_indices = @transform_3, window_bounds = array<i64: 1, 128>}, {transform_indices = @transform_4, window_bounds = array<i64: 128, 256>}, {pipeline_mode = #tpu.pipeline_mode<synchronous>, transform_indices = @transform_5, window_bounds = array<i64: 256, 128>}, {transform_indices = @transform_6, window_bounds = array<i64: 128, 128>}, {transform_indices = @transform_7, window_bounds = array<i64: 128, 128>}]} {
    %c0_i32 = arith.constant 0 : i32
    %0 = arith.cmpi eq, %arg1, %c0_i32 : i32
    %1 = arith.extui %0 : i1 to i32
    %c0_i32_0 = arith.constant 0 : i32
    %2 = arith.cmpi ne, %1, %c0_i32_0 : i32
    scf.if %2 {
      %cst_9 = arith.constant 0.000000e+00 : f32
      %12 = vector.broadcast %cst_9 : f32 to vector<128x128xf32>
      %c0_10 = arith.constant 0 : index
      %c0_11 = arith.constant 0 : index
      %13 = vector.load %arg10[%c0_10, %c0_11] : memref<128x128xf32, #tpu.memory_space<vmem>>, vector<128x128xf32>
      tpu.vector_store %arg10[%c0_10, %c0_11], %12 {strides = array<i32>} : memref<128x128xf32, #tpu.memory_space<vmem>>, vector<128x128xf32>,
    } else {
    }
    %c0 = arith.constant 0 : index
    %c0_1 = arith.constant 0 : index
    %3 = vector.load %arg10[%c0, %c0_1] : memref<128x128xf32, #tpu.memory_space<vmem>>, vector<128x128xf32>
    %c0_2 = arith.constant 0 : index
    %c0_3 = arith.constant 0 : index
    %4 = vector.load %arg2[%c0_2, %c0_3] : memref<128x256xbf16, #tpu.memory_space<vmem>>, vector<128x256xbf16>
    %c0_4 = arith.constant 0 : index
    %c0_5 = arith.constant 0 : index
    %5 = vector.load %arg3[%c0_4, %c0_5] : memref<256x128xbf16, #tpu.memory_space<vmem>>, vector<256x128xbf16>
    %cst = arith.constant dense<0.000000e+00> : vector<128x128xf32>
    %6 = tpu.matmul %4, %5, %cst {dimension_numbers = #tpu.dot_dimension_numbers<[1], [0], [0], [1], [0, 0, 1, 1], [], []>} : vector<128x256xbf16>, vector<256x128xbf16>, vector<128x128xf32> -> vector<128x128xf32>
    %7 = arith.addf %3, %6 : vector<128x128xf32>
    %c0_6 = arith.constant 0 : index
    %c0_7 = arith.constant 0 : index
    %8 = vector.load %arg10[%c0_6, %c0_7] : memref<128x128xf32, #tpu.memory_space<vmem>>, vector<128x128xf32>
    tpu.vector_store %arg10[%c0_6, %c0_7], %7 {strides = array<i32>} : memref<128x128xf32, #tpu.memory_space<vmem>>, vector<128x128xf32>,
    %c1_i32 = arith.constant 1 : i32
    %9 = arith.cmpi eq, %arg1, %c1_i32 : i32
    %10 = arith.extui %9 : i1 to i32
    %c0_i32_8 = arith.constant 0 : i32
    %11 = arith.cmpi ne, %10, %c0_i32_8 : i32
    scf.if %11 {
      %c0_9 = arith.constant 0 : index
      %c0_10 = arith.constant 0 : index
      %12 = vector.load %arg10[%c0_9, %c0_10] : memref<128x128xf32, #tpu.memory_space<vmem>>, vector<128x128xf32>
      %c0_11 = arith.constant 0 : index
      %c0_12 = arith.constant 0 : index
      %13 = vector.load %arg4[%c0_11, %c0_12] : memref<128x1xf32, #tpu.memory_space<vmem>>, vector<128x1xf32>
      %14 = vector.broadcast %13 : vector<128x1xf32> to vector<128x128xf32>
      %15 = arith.mulf %12, %14 : vector<128x128xf32>
      %c0_13 = arith.constant 0 : index
      %c0_14 = arith.constant 0 : index
      %16 = vector.load %arg5[%c0_13, %c0_14] : memref<1x128xf32, #tpu.memory_space<vmem>>, vector<1x128xf32>
      %17 = vector.broadcast %16 : vector<1x128xf32> to vector<128x128xf32>
      %18 = arith.addf %15, %17 : vector<128x128xf32>
      %c0_15 = arith.constant 0 : index
      %c0_16 = arith.constant 0 : index
      %19 = vector.load %arg6[%c0_15, %c0_16] : memref<128x256xbf16, #tpu.memory_space<vmem>>, vector<128x256xbf16>
      %c0_17 = arith.constant 0 : index
      %c0_18 = arith.constant 0 : index
      %20 = vector.load %arg7[%c0_17, %c0_18] : memref<256x128xbf16, #tpu.memory_space<vmem>>, vector<256x128xbf16>
      %cst_19 = arith.constant dense<0.000000e+00> : vector<128x128xf32>
      %21 = tpu.matmul %19, %20, %cst_19 {dimension_numbers = #tpu.dot_dimension_numbers<[1], [0], [0], [1], [0, 0, 1, 1], [], []>} : vector<128x256xbf16>, vector<256x128xbf16>, vector<128x128xf32> -> vector<128x128xf32>
      %22 = arith.addf %18, %21 : vector<128x128xf32>
      %c0_20 = arith.constant 0 : index
      %c0_21 = arith.constant 0 : index
      %23 = vector.load %arg8[%c0_20, %c0_21] : memref<128x128xf32, #tpu.memory_space<vmem>>, vector<128x128xf32>
      tpu.vector_store %arg8[%c0_20, %c0_21], %22 {strides = array<i32>} : memref<128x128xf32, #tpu.memory_space<vmem>>, vector<128x128xf32>,
      %24 = tpu.iota {dimensions = array<i32: 1>} : vector<128x128xi32>
      %c8_i32 = arith.constant 8 : i32
      %25 = vector.broadcast %c8_i32 : i32 to vector<128x128xi32>
      %26 = arith.cmpi slt, %24, %25 : vector<128x128xi32>
      %cst_22 = arith.constant -1.000000e+30 : f32
      %27 = vector.broadcast %cst_22 : f32 to vector<128x128xf32>
      %28 = arith.select %26, %22, %27 : vector<128x128xi1>, vector<128x128xf32>
      %cst_23 = arith.constant dense<0xFF800000> : vector<128xf32>
      %29 = vector.multi_reduction <maximumf>, %28, %cst_23 [1] : vector<128x128xf32> to vector<128xf32>
      %30 = vector.shape_cast %29 : vector<128xf32> to vector<128x1xf32>
      %31 = vector.broadcast %30 : vector<128x1xf32> to vector<128x128xf32>
      %32 = arith.subf %28, %31 : vector<128x128xf32>
      %33 = math.exp %32 : vector<128x128xf32>
      %cst_24 = arith.constant 0.000000e+00 : f32
      %34 = vector.broadcast %cst_24 : f32 to vector<128x128xf32>
      %35 = arith.select %26, %33, %34 : vector<128x128xi1>, vector<128x128xf32>
      %cst_25 = arith.constant dense<0.000000e+00> : vector<128xf32>
      %36 = vector.multi_reduction <add>, %35, %cst_25 [1] : vector<128x128xf32> to vector<128xf32>
      %37 = vector.shape_cast %36 : vector<128xf32> to vector<128x1xf32>
      %38 = math.log %37 : vector<128x1xf32>
      %39 = vector.broadcast %30 : vector<128x1xf32> to vector<128x128xf32>
      %40 = arith.subf %28, %39 : vector<128x128xf32>
      %41 = vector.broadcast %38 : vector<128x1xf32> to vector<128x128xf32>
      %42 = arith.subf %40, %41 : vector<128x128xf32>
      %c0_26 = arith.constant 0 : index
      %c0_27 = arith.constant 0 : index
      %43 = vector.load %arg9[%c0_26, %c0_27] : memref<128x128xf32, #tpu.memory_space<vmem>>, vector<128x128xf32>
      tpu.vector_store %arg9[%c0_26, %c0_27], %42 {strides = array<i32>} : memref<128x128xf32, #tpu.memory_space<vmem>>, vector<128x128xf32>,
    } else {
    }
    return
  }
  func.func @transform_0(%arg0: i32, %arg1: i32) -> (i32, i32) {
    %c0_i32 = arith.constant 0 : i32
    return %arg0, %arg1 : i32, i32
  }
  func.func @transform_1(%arg0: i32, %arg1: i32) -> (i32, i32) {
    %c0_i32 = arith.constant 0 : i32
    %c0_i32_0 = arith.constant 0 : i32
    return %arg1, %c0_i32 : i32, i32
  }
  func.func @transform_2(%arg0: i32, %arg1: i32) -> (i32, i32) {
    %c0_i32 = arith.constant 0 : i32
    %c0_i32_0 = arith.constant 0 : i32
    return %arg0, %c0_i32 : i32, i32
  }
  func.func @transform_3(%arg0: i32, %arg1: i32) -> (i32, i32) {
    %c0_i32 = arith.constant 0 : i32
    %c0_i32_0 = arith.constant 0 : i32
    %c0_i32_1 = arith.constant 0 : i32
    return %c0_i32, %c0_i32_0 : i32, i32
  }
  func.func @transform_4(%arg0: i32, %arg1: i32) -> (i32, i32) {
    %c0_i32 = arith.constant 0 : i32
    %c0_i32_0 = arith.constant 0 : i32
    return %arg0, %c0_i32 : i32, i32
  }
  func.func @transform_5(%arg0: i32, %arg1: i32) -> (i32, i32) {
    %c0_i32 = arith.constant 0 : i32
    %c0_i32_0 = arith.constant 0 : i32
    %c0_i32_1 = arith.constant 0 : i32
    return %c0_i32, %c0_i32_0 : i32, i32
  }
  func.func @transform_6(%arg0: i32, %arg1: i32) -> (i32, i32) {
    %c0_i32 = arith.constant 0 : i32
    %c0_i32_0 = arith.constant 0 : i32
    return %arg0, %c0_i32 : i32, i32
  }
  func.func @transform_7(%arg0: i32, %arg1: i32) -> (i32, i32) {
    %c0_i32 = arith.constant 0 : i32
    %c0_i32_0 = arith.constant 0 : i32
    return %arg0, %c0_i32 : i32, i32
  }
}

</mosaic_0001>

<llo_original>
// kernel: _sage_forward_impl.4
$region0: #{_sage_forward_impl.4}
  #allocation0 [shape = 'u32[]', space=smem, size = 0x4, offset = 0x4, fixed_abs, tag = 'smem constant byte address 0x4 - core index']
  #allocation1 [shape = 'u32[144,128]{1,0:T(1,128)}', space=vmem, size = 0x12000, scoped, tag = 'internal scratch']
  #allocation2 [shape = 'f32[128,128]{1,0:T(8,128)}', space=vmem, size = 0x10000, scoped, tag = 'scratch operand']
  %s0 = inlined_call_operand.vmem [shape: bf16[768,1024], index: 0, kind: input, shape index: {}]
  %s1 = inlined_call_operand.vmem [shape: bf16[1024,128], index: 1, kind: input, shape index: {}]
  %s2 = inlined_call_operand.vmem [shape: f32[768,1], index: 2, kind: input, shape index: {}]
  %s3 = inlined_call_operand.vmem [shape: bf16[128,256], index: 3, kind: input, shape index: {}]
  %s4 = inlined_call_operand.vmem [shape: f32[1,256], index: 4, kind: input, shape index: {}]
  %s5 = inlined_call_operand.vmem [shape: bf16[768,128], index: 5, kind: input, shape index: {}]
  %s6 = inlined_call_operand.vmem [shape: bf16[128,256], index: 6, kind: input, shape index: {}]
  %s7 = inlined_call_operand.vmem [shape: f32[768,256], index: 7, kind: output, shape index: {0}]
  %s8 = inlined_call_operand.vmem [shape: bf16[768,256], index: 8, kind: output, shape index: {1}]
  %9 = xla_tuple %s7, %s8
  %s10 = sld [smem:[#allocation0]]
  $region115: #{_sage_forward_impl.4} parent=0
    _
  %s12 = ssub.s32 1, %s10
  %s13 = scalar_select 0, %s12, %s10
  $region1: #{_sage_forward_impl.4} parent=0
    #allocation3 [shape = 'u8[131072]{0}', space=vmem, size = 0x20000, scoped, tag = 'input window, operand 0']
    loop: start=0, step=1, limit=26
    $region2: #{_sage_forward_impl.4} parent=1 // loop_pre_header
      _
    $region3: #{_sage_forward_impl.4} parent=1 // loop_header
      %s15 = sphi 0, %s19
      %p16 = scmp.ge.s32.totalorder %s15, 26
      %s22 = sphi 0, %s34
      %s23 = sphi 0, %s30
      %s24 = sphi 0, %s22
      %s25 = sphi 0, %s23
      %s26 = sphi 0, %s24
      %s27 = sphi 0, %s25
      %s39 = sphi 0, %s41
      %s42 = sphi 0, %s39
      %s43 = sphi 0, %s42
      %s59 = sphi 0, %s43
      %s65 = sphi 0, %s67
      %s68 = sphi 0, %s65
      %s69 = sphi 0, %s68
      %s85 = sphi 0, %s69
      %s91 = sphi 0, %s93
      %s94 = sphi 0, %s91
      %s95 = sphi 0, %s94
      %s111 = sphi 0, %s95
      %s115 = sphi 0, %s115
      %s117 = sphi 0, %s115
      %s118 = sphi 0, %s117
      %s132 = sphi 0, %s118
      %s136 = sphi 0, %s136
      %s138 = sphi 0, %s136
      %s139 = sphi 0, %s138
      %s153 = sphi 0, %s139
      %s159 = sphi 0, %s161
      %s162 = sphi 0, %s159
      %s163 = sphi 0, %s162
      %s179 = sphi 0, %s163
      %s183 = sphi 0, %s183
      %s185 = sphi 0, %s183
      %s186 = sphi 0, %s185
      %s200 = sphi 0, %s186
      %s206 = sphi 0, %s208
      %s209 = sphi 0, %s206
      %s210 = sphi 0, %s209
      %s226 = sphi 0, %s210
      %s232 = sphi 0, %s234
      %s235 = sphi 0, %s232
      %s236 = sphi 0, %s235
      %s252 = sphi 0, %s236
    $region4: #{_sage_forward_impl.4} parent=1 // loop_header_branch
      %18 = sbr.rel (%p16) target = $region8
    $region5: #{_sage_forward_impl.4} parent=1 // loop_body
      %s20 = ssub.s32 %s15, 1
      %s21 = ssub.s32 %s15, 2
      %s28 = sadd.s32 1, %s23
      %p29 = scmp.ge.s32.totalorder %s28, 4
      %s30 = scalar_select %p29, 0, %s28
      %s31 = sadd.s32 1, %s22
      %s32 = scalar_select %p29, %s31, %s22
      %p33 = scmp.ge.s32.totalorder %s32, 6
      %s34 = scalar_select %p33, 0, %s32
      %s35 = ssub.s32 %s22, %s34
      %s36 = ssub.s32 %s23, %s30
      %s37 = sor.u32 %s35, %s36
      %p38 = scmp.eq.s32.totalorder %s37, 0
      %s40 = sadd.s32 %s39, 1
      %s41 = scalar_select %p38, %s39, %s40
      %p44 = pneg %p38
      %p45 = scmp.eq.s32.totalorder %s15, 23
      %p46 = por %p44, %p45
      %p47 = scmp.ne.s32.totalorder %s39, %s42
      %p48 = scmp.eq.s32.totalorder %s15, 0
      %p49 = por %p47, %p48
      %p50 = scmp.ne.s32.totalorder %s39, %s42
      %p51 = scmp.eq.s32.totalorder %s20, 23
      %p52 = por %p50, %p51
      %p53 = scmp.ne.s32.totalorder %s42, %s43
      %p54 = scmp.eq.s32.totalorder %s20, 0
      %p55 = por %p53, %p54
      %p56 = scmp.ne.s32.totalorder %s42, %s43
      %p57 = scmp.eq.s32.totalorder %s21, 23
      %p58 = por %p56, %p57
      %p60 = scmp.ne.s32.totalorder %s43, %s59
      %p61 = scmp.eq.s32.totalorder %s21, 0
      %p62 = por %p60, %p61
      %s63 = ssub.s32 %s23, %s30
      %p64 = scmp.eq.s32.totalorder %s63, 0
      %s66 = sadd.s32 %s65, 1
      %s67 = scalar_select %p64, %s65, %s66
      %p70 = pneg %p64
      %p71 = scmp.eq.s32.totalorder %s15, 23
      %p72 = por %p70, %p71
      %p73 = scmp.ne.s32.totalorder %s65, %s68
      %p74 = scmp.eq.s32.totalorder %s15, 0
      %p75 = por %p73, %p74
      %p76 = scmp.ne.s32.totalorder %s65, %s68
      %p77 = scmp.eq.s32.totalorder %s20, 23
      %p78 = por %p76, %p77
      %p79 = scmp.ne.s32.totalorder %s68, %s69
      %p80 = scmp.eq.s32.totalorder %s20, 0
      %p81 = por %p79, %p80
      %p82 = scmp.ne.s32.totalorder %s68, %s69
      %p83 = scmp.eq.s32.totalorder %s21, 23
      %p84 = por %p82, %p83
      %p86 = scmp.ne.s32.totalorder %s69, %s85
      %p87 = scmp.eq.s32.totalorder %s21, 0
      %p88 = por %p86, %p87
      %s89 = ssub.s32 %s22, %s34
      %p90 = scmp.eq.s32.totalorder %s89, 0
      %s92 = sadd.s32 %s91, 1
      %s93 = scalar_select %p90, %s91, %s92
      %p96 = pneg %p90
      %p97 = scmp.eq.s32.totalorder %s15, 23
      %p98 = por %p96, %p97
      %p99 = scmp.ne.s32.totalorder %s91, %s94
      %p100 = scmp.eq.s32.totalorder %s15, 0
      %p101 = por %p99, %p100
      %p102 = scmp.ne.s32.totalorder %s91, %s94
      %p103 = scmp.eq.s32.totalorder %s20, 23
      %p104 = por %p102, %p103
      %p105 = scmp.ne.s32.totalorder %s94, %s95
      %p106 = scmp.eq.s32.totalorder %s20, 0
      %p107 = por %p105, %p106
      %p108 = scmp.ne.s32.totalorder %s94, %s95
      %p109 = scmp.eq.s32.totalorder %s21, 23
      %p110 = por %p108, %p109
      %p112 = scmp.ne.s32.totalorder %s95, %s111
      %p113 = scmp.eq.s32.totalorder %s21, 0
      %p114 = por %p112, %p113
      %s116 = sadd.s32 %s115, 1
      %p119 = scmp.eq.s32.totalorder %s15, 23
      %p120 = scmp.ne.s32.totalorder %s115, %s117
      %p121 = scmp.eq.s32.totalorder %s15, 0
      %p122 = por %p120, %p121
      %p123 = scmp.ne.s32.totalorder %s115, %s117
      %p124 = scmp.eq.s32.totalorder %s20, 23
      %p125 = por %p123, %p124
      %p126 = scmp.ne.s32.totalorder %s117, %s118
      %p127 = scmp.eq.s32.totalorder %s20, 0
      %p128 = por %p126, %p127
      %p129 = scmp.ne.s32.totalorder %s117, %s118
      %p130 = scmp.eq.s32.totalorder %s21, 23
      %p131 = por %p129, %p130
      %p133 = scmp.ne.s32.totalorder %s118, %s132
      %p134 = scmp.eq.s32.totalorder %s21, 0
      %p135 = por %p133, %p134
      %s137 = sadd.s32 %s136, 1
      %p140 = scmp.eq.s32.totalorder %s15, 23
      %p141 = scmp.ne.s32.totalorder %s136, %s138
      %p142 = scmp.eq.s32.totalorder %s15, 0
      %p143 = por %p141, %p142
      %p144 = scmp.ne.s32.totalorder %s136, %s138
      %p145 = scmp.eq.s32.totalorder %s20, 23
      %p146 = por %p144, %p145
      %p147 = scmp.ne.s32.totalorder %s138, %s139
      %p148 = scmp.eq.s32.totalorder %s20, 0
      %p149 = por %p147, %p148
      %p150 = scmp.ne.s32.totalorder %s138, %s139
      %p151 = scmp.eq.s32.totalorder %s21, 23
      %p152 = por %p150, %p151
      %p154 = scmp.ne.s32.totalorder %s139, %s153
      %p155 = scmp.eq.s32.totalorder %s21, 0
      %p156 = por %p154, %p155
      %s157 = ssub.s32 %s22, %s34
      %p158 = scmp.eq.s32.totalorder %s157, 0
      %s160 = sadd.s32 %s159, 1
      %s161 = scalar_select %p158, %s159, %s160
      %p164 = pneg %p158
      %p165 = scmp.eq.s32.totalorder %s15, 23
      %p166 = por %p164, %p165
      %p167 = scmp.ne.s32.totalorder %s159, %s162
      %p168 = scmp.eq.s32.totalorder %s15, 0
      %p169 = por %p167, %p168
      %p170 = scmp.ne.s32.totalorder %s159, %s162
      %p171 = scmp.eq.s32.totalorder %s20, 23
      %p172 = por %p170, %p171
      %p173 = scmp.ne.s32.totalorder %s162, %s163
      %p174 = scmp.eq.s32.totalorder %s20, 0
      %p175 = por %p173, %p174
      %p176 = scmp.ne.s32.totalorder %s162, %s163
      %p177 = scmp.eq.s32.totalorder %s21, 23
      %p178 = por %p176, %p177
      %p180 = scmp.ne.s32.totalorder %s163, %s179
      %p181 = scmp.eq.s32.totalorder %s21, 0
      %p182 = por %p180, %p181
      %s184 = sadd.s32 %s183, 1
      %p187 = scmp.eq.s32.totalorder %s15, 23
      %p188 = scmp.ne.s32.totalorder %s183, %s185
      %p189 = scmp.eq.s32.totalorder %s15, 0
      %p190 = por %p188, %p189
      %p191 = scmp.ne.s32.totalorder %s183, %s185
      %p192 = scmp.eq.s32.totalorder %s20, 23
      %p193 = por %p191, %p192
      %p194 = scmp.ne.s32.totalorder %s185, %s186
      %p195 = scmp.eq.s32.totalorder %s20, 0
      %p196 = por %p194, %p195
      %p197 = scmp.ne.s32.totalorder %s185, %s186
      %p198 = scmp.eq.s32.totalorder %s21, 23
      %p199 = por %p197, %p198
      %p201 = scmp.ne.s32.totalorder %s186, %s200
      %p202 = scmp.eq.s32.totalorder %s21, 0
      %p203 = por %p201, %p202
      %s204 = ssub.s32 %s22, %s34
      %p205 = scmp.eq.s32.totalorder %s204, 0
      %s207 = sadd.s32 %s206, 1
      %s208 = scalar_select %p205, %s206, %s207
      %p211 = pneg %p205
      %p212 = scmp.eq.s32.totalorder %s15, 23
      %p213 = por %p211, %p212
      %p214 = scmp.ne.s32.totalorder %s206, %s209
      %p215 = scmp.eq.s32.totalorder %s15, 0
      %p216 = por %p214, %p215
      %p217 = scmp.ne.s32.totalorder %s206, %s209
      %p218 = scmp.eq.s32.totalorder %s20, 23
      %p219 = por %p217, %p218
      %p220 = scmp.ne.s32.totalorder %s209, %s210
      %p221 = scmp.eq.s32.totalorder %s20, 0
      %p222 = por %p220, %p221
      %p223 = scmp.ne.s32.totalorder %s209, %s210
      %p224 = scmp.eq.s32.totalorder %s21, 23
      %p225 = por %p223, %p224
      %p227 = scmp.ne.s32.totalorder %s210, %s226
      %p228 = scmp.eq.s32.totalorder %s21, 0
      %p229 = por %p227, %p228
      %s230 = ssub.s32 %s22, %s34
      %p231 = scmp.eq.s32.totalorder %s230, 0
      %s233 = sadd.s32 %s232, 1
      %s234 = scalar_select %p231, %s232, %s233
      %p237 = pneg %p231
      %p238 = scmp.eq.s32.totalorder %s15, 23
      %p239 = por %p237, %p238
      %p240 = scmp.ne.s32.totalorder %s232, %s235
      %p241 = scmp.eq.s32.totalorder %s15, 0
      %p242 = por %p240, %p241
      %p243 = scmp.ne.s32.totalorder %s232, %s235
      %p244 = scmp.eq.s32.totalorder %s20, 23
      %p245 = por %p243, %p244
      %p246 = scmp.ne.s32.totalorder %s235, %s236
      %p247 = scmp.eq.s32.totalorder %s20, 0
      %p248 = por %p246, %p247
      %p249 = scmp.ne.s32.totalorder %s235, %s236
      %p250 = scmp.eq.s32.totalorder %s21, 23
      %p251 = por %p249, %p250
      %p253 = scmp.ne.s32.totalorder %s236, %s252
      %p254 = scmp.eq.s32.totalorder %s21, 0
      %p255 = por %p253, %p254
      %p256 = scmp.le.s32.totalorder 1, %s15
      %p257 = scmp.lt.s32.totalorder %s15, 25
      %p258 = pnand %p256, %p257
      %p259 = pneg %p258
      // Predicated region
      $region9: #{_sage_forward_impl.4} parent=5 // pred_check
        _
      $region10: #{_sage_forward_impl.4} parent=5 // pred_check_branch
        %261 = sbr.rel (%p258) target = $region12
      $region11: #{_sage_forward_impl.4} parent=5 // pred_region
        %s262 = ssub.s32 %s15, 1
        // Predicated region
        $region13: #{_sage_forward_impl.4} parent=11 // pred_check
          %p263 = pneg %p128
        $region14: #{_sage_forward_impl.4} parent=11 // pred_check_branch
          %265 = sbr.rel (%p263) target = $region16
        $region15: #{_sage_forward_impl.4} parent=11 // pred_region
          _
        $region16: #{_sage_forward_impl.4} parent=11 // pred_fallthru
          _
        // Predicated region
        $region17: #{_sage_forward_impl.4} parent=11 // pred_check
          %p266 = pneg %p149
        $region18: #{_sage_forward_impl.4} parent=11 // pred_check_branch
          %268 = sbr.rel (%p266) target = $region20
        $region19: #{_sage_forward_impl.4} parent=11 // pred_region
          _
        $region20: #{_sage_forward_impl.4} parent=11 // pred_fallthru
          _
        // Predicated region
        $region21: #{_sage_forward_impl.4} parent=11 // pred_check
          %p269 = pneg %p196
        $region22: #{_sage_forward_impl.4} parent=11 // pred_check_branch
          %271 = sbr.rel (%p269) target = $region24
        $region23: #{_sage_forward_impl.4} parent=11 // pred_region
          _
        $region24: #{_sage_forward_impl.4} parent=11 // pred_fallthru
          _
      $region12: #{_sage_forward_impl.4} parent=5 // pred_fallthru
        _
      %p272 = scmp.lt.s32.totalorder %s15, 24
      // Predicated region
      $region25: #{_sage_forward_impl.4} parent=5 // pred_check
        %p273 = pneg %p272
      $region26: #{_sage_forward_impl.4} parent=5 // pred_check_branch
        %275 = sbr.rel (%p273) target = $region28
      $region27: #{_sage_forward_impl.4} parent=5 // pred_region
        // Predicated region
        $region29: #{_sage_forward_impl.4} parent=27 // pred_check
          %p276 = pneg %p49
        $region30: #{_sage_forward_impl.4} parent=27 // pred_check_branch
          %278 = sbr.rel (%p276) target = $region32
        $region31: #{_sage_forward_impl.4} parent=27 // pred_region
          %s279 = sand.u32 %s39, 1
          %s280 = sand.u32 %s39, 1
          %s281 = smul.addr %s280, 128
          %s282 = scalar_lea.vmem [#allocation3], %s281
          %s283 = smul.u32 16, %s22
          %s284 = smul.u32 2, %s23
          %s285 = smul.addr %s283, 8
          %s286 = sadd.s32 %s284, %s285
          %s287 = smul.addr %s286, 4
          %s288 = scalar_lea.vmem %s0, %s287
          // Predicated region
          $region33: #{_sage_forward_impl.4} parent=31 // pred_check
            _
          $region34: #{_sage_forward_impl.4} parent=31 // pred_check_branch
            %290 = sbr.rel (0) target = $region36
          $region35: #{_sage_forward_impl.4} parent=31 // pred_region
            // Predicated region
            $region37: #{_sage_forward_impl.4} parent=35 // pred_check
              _
            $region38: #{_sage_forward_impl.4} parent=35 // pred_check_branch
              %292 = sbr.rel (0) target = $region40
            $region39: #{_sage_forward_impl.4} parent=35 // pred_region
              // Predicated region
              $region52: #{_sage_forward_impl.4} parent=39 // pred_check
                _
              $region53: #{_sage_forward_impl.4} parent=39 // pred_check_branch
                %337 = sbr.rel (0) target = $region55
              $region54: #{_sage_forward_impl.4} parent=39 // pred_region
                loop: start=0, step=1, limit=1
                $region56: #{_sage_forward_impl.4} parent=54 // loop_pre_header
                  _
                $region57: #{_sage_forward_impl.4} parent=54 // loop_header
                  %s339 = sphi 0, %s343
                  %p340 = scmp.ge.s32.totalorder %s339, 1
                  %s344 = sphi %s288, %s288
                  %s345 = sphi %s282, %s282
                $region58: #{_sage_forward_impl.4} parent=54 // loop_header_branch
                  %342 = sbr.rel (%p340) target = $region62
                $region59: #{_sage_forward_impl.4} parent=54 // loop_body
                  %v346 = vld [vmem:[%s344] sm:$0xff]
                  %347 = vst [vmem:[%s345] sm:$0xff] %v346
                  %v348 = vld [vmem:[%s344 + $0x20] sm:$0xff]
                  %349 = vst [vmem:[%s345 + $0x8] sm:$0xff] %v348
                  %v350 = vld [vmem:[%s344 + $0x40] sm:$0xff]
                  %351 = vst [vmem:[%s345 + $0x10] sm:$0xff] %v350
                  %v352 = vld [vmem:[%s344 + $0x60] sm:$0xff]
                  %353 = vst [vmem:[%s345 + $0x18] sm:$0xff] %v352
                  %v354 = vld [vmem:[%s344 + $0x80] sm:$0xff]
                  %355 = vst [vmem:[%s345 + $0x20] sm:$0xff] %v354
                  %v356 = vld [vmem:[%s344 + $0xa0] sm:$0xff]
                  %357 = vst [vmem:[%s345 + $0x28] sm:$0xff] %v356
                  %v358 = vld [vmem:[%s344 + $0xc0] sm:$0xff]
                  %359 = vst [vmem:[%s345 + $0x30] sm:$0xff] %v358
                  %v360 = vld [vmem:[%s344 + $0xe0] sm:$0xff]
                  %361 = vst [vmem:[%s345 + $0x38] sm:$0xff] %v360
                  %v362 = vld [vmem:[%s344 + $0x100] sm:$0xff]
                  %363 = vst [vmem:[%s345 + $0x40] sm:$0xff] %v362
                  %v364 = vld [vmem:[%s344 + $0x120] sm:$0xff]
                  %365 = vst [vmem:[%s345 + $0x48] sm:$0xff] %v364
                  %v366 = vld [vmem:[%s344 + $0x140] sm:$0xff]
                  %367 = vst [vmem:[%s345 + $0x50] sm:$0xff] %v366
                  %v368 = vld [vmem:[%s344 + $0x160] sm:$0xff]
                  %369 = vst [vmem:[%s345 + $0x58] sm:$0xff] %v368
                  %v370 = vld [vmem:[%s344 + $0x180] sm:$0xff]
                  %371 = vst [vmem:[%s345 + $0x60] sm:$0xff] %v370
                  %v372 = vld [vmem:[%s344 + $0x1a0] sm:$0xff]
                  %373 = vst [vmem:[%s345 + $0x68] sm:$0xff] %v372
                  %v374 = vld [vmem:[%s344 + $0x1c0] sm:$0xff]
                  %375 = vst [vmem:[%s345 + $0x70] sm:$0xff] %v374
                  %v376 = vld [vmem:[%s344 + $0x1e0] sm:$0xff]
                  %377 = vst [vmem:[%s345 + $0x78] sm:$0xff] %v376
                $region60: #{_sage_forward_impl.4} parent=54 // loop_footer
                  %s343 = sadd.s32 1, %s339
                $region61: #{_sage_forward_impl.4} parent=54 // loop_footer_branch
                  %338 = sbr.rel target = $region57
                $region62: #{_sage_forward_impl.4} parent=54 // loop_exit
                  _
              $region55: #{_sage_forward_impl.4} parent=39 // pred_fallthru
                _
              // Predicated region
              $region63: #{_sage_forward_impl.4} parent=39 // pred_check
                _
              $region64: #{_sage_forward_impl.4} parent=39 // pred_check_branch
                %379 = sbr.rel target = $region66
              $region65: #{_sage_forward_impl.4} parent=39 // pred_region
                _
              $region66: #{_sage_forward_impl.4} parent=39 // pred_fallthru
                _
            $region40: #{_sage_forward_impl.4} parent=35 // pred_fallthru
              _
            // Predicated region
            $region41: #{_sage_forward_impl.4} parent=35 // pred_check
              _
            $region42: #{_sage_forward_impl.4} parent=35 // pred_check_branch
              %294 = sbr.rel target = $region44
            $region43: #{_sage_forward_impl.4} parent=35 // pred_region
              loop: start=0, step=1, limit=1
              $region45: #{_sage_forward_impl.4} parent=43 // loop_pre_header
                _
              $region46: #{_sage_forward_impl.4} parent=43 // loop_header
                %s297 = sphi 0, %s301
                %p298 = scmp.ge.s32.totalorder %s297, 1
                %s302 = sphi %s288, %s288
                %s303 = sphi %s282, %s282
              $region47: #{_sage_forward_impl.4} parent=43 // loop_header_branch
                %300 = sbr.rel (%p298) target = $region51
              $region48: #{_sage_forward_impl.4} parent=43 // loop_body
                %v304 = vld [vmem:[%s302] sm:$0xff]
                %305 = vst [vmem:[%s303] sm:$0xff] %v304
                %v306 = vld [vmem:[%s302 + $0x20] sm:$0xff]
                %307 = vst [vmem:[%s303 + $0x8] sm:$0xff] %v306
                %v308 = vld [vmem:[%s302 + $0x40] sm:$0xff]
                %309 = vst [vmem:[%s303 + $0x10] sm:$0xff] %v308
                %v310 = vld [vmem:[%s302 + $0x60] sm:$0xff]
                %311 = vst [vmem:[%s303 + $0x18] sm:$0xff] %v310
                %v312 = vld [vmem:[%s302 + $0x80] sm:$0xff]
                %313 = vst [vmem:[%s303 + $0x20] sm:$0xff] %v312
                %v314 = vld [vmem:[%s302 + $0xa0] sm:$0xff]
                %315 = vst [vmem:[%s303 + $0x28] sm:$0xff] %v314
                %v316 = vld [vmem:[%s302 + $0xc0] sm:$0xff]
                %317 = vst [vmem:[%s303 + $0x30] sm:$0xff] %v316
                %v318 = vld [vmem:[%s302 + $0xe0] sm:$0xff]
                %319 = vst [vmem:[%s303 + $0x38] sm:$0xff] %v318
                %v320 = vld [vmem:[%s302 + $0x100] sm:$0xff]
                %321 = vst [vmem:[%s303 + $0x40] sm:$0xff] %v320
                %v322 = vld [vmem:[%s302 + $0x120] sm:$0xff]
                %323 = vst [vmem:[%s303 + $0x48] sm:$0xff] %v322
                %v324 = vld [vmem:[%s302 + $0x140] sm:$0xff]
                %325 = vst [vmem:[%s303 + $0x50] sm:$0xff] %v324
                %v326 = vld [vmem:[%s302 + $0x160] sm:$0xff]
                %327 = vst [vmem:[%s303 + $0x58] sm:$0xff] %v326
                %v328 = vld [vmem:[%s302 + $0x180] sm:$0xff]
                %329 = vst [vmem:[%s303 + $0x60] sm:$0xff] %v328
                %v330 = vld [vmem:[%s302 + $0x1a0] sm:$0xff]
                %331 = vst [vmem:[%s303 + $0x68] sm:$0xff] %v330
                %v332 = vld [vmem:[%s302 + $0x1c0] sm:$0xff]
                %333 = vst [vmem:[%s303 + $0x70] sm:$0xff] %v332
                %v334 = vld [vmem:[%s302 + $0x1e0] sm:$0xff]
                %335 = vst [vmem:[%s303 + $0x78] sm:$0xff] %v334
              $region49: #{_sage_forward_impl.4} parent=43 // loop_footer
                %s301 = sadd.s32 1, %s297
              $region50: #{_sage_forward_impl.4} parent=43 // loop_footer_branch
                %296 = sbr.rel target = $region46
              $region51: #{_sage_forward_impl.4} parent=43 // loop_exit
                _
            $region44: #{_sage_forward_impl.4} parent=35 // pred_fallthru
              _
          $region36: #{_sage_forward_impl.4} parent=31 // pred_fallthru
            _
          %380 = vnop
        $region32: #{_sage_forward_impl.4} parent=27 // pred_fallthru
          _
        // Predicated region
        $region67: #{_sage_forward_impl.4} parent=27 // pred_check
          %p381 = pneg %p75
        $region68: #{_sage_forward_impl.4} parent=27 // pred_check_branch
          %383 = sbr.rel (%p381) target = $region70
        $region69: #{_sage_forward_impl.4} parent=27 // pred_region
          %s384 = smul.u32 32, %s23
          %p385 = scmp.lt.s32.totalorder %s384, 127
          %s386 = scalar_select %p385, %s384, 127
          %s387 = smul.addr %s386, 4
          %s388 = scalar_lea.vmem %s1, %s387
          %s389 = smul.u32 32, %s23
        $region70: #{_sage_forward_impl.4} parent=27 // pred_fallthru
          _
        // Predicated region
        $region71: #{_sage_forward_impl.4} parent=27 // pred_check
          %p390 = pneg %p101
        $region72: #{_sage_forward_impl.4} parent=27 // pred_check_branch
          %392 = sbr.rel (%p390) target = $region74
        $region73: #{_sage_forward_impl.4} parent=27 // pred_region
          %s393 = smul.u32 16, %s22
          %p394 = scmp.lt.s32.totalorder %s393, 95
          %s395 = scalar_select %p394, %s393, 95
          %s396 = smul.addr %s395, 8
          %s397 = scalar_lea.vmem %s2, %s396
          %s398 = smul.u32 16, %s22
        $region74: #{_sage_forward_impl.4} parent=27 // pred_fallthru
          _
        // Predicated region
        $region75: #{_sage_forward_impl.4} parent=27 // pred_check
          %p399 = pneg %p169
        $region76: #{_sage_forward_impl.4} parent=27 // pred_check_branch
          %401 = sbr.rel (%p399) target = $region78
        $region77: #{_sage_forward_impl.4} parent=27 // pred_region
          %s402 = smul.u32 16, %s22
          %p403 = scmp.lt.s32.totalorder %s402, 95
          %s404 = scalar_select %p403, %s402, 95
          %s405 = smul.addr %s404, 4
          %s406 = scalar_lea.vmem %s5, %s405
          %s407 = smul.u32 16, %s22
        $region78: #{_sage_forward_impl.4} parent=27 // pred_fallthru
          _
      $region28: #{_sage_forward_impl.4} parent=5 // pred_fallthru
        _
      %p408 = scmp.le.s32.totalorder 1, %s15
      %p409 = scmp.lt.s32.totalorder %s15, 25
      %p410 = pnand %p408, %p409
      %p411 = pneg %p410
      // Predicated region
      $region79: #{_sage_forward_impl.4} parent=5 // pred_check
        _
      $region80: #{_sage_forward_impl.4} parent=5 // pred_check_branch
        %413 = sbr.rel (%p410) target = $region82
      $region81: #{_sage_forward_impl.4} parent=5 // pred_region
        %s414 = ssub.s32 %s15, 1
        %s415 = sand.u32 %s42, 1
        %s416 = sand.u32 %s42, 1
        %s417 = smul.addr %s416, 128
        %s418 = scalar_lea.vmem [#allocation3], %s417
        // Predicated region
        $region83: #{_sage_forward_impl.4} parent=81 // pred_check
          %p419 = pneg %p55
        $region84: #{_sage_forward_impl.4} parent=81 // pred_check_branch
          %421 = sbr.rel (%p419) target = $region86
        $region85: #{_sage_forward_impl.4} parent=81 // pred_region
          _
        $region86: #{_sage_forward_impl.4} parent=81 // pred_fallthru
          _
        %s422 = sand.u32 %s42, 1
        %s423 = sand.u32 %s42, 1
        %s424 = smul.addr %s423, 128
        %s425 = scalar_lea.vmem [#allocation3], %s424
        %p426 = pneg %p55
        %p427 = pneg %p52
        %s428 = smul.u32 32, %s25
        %p429 = scmp.lt.s32.totalorder %s428, 127
        %s430 = scalar_select %p429, %s428, 127
        %s431 = smul.addr %s430, 4
        %s432 = scalar_lea.vmem %s1, %s431
        %p433 = pneg %p81
        %p434 = pneg %p78
        %s435 = smul.u32 16, %s24
        %p436 = scmp.lt.s32.totalorder %s435, 95
        %s437 = scalar_select %p436, %s435, 95
        %s438 = smul.addr %s437, 8
        %s439 = scalar_lea.vmem %s2, %s438
        %p440 = pneg %p107
        %p441 = pneg %p104
        %p442 = pneg %p128
        %p443 = pneg %p125
        %p444 = pneg %p149
        %p445 = pneg %p146
        %s446 = smul.u32 16, %s24
        %p447 = scmp.lt.s32.totalorder %s446, 95
        %s448 = scalar_select %p447, %s446, 95
        %s449 = smul.addr %s448, 4
        %s450 = scalar_lea.vmem %s5, %s449
        %p451 = pneg %p175
        %p452 = pneg %p172
        %p453 = pneg %p196
        %p454 = pneg %p193
        %p455 = pneg %p222
        %p456 = pneg %p219
        %s457 = smul.u32 16, %s24
        %p458 = scmp.lt.s32.totalorder %s457, 95
        %s459 = scalar_select %p458, %s457, 95
        %s460 = smul.addr %s459, 2
        %s461 = smul.addr %s460, 8
        %s462 = scalar_lea.vmem %s7, %s461
        %p463 = pneg %p248
        %p464 = pneg %p245
        %s465 = smul.u32 16, %s24
        %p466 = scmp.lt.s32.totalorder %s465, 95
        %s467 = scalar_select %p466, %s465, 95
        %s468 = smul.addr %s467, 2
        %s469 = smul.addr %s468, 4
        %s470 = scalar_lea.vmem %s8, %s469
        %s471 = smul.u32 16, %s24
        %s472 = smul.u32 2, %s25
        %s473 = smul.u32 32, %s25
        %p474 = scmp.lt.s32.totalorder %s473, 127
        %s475 = scalar_select %p474, %s473, 127
        %s476 = smul.addr %s475, 4
        %s477 = scalar_lea.vmem %s1, %s476
        %s478 = smul.u32 32, %s25
        %s479 = smul.u32 16, %s24
        %p480 = scmp.lt.s32.totalorder %s479, 95
        %s481 = scalar_select %p480, %s479, 95
        %s482 = smul.addr %s481, 8
        %s483 = scalar_lea.vmem %s2, %s482
        %s484 = smul.u32 16, %s24
        %s485 = smul.u32 16, %s24
        %p486 = scmp.lt.s32.totalorder %s485, 95
        %s487 = scalar_select %p486, %s485, 95
        %s488 = smul.addr %s487, 4
        %s489 = scalar_lea.vmem %s5, %s488
        %s490 = smul.u32 16, %s24
        %s491 = smul.u32 16, %s24
        %p492 = scmp.lt.s32.totalorder %s491, 95
        %s493 = scalar_select %p492, %s491, 95
        %s494 = smul.addr %s493, 2
        %s495 = smul.addr %s494, 8
        %s496 = scalar_lea.vmem %s7, %s495
        %s497 = smul.u32 16, %s24
        %s498 = smul.u32 16, %s24
        %p499 = scmp.lt.s32.totalorder %s498, 95
        %s500 = scalar_select %p499, %s498, 95
        %s501 = smul.addr %s500, 2
        %s502 = smul.addr %s501, 4
        %s503 = scalar_lea.vmem %s8, %s502
        %s504 = smul.u32 16, %s24
        %p506 = scmp.eq.s32.totalorder %s25, 0
        // Predicated region
        $region87: #{_sage_forward_impl.4} parent=81 // pred_check
          %p507 = pneg %p506
        $region88: #{_sage_forward_impl.4} parent=81 // pred_check_branch
          %509 = sbr.rel (%p507) target = $region90
        $region89: #{_sage_forward_impl.4} parent=81 // pred_region
          %510 = vst [vmem:[#allocation2] sm:$0xff] 0.0
          %511 = vst [vmem:[#allocation2 + $0x8] sm:$0xff] 0.0
          %512 = vst [vmem:[#allocation2 + $0x10] sm:$0xff] 0.0
          %513 = vst [vmem:[#allocation2 + $0x18] sm:$0xff] 0.0
          %514 = vst [vmem:[#allocation2 + $0x20] sm:$0xff] 0.0
          %515 = vst [vmem:[#allocation2 + $0x28] sm:$0xff] 0.0
          %516 = vst [vmem:[#allocation2 + $0x30] sm:$0xff] 0.0
          %517 = vst [vmem:[#allocation2 + $0x38] sm:$0xff] 0.0
          %518 = vst [vmem:[#allocation2 + $0x40] sm:$0xff] 0.0
          %519 = vst [vmem:[#allocation2 + $0x48] sm:$0xff] 0.0
          %520 = vst [vmem:[#allocation2 + $0x50] sm:$0xff] 0.0
          %521 = vst [vmem:[#allocation2 + $0x58] sm:$0xff] 0.0
          %522 = vst [vmem:[#allocation2 + $0x60] sm:$0xff] 0.0
          %523 = vst [vmem:[#allocation2 + $0x68] sm:$0xff] 0.0
          %524 = vst [vmem:[#allocation2 + $0x70] sm:$0xff] 0.0
          %525 = vst [vmem:[#allocation2 + $0x78] sm:$0xff] 0.0
        $region90: #{_sage_forward_impl.4} parent=81 // pred_fallthru
          _
        %v526 = vld [vmem:[#allocation2] sm:$0xff]
        %v527 = vld [vmem:[#allocation2 + $0x8] sm:$0xff]
        %v528 = vld [vmem:[#allocation2 + $0x10] sm:$0xff]
        %v529 = vld [vmem:[#allocation2 + $0x18] sm:$0xff]
        %v530 = vld [vmem:[#allocation2 + $0x20] sm:$0xff]
        %v531 = vld [vmem:[#allocation2 + $0x28] sm:$0xff]
        %v532 = vld [vmem:[#allocation2 + $0x30] sm:$0xff]
        %v533 = vld [vmem:[#allocation2 + $0x38] sm:$0xff]
        %v534 = vld [vmem:[#allocation2 + $0x40] sm:$0xff]
        %v535 = vld [vmem:[#allocation2 + $0x48] sm:$0xff]
        %v536 = vld [vmem:[#allocation2 + $0x50] sm:$0xff]
        %v537 = vld [vmem:[#allocation2 + $0x58] sm:$0xff]
        %v538 = vld [vmem:[#allocation2 + $0x60] sm:$0xff]
        %v539 = vld [vmem:[#allocation2 + $0x68] sm:$0xff]
        %v540 = vld [vmem:[#allocation2 + $0x70] sm:$0xff]
        %v541 = vld [vmem:[#allocation2 + $0x78] sm:$0xff]
        %v542 = vld [vmem:[%s418] sm:$0xff]
        %v543 = vld [vmem:[%s418 + $0x8] sm:$0xff]
        %v544 = vld [vmem:[%s418 + $0x10] sm:$0xff]
        %v545 = vld [vmem:[%s418 + $0x18] sm:$0xff]
        %v546 = vld [vmem:[%s418 + $0x20] sm:$0xff]
        %v547 = vld [vmem:[%s418 + $0x28] sm:$0xff]
        %v548 = vld [vmem:[%s418 + $0x30] sm:$0xff]
        %v549 = vld [vmem:[%s418 + $0x38] sm:$0xff]
        %v550 = vld [vmem:[%s418 + $0x40] sm:$0xff]
        %v551 = vld [vmem:[%s418 + $0x48] sm:$0xff]
        %v552 = vld [vmem:[%s418 + $0x50] sm:$0xff]
        %v553 = vld [vmem:[%s418 + $0x58] sm:$0xff]
        %v554 = vld [vmem:[%s418 + $0x60] sm:$0xff]
        %v555 = vld [vmem:[%s418 + $0x68] sm:$0xff]
        %v556 = vld [vmem:[%s418 + $0x70] sm:$0xff]
        %v557 = vld [vmem:[%s418 + $0x78] sm:$0xff]
        %v558 = vld [vmem:[%s477] sm:$0xf]
        %v559 = vld [vmem:[%s477 + $0x4] sm:$0xf]
        %v560 = vld [vmem:[%s477 + $0x8] sm:$0xf]
        %v561 = vld [vmem:[%s477 + $0xc] sm:$0xf]
        %v562 = vld [vmem:[%s477 + $0x10] sm:$0xf]
        %v563 = vld [vmem:[%s477 + $0x14] sm:$0xf]
        %v564 = vld [vmem:[%s477 + $0x18] sm:$0xf]
        %v565 = vld [vmem:[%s477 + $0x1c] sm:$0xf]
        %v566 = vld [vmem:[%s477 + $0x20] sm:$0xf]
        %v567 = vld [vmem:[%s477 + $0x24] sm:$0xf]
        %v568 = vld [vmem:[%s477 + $0x28] sm:$0xf]
        %v569 = vld [vmem:[%s477 + $0x2c] sm:$0xf]
        %v570 = vld [vmem:[%s477 + $0x30] sm:$0xf]
        %v571 = vld [vmem:[%s477 + $0x34] sm:$0xf]
        %v572 = vld [vmem:[%s477 + $0x38] sm:$0xf]
        %v573 = vld [vmem:[%s477 + $0x3c] sm:$0xf]
        %v574 = vld [vmem:[%s477 + $0x40] sm:$0xf]
        %v575 = vld [vmem:[%s477 + $0x44] sm:$0xf]
        %v576 = vld [vmem:[%s477 + $0x48] sm:$0xf]
        %v577 = vld [vmem:[%s477 + $0x4c] sm:$0xf]
        %v578 = vld [vmem:[%s477 + $0x50] sm:$0xf]
        %v579 = vld [vmem:[%s477 + $0x54] sm:$0xf]
        %v580 = vld [vmem:[%s477 + $0x58] sm:$0xf]
        %v581 = vld [vmem:[%s477 + $0x5c] sm:$0xf]
        %v582 = vld [vmem:[%s477 + $0x60] sm:$0xf]
        %v583 = vld [vmem:[%s477 + $0x64] sm:$0xf]
        %v584 = vld [vmem:[%s477 + $0x68] sm:$0xf]
        %v585 = vld [vmem:[%s477 + $0x6c] sm:$0xf]
        %v586 = vld [vmem:[%s477 + $0x70] sm:$0xf]
        %v587 = vld [vmem:[%s477 + $0x74] sm:$0xf]
        %v588 = vld [vmem:[%s477 + $0x78] sm:$0xf]
        %v589 = vld [vmem:[%s477 + $0x7c] sm:$0xf]
        %v606 = vunpack.c.l.b16 %v542
        %v607 = vunpack.c.h.b16 %v542
        %v608 = vunpack.c.l.b16 %v543
        %v609 = vunpack.c.h.b16 %v543
        %v610 = vunpack.c.l.b16 %v544
        %v611 = vunpack.c.h.b16 %v544
        %v612 = vunpack.c.l.b16 %v545
        %v613 = vunpack.c.h.b16 %v545
        %v614 = vunpack.c.l.b16 %v546
        %v615 = vunpack.c.h.b16 %v546
        %v616 = vunpack.c.l.b16 %v547
        %v617 = vunpack.c.h.b16 %v547
        %v618 = vunpack.c.l.b16 %v548
        %v619 = vunpack.c.h.b16 %v548
        %v620 = vunpack.c.l.b16 %v549
        %v621 = vunpack.c.h.b16 %v549
        %v622 = vunpack.c.l.b16 %v550
        %v623 = vunpack.c.h.b16 %v550
        %v624 = vunpack.c.l.b16 %v551
        %v625 = vunpack.c.h.b16 %v551
        %v626 = vunpack.c.l.b16 %v552
        %v627 = vunpack.c.h.b16 %v552
        %v628 = vunpack.c.l.b16 %v553
        %v629 = vunpack.c.h.b16 %v553
        %v630 = vunpack.c.l.b16 %v554
        %v631 = vunpack.c.h.b16 %v554
        %v632 = vunpack.c.l.b16 %v555
        %v633 = vunpack.c.h.b16 %v555
        %v634 = vunpack.c.l.b16 %v556
        %v635 = vunpack.c.h.b16 %v556
        %v636 = vunpack.c.l.b16 %v557
        %v637 = vunpack.c.h.b16 %v557
        %v638 = vpack.c.b16 %v608, %v606
        %v639 = vpack.c.b16 %v609, %v607
        %v640 = vpack.c.b16 %v612, %v610
        %v641 = vpack.c.b16 %v613, %v611
        %v642 = vpack.c.b16 %v616, %v614
        %v643 = vpack.c.b16 %v617, %v615
        %v644 = vpack.c.b16 %v620, %v618
        %v645 = vpack.c.b16 %v621, %v619
        %v646 = vpack.c.b16 %v624, %v622
        %v647 = vpack.c.b16 %v625, %v623
        %v648 = vpack.c.b16 %v628, %v626
        %v649 = vpack.c.b16 %v629, %v627
        %v650 = vpack.c.b16 %v632, %v630
        %v651 = vpack.c.b16 %v633, %v631
        %v652 = vpack.c.b16 %v636, %v634
        %v653 = vpack.c.b16 %v637, %v635
        %v702 = vunpack.c.l.b16 %v558
        %v703 = vunpack.c.l.b16 %v559
        %v704 = vunpack.c.l.b16 %v560
        %v705 = vunpack.c.l.b16 %v561
        %v706 = vunpack.c.l.b16 %v562
        %v707 = vunpack.c.l.b16 %v563
        %v708 = vunpack.c.l.b16 %v564
        %v709 = vunpack.c.l.b16 %v565
        %v710 = vunpack.c.l.b16 %v566
        %v711 = vunpack.c.l.b16 %v567
        %v712 = vunpack.c.l.b16 %v568
        %v713 = vunpack.c.l.b16 %v569
        %v714 = vunpack.c.l.b16 %v570
        %v715 = vunpack.c.l.b16 %v571
        %v716 = vunpack.c.l.b16 %v572
        %v717 = vunpack.c.l.b16 %v573
        %v718 = vunpack.c.l.b16 %v574
        %v719 = vunpack.c.l.b16 %v575
        %v720 = vunpack.c.l.b16 %v576
        %v721 = vunpack.c.l.b16 %v577
        %v722 = vunpack.c.l.b16 %v578
        %v723 = vunpack.c.l.b16 %v579
        %v724 = vunpack.c.l.b16 %v580
        %v725 = vunpack.c.l.b16 %v581
        %v726 = vunpack.c.l.b16 %v582
        %v727 = vunpack.c.l.b16 %v583
        %v728 = vunpack.c.l.b16 %v584
        %v729 = vunpack.c.l.b16 %v585
        %v730 = vunpack.c.l.b16 %v586
        %v731 = vunpack.c.l.b16 %v587
        %v732 = vunpack.c.l.b16 %v588
        %v733 = vunpack.c.l.b16 %v589
        %v734 = vpack.c.b16 %v703, %v702
        %v735 = vpack.c.b16 %v705, %v704
        %v736 = vpack.c.b16 %v707, %v706
        %v737 = vpack.c.b16 %v709, %v708
        %v738 = vpack.c.b16 %v711, %v710
        %v739 = vpack.c.b16 %v713, %v712
        %v740 = vpack.c.b16 %v715, %v714
        %v741 = vpack.c.b16 %v717, %v716
        %v742 = vpack.c.b16 %v719, %v718
        %v743 = vpack.c.b16 %v721, %v720
        %v744 = vpack.c.b16 %v723, %v722
        %v745 = vpack.c.b16 %v725, %v724
        %v746 = vpack.c.b16 %v727, %v726
        %v747 = vpack.c.b16 %v729, %v728
        %v748 = vpack.c.b16 %v731, %v730
        %v749 = vpack.c.b16 %v733, %v732
        %766 = vmatprep.subr.bf16.mxu0 0
        %767 = vmatpush1.bf16.msra.mxu0 %v734
        %768 = vmatprep.subr.bf16.mxu0 0
        %769 = vmatpush1.bf16.msra.mxu0 %v735
        %770 = vmatprep.subr.bf16.mxu0 0
        %771 = vmatpush1.bf16.msra.mxu0 %v736
        %772 = vmatprep.subr.bf16.mxu0 0
        %773 = vmatpush1.bf16.msra.mxu0 %v737
        %774 = vmatprep.subr.bf16.mxu0 0
        %775 = vmatpush1.bf16.msra.mxu0 %v738
        %776 = vmatprep.subr.bf16.mxu0 0
        %777 = vmatpush1.bf16.msra.mxu0 %v739
        %778 = vmatprep.subr.bf16.mxu0 0
        %779 = vmatpush1.bf16.msra.mxu0 %v740
        %780 = vmatprep.subr.bf16.mxu0 0
        %781 = vmatpush1.bf16.msra.mxu0 %v741
        %782 = vmatprep.subr.bf16.mxu0 0
        %783 = vmatpush1.bf16.msra.mxu0 %v742
        %784 = vmatprep.subr.bf16.mxu0 0
        %785 = vmatpush1.bf16.msra.mxu0 %v743
        %786 = vmatprep.subr.bf16.mxu0 0
        %787 = vmatpush1.bf16.msra.mxu0 %v744
        %788 = vmatprep.subr.bf16.mxu0 0
        %789 = vmatpush1.bf16.msra.mxu0 %v745
        %790 = vmatprep.subr.bf16.mxu0 0
        %791 = vmatpush1.bf16.msra.mxu0 %v746
        %792 = vmatprep.subr.bf16.mxu0 0
        %793 = vmatpush1.bf16.msra.mxu0 %v747
        %794 = vmatprep.subr.bf16.mxu0 0
        %795 = vmatpush1.bf16.msra.mxu0 %v748
        %796 = vmatprep.subr.bf16.mxu0 0
        %797 = vmatpush1.bf16.msra.mxu0 %v749
        %798 = vmatprep.mubr.bf16.mxu0 %v639
        %799 = vmatmul.mubr.bf16.gmra.mrb[0].mxu0 %v638
        %v800 = vpop.f32.mrb[0].mxu0
        %v801 = vadd.f32 0.0, %v800
        %v802 = vpop.f32.mrb[0].mxu0
        %v803 = vpop.f32.mrb[0].mxu0
        %v804 = vadd.f32 0.0, %v803
        %v805 = vpop.f32.mrb[0].mxu0
        %806 = vmatprep.mubr.bf16.mxu0 %v641
        %807 = vmatmul.mubr.bf16.gmra.mrb[0].mxu0 %v640
        %v808 = vpop.f32.mrb[0].mxu0
        %v809 = vadd.f32 0.0, %v808
        %v810 = vpop.f32.mrb[0].mxu0
        %v811 = vpop.f32.mrb[0].mxu0
        %v812 = vadd.f32 0.0, %v811
        %v813 = vpop.f32.mrb[0].mxu0
        %814 = vmatprep.mubr.bf16.mxu0 %v643
        %815 = vmatmul.mubr.bf16.gmra.mrb[0].mxu0 %v642
        %v816 = vpop.f32.mrb[0].mxu0
        %v817 = vadd.f32 0.0, %v816
        %v818 = vpop.f32.mrb[0].mxu0
        %v819 = vpop.f32.mrb[0].mxu0
        %v820 = vadd.f32 0.0, %v819
        %v821 = vpop.f32.mrb[0].mxu0
        %822 = vmatprep.mubr.bf16.mxu0 %v645
        %823 = vmatmul.mubr.bf16.gmra.mrb[0].mxu0 %v644
        %v824 = vpop.f32.mrb[0].mxu0
        %v825 = vadd.f32 0.0, %v824
        %v826 = vpop.f32.mrb[0].mxu0
        %v827 = vpop.f32.mrb[0].mxu0
        %v828 = vadd.f32 0.0, %v827
        %v829 = vpop.f32.mrb[0].mxu0
        %830 = vmatprep.mubr.bf16.mxu0 %v647
        %831 = vmatmul.mubr.bf16.gmra.mrb[0].mxu0 %v646
        %v832 = vpop.f32.mrb[0].mxu0
        %v833 = vadd.f32 0.0, %v832
        %v834 = vpop.f32.mrb[0].mxu0
        %v835 = vpop.f32.mrb[0].mxu0
        %v836 = vadd.f32 0.0, %v835
        %v837 = vpop.f32.mrb[0].mxu0
        %838 = vmatprep.mubr.bf16.mxu0 %v649
        %839 = vmatmul.mubr.bf16.gmra.mrb[0].mxu0 %v648
        %v840 = vpop.f32.mrb[0].mxu0
        %v841 = vadd.f32 0.0, %v840
        %v842 = vpop.f32.mrb[0].mxu0
        %v843 = vpop.f32.mrb[0].mxu0
        %v844 = vadd.f32 0.0, %v843
        %v845 = vpop.f32.mrb[0].mxu0
        %846 = vmatprep.mubr.bf16.mxu0 %v651
        %847 = vmatmul.mubr.bf16.gmra.mrb[0].mxu0 %v650
        %v848 = vpop.f32.mrb[0].mxu0
        %v849 = vadd.f32 0.0, %v848
        %v850 = vpop.f32.mrb[0].mxu0
        %v851 = vpop.f32.mrb[0].mxu0
        %v852 = vadd.f32 0.0, %v851
        %v853 = vpop.f32.mrb[0].mxu0
        %854 = vmatprep.mubr.bf16.mxu0 %v653
        %855 = vmatmul.mubr.bf16.gmra.mrb[0].mxu0 %v652
        %v856 = vpop.f32.mrb[0].mxu0
        %v857 = vadd.f32 0.0, %v856
        %v858 = vpop.f32.mrb[0].mxu0
        %v859 = vpop.f32.mrb[0].mxu0
        %v860 = vadd.f32 0.0, %v859
        %v861 = vpop.f32.mrb[0].mxu0
        %862 = vdwg.mxu0
        %v863 = vadd.f32 %v526, %v801
        %v864 = vadd.f32 %v527, %v804
        %v865 = vadd.f32 %v528, %v809
        %v866 = vadd.f32 %v529, %v812
        %v867 = vadd.f32 %v530, %v817
        %v868 = vadd.f32 %v531, %v820
        %v869 = vadd.f32 %v532, %v825
        %v870 = vadd.f32 %v533, %v828
        %v871 = vadd.f32 %v534, %v833
        %v872 = vadd.f32 %v535, %v836
        %v873 = vadd.f32 %v536, %v841
        %v874 = vadd.f32 %v537, %v844
        %v875 = vadd.f32 %v538, %v849
        %v876 = vadd.f32 %v539, %v852
        %v877 = vadd.f32 %v540, %v857
        %v878 = vadd.f32 %v541, %v860
        %879 = vst [vmem:[#allocation2] sm:$0xff] %v863
        %880 = vst [vmem:[#allocation2 + $0x8] sm:$0xff] %v864
        %881 = vst [vmem:[#allocation2 + $0x10] sm:$0xff] %v865
        %882 = vst [vmem:[#allocation2 + $0x18] sm:$0xff] %v866
        %883 = vst [vmem:[#allocation2 + $0x20] sm:$0xff] %v867
        %884 = vst [vmem:[#allocation2 + $0x28] sm:$0xff] %v868
        %885 = vst [vmem:[#allocation2 + $0x30] sm:$0xff] %v869
        %886 = vst [vmem:[#allocation2 + $0x38] sm:$0xff] %v870
        %887 = vst [vmem:[#allocation2 + $0x40] sm:$0xff] %v871
        %888 = vst [vmem:[#allocation2 + $0x48] sm:$0xff] %v872
        %889 = vst [vmem:[#allocation2 + $0x50] sm:$0xff] %v873
        %890 = vst [vmem:[#allocation2 + $0x58] sm:$0xff] %v874
        %891 = vst [vmem:[#allocation2 + $0x60] sm:$0xff] %v875
        %892 = vst [vmem:[#allocation2 + $0x68] sm:$0xff] %v876
        %893 = vst [vmem:[#allocation2 + $0x70] sm:$0xff] %v877
        %894 = vst [vmem:[#allocation2 + $0x78] sm:$0xff] %v878
        %p895 = scmp.eq.s32.totalorder %s25, 3
        // Predicated region
        $region91: #{_sage_forward_impl.4} parent=81 // pred_check
          %p896 = pneg %p895
        $region92: #{_sage_forward_impl.4} parent=81 // pred_check_branch
          %898 = sbr.rel (%p896) target = $region94
        $region93: #{_sage_forward_impl.4} parent=81 // pred_region
          %v899 = vld [vmem:[#allocation2] sm:$0xff]
          %v900 = vld [vmem:[#allocation2 + $0x8] sm:$0xff]
          %v901 = vld [vmem:[#allocation2 + $0x10] sm:$0xff]
          %v902 = vld [vmem:[#allocation2 + $0x18] sm:$0xff]
          %v903 = vld [vmem:[#allocation2 + $0x20] sm:$0xff]
          %v904 = vld [vmem:[#allocation2 + $0x28] sm:$0xff]
          %v905 = vld [vmem:[#allocation2 + $0x30] sm:$0xff]
          %v906 = vld [vmem:[#allocation2 + $0x38] sm:$0xff]
          %v907 = vld [vmem:[#allocation2 + $0x40] sm:$0xff]
          %v908 = vld [vmem:[#allocation2 + $0x48] sm:$0xff]
          %v909 = vld [vmem:[#allocation2 + $0x50] sm:$0xff]
          %v910 = vld [vmem:[#allocation2 + $0x58] sm:$0xff]
          %v911 = vld [vmem:[#allocation2 + $0x60] sm:$0xff]
          %v912 = vld [vmem:[#allocation2 + $0x68] sm:$0xff]
          %v913 = vld [vmem:[#allocation2 + $0x70] sm:$0xff]
          %v914 = vld [vmem:[#allocation2 + $0x78] sm:$0xff]
          %v915 = vld [vmem:[%s483] sm:$0xff]
          %v916 = vld [vmem:[%s483 + $0x8] sm:$0xff]
          %v917 = vld [vmem:[%s483 + $0x10] sm:$0xff]
          %v918 = vld [vmem:[%s483 + $0x18] sm:$0xff]
          %v919 = vld [vmem:[%s483 + $0x20] sm:$0xff]
          %v920 = vld [vmem:[%s483 + $0x28] sm:$0xff]
          %v921 = vld [vmem:[%s483 + $0x30] sm:$0xff]
          %v922 = vld [vmem:[%s483 + $0x38] sm:$0xff]
          %v923 = vld [vmem:[%s483 + $0x40] sm:$0xff]
          %v924 = vld [vmem:[%s483 + $0x48] sm:$0xff]
          %v925 = vld [vmem:[%s483 + $0x50] sm:$0xff]
          %v926 = vld [vmem:[%s483 + $0x58] sm:$0xff]
          %v927 = vld [vmem:[%s483 + $0x60] sm:$0xff]
          %v928 = vld [vmem:[%s483 + $0x68] sm:$0xff]
          %v929 = vld [vmem:[%s483 + $0x70] sm:$0xff]
          %v930 = vld [vmem:[%s483 + $0x78] sm:$0xff]
          %932 = vset.pattern.permute.xlu0 0
          %933 = vperm.xlu0 %932, %v915
          %v934 = vpop.permute.xlu0 %933
          %937 = vset.pattern.permute.xlu0 0
          %938 = vperm.xlu0 %937, %v916
          %v939 = vpop.permute.xlu0 %938
          %942 = vset.pattern.permute.xlu0 0
          %943 = vperm.xlu0 %942, %v917
          %v944 = vpop.permute.xlu0 %943
          %947 = vset.pattern.permute.xlu0 0
          %948 = vperm.xlu0 %947, %v918
          %v949 = vpop.permute.xlu0 %948
          %952 = vset.pattern.permute.xlu0 0
          %953 = vperm.xlu0 %952, %v919
          %v954 = vpop.permute.xlu0 %953
          %957 = vset.pattern.permute.xlu0 0
          %958 = vperm.xlu0 %957, %v920
          %v959 = vpop.permute.xlu0 %958
          %962 = vset.pattern.permute.xlu0 0
          %963 = vperm.xlu0 %962, %v921
          %v964 = vpop.permute.xlu0 %963
          %967 = vset.pattern.permute.xlu0 0
          %968 = vperm.xlu0 %967, %v922
          %v969 = vpop.permute.xlu0 %968
          %972 = vset.pattern.permute.xlu0 0
          %973 = vperm.xlu0 %972, %v923
          %v974 = vpop.permute.xlu0 %973
          %977 = vset.pattern.permute.xlu0 0
          %978 = vperm.xlu0 %977, %v924
          %v979 = vpop.permute.xlu0 %978
          %982 = vset.pattern.permute.xlu0 0
          %983 = vperm.xlu0 %982, %v925
          %v984 = vpop.permute.xlu0 %983
          %987 = vset.pattern.permute.xlu0 0
          %988 = vperm.xlu0 %987, %v926
          %v989 = vpop.permute.xlu0 %988
          %992 = vset.pattern.permute.xlu0 0
          %993 = vperm.xlu0 %992, %v927
          %v994 = vpop.permute.xlu0 %993
          %997 = vset.pattern.permute.xlu0 0
          %998 = vperm.xlu0 %997, %v928
          %v999 = vpop.permute.xlu0 %998
          %1002 = vset.pattern.permute.xlu0 0
          %1003 = vperm.xlu0 %1002, %v929
          %v1004 = vpop.permute.xlu0 %1003
          %1007 = vset.pattern.permute.xlu0 0
          %1008 = vperm.xlu0 %1007, %v930
          %v1009 = vpop.permute.xlu0 %1008
          %v1011 = vmul.f32 %v899, %v934
          %v1012 = vmul.f32 %v900, %v939
          %v1013 = vmul.f32 %v901, %v944
          %v1014 = vmul.f32 %v902, %v949
          %v1015 = vmul.f32 %v903, %v954
          %v1016 = vmul.f32 %v904, %v959
          %v1017 = vmul.f32 %v905, %v964
          %v1018 = vmul.f32 %v906, %v969
          %v1019 = vmul.f32 %v907, %v974
          %v1020 = vmul.f32 %v908, %v979
          %v1021 = vmul.f32 %v909, %v984
          %v1022 = vmul.f32 %v910, %v989
          %v1023 = vmul.f32 %v911, %v994
          %v1024 = vmul.f32 %v912, %v999
          %v1025 = vmul.f32 %v913, %v1004
          %v1026 = vmul.f32 %v914, %v1009
          %v1027 = vpack.c.bf16 %v1012, %v1011
          %v1028 = vpack.c.bf16 %v1014, %v1013
          %v1029 = vpack.c.bf16 %v1016, %v1015
          %v1030 = vpack.c.bf16 %v1018, %v1017
          %v1031 = vpack.c.bf16 %v1020, %v1019
          %v1032 = vpack.c.bf16 %v1022, %v1021
          %v1033 = vpack.c.bf16 %v1024, %v1023
          %v1034 = vpack.c.bf16 %v1026, %v1025
          %v1035 = vld [vmem:[%s3] sm:$0xff]
          %v1036 = vld [vmem:[%s3 + $0x8] sm:$0xff]
          %v1037 = vld [vmem:[%s3 + $0x10] sm:$0xff]
          %v1038 = vld [vmem:[%s3 + $0x18] sm:$0xff]
          %v1039 = vld [vmem:[%s3 + $0x20] sm:$0xff]
          %v1040 = vld [vmem:[%s3 + $0x28] sm:$0xff]
          %v1041 = vld [vmem:[%s3 + $0x30] sm:$0xff]
          %v1042 = vld [vmem:[%s3 + $0x38] sm:$0xff]
          %v1043 = vld [vmem:[%s3 + $0x40] sm:$0xff]
          %v1044 = vld [vmem:[%s3 + $0x48] sm:$0xff]
          %v1045 = vld [vmem:[%s3 + $0x50] sm:$0xff]
          %v1046 = vld [vmem:[%s3 + $0x58] sm:$0xff]
          %v1047 = vld [vmem:[%s3 + $0x60] sm:$0xff]
          %v1048 = vld [vmem:[%s3 + $0x68] sm:$0xff]
          %v1049 = vld [vmem:[%s3 + $0x70] sm:$0xff]
          %v1050 = vld [vmem:[%s3 + $0x78] sm:$0xff]
          %v1051 = vld [vmem:[%s4] sm:$0x3]
          %v1053 = vlaneseq
          %v1054 = vshrl.u32 %v1053, 7
          %v1055 = vsub.s32 0, %v1054
          %v1056 = vrot.slane %v1051, %v1055
          %v1057 = vlaneseq
          %v1058 = vshrl.u32 %v1057, 7
          %v1059 = vsub.s32 1, %v1058
          %v1060 = vrot.slane %v1051, %v1059
          %v1079 = vunpack.c.l.b16 %v1035
          %v1080 = vunpack.c.h.b16 %v1035
          %v1081 = vunpack.c.l.b16 %v1036
          %v1082 = vunpack.c.h.b16 %v1036
          %v1083 = vunpack.c.l.b16 %v1037
          %v1084 = vunpack.c.h.b16 %v1037
          %v1085 = vunpack.c.l.b16 %v1038
          %v1086 = vunpack.c.h.b16 %v1038
          %v1087 = vunpack.c.l.b16 %v1039
          %v1088 = vunpack.c.h.b16 %v1039
          %v1089 = vunpack.c.l.b16 %v1040
          %v1090 = vunpack.c.h.b16 %v1040
          %v1091 = vunpack.c.l.b16 %v1041
          %v1092 = vunpack.c.h.b16 %v1041
          %v1093 = vunpack.c.l.b16 %v1042
          %v1094 = vunpack.c.h.b16 %v1042
          %v1095 = vunpack.c.l.b16 %v1043
          %v1096 = vunpack.c.h.b16 %v1043
          %v1097 = vunpack.c.l.b16 %v1044
          %v1098 = vunpack.c.h.b16 %v1044
          %v1099 = vunpack.c.l.b16 %v1045
          %v1100 = vunpack.c.h.b16 %v1045
          %v1101 = vunpack.c.l.b16 %v1046
          %v1102 = vunpack.c.h.b16 %v1046
          %v1103 = vunpack.c.l.b16 %v1047
          %v1104 = vunpack.c.h.b16 %v1047
          %v1105 = vunpack.c.l.b16 %v1048
          %v1106 = vunpack.c.h.b16 %v1048
          %v1107 = vunpack.c.l.b16 %v1049
          %v1108 = vunpack.c.h.b16 %v1049
          %v1109 = vunpack.c.l.b16 %v1050
          %v1110 = vunpack.c.h.b16 %v1050
          %v1111 = vpack.c.b16 %v1081, %v1079
          %v1112 = vpack.c.b16 %v1082, %v1080
          %v1113 = vpack.c.b16 %v1085, %v1083
          %v1114 = vpack.c.b16 %v1086, %v1084
          %v1115 = vpack.c.b16 %v1089, %v1087
          %v1116 = vpack.c.b16 %v1090, %v1088
          %v1117 = vpack.c.b16 %v1093, %v1091
          %v1118 = vpack.c.b16 %v1094, %v1092
          %v1119 = vpack.c.b16 %v1097, %v1095
          %v1120 = vpack.c.b16 %v1098, %v1096
          %v1121 = vpack.c.b16 %v1101, %v1099
          %v1122 = vpack.c.b16 %v1102, %v1100
          %v1123 = vpack.c.b16 %v1105, %v1103
          %v1124 = vpack.c.b16 %v1106, %v1104
          %v1125 = vpack.c.b16 %v1109, %v1107
          %v1126 = vpack.c.b16 %v1110, %v1108
          %1143 = vmatprep.subr.bf16.mxu0 %v1112
          %1144 = vmatpush1.bf16.msra.mxu0 %v1111
          %1145 = vmatprep.subr.bf16.mxu0 %v1114
          %1146 = vmatpush1.bf16.msra.mxu0 %v1113
          %1147 = vmatprep.subr.bf16.mxu0 %v1116
          %1148 = vmatpush1.bf16.msra.mxu0 %v1115
          %1149 = vmatprep.subr.bf16.mxu0 %v1118
          %1150 = vmatpush1.bf16.msra.mxu0 %v1117
          %1151 = vmatprep.subr.bf16.mxu0 %v1120
          %1152 = vmatpush1.bf16.msra.mxu0 %v1119
          %1153 = vmatprep.subr.bf16.mxu0 %v1122
          %1154 = vmatpush1.bf16.msra.mxu0 %v1121
          %1155 = vmatprep.subr.bf16.mxu0 %v1124
          %1156 = vmatpush1.bf16.msra.mxu0 %v1123
          %1157 = vmatprep.subr.bf16.mxu0 %v1126
          %1158 = vmatpush1.bf16.msra.mxu0 %v1125
          %1159 = vmatprep.subr.bf16.mxu0 0
          %1160 = vmatpush1.bf16.msra.mxu0 0
          %1161 = vmatprep.subr.bf16.mxu0 0
          %1162 = vmatpush1.bf16.msra.mxu0 0
          %1163 = vmatprep.subr.bf16.mxu0 0
          %1164 = vmatpush1.bf16.msra.mxu0 0
          %1165 = vmatprep.subr.bf16.mxu0 0
          %1166 = vmatpush1.bf16.msra.mxu0 0
          %1167 = vmatprep.subr.bf16.mxu0 0
          %1168 = vmatpush1.bf16.msra.mxu0 0
          %1169 = vmatprep.subr.bf16.mxu0 0
          %1170 = vmatpush1.bf16.msra.mxu0 0
          %1171 = vmatprep.subr.bf16.mxu0 0
          %1172 = vmatpush1.bf16.msra.mxu0 0
          %1173 = vmatprep.subr.bf16.mxu0 0
          %1174 = vmatpush1.bf16.msra.mxu0 0
          %1175 = vmatprep.mubr.bf16.mxu0 0
          %1176 = vmatmul.mubr.bf16.gmra.mrb[0].mxu0 %v1027
          %v1177 = vpop.f32.mrb[0].mxu0
          %v1178 = vadd.f32 %v1056, %v1177
          %v1179 = vpop.f32.mrb[0].mxu0
          %v1180 = vadd.f32 %v1060, %v1179
          %v1181 = vpop.f32.mrb[0].mxu0
          %v1182 = vadd.f32 %v1056, %v1181
          %v1183 = vpop.f32.mrb[0].mxu0
          %v1184 = vadd.f32 %v1060, %v1183
          %1185 = vmatprep.mubr.bf16.mxu0 0
          %1186 = vmatmul.mubr.bf16.gmra.mrb[0].mxu0 %v1028
          %v1187 = vpop.f32.mrb[0].mxu0
          %v1188 = vadd.f32 %v1056, %v1187
          %v1189 = vpop.f32.mrb[0].mxu0
          %v1190 = vadd.f32 %v1060, %v1189
          %v1191 = vpop.f32.mrb[0].mxu0
          %v1192 = vadd.f32 %v1056, %v1191
          %v1193 = vpop.f32.mrb[0].mxu0
          %v1194 = vadd.f32 %v1060, %v1193
          %1195 = vmatprep.mubr.bf16.mxu0 0
          %1196 = vmatmul.mubr.bf16.gmra.mrb[0].mxu0 %v1029
          %v1197 = vpop.f32.mrb[0].mxu0
          %v1198 = vadd.f32 %v1056, %v1197
          %v1199 = vpop.f32.mrb[0].mxu0
          %v1200 = vadd.f32 %v1060, %v1199
          %v1201 = vpop.f32.mrb[0].mxu0
          %v1202 = vadd.f32 %v1056, %v1201
          %v1203 = vpop.f32.mrb[0].mxu0
          %v1204 = vadd.f32 %v1060, %v1203
          %1205 = vmatprep.mubr.bf16.mxu0 0
          %1206 = vmatmul.mubr.bf16.gmra.mrb[0].mxu0 %v1030
          %v1207 = vpop.f32.mrb[0].mxu0
          %v1208 = vadd.f32 %v1056, %v1207
          %v1209 = vpop.f32.mrb[0].mxu0
          %v1210 = vadd.f32 %v1060, %v1209
          %v1211 = vpop.f32.mrb[0].mxu0
          %v1212 = vadd.f32 %v1056, %v1211
          %v1213 = vpop.f32.mrb[0].mxu0
          %v1214 = vadd.f32 %v1060, %v1213
          %1215 = vmatprep.mubr.bf16.mxu0 0
          %1216 = vmatmul.mubr.bf16.gmra.mrb[0].mxu0 %v1031
          %v1217 = vpop.f32.mrb[0].mxu0
          %v1218 = vadd.f32 %v1056, %v1217
          %v1219 = vpop.f32.mrb[0].mxu0
          %v1220 = vadd.f32 %v1060, %v1219
          %v1221 = vpop.f32.mrb[0].mxu0
          %v1222 = vadd.f32 %v1056, %v1221
          %v1223 = vpop.f32.mrb[0].mxu0
          %v1224 = vadd.f32 %v1060, %v1223
          %1225 = vmatprep.mubr.bf16.mxu0 0
          %1226 = vmatmul.mubr.bf16.gmra.mrb[0].mxu0 %v1032
          %v1227 = vpop.f32.mrb[0].mxu0
          %v1228 = vadd.f32 %v1056, %v1227
          %v1229 = vpop.f32.mrb[0].mxu0
          %v1230 = vadd.f32 %v1060, %v1229
          %v1231 = vpop.f32.mrb[0].mxu0
          %v1232 = vadd.f32 %v1056, %v1231
          %v1233 = vpop.f32.mrb[0].mxu0
          %v1234 = vadd.f32 %v1060, %v1233
          %1235 = vmatprep.mubr.bf16.mxu0 0
          %1236 = vmatmul.mubr.bf16.gmra.mrb[0].mxu0 %v1033
          %v1237 = vpop.f32.mrb[0].mxu0
          %v1238 = vadd.f32 %v1056, %v1237
          %v1239 = vpop.f32.mrb[0].mxu0
          %v1240 = vadd.f32 %v1060, %v1239
          %v1241 = vpop.f32.mrb[0].mxu0
          %v1242 = vadd.f32 %v1056, %v1241
          %v1243 = vpop.f32.mrb[0].mxu0
          %v1244 = vadd.f32 %v1060, %v1243
          %1245 = vmatprep.mubr.bf16.mxu0 0
          %1246 = vmatmul.mubr.bf16.gmra.mrb[0].mxu0 %v1034
          %v1247 = vpop.f32.mrb[0].mxu0
          %v1248 = vadd.f32 %v1056, %v1247
          %v1249 = vpop.f32.mrb[0].mxu0
          %v1250 = vadd.f32 %v1060, %v1249
          %v1251 = vpop.f32.mrb[0].mxu0
          %v1252 = vadd.f32 %v1056, %v1251
          %v1253 = vpop.f32.mrb[0].mxu0
          %v1254 = vadd.f32 %v1060, %v1253
          %1255 = vdwg.mxu0
          %v1256 = vld [vmem:[%s489] sm:$0xf]
          %v1257 = vld [vmem:[%s489 + $0x4] sm:$0xf]
          %v1258 = vld [vmem:[%s489 + $0x8] sm:$0xf]
          %v1259 = vld [vmem:[%s489 + $0xc] sm:$0xf]
          %v1260 = vld [vmem:[%s489 + $0x10] sm:$0xf]
          %v1261 = vld [vmem:[%s489 + $0x14] sm:$0xf]
          %v1262 = vld [vmem:[%s489 + $0x18] sm:$0xf]
          %v1263 = vld [vmem:[%s489 + $0x1c] sm:$0xf]
          %v1264 = vld [vmem:[%s489 + $0x20] sm:$0xf]
          %v1265 = vld [vmem:[%s489 + $0x24] sm:$0xf]
          %v1266 = vld [vmem:[%s489 + $0x28] sm:$0xf]
          %v1267 = vld [vmem:[%s489 + $0x2c] sm:$0xf]
          %v1268 = vld [vmem:[%s489 + $0x30] sm:$0xf]
          %v1269 = vld [vmem:[%s489 + $0x34] sm:$0xf]
          %v1270 = vld [vmem:[%s489 + $0x38] sm:$0xf]
          %v1271 = vld [vmem:[%s489 + $0x3c] sm:$0xf]
          %v1272 = vld [vmem:[%s6] sm:$0xff]
          %v1273 = vld [vmem:[%s6 + $0x8] sm:$0xff]
          %v1274 = vld [vmem:[%s6 + $0x10] sm:$0xff]
          %v1275 = vld [vmem:[%s6 + $0x18] sm:$0xff]
          %v1276 = vld [vmem:[%s6 + $0x20] sm:$0xff]
          %v1277 = vld [vmem:[%s6 + $0x28] sm:$0xff]
          %v1278 = vld [vmem:[%s6 + $0x30] sm:$0xff]
          %v1279 = vld [vmem:[%s6 + $0x38] sm:$0xff]
          %v1280 = vld [vmem:[%s6 + $0x40] sm:$0xff]
          %v1281 = vld [vmem:[%s6 + $0x48] sm:$0xff]
          %v1282 = vld [vmem:[%s6 + $0x50] sm:$0xff]
          %v1283 = vld [vmem:[%s6 + $0x58] sm:$0xff]
          %v1284 = vld [vmem:[%s6 + $0x60] sm:$0xff]
          %v1285 = vld [vmem:[%s6 + $0x68] sm:$0xff]
          %v1286 = vld [vmem:[%s6 + $0x70] sm:$0xff]
          %v1287 = vld [vmem:[%s6 + $0x78] sm:$0xff]
          %v1304 = vunpack.c.l.b16 %v1256
          %v1305 = vunpack.c.l.b16 %v1257
          %v1306 = vunpack.c.l.b16 %v1258
          %v1307 = vunpack.c.l.b16 %v1259
          %v1308 = vunpack.c.l.b16 %v1260
          %v1309 = vunpack.c.l.b16 %v1261
          %v1310 = vunpack.c.l.b16 %v1262
          %v1311 = vunpack.c.l.b16 %v1263
          %v1312 = vunpack.c.l.b16 %v1264
          %v1313 = vunpack.c.l.b16 %v1265
          %v1314 = vunpack.c.l.b16 %v1266
          %v1315 = vunpack.c.l.b16 %v1267
          %v1316 = vunpack.c.l.b16 %v1268
          %v1317 = vunpack.c.l.b16 %v1269
          %v1318 = vunpack.c.l.b16 %v1270
          %v1319 = vunpack.c.l.b16 %v1271
          %v1320 = vpack.c.b16 %v1305, %v1304
          %v1321 = vpack.c.b16 %v1307, %v1306
          %v1322 = vpack.c.b16 %v1309, %v1308
          %v1323 = vpack.c.b16 %v1311, %v1310
          %v1324 = vpack.c.b16 %v1313, %v1312
          %v1325 = vpack.c.b16 %v1315, %v1314
          %v1326 = vpack.c.b16 %v1317, %v1316
          %v1327 = vpack.c.b16 %v1319, %v1318
          %v1352 = vunpack.c.l.b16 %v1272
          %v1353 = vunpack.c.h.b16 %v1272
          %v1354 = vunpack.c.l.b16 %v1273
          %v1355 = vunpack.c.h.b16 %v1273
          %v1356 = vunpack.c.l.b16 %v1274
          %v1357 = vunpack.c.h.b16 %v1274
          %v1358 = vunpack.c.l.b16 %v1275
          %v1359 = vunpack.c.h.b16 %v1275
          %v1360 = vunpack.c.l.b16 %v1276
          %v1361 = vunpack.c.h.b16 %v1276
          %v1362 = vunpack.c.l.b16 %v1277
          %v1363 = vunpack.c.h.b16 %v1277
          %v1364 = vunpack.c.l.b16 %v1278
          %v1365 = vunpack.c.h.b16 %v1278
          %v1366 = vunpack.c.l.b16 %v1279
          %v1367 = vunpack.c.h.b16 %v1279
          %v1368 = vunpack.c.l.b16 %v1280
          %v1369 = vunpack.c.h.b16 %v1280
          %v1370 = vunpack.c.l.b16 %v1281
          %v1371 = vunpack.c.h.b16 %v1281
          %v1372 = vunpack.c.l.b16 %v1282
          %v1373 = vunpack.c.h.b16 %v1282
          %v1374 = vunpack.c.l.b16 %v1283
          %v1375 = vunpack.c.h.b16 %v1283
          %v1376 = vunpack.c.l.b16 %v1284
          %v1377 = vunpack.c.h.b16 %v1284
          %v1378 = vunpack.c.l.b16 %v1285
          %v1379 = vunpack.c.h.b16 %v1285
          %v1380 = vunpack.c.l.b16 %v1286
          %v1381 = vunpack.c.h.b16 %v1286
          %v1382 = vunpack.c.l.b16 %v1287
          %v1383 = vunpack.c.h.b16 %v1287
          %v1384 = vpack.c.b16 %v1354, %v1352
          %v1385 = vpack.c.b16 %v1355, %v1353
          %v1386 = vpack.c.b16 %v1358, %v1356
          %v1387 = vpack.c.b16 %v1359, %v1357
          %v1388 = vpack.c.b16 %v1362, %v1360
          %v1389 = vpack.c.b16 %v1363, %v1361
          %v1390 = vpack.c.b16 %v1366, %v1364
          %v1391 = vpack.c.b16 %v1367, %v1365
          %v1392 = vpack.c.b16 %v1370, %v1368
          %v1393 = vpack.c.b16 %v1371, %v1369
          %v1394 = vpack.c.b16 %v1374, %v1372
          %v1395 = vpack.c.b16 %v1375, %v1373
          %v1396 = vpack.c.b16 %v1378, %v1376
          %v1397 = vpack.c.b16 %v1379, %v1377
          %v1398 = vpack.c.b16 %v1382, %v1380
          %v1399 = vpack.c.b16 %v1383, %v1381
          %1416 = vmatprep.subr.bf16.mxu0 %v1385
          %1417 = vmatpush1.bf16.msra.mxu0 %v1384
          %1418 = vmatprep.subr.bf16.mxu0 %v1387
          %1419 = vmatpush1.bf16.msra.mxu0 %v1386
          %1420 = vmatprep.subr.bf16.mxu0 %v1389
          %1421 = vmatpush1.bf16.msra.mxu0 %v1388
          %1422 = vmatprep.subr.bf16.mxu0 %v1391
          %1423 = vmatpush1.bf16.msra.mxu0 %v1390
          %1424 = vmatprep.subr.bf16.mxu0 %v1393
          %1425 = vmatpush1.bf16.msra.mxu0 %v1392
          %1426 = vmatprep.subr.bf16.mxu0 %v1395
          %1427 = vmatpush1.bf16.msra.mxu0 %v1394
          %1428 = vmatprep.subr.bf16.mxu0 %v1397
          %1429 = vmatpush1.bf16.msra.mxu0 %v1396
          %1430 = vmatprep.subr.bf16.mxu0 %v1399
          %1431 = vmatpush1.bf16.msra.mxu0 %v1398
          %1432 = vmatprep.subr.bf16.mxu0 0
          %1433 = vmatpush1.bf16.msra.mxu0 0
          %1434 = vmatprep.subr.bf16.mxu0 0
          %1435 = vmatpush1.bf16.msra.mxu0 0
          %1436 = vmatprep.subr.bf16.mxu0 0
          %1437 = vmatpush1.bf16.msra.mxu0 0
          %1438 = vmatprep.subr.bf16.mxu0 0
          %1439 = vmatpush1.bf16.msra.mxu0 0
          %1440 = vmatprep.subr.bf16.mxu0 0
          %1441 = vmatpush1.bf16.msra.mxu0 0
          %1442 = vmatprep.subr.bf16.mxu0 0
          %1443 = vmatpush1.bf16.msra.mxu0 0
          %1444 = vmatprep.subr.bf16.mxu0 0
          %1445 = vmatpush1.bf16.msra.mxu0 0
          %1446 = vmatprep.subr.bf16.mxu0 0
          %1447 = vmatpush1.bf16.msra.mxu0 0
          %1448 = vmatprep.mubr.bf16.mxu0 0
          %1449 = vmatmul.mubr.bf16.gmra.mrb[0].mxu0 %v1320
          %v1450 = vpop.f32.mrb[0].mxu0
          %v1451 = vadd.f32 0.0, %v1450
          %v1452 = vpop.f32.mrb[0].mxu0
          %v1453 = vadd.f32 0.0, %v1452
          %v1454 = vpop.f32.mrb[0].mxu0
          %v1455 = vadd.f32 0.0, %v1454
          %v1456 = vpop.f32.mrb[0].mxu0
          %v1457 = vadd.f32 0.0, %v1456
          %1458 = vmatprep.mubr.bf16.mxu0 0
          %1459 = vmatmul.mubr.bf16.gmra.mrb[0].mxu0 %v1321
          %v1460 = vpop.f32.mrb[0].mxu0
          %v1461 = vadd.f32 0.0, %v1460
          %v1462 = vpop.f32.mrb[0].mxu0
          %v1463 = vadd.f32 0.0, %v1462
          %v1464 = vpop.f32.mrb[0].mxu0
          %v1465 = vadd.f32 0.0, %v1464
          %v1466 = vpop.f32.mrb[0].mxu0
          %v1467 = vadd.f32 0.0, %v1466
          %1468 = vmatprep.mubr.bf16.mxu0 0
          %1469 = vmatmul.mubr.bf16.gmra.mrb[0].mxu0 %v1322
          %v1470 = vpop.f32.mrb[0].mxu0
          %v1471 = vadd.f32 0.0, %v1470
          %v1472 = vpop.f32.mrb[0].mxu0
          %v1473 = vadd.f32 0.0, %v1472
          %v1474 = vpop.f32.mrb[0].mxu0
          %v1475 = vadd.f32 0.0, %v1474
          %v1476 = vpop.f32.mrb[0].mxu0
          %v1477 = vadd.f32 0.0, %v1476
          %1478 = vmatprep.mubr.bf16.mxu0 0
          %1479 = vmatmul.mubr.bf16.gmra.mrb[0].mxu0 %v1323
          %v1480 = vpop.f32.mrb[0].mxu0
          %v1481 = vadd.f32 0.0, %v1480
          %v1482 = vpop.f32.mrb[0].mxu0
          %v1483 = vadd.f32 0.0, %v1482
          %v1484 = vpop.f32.mrb[0].mxu0
          %v1485 = vadd.f32 0.0, %v1484
          %v1486 = vpop.f32.mrb[0].mxu0
          %v1487 = vadd.f32 0.0, %v1486
          %1488 = vmatprep.mubr.bf16.mxu0 0
          %1489 = vmatmul.mubr.bf16.gmra.mrb[0].mxu0 %v1324
          %v1490 = vpop.f32.mrb[0].mxu0
          %v1491 = vadd.f32 0.0, %v1490
          %v1492 = vpop.f32.mrb[0].mxu0
          %v1493 = vadd.f32 0.0, %v1492
          %v1494 = vpop.f32.mrb[0].mxu0
          %v1495 = vadd.f32 0.0, %v1494
          %v1496 = vpop.f32.mrb[0].mxu0
          %v1497 = vadd.f32 0.0, %v1496
          %1498 = vmatprep.mubr.bf16.mxu0 0
          %1499 = vmatmul.mubr.bf16.gmra.mrb[0].mxu0 %v1325
          %v1500 = vpop.f32.mrb[0].mxu0
          %v1501 = vadd.f32 0.0, %v1500
          %v1502 = vpop.f32.mrb[0].mxu0
          %v1503 = vadd.f32 0.0, %v1502
          %v1504 = vpop.f32.mrb[0].mxu0
          %v1505 = vadd.f32 0.0, %v1504
          %v1506 = vpop.f32.mrb[0].mxu0
          %v1507 = vadd.f32 0.0, %v1506
          %1508 = vmatprep.mubr.bf16.mxu0 0
          %1509 = vmatmul.mubr.bf16.gmra.mrb[0].mxu0 %v1326
          %v1510 = vpop.f32.mrb[0].mxu0
          %v1511 = vadd.f32 0.0, %v1510
          %v1512 = vpop.f32.mrb[0].mxu0
          %v1513 = vadd.f32 0.0, %v1512
          %v1514 = vpop.f32.mrb[0].mxu0
          %v1515 = vadd.f32 0.0, %v1514
          %v1516 = vpop.f32.mrb[0].mxu0
          %v1517 = vadd.f32 0.0, %v1516
          %1518 = vmatprep.mubr.bf16.mxu0 0
          %1519 = vmatmul.mubr.bf16.gmra.mrb[0].mxu0 %v1327
          %v1520 = vpop.f32.mrb[0].mxu0
          %v1521 = vadd.f32 0.0, %v1520
          %v1522 = vpop.f32.mrb[0].mxu0
          %v1523 = vadd.f32 0.0, %v1522
          %v1524 = vpop.f32.mrb[0].mxu0
          %v1525 = vadd.f32 0.0, %v1524
          %v1526 = vpop.f32.mrb[0].mxu0
          %v1527 = vadd.f32 0.0, %v1526
          %1528 = vdwg.mxu0
          %v1529 = vadd.f32 %v1178, %v1451
          %v1530 = vadd.f32 %v1180, %v1453
          %v1531 = vadd.f32 %v1182, %v1455
          %v1532 = vadd.f32 %v1184, %v1457
          %v1533 = vadd.f32 %v1188, %v1461
          %v1534 = vadd.f32 %v1190, %v1463
          %v1535 = vadd.f32 %v1192, %v1465
          %v1536 = vadd.f32 %v1194, %v1467
          %v1537 = vadd.f32 %v1198, %v1471
          %v1538 = vadd.f32 %v1200, %v1473
          %v1539 = vadd.f32 %v1202, %v1475
          %v1540 = vadd.f32 %v1204, %v1477
          %v1541 = vadd.f32 %v1208, %v1481
          %v1542 = vadd.f32 %v1210, %v1483
          %v1543 = vadd.f32 %v1212, %v1485
          %v1544 = vadd.f32 %v1214, %v1487
          %v1545 = vadd.f32 %v1218, %v1491
          %v1546 = vadd.f32 %v1220, %v1493
          %v1547 = vadd.f32 %v1222, %v1495
          %v1548 = vadd.f32 %v1224, %v1497
          %v1549 = vadd.f32 %v1228, %v1501
          %v1550 = vadd.f32 %v1230, %v1503
          %v1551 = vadd.f32 %v1232, %v1505
          %v1552 = vadd.f32 %v1234, %v1507
          %v1553 = vadd.f32 %v1238, %v1511
          %v1554 = vadd.f32 %v1240, %v1513
          %v1555 = vadd.f32 %v1242, %v1515
          %v1556 = vadd.f32 %v1244, %v1517
          %v1557 = vadd.f32 %v1248, %v1521
          %v1558 = vadd.f32 %v1250, %v1523
          %v1559 = vadd.f32 %v1252, %v1525
          %v1560 = vadd.f32 %v1254, %v1527
          %v1561 = vmax.f32 %v1529, 0.0
          %v1562 = vmax.f32 %v1530, 0.0
          %v1563 = vmax.f32 %v1531, 0.0
          %v1564 = vmax.f32 %v1532, 0.0
          %v1565 = vmax.f32 %v1533, 0.0
          %v1566 = vmax.f32 %v1534, 0.0
          %v1567 = vmax.f32 %v1535, 0.0
          %v1568 = vmax.f32 %v1536, 0.0
          %v1569 = vmax.f32 %v1537, 0.0
          %v1570 = vmax.f32 %v1538, 0.0
          %v1571 = vmax.f32 %v1539, 0.0
          %v1572 = vmax.f32 %v1540, 0.0
          %v1573 = vmax.f32 %v1541, 0.0
          %v1574 = vmax.f32 %v1542, 0.0
          %v1575 = vmax.f32 %v1543, 0.0
          %v1576 = vmax.f32 %v1544, 0.0
          %v1577 = vmax.f32 %v1545, 0.0
          %v1578 = vmax.f32 %v1546, 0.0
          %v1579 = vmax.f32 %v1547, 0.0
          %v1580 = vmax.f32 %v1548, 0.0
          %v1581 = vmax.f32 %v1549, 0.0
          %v1582 = vmax.f32 %v1550, 0.0
          %v1583 = vmax.f32 %v1551, 0.0
          %v1584 = vmax.f32 %v1552, 0.0
          %v1585 = vmax.f32 %v1553, 0.0
          %v1586 = vmax.f32 %v1554, 0.0
          %v1587 = vmax.f32 %v1555, 0.0
          %v1588 = vmax.f32 %v1556, 0.0
          %v1589 = vmax.f32 %v1557, 0.0
          %v1590 = vmax.f32 %v1558, 0.0
          %v1591 = vmax.f32 %v1559, 0.0
          %v1592 = vmax.f32 %v1560, 0.0
          %1593 = vst [vmem:[%s496] sm:$0xff] %v1561
          %1594 = vst [vmem:[%s496 + $0x8] sm:$0xff] %v1562
          %1595 = vst [vmem:[%s496 + $0x10] sm:$0xff] %v1563
          %1596 = vst [vmem:[%s496 + $0x18] sm:$0xff] %v1564
          %1597 = vst [vmem:[%s496 + $0x20] sm:$0xff] %v1565
          %1598 = vst [vmem:[%s496 + $0x28] sm:$0xff] %v1566
          %1599 = vst [vmem:[%s496 + $0x30] sm:$0xff] %v1567
          %1600 = vst [vmem:[%s496 + $0x38] sm:$0xff] %v1568
          %1601 = vst [vmem:[%s496 + $0x40] sm:$0xff] %v1569
          %1602 = vst [vmem:[%s496 + $0x48] sm:$0xff] %v1570
          %1603 = vst [vmem:[%s496 + $0x50] sm:$0xff] %v1571
          %1604 = vst [vmem:[%s496 + $0x58] sm:$0xff] %v1572
          %1605 = vst [vmem:[%s496 + $0x60] sm:$0xff] %v1573
          %1606 = vst [vmem:[%s496 + $0x68] sm:$0xff] %v1574
          %1607 = vst [vmem:[%s496 + $0x70] sm:$0xff] %v1575
          %1608 = vst [vmem:[%s496 + $0x78] sm:$0xff] %v1576
          %1609 = vst [vmem:[%s496 + $0x80] sm:$0xff] %v1577
          %1610 = vst [vmem:[%s496 + $0x88] sm:$0xff] %v1578
          %1611 = vst [vmem:[%s496 + $0x90] sm:$0xff] %v1579
          %1612 = vst [vmem:[%s496 + $0x98] sm:$0xff] %v1580
          %1613 = vst [vmem:[%s496 + $0xa0] sm:$0xff] %v1581
          %1614 = vst [vmem:[%s496 + $0xa8] sm:$0xff] %v1582
          %1615 = vst [vmem:[%s496 + $0xb0] sm:$0xff] %v1583
          %1616 = vst [vmem:[%s496 + $0xb8] sm:$0xff] %v1584
          %1617 = vst [vmem:[%s496 + $0xc0] sm:$0xff] %v1585
          %1618 = vst [vmem:[%s496 + $0xc8] sm:$0xff] %v1586
          %1619 = vst [vmem:[%s496 + $0xd0] sm:$0xff] %v1587
          %1620 = vst [vmem:[%s496 + $0xd8] sm:$0xff] %v1588
          %1621 = vst [vmem:[%s496 + $0xe0] sm:$0xff] %v1589
          %1622 = vst [vmem:[%s496 + $0xe8] sm:$0xff] %v1590
          %1623 = vst [vmem:[%s496 + $0xf0] sm:$0xff] %v1591
          %1624 = vst [vmem:[%s496 + $0xf8] sm:$0xff] %v1592
          %v1625 = vpack.c.bf16 %v1531, %v1529
          %v1626 = vpack.c.bf16 %v1532, %v1530
          %v1627 = vpack.c.bf16 %v1535, %v1533
          %v1628 = vpack.c.bf16 %v1536, %v1534
          %v1629 = vpack.c.bf16 %v1539, %v1537
          %v1630 = vpack.c.bf16 %v1540, %v1538
          %v1631 = vpack.c.bf16 %v1543, %v1541
          %v1632 = vpack.c.bf16 %v1544, %v1542
          %v1633 = vpack.c.bf16 %v1547, %v1545
          %v1634 = vpack.c.bf16 %v1548, %v1546
          %v1635 = vpack.c.bf16 %v1551, %v1549
          %v1636 = vpack.c.bf16 %v1552, %v1550
          %v1637 = vpack.c.bf16 %v1555, %v1553
          %v1638 = vpack.c.bf16 %v1556, %v1554
          %v1639 = vpack.c.bf16 %v1559, %v1557
          %v1640 = vpack.c.bf16 %v1560, %v1558
          %v1657 = vunpack.c.l.b16 %v1625
          %v1658 = vunpack.c.l.b16 %v1626
          %v1659 = vunpack.c.h.b16 %v1625
          %v1660 = vunpack.c.h.b16 %v1626
          %v1661 = vunpack.c.l.b16 %v1627
          %v1662 = vunpack.c.l.b16 %v1628
          %v1663 = vunpack.c.h.b16 %v1627
          %v1664 = vunpack.c.h.b16 %v1628
          %v1665 = vunpack.c.l.b16 %v1629
          %v1666 = vunpack.c.l.b16 %v1630
          %v1667 = vunpack.c.h.b16 %v1629
          %v1668 = vunpack.c.h.b16 %v1630
          %v1669 = vunpack.c.l.b16 %v1631
          %v1670 = vunpack.c.l.b16 %v1632
          %v1671 = vunpack.c.h.b16 %v1631
          %v1672 = vunpack.c.h.b16 %v1632
          %v1673 = vunpack.c.l.b16 %v1633
          %v1674 = vunpack.c.l.b16 %v1634
          %v1675 = vunpack.c.h.b16 %v1633
          %v1676 = vunpack.c.h.b16 %v1634
          %v1677 = vunpack.c.l.b16 %v1635
          %v1678 = vunpack.c.l.b16 %v1636
          %v1679 = vunpack.c.h.b16 %v1635
          %v1680 = vunpack.c.h.b16 %v1636
          %v1681 = vunpack.c.l.b16 %v1637
          %v1682 = vunpack.c.l.b16 %v1638
          %v1683 = vunpack.c.h.b16 %v1637
          %v1684 = vunpack.c.h.b16 %v1638
          %v1685 = vunpack.c.l.b16 %v1639
          %v1686 = vunpack.c.l.b16 %v1640
          %v1687 = vunpack.c.h.b16 %v1639
          %v1688 = vunpack.c.h.b16 %v1640
          %v1689 = vpack.c.b16 %v1658, %v1657
          %v1690 = vpack.c.b16 %v1660, %v1659
          %v1691 = vpack.c.b16 %v1662, %v1661
          %v1692 = vpack.c.b16 %v1664, %v1663
          %v1693 = vpack.c.b16 %v1666, %v1665
          %v1694 = vpack.c.b16 %v1668, %v1667
          %v1695 = vpack.c.b16 %v1670, %v1669
          %v1696 = vpack.c.b16 %v1672, %v1671
          %v1697 = vpack.c.b16 %v1674, %v1673
          %v1698 = vpack.c.b16 %v1676, %v1675
          %v1699 = vpack.c.b16 %v1678, %v1677
          %v1700 = vpack.c.b16 %v1680, %v1679
          %v1701 = vpack.c.b16 %v1682, %v1681
          %v1702 = vpack.c.b16 %v1684, %v1683
          %v1703 = vpack.c.b16 %v1686, %v1685
          %v1704 = vpack.c.b16 %v1688, %v1687
          %1721 = vst [vmem:[%s503] sm:$0xff] %v1689
          %1722 = vst [vmem:[%s503 + $0x8] sm:$0xff] %v1690
          %1723 = vst [vmem:[%s503 + $0x10] sm:$0xff] %v1691
          %1724 = vst [vmem:[%s503 + $0x18] sm:$0xff] %v1692
          %1725 = vst [vmem:[%s503 + $0x20] sm:$0xff] %v1693
          %1726 = vst [vmem:[%s503 + $0x28] sm:$0xff] %v1694
          %1727 = vst [vmem:[%s503 + $0x30] sm:$0xff] %v1695
          %1728 = vst [vmem:[%s503 + $0x38] sm:$0xff] %v1696
          %1729 = vst [vmem:[%s503 + $0x40] sm:$0xff] %v1697
          %1730 = vst [vmem:[%s503 + $0x48] sm:$0xff] %v1698
          %1731 = vst [vmem:[%s503 + $0x50] sm:$0xff] %v1699
          %1732 = vst [vmem:[%s503 + $0x58] sm:$0xff] %v1700
          %1733 = vst [vmem:[%s503 + $0x60] sm:$0xff] %v1701
          %1734 = vst [vmem:[%s503 + $0x68] sm:$0xff] %v1702
          %1735 = vst [vmem:[%s503 + $0x70] sm:$0xff] %v1703
          %1736 = vst [vmem:[%s503 + $0x78] sm:$0xff] %v1704
        $region94: #{_sage_forward_impl.4} parent=81 // pred_fallthru
          _
        %s1737 = smul.u32 16, %s24
        %p1738 = scmp.lt.s32.totalorder %s1737, 95
        %s1739 = scalar_select %p1738, %s1737, 95
        %s1740 = smul.addr %s1739, 2
        %s1741 = smul.addr %s1740, 8
        %s1742 = scalar_lea.vmem %s7, %s1741
        %s1743 = smul.u32 16, %s24
        %p1744 = scmp.lt.s32.totalorder %s1743, 95
        %s1745 = scalar_select %p1744, %s1743, 95
        %s1746 = smul.addr %s1745, 2
        %s1747 = smul.addr %s1746, 4
        %s1748 = scalar_lea.vmem %s8, %s1747
        // Predicated region
        $region95: #{_sage_forward_impl.4} parent=81 // pred_check
          %p1749 = pneg %p219
        $region96: #{_sage_forward_impl.4} parent=81 // pred_check_branch
          %1751 = sbr.rel (%p1749) target = $region98
        $region97: #{_sage_forward_impl.4} parent=81 // pred_region
          %s1752 = smul.u32 16, %s24
        $region98: #{_sage_forward_impl.4} parent=81 // pred_fallthru
          _
        // Predicated region
        $region99: #{_sage_forward_impl.4} parent=81 // pred_check
          %p1753 = pneg %p245
        $region100: #{_sage_forward_impl.4} parent=81 // pred_check_branch
          %1755 = sbr.rel (%p1753) target = $region102
        $region101: #{_sage_forward_impl.4} parent=81 // pred_region
          %s1756 = smul.u32 16, %s24
        $region102: #{_sage_forward_impl.4} parent=81 // pred_fallthru
          _
      $region82: #{_sage_forward_impl.4} parent=5 // pred_fallthru
        _
      %p1757 = scmp.le.s32.totalorder 2, %s15
      // Predicated region
      $region103: #{_sage_forward_impl.4} parent=5 // pred_check
        %p1758 = pneg %p1757
      $region104: #{_sage_forward_impl.4} parent=5 // pred_check_branch
        %1760 = sbr.rel (%p1758) target = $region106
      $region105: #{_sage_forward_impl.4} parent=5 // pred_region
        %s1761 = ssub.s32 %s15, 2
        // Predicated region
        $region107: #{_sage_forward_impl.4} parent=105 // pred_check
          %p1762 = pneg %p225
        $region108: #{_sage_forward_impl.4} parent=105 // pred_check_branch
          %1764 = sbr.rel (%p1762) target = $region110
        $region109: #{_sage_forward_impl.4} parent=105 // pred_region
          %s1765 = smul.u32 16, %s26
          %p1766 = scmp.lt.s32.totalorder %s1765, 95
          %s1767 = scalar_select %p1766, %s1765, 95
          %s1768 = smul.addr %s1767, 2
          %s1769 = smul.addr %s1768, 8
          %s1770 = scalar_lea.vmem %s7, %s1769
        $region110: #{_sage_forward_impl.4} parent=105 // pred_fallthru
          _
        // Predicated region
        $region111: #{_sage_forward_impl.4} parent=105 // pred_check
          %p1771 = pneg %p251
        $region112: #{_sage_forward_impl.4} parent=105 // pred_check_branch
          %1773 = sbr.rel (%p1771) target = $region114
        $region113: #{_sage_forward_impl.4} parent=105 // pred_region
          %s1774 = smul.u32 16, %s26
          %p1775 = scmp.lt.s32.totalorder %s1774, 95
          %s1776 = scalar_select %p1775, %s1774, 95
          %s1777 = smul.addr %s1776, 2
          %s1778 = smul.addr %s1777, 4
          %s1779 = scalar_lea.vmem %s8, %s1778
        $region114: #{_sage_forward_impl.4} parent=105 // pred_fallthru
          _
      $region106: #{_sage_forward_impl.4} parent=5 // pred_fallthru
        _
    $region6: #{_sage_forward_impl.4} parent=1 // loop_footer
      %s19 = sadd.s32 1, %s15
    $region7: #{_sage_forward_impl.4} parent=1 // loop_footer_branch
      %14 = sbr.rel target = $region3
    $region8: #{_sage_forward_impl.4} parent=1 // loop_exit
      _

// kernel: _sage_forward_impl.6
$region0: #{_sage_forward_impl.6}
  #allocation0 [shape = 'u32[]', space=smem, size = 0x4, offset = 0x4, fixed_abs, tag = 'smem constant byte address 0x4 - core index']
  #allocation1 [shape = 'u32[144,128]{1,0:T(1,128)}', space=vmem, size = 0x12000, scoped, tag = 'internal scratch']
  %s0 = inlined_call_operand.vmem [shape: bf16[512,256], index: 0, kind: input, shape index: {}]
  %s1 = inlined_call_operand.vmem [shape: bf16[256,128], index: 1, kind: input, shape index: {}]
  %s2 = inlined_call_operand.vmem [shape: bf16[512,128], index: 2, kind: output, shape index: {}]
  %s3 = sld [smem:[#allocation0]]
  $region41: #{_sage_forward_impl.6} parent=0
    _
  %s5 = ssub.s32 1, %s3
  %s6 = scalar_select 0, %s5, %s3
  loop: start=0, step=1, limit=4
  $region2: #{_sage_forward_impl.6} parent=0 // loop_pre_header
    _
  $region3: #{_sage_forward_impl.6} parent=0 // loop_header
    %s8 = sphi 0, %s12
    %p9 = scmp.ge.s32.totalorder %s8, 4
    %s18 = sphi 0, %s20
    %s21 = sphi 0, %s18
    %s22 = sphi 0, %s21
    %s38 = sphi 0, %s22
    %s42 = sphi 0, %s42
    %s44 = sphi 0, %s42
    %s45 = sphi 0, %s44
    %s59 = sphi 0, %s45
    %s65 = sphi 0, %s67
    %s68 = sphi 0, %s65
    %s69 = sphi 0, %s68
    %s85 = sphi 0, %s69
  $region4: #{_sage_forward_impl.6} parent=0 // loop_header_branch
    %11 = sbr.rel (%p9) target = $region8
  $region5: #{_sage_forward_impl.6} parent=0 // loop_body
    %s13 = ssub.s32 %s8, 1
    %s14 = ssub.s32 %s8, 2
    %s15 = sadd.s32 %s8, 1
    %s16 = ssub.s32 %s8, %s15
    %p17 = scmp.eq.s32.totalorder %s16, 0
    %s19 = sadd.s32 %s18, 1
    %s20 = scalar_select %p17, %s18, %s19
    %p23 = pneg %p17
    %p24 = scmp.eq.s32.totalorder %s8, 1
    %p25 = por %p23, %p24
    %p26 = scmp.ne.s32.totalorder %s18, %s21
    %p27 = scmp.eq.s32.totalorder %s8, 0
    %p28 = por %p26, %p27
    %p29 = scmp.ne.s32.totalorder %s18, %s21
    %p30 = scmp.eq.s32.totalorder %s13, 1
    %p31 = por %p29, %p30
    %p32 = scmp.ne.s32.totalorder %s21, %s22
    %p33 = scmp.eq.s32.totalorder %s13, 0
    %p34 = por %p32, %p33
    %p35 = scmp.ne.s32.totalorder %s21, %s22
    %p36 = scmp.eq.s32.totalorder %s14, 1
    %p37 = por %p35, %p36
    %p39 = scmp.ne.s32.totalorder %s22, %s38
    %p40 = scmp.eq.s32.totalorder %s14, 0
    %p41 = por %p39, %p40
    %s43 = sadd.s32 %s42, 1
    %p46 = scmp.eq.s32.totalorder %s8, 1
    %p47 = scmp.ne.s32.totalorder %s42, %s44
    %p48 = scmp.eq.s32.totalorder %s8, 0
    %p49 = por %p47, %p48
    %p50 = scmp.ne.s32.totalorder %s42, %s44
    %p51 = scmp.eq.s32.totalorder %s13, 1
    %p52 = por %p50, %p51
    %p53 = scmp.ne.s32.totalorder %s44, %s45
    %p54 = scmp.eq.s32.totalorder %s13, 0
    %p55 = por %p53, %p54
    %p56 = scmp.ne.s32.totalorder %s44, %s45
    %p57 = scmp.eq.s32.totalorder %s14, 1
    %p58 = por %p56, %p57
    %p60 = scmp.ne.s32.totalorder %s45, %s59
    %p61 = scmp.eq.s32.totalorder %s14, 0
    %p62 = por %p60, %p61
    %s63 = ssub.s32 %s8, %s15
    %p64 = scmp.eq.s32.totalorder %s63, 0
    %s66 = sadd.s32 %s65, 1
    %s67 = scalar_select %p64, %s65, %s66
    %p70 = pneg %p64
    %p71 = scmp.eq.s32.totalorder %s8, 1
    %p72 = por %p70, %p71
    %p73 = scmp.ne.s32.totalorder %s65, %s68
    %p74 = scmp.eq.s32.totalorder %s8, 0
    %p75 = por %p73, %p74
    %p76 = scmp.ne.s32.totalorder %s65, %s68
    %p77 = scmp.eq.s32.totalorder %s13, 1
    %p78 = por %p76, %p77
    %p79 = scmp.ne.s32.totalorder %s68, %s69
    %p80 = scmp.eq.s32.totalorder %s13, 0
    %p81 = por %p79, %p80
    %p82 = scmp.ne.s32.totalorder %s68, %s69
    %p83 = scmp.eq.s32.totalorder %s14, 1
    %p84 = por %p82, %p83
    %p86 = scmp.ne.s32.totalorder %s69, %s85
    %p87 = scmp.eq.s32.totalorder %s14, 0
    %p88 = por %p86, %p87
    %p89 = scmp.le.s32.totalorder 1, %s8
    %p90 = scmp.lt.s32.totalorder %s8, 3
    %p91 = pnand %p89, %p90
    %p92 = pneg %p91
    // Predicated region
    $region9: #{_sage_forward_impl.6} parent=5 // pred_check
      _
    $region10: #{_sage_forward_impl.6} parent=5 // pred_check_branch
      %94 = sbr.rel (%p91) target = $region12
    $region11: #{_sage_forward_impl.6} parent=5 // pred_region
      %s95 = ssub.s32 %s8, 1
      // Predicated region
      $region13: #{_sage_forward_impl.6} parent=11 // pred_check
        %p96 = pneg %p55
      $region14: #{_sage_forward_impl.6} parent=11 // pred_check_branch
        %98 = sbr.rel (%p96) target = $region16
      $region15: #{_sage_forward_impl.6} parent=11 // pred_region
        _
      $region16: #{_sage_forward_impl.6} parent=11 // pred_fallthru
        _
    $region12: #{_sage_forward_impl.6} parent=5 // pred_fallthru
      _
    %p99 = scmp.lt.s32.totalorder %s8, 2
    // Predicated region
    $region17: #{_sage_forward_impl.6} parent=5 // pred_check
      %p100 = pneg %p99
    $region18: #{_sage_forward_impl.6} parent=5 // pred_check_branch
      %102 = sbr.rel (%p100) target = $region20
    $region19: #{_sage_forward_impl.6} parent=5 // pred_region
      // Predicated region
      $region21: #{_sage_forward_impl.6} parent=19 // pred_check
        %p103 = pneg %p28
      $region22: #{_sage_forward_impl.6} parent=19 // pred_check_branch
        %105 = sbr.rel (%p103) target = $region24
      $region23: #{_sage_forward_impl.6} parent=19 // pred_region
        %s106 = smul.u32 32, %s8
        %p107 = scmp.lt.s32.totalorder %s106, 63
        %s108 = scalar_select %p107, %s106, 63
        %s109 = smul.addr %s108, 2
        %s110 = smul.addr %s109, 4
        %s111 = scalar_lea.vmem %s0, %s110
        %s112 = smul.u32 32, %s8
      $region24: #{_sage_forward_impl.6} parent=19 // pred_fallthru
        _
    $region20: #{_sage_forward_impl.6} parent=5 // pred_fallthru
      _
    %p113 = scmp.le.s32.totalorder 1, %s8
    %p114 = scmp.lt.s32.totalorder %s8, 3
    %p115 = pnand %p113, %p114
    %p116 = pneg %p115
    // Predicated region
    $region25: #{_sage_forward_impl.6} parent=5 // pred_check
      _
    $region26: #{_sage_forward_impl.6} parent=5 // pred_check_branch
      %118 = sbr.rel (%p115) target = $region28
    $region27: #{_sage_forward_impl.6} parent=5 // pred_region
      %s119 = ssub.s32 %s8, 1
      %s120 = smul.u32 32, %s13
      %p121 = scmp.lt.s32.totalorder %s120, 63
      %s122 = scalar_select %p121, %s120, 63
      %s123 = smul.addr %s122, 2
      %s124 = smul.addr %s123, 4
      %s125 = scalar_lea.vmem %s0, %s124
      %p126 = pneg %p34
      %p127 = pneg %p31
      %p128 = pneg %p55
      %p129 = pneg %p52
      %p130 = pneg %p81
      %p131 = pneg %p78
      %s132 = smul.u32 32, %s13
      %p133 = scmp.lt.s32.totalorder %s132, 63
      %s134 = scalar_select %p133, %s132, 63
      %s135 = smul.addr %s134, 4
      %s136 = scalar_lea.vmem %s2, %s135
      %s137 = smul.u32 32, %s13
      %p138 = scmp.lt.s32.totalorder %s137, 63
      %s139 = scalar_select %p138, %s137, 63
      %s140 = smul.addr %s139, 2
      %s141 = smul.addr %s140, 4
      %s142 = scalar_lea.vmem %s0, %s141
      %s143 = smul.u32 32, %s13
      %s144 = smul.u32 32, %s13
      %p145 = scmp.lt.s32.totalorder %s144, 63
      %s146 = scalar_select %p145, %s144, 63
      %s147 = smul.addr %s146, 4
      %s148 = scalar_lea.vmem %s2, %s147
      %s149 = smul.u32 32, %s13
      %v151 = vld [vmem:[%s142] sm:$0xff]
      %v152 = vld [vmem:[%s142 + $0x8] sm:$0xff]
      %v153 = vld [vmem:[%s142 + $0x10] sm:$0xff]
      %v154 = vld [vmem:[%s142 + $0x18] sm:$0xff]
      %v155 = vld [vmem:[%s142 + $0x20] sm:$0xff]
      %v156 = vld [vmem:[%s142 + $0x28] sm:$0xff]
      %v157 = vld [vmem:[%s142 + $0x30] sm:$0xff]
      %v158 = vld [vmem:[%s142 + $0x38] sm:$0xff]
      %v159 = vld [vmem:[%s142 + $0x40] sm:$0xff]
      %v160 = vld [vmem:[%s142 + $0x48] sm:$0xff]
      %v161 = vld [vmem:[%s142 + $0x50] sm:$0xff]
      %v162 = vld [vmem:[%s142 + $0x58] sm:$0xff]
      %v163 = vld [vmem:[%s142 + $0x60] sm:$0xff]
      %v164 = vld [vmem:[%s142 + $0x68] sm:$0xff]
      %v165 = vld [vmem:[%s142 + $0x70] sm:$0xff]
      %v166 = vld [vmem:[%s142 + $0x78] sm:$0xff]
      %v167 = vld [vmem:[%s142 + $0x80] sm:$0xff]
      %v168 = vld [vmem:[%s142 + $0x88] sm:$0xff]
      %v169 = vld [vmem:[%s142 + $0x90] sm:$0xff]
      %v170 = vld [vmem:[%s142 + $0x98] sm:$0xff]
      %v171 = vld [vmem:[%s142 + $0xa0] sm:$0xff]
      %v172 = vld [vmem:[%s142 + $0xa8] sm:$0xff]
      %v173 = vld [vmem:[%s142 + $0xb0] sm:$0xff]
      %v174 = vld [vmem:[%s142 + $0xb8] sm:$0xff]
      %v175 = vld [vmem:[%s142 + $0xc0] sm:$0xff]
      %v176 = vld [vmem:[%s142 + $0xc8] sm:$0xff]
      %v177 = vld [vmem:[%s142 + $0xd0] sm:$0xff]
      %v178 = vld [vmem:[%s142 + $0xd8] sm:$0xff]
      %v179 = vld [vmem:[%s142 + $0xe0] sm:$0xff]
      %v180 = vld [vmem:[%s142 + $0xe8] sm:$0xff]
      %v181 = vld [vmem:[%s142 + $0xf0] sm:$0xff]
      %v182 = vld [vmem:[%s142 + $0xf8] sm:$0xff]
      %v183 = vld [vmem:[%s1] sm:$0xf]
      %v184 = vld [vmem:[%s1 + $0x4] sm:$0xf]
      %v185 = vld [vmem:[%s1 + $0x8] sm:$0xf]
      %v186 = vld [vmem:[%s1 + $0xc] sm:$0xf]
      %v187 = vld [vmem:[%s1 + $0x10] sm:$0xf]
      %v188 = vld [vmem:[%s1 + $0x14] sm:$0xf]
      %v189 = vld [vmem:[%s1 + $0x18] sm:$0xf]
      %v190 = vld [vmem:[%s1 + $0x1c] sm:$0xf]
      %v191 = vld [vmem:[%s1 + $0x20] sm:$0xf]
      %v192 = vld [vmem:[%s1 + $0x24] sm:$0xf]
      %v193 = vld [vmem:[%s1 + $0x28] sm:$0xf]
      %v194 = vld [vmem:[%s1 + $0x2c] sm:$0xf]
      %v195 = vld [vmem:[%s1 + $0x30] sm:$0xf]
      %v196 = vld [vmem:[%s1 + $0x34] sm:$0xf]
      %v197 = vld [vmem:[%s1 + $0x38] sm:$0xf]
      %v198 = vld [vmem:[%s1 + $0x3c] sm:$0xf]
      %v199 = vld [vmem:[%s1 + $0x40] sm:$0xf]
      %v200 = vld [vmem:[%s1 + $0x44] sm:$0xf]
      %v201 = vld [vmem:[%s1 + $0x48] sm:$0xf]
      %v202 = vld [vmem:[%s1 + $0x4c] sm:$0xf]
      %v203 = vld [vmem:[%s1 + $0x50] sm:$0xf]
      %v204 = vld [vmem:[%s1 + $0x54] sm:$0xf]
      %v205 = vld [vmem:[%s1 + $0x58] sm:$0xf]
      %v206 = vld [vmem:[%s1 + $0x5c] sm:$0xf]
      %v207 = vld [vmem:[%s1 + $0x60] sm:$0xf]
      %v208 = vld [vmem:[%s1 + $0x64] sm:$0xf]
      %v209 = vld [vmem:[%s1 + $0x68] sm:$0xf]
      %v210 = vld [vmem:[%s1 + $0x6c] sm:$0xf]
      %v211 = vld [vmem:[%s1 + $0x70] sm:$0xf]
      %v212 = vld [vmem:[%s1 + $0x74] sm:$0xf]
      %v213 = vld [vmem:[%s1 + $0x78] sm:$0xf]
      %v214 = vld [vmem:[%s1 + $0x7c] sm:$0xf]
      %v247 = vunpack.c.l.b16 %v151
      %v248 = vunpack.c.h.b16 %v151
      %v249 = vunpack.c.l.b16 %v152
      %v250 = vunpack.c.h.b16 %v152
      %v251 = vunpack.c.l.b16 %v153
      %v252 = vunpack.c.h.b16 %v153
      %v253 = vunpack.c.l.b16 %v154
      %v254 = vunpack.c.h.b16 %v154
      %v255 = vunpack.c.l.b16 %v155
      %v256 = vunpack.c.h.b16 %v155
      %v257 = vunpack.c.l.b16 %v156
      %v258 = vunpack.c.h.b16 %v156
      %v259 = vunpack.c.l.b16 %v157
      %v260 = vunpack.c.h.b16 %v157
      %v261 = vunpack.c.l.b16 %v158
      %v262 = vunpack.c.h.b16 %v158
      %v263 = vunpack.c.l.b16 %v159
      %v264 = vunpack.c.h.b16 %v159
      %v265 = vunpack.c.l.b16 %v160
      %v266 = vunpack.c.h.b16 %v160
      %v267 = vunpack.c.l.b16 %v161
      %v268 = vunpack.c.h.b16 %v161
      %v269 = vunpack.c.l.b16 %v162
      %v270 = vunpack.c.h.b16 %v162
      %v271 = vunpack.c.l.b16 %v163
      %v272 = vunpack.c.h.b16 %v163
      %v273 = vunpack.c.l.b16 %v164
      %v274 = vunpack.c.h.b16 %v164
      %v275 = vunpack.c.l.b16 %v165
      %v276 = vunpack.c.h.b16 %v165
      %v277 = vunpack.c.l.b16 %v166
      %v278 = vunpack.c.h.b16 %v166
      %v279 = vunpack.c.l.b16 %v167
      %v280 = vunpack.c.h.b16 %v167
      %v281 = vunpack.c.l.b16 %v168
      %v282 = vunpack.c.h.b16 %v168
      %v283 = vunpack.c.l.b16 %v169
      %v284 = vunpack.c.h.b16 %v169
      %v285 = vunpack.c.l.b16 %v170
      %v286 = vunpack.c.h.b16 %v170
      %v287 = vunpack.c.l.b16 %v171
      %v288 = vunpack.c.h.b16 %v171
      %v289 = vunpack.c.l.b16 %v172
      %v290 = vunpack.c.h.b16 %v172
      %v291 = vunpack.c.l.b16 %v173
      %v292 = vunpack.c.h.b16 %v173
      %v293 = vunpack.c.l.b16 %v174
      %v294 = vunpack.c.h.b16 %v174
      %v295 = vunpack.c.l.b16 %v175
      %v296 = vunpack.c.h.b16 %v175
      %v297 = vunpack.c.l.b16 %v176
      %v298 = vunpack.c.h.b16 %v176
      %v299 = vunpack.c.l.b16 %v177
      %v300 = vunpack.c.h.b16 %v177
      %v301 = vunpack.c.l.b16 %v178
      %v302 = vunpack.c.h.b16 %v178
      %v303 = vunpack.c.l.b16 %v179
      %v304 = vunpack.c.h.b16 %v179
      %v305 = vunpack.c.l.b16 %v180
      %v306 = vunpack.c.h.b16 %v180
      %v307 = vunpack.c.l.b16 %v181
      %v308 = vunpack.c.h.b16 %v181
      %v309 = vunpack.c.l.b16 %v182
      %v310 = vunpack.c.h.b16 %v182
      %v311 = vpack.c.b16 %v249, %v247
      %v312 = vpack.c.b16 %v250, %v248
      %v313 = vpack.c.b16 %v253, %v251
      %v314 = vpack.c.b16 %v254, %v252
      %v315 = vpack.c.b16 %v257, %v255
      %v316 = vpack.c.b16 %v258, %v256
      %v317 = vpack.c.b16 %v261, %v259
      %v318 = vpack.c.b16 %v262, %v260
      %v319 = vpack.c.b16 %v265, %v263
      %v320 = vpack.c.b16 %v266, %v264
      %v321 = vpack.c.b16 %v269, %v267
      %v322 = vpack.c.b16 %v270, %v268
      %v323 = vpack.c.b16 %v273, %v271
      %v324 = vpack.c.b16 %v274, %v272
      %v325 = vpack.c.b16 %v277, %v275
      %v326 = vpack.c.b16 %v278, %v276
      %v327 = vpack.c.b16 %v281, %v279
      %v328 = vpack.c.b16 %v282, %v280
      %v329 = vpack.c.b16 %v285, %v283
      %v330 = vpack.c.b16 %v286, %v284
      %v331 = vpack.c.b16 %v289, %v287
      %v332 = vpack.c.b16 %v290, %v288
      %v333 = vpack.c.b16 %v293, %v291
      %v334 = vpack.c.b16 %v294, %v292
      %v335 = vpack.c.b16 %v297, %v295
      %v336 = vpack.c.b16 %v298, %v296
      %v337 = vpack.c.b16 %v301, %v299
      %v338 = vpack.c.b16 %v302, %v300
      %v339 = vpack.c.b16 %v305, %v303
      %v340 = vpack.c.b16 %v306, %v304
      %v341 = vpack.c.b16 %v309, %v307
      %v342 = vpack.c.b16 %v310, %v308
      %v407 = vunpack.c.l.b16 %v183
      %v408 = vunpack.c.l.b16 %v184
      %v409 = vunpack.c.l.b16 %v185
      %v410 = vunpack.c.l.b16 %v186
      %v411 = vunpack.c.l.b16 %v187
      %v412 = vunpack.c.l.b16 %v188
      %v413 = vunpack.c.l.b16 %v189
      %v414 = vunpack.c.l.b16 %v190
      %v415 = vunpack.c.l.b16 %v191
      %v416 = vunpack.c.l.b16 %v192
      %v417 = vunpack.c.l.b16 %v193
      %v418 = vunpack.c.l.b16 %v194
      %v419 = vunpack.c.l.b16 %v195
      %v420 = vunpack.c.l.b16 %v196
      %v421 = vunpack.c.l.b16 %v197
      %v422 = vunpack.c.l.b16 %v198
      %v423 = vunpack.c.l.b16 %v199
      %v424 = vunpack.c.l.b16 %v200
      %v425 = vunpack.c.l.b16 %v201
      %v426 = vunpack.c.l.b16 %v202
      %v427 = vunpack.c.l.b16 %v203
      %v428 = vunpack.c.l.b16 %v204
      %v429 = vunpack.c.l.b16 %v205
      %v430 = vunpack.c.l.b16 %v206
      %v431 = vunpack.c.l.b16 %v207
      %v432 = vunpack.c.l.b16 %v208
      %v433 = vunpack.c.l.b16 %v209
      %v434 = vunpack.c.l.b16 %v210
      %v435 = vunpack.c.l.b16 %v211
      %v436 = vunpack.c.l.b16 %v212
      %v437 = vunpack.c.l.b16 %v213
      %v438 = vunpack.c.l.b16 %v214
      %v439 = vpack.c.b16 %v408, %v407
      %v440 = vpack.c.b16 %v410, %v409
      %v441 = vpack.c.b16 %v412, %v411
      %v442 = vpack.c.b16 %v414, %v413
      %v443 = vpack.c.b16 %v416, %v415
      %v444 = vpack.c.b16 %v418, %v417
      %v445 = vpack.c.b16 %v420, %v419
      %v446 = vpack.c.b16 %v422, %v421
      %v447 = vpack.c.b16 %v424, %v423
      %v448 = vpack.c.b16 %v426, %v425
      %v449 = vpack.c.b16 %v428, %v427
      %v450 = vpack.c.b16 %v430, %v429
      %v451 = vpack.c.b16 %v432, %v431
      %v452 = vpack.c.b16 %v434, %v433
      %v453 = vpack.c.b16 %v436, %v435
      %v454 = vpack.c.b16 %v438, %v437
      %471 = vmatprep.subr.bf16.mxu0 0
      %472 = vmatpush1.bf16.msra.mxu0 %v439
      %473 = vmatprep.subr.bf16.mxu0 0
      %474 = vmatpush1.bf16.msra.mxu0 %v440
      %475 = vmatprep.subr.bf16.mxu0 0
      %476 = vmatpush1.bf16.msra.mxu0 %v441
      %477 = vmatprep.subr.bf16.mxu0 0
      %478 = vmatpush1.bf16.msra.mxu0 %v442
      %479 = vmatprep.subr.bf16.mxu0 0
      %480 = vmatpush1.bf16.msra.mxu0 %v443
      %481 = vmatprep.subr.bf16.mxu0 0
      %482 = vmatpush1.bf16.msra.mxu0 %v444
      %483 = vmatprep.subr.bf16.mxu0 0
      %484 = vmatpush1.bf16.msra.mxu0 %v445
      %485 = vmatprep.subr.bf16.mxu0 0
      %486 = vmatpush1.bf16.msra.mxu0 %v446
      %487 = vmatprep.subr.bf16.mxu0 0
      %488 = vmatpush1.bf16.msra.mxu0 %v447
      %489 = vmatprep.subr.bf16.mxu0 0
      %490 = vmatpush1.bf16.msra.mxu0 %v448
      %491 = vmatprep.subr.bf16.mxu0 0
      %492 = vmatpush1.bf16.msra.mxu0 %v449
      %493 = vmatprep.subr.bf16.mxu0 0
      %494 = vmatpush1.bf16.msra.mxu0 %v450
      %495 = vmatprep.subr.bf16.mxu0 0
      %496 = vmatpush1.bf16.msra.mxu0 %v451
      %497 = vmatprep.subr.bf16.mxu0 0
      %498 = vmatpush1.bf16.msra.mxu0 %v452
      %499 = vmatprep.subr.bf16.mxu0 0
      %500 = vmatpush1.bf16.msra.mxu0 %v453
      %501 = vmatprep.subr.bf16.mxu0 0
      %502 = vmatpush1.bf16.msra.mxu0 %v454
      %503 = vmatprep.mubr.bf16.mxu0 %v312
      %504 = vmatmul.mubr.bf16.gmra.mrb[0].mxu0 %v311
      %v505 = vpop.f32.mrb[0].mxu0
      %v506 = vadd.f32 0.0, %v505
      %v507 = vpop.f32.mrb[0].mxu0
      %v508 = vpop.f32.mrb[0].mxu0
      %v509 = vadd.f32 0.0, %v508
      %v510 = vpop.f32.mrb[0].mxu0
      %511 = vmatprep.mubr.bf16.mxu0 %v314
      %512 = vmatmul.mubr.bf16.gmra.mrb[0].mxu0 %v313
      %v513 = vpop.f32.mrb[0].mxu0
      %v514 = vadd.f32 0.0, %v513
      %v515 = vpop.f32.mrb[0].mxu0
      %v516 = vpop.f32.mrb[0].mxu0
      %v517 = vadd.f32 0.0, %v516
      %v518 = vpop.f32.mrb[0].mxu0
      %519 = vmatprep.mubr.bf16.mxu0 %v316
      %520 = vmatmul.mubr.bf16.gmra.mrb[0].mxu0 %v315
      %v521 = vpop.f32.mrb[0].mxu0
      %v522 = vadd.f32 0.0, %v521
      %v523 = vpop.f32.mrb[0].mxu0
      %v524 = vpop.f32.mrb[0].mxu0
      %v525 = vadd.f32 0.0, %v524
      %v526 = vpop.f32.mrb[0].mxu0
      %527 = vmatprep.mubr.bf16.mxu0 %v318
      %528 = vmatmul.mubr.bf16.gmra.mrb[0].mxu0 %v317
      %v529 = vpop.f32.mrb[0].mxu0
      %v530 = vadd.f32 0.0, %v529
      %v531 = vpop.f32.mrb[0].mxu0
      %v532 = vpop.f32.mrb[0].mxu0
      %v533 = vadd.f32 0.0, %v532
      %v534 = vpop.f32.mrb[0].mxu0
      %535 = vmatprep.mubr.bf16.mxu0 %v320
      %536 = vmatmul.mubr.bf16.gmra.mrb[0].mxu0 %v319
      %v537 = vpop.f32.mrb[0].mxu0
      %v538 = vadd.f32 0.0, %v537
      %v539 = vpop.f32.mrb[0].mxu0
      %v540 = vpop.f32.mrb[0].mxu0
      %v541 = vadd.f32 0.0, %v540
      %v542 = vpop.f32.mrb[0].mxu0
      %543 = vmatprep.mubr.bf16.mxu0 %v322
      %544 = vmatmul.mubr.bf16.gmra.mrb[0].mxu0 %v321
      %v545 = vpop.f32.mrb[0].mxu0
      %v546 = vadd.f32 0.0, %v545
      %v547 = vpop.f32.mrb[0].mxu0
      %v548 = vpop.f32.mrb[0].mxu0
      %v549 = vadd.f32 0.0, %v548
      %v550 = vpop.f32.mrb[0].mxu0
      %551 = vmatprep.mubr.bf16.mxu0 %v324
      %552 = vmatmul.mubr.bf16.gmra.mrb[0].mxu0 %v323
      %v553 = vpop.f32.mrb[0].mxu0
      %v554 = vadd.f32 0.0, %v553
      %v555 = vpop.f32.mrb[0].mxu0
      %v556 = vpop.f32.mrb[0].mxu0
      %v557 = vadd.f32 0.0, %v556
      %v558 = vpop.f32.mrb[0].mxu0
      %559 = vmatprep.mubr.bf16.mxu0 %v326
      %560 = vmatmul.mubr.bf16.gmra.mrb[0].mxu0 %v325
      %v561 = vpop.f32.mrb[0].mxu0
      %v562 = vadd.f32 0.0, %v561
      %v563 = vpop.f32.mrb[0].mxu0
      %v564 = vpop.f32.mrb[0].mxu0
      %v565 = vadd.f32 0.0, %v564
      %v566 = vpop.f32.mrb[0].mxu0
      %567 = vmatprep.mubr.bf16.mxu0 %v328
      %568 = vmatmul.mubr.bf16.gmra.mrb[0].mxu0 %v327
      %v569 = vpop.f32.mrb[0].mxu0
      %v570 = vadd.f32 0.0, %v569
      %v571 = vpop.f32.mrb[0].mxu0
      %v572 = vpop.f32.mrb[0].mxu0
      %v573 = vadd.f32 0.0, %v572
      %v574 = vpop.f32.mrb[0].mxu0
      %575 = vmatprep.mubr.bf16.mxu0 %v330
      %576 = vmatmul.mubr.bf16.gmra.mrb[0].mxu0 %v329
      %v577 = vpop.f32.mrb[0].mxu0
      %v578 = vadd.f32 0.0, %v577
      %v579 = vpop.f32.mrb[0].mxu0
      %v580 = vpop.f32.mrb[0].mxu0
      %v581 = vadd.f32 0.0, %v580
      %v582 = vpop.f32.mrb[0].mxu0
      %583 = vmatprep.mubr.bf16.mxu0 %v332
      %584 = vmatmul.mubr.bf16.gmra.mrb[0].mxu0 %v331
      %v585 = vpop.f32.mrb[0].mxu0
      %v586 = vadd.f32 0.0, %v585
      %v587 = vpop.f32.mrb[0].mxu0
      %v588 = vpop.f32.mrb[0].mxu0
      %v589 = vadd.f32 0.0, %v588
      %v590 = vpop.f32.mrb[0].mxu0
      %591 = vmatprep.mubr.bf16.mxu0 %v334
      %592 = vmatmul.mubr.bf16.gmra.mrb[0].mxu0 %v333
      %v593 = vpop.f32.mrb[0].mxu0
      %v594 = vadd.f32 0.0, %v593
      %v595 = vpop.f32.mrb[0].mxu0
      %v596 = vpop.f32.mrb[0].mxu0
      %v597 = vadd.f32 0.0, %v596
      %v598 = vpop.f32.mrb[0].mxu0
      %599 = vmatprep.mubr.bf16.mxu0 %v336
      %600 = vmatmul.mubr.bf16.gmra.mrb[0].mxu0 %v335
      %v601 = vpop.f32.mrb[0].mxu0
      %v602 = vadd.f32 0.0, %v601
      %v603 = vpop.f32.mrb[0].mxu0
      %v604 = vpop.f32.mrb[0].mxu0
      %v605 = vadd.f32 0.0, %v604
      %v606 = vpop.f32.mrb[0].mxu0
      %607 = vmatprep.mubr.bf16.mxu0 %v338
      %608 = vmatmul.mubr.bf16.gmra.mrb[0].mxu0 %v337
      %v609 = vpop.f32.mrb[0].mxu0
      %v610 = vadd.f32 0.0, %v609
      %v611 = vpop.f32.mrb[0].mxu0
      %v612 = vpop.f32.mrb[0].mxu0
      %v613 = vadd.f32 0.0, %v612
      %v614 = vpop.f32.mrb[0].mxu0
      %615 = vmatprep.mubr.bf16.mxu0 %v340
      %616 = vmatmul.mubr.bf16.gmra.mrb[0].mxu0 %v339
      %v617 = vpop.f32.mrb[0].mxu0
      %v618 = vadd.f32 0.0, %v617
      %v619 = vpop.f32.mrb[0].mxu0
      %v620 = vpop.f32.mrb[0].mxu0
      %v621 = vadd.f32 0.0, %v620
      %v622 = vpop.f32.mrb[0].mxu0
      %623 = vmatprep.mubr.bf16.mxu0 %v342
      %624 = vmatmul.mubr.bf16.gmra.mrb[0].mxu0 %v341
      %v625 = vpop.f32.mrb[0].mxu0
      %v626 = vadd.f32 0.0, %v625
      %v627 = vpop.f32.mrb[0].mxu0
      %v628 = vpop.f32.mrb[0].mxu0
      %v629 = vadd.f32 0.0, %v628
      %v630 = vpop.f32.mrb[0].mxu0
      %631 = vdwg.mxu0
      %v632 = vpack.c.bf16 %v509, %v506
      %v633 = vpack.c.bf16 %v517, %v514
      %v634 = vpack.c.bf16 %v525, %v522
      %v635 = vpack.c.bf16 %v533, %v530
      %v636 = vpack.c.bf16 %v541, %v538
      %v637 = vpack.c.bf16 %v549, %v546
      %v638 = vpack.c.bf16 %v557, %v554
      %v639 = vpack.c.bf16 %v565, %v562
      %v640 = vpack.c.bf16 %v573, %v570
      %v641 = vpack.c.bf16 %v581, %v578
      %v642 = vpack.c.bf16 %v589, %v586
      %v643 = vpack.c.bf16 %v597, %v594
      %v644 = vpack.c.bf16 %v605, %v602
      %v645 = vpack.c.bf16 %v613, %v610
      %v646 = vpack.c.bf16 %v621, %v618
      %v647 = vpack.c.bf16 %v629, %v626
      %v664 = vunpack.c.l.b16 %v632
      %v665 = vunpack.c.h.b16 %v632
      %v666 = vunpack.c.l.b16 %v633
      %v667 = vunpack.c.h.b16 %v633
      %v668 = vunpack.c.l.b16 %v634
      %v669 = vunpack.c.h.b16 %v634
      %v670 = vunpack.c.l.b16 %v635
      %v671 = vunpack.c.h.b16 %v635
      %v672 = vunpack.c.l.b16 %v636
      %v673 = vunpack.c.h.b16 %v636
      %v674 = vunpack.c.l.b16 %v637
      %v675 = vunpack.c.h.b16 %v637
      %v676 = vunpack.c.l.b16 %v638
      %v677 = vunpack.c.h.b16 %v638
      %v678 = vunpack.c.l.b16 %v639
      %v679 = vunpack.c.h.b16 %v639
      %v680 = vunpack.c.l.b16 %v640
      %v681 = vunpack.c.h.b16 %v640
      %v682 = vunpack.c.l.b16 %v641
      %v683 = vunpack.c.h.b16 %v641
      %v684 = vunpack.c.l.b16 %v642
      %v685 = vunpack.c.h.b16 %v642
      %v686 = vunpack.c.l.b16 %v643
      %v687 = vunpack.c.h.b16 %v643
      %v688 = vunpack.c.l.b16 %v644
      %v689 = vunpack.c.h.b16 %v644
      %v690 = vunpack.c.l.b16 %v645
      %v691 = vunpack.c.h.b16 %v645
      %v692 = vunpack.c.l.b16 %v646
      %v693 = vunpack.c.h.b16 %v646
      %v694 = vunpack.c.l.b16 %v647
      %v695 = vunpack.c.h.b16 %v647
      %v696 = vpack.c.b16 %v664, %v664
      %v697 = vpack.c.b16 %v665, %v665
      %v698 = vpack.c.b16 %v666, %v666
      %v699 = vpack.c.b16 %v667, %v667
      %v700 = vpack.c.b16 %v668, %v668
      %v701 = vpack.c.b16 %v669, %v669
      %v702 = vpack.c.b16 %v670, %v670
      %v703 = vpack.c.b16 %v671, %v671
      %v704 = vpack.c.b16 %v672, %v672
      %v705 = vpack.c.b16 %v673, %v673
      %v706 = vpack.c.b16 %v674, %v674
      %v707 = vpack.c.b16 %v675, %v675
      %v708 = vpack.c.b16 %v676, %v676
      %v709 = vpack.c.b16 %v677, %v677
      %v710 = vpack.c.b16 %v678, %v678
      %v711 = vpack.c.b16 %v679, %v679
      %v712 = vpack.c.b16 %v680, %v680
      %v713 = vpack.c.b16 %v681, %v681
      %v714 = vpack.c.b16 %v682, %v682
      %v715 = vpack.c.b16 %v683, %v683
      %v716 = vpack.c.b16 %v684, %v684
      %v717 = vpack.c.b16 %v685, %v685
      %v718 = vpack.c.b16 %v686, %v686
      %v719 = vpack.c.b16 %v687, %v687
      %v720 = vpack.c.b16 %v688, %v688
      %v721 = vpack.c.b16 %v689, %v689
      %v722 = vpack.c.b16 %v690, %v690
      %v723 = vpack.c.b16 %v691, %v691
      %v724 = vpack.c.b16 %v692, %v692
      %v725 = vpack.c.b16 %v693, %v693
      %v726 = vpack.c.b16 %v694, %v694
      %v727 = vpack.c.b16 %v695, %v695
      %760 = vst [vmem:[%s148] sm:$0xf] %v696
      %761 = vst [vmem:[%s148 + $0x4] sm:$0xf] %v697
      %762 = vst [vmem:[%s148 + $0x8] sm:$0xf] %v698
      %763 = vst [vmem:[%s148 + $0xc] sm:$0xf] %v699
      %764 = vst [vmem:[%s148 + $0x10] sm:$0xf] %v700
      %765 = vst [vmem:[%s148 + $0x14] sm:$0xf] %v701
      %766 = vst [vmem:[%s148 + $0x18] sm:$0xf] %v702
      %767 = vst [vmem:[%s148 + $0x1c] sm:$0xf] %v703
      %768 = vst [vmem:[%s148 + $0x20] sm:$0xf] %v704
      %769 = vst [vmem:[%s148 + $0x24] sm:$0xf] %v705
      %770 = vst [vmem:[%s148 + $0x28] sm:$0xf] %v706
      %771 = vst [vmem:[%s148 + $0x2c] sm:$0xf] %v707
      %772 = vst [vmem:[%s148 + $0x30] sm:$0xf] %v708
      %773 = vst [vmem:[%s148 + $0x34] sm:$0xf] %v709
      %774 = vst [vmem:[%s148 + $0x38] sm:$0xf] %v710
      %775 = vst [vmem:[%s148 + $0x3c] sm:$0xf] %v711
      %776 = vst [vmem:[%s148 + $0x40] sm:$0xf] %v712
      %777 = vst [vmem:[%s148 + $0x44] sm:$0xf] %v713
      %778 = vst [vmem:[%s148 + $0x48] sm:$0xf] %v714
      %779 = vst [vmem:[%s148 + $0x4c] sm:$0xf] %v715
      %780 = vst [vmem:[%s148 + $0x50] sm:$0xf] %v716
      %781 = vst [vmem:[%s148 + $0x54] sm:$0xf] %v717
      %782 = vst [vmem:[%s148 + $0x58] sm:$0xf] %v718
      %783 = vst [vmem:[%s148 + $0x5c] sm:$0xf] %v719
      %784 = vst [vmem:[%s148 + $0x60] sm:$0xf] %v720
      %785 = vst [vmem:[%s148 + $0x64] sm:$0xf] %v721
      %786 = vst [vmem:[%s148 + $0x68] sm:$0xf] %v722
      %787 = vst [vmem:[%s148 + $0x6c] sm:$0xf] %v723
      %788 = vst [vmem:[%s148 + $0x70] sm:$0xf] %v724
      %789 = vst [vmem:[%s148 + $0x74] sm:$0xf] %v725
      %790 = vst [vmem:[%s148 + $0x78] sm:$0xf] %v726
      %791 = vst [vmem:[%s148 + $0x7c] sm:$0xf] %v727
      %s792 = smul.u32 32, %s13
      %p793 = scmp.lt.s32.totalorder %s792, 63
      %s794 = scalar_select %p793, %s792, 63
      %s795 = smul.addr %s794, 4
      %s796 = scalar_lea.vmem %s2, %s795
      // Predicated region
      $region29: #{_sage_forward_impl.6} parent=27 // pred_check
        %p797 = pneg %p78
      $region30: #{_sage_forward_impl.6} parent=27 // pred_check_branch
        %799 = sbr.rel (%p797) target = $region32
      $region31: #{_sage_forward_impl.6} parent=27 // pred_region
        %s800 = smul.u32 32, %s13
      $region32: #{_sage_forward_impl.6} parent=27 // pred_fallthru
        _
    $region28: #{_sage_forward_impl.6} parent=5 // pred_fallthru
      _
    %p801 = scmp.le.s32.totalorder 2, %s8
    // Predicated region
    $region33: #{_sage_forward_impl.6} parent=5 // pred_check
      %p802 = pneg %p801
    $region34: #{_sage_forward_impl.6} parent=5 // pred_check_branch
      %804 = sbr.rel (%p802) target = $region36
    $region35: #{_sage_forward_impl.6} parent=5 // pred_region
      %s805 = ssub.s32 %s8, 2
      // Predicated region
      $region37: #{_sage_forward_impl.6} parent=35 // pred_check
        %p806 = pneg %p84
      $region38: #{_sage_forward_impl.6} parent=35 // pred_check_branch
        %808 = sbr.rel (%p806) target = $region40
      $region39: #{_sage_forward_impl.6} parent=35 // pred_region
        %s809 = smul.u32 32, %s14
        %p810 = scmp.lt.s32.totalorder %s809, 63
        %s811 = scalar_select %p810, %s809, 63
        %s812 = smul.addr %s811, 4
        %s813 = scalar_lea.vmem %s2, %s812
      $region40: #{_sage_forward_impl.6} parent=35 // pred_fallthru
        _
    $region36: #{_sage_forward_impl.6} parent=5 // pred_fallthru
      _
  $region6: #{_sage_forward_impl.6} parent=0 // loop_footer
    %s12 = sadd.s32 1, %s8
  $region7: #{_sage_forward_impl.6} parent=0 // loop_footer_branch
    %7 = sbr.rel target = $region3
  $region8: #{_sage_forward_impl.6} parent=0 // loop_exit
    _

// kernel: _sage_forward_impl.5
$region0: #{_sage_forward_impl.5}
  #allocation0 [shape = 'u32[]', space=smem, size = 0x4, offset = 0x4, fixed_abs, tag = 'smem constant byte address 0x4 - core index']
  #allocation1 [shape = 'u32[144,128]{1,0:T(1,128)}', space=vmem, size = 0x12000, scoped, tag = 'internal scratch']
  #allocation2 [shape = 'f32[128,256]{1,0:T(8,128)}', space=vmem, size = 0x20000, scoped, tag = 'scratch operand']
  %s0 = inlined_call_operand.vmem [shape: bf16[512,768], index: 0, kind: input, shape index: {}]
  %s1 = inlined_call_operand.vmem [shape: bf16[768,256], index: 1, kind: input, shape index: {}]
  %s2 = inlined_call_operand.vmem [shape: f32[512,1], index: 2, kind: input, shape index: {}]
  %s3 = inlined_call_operand.vmem [shape: bf16[256,256], index: 3, kind: input, shape index: {}]
  %s4 = inlined_call_operand.vmem [shape: f32[1,256], index: 4, kind: input, shape index: {}]
  %s5 = inlined_call_operand.vmem [shape: bf16[512,256], index: 5, kind: input, shape index: {}]
  %s6 = inlined_call_operand.vmem [shape: bf16[256,256], index: 6, kind: input, shape index: {}]
  %s7 = inlined_call_operand.vmem [shape: f32[512,256], index: 7, kind: output, shape index: {0}]
  %s8 = inlined_call_operand.vmem [shape: bf16[512,256], index: 8, kind: output, shape index: {1}]
  %9 = xla_tuple %s7, %s8
  %s10 = sld [smem:[#allocation0]]
  $region115: #{_sage_forward_impl.5} parent=0
    _
  %s12 = ssub.s32 1, %s10
  %s13 = scalar_select 0, %s12, %s10
  $region1: #{_sage_forward_impl.5} parent=0
    #allocation3 [shape = 'u8[131072]{0}', space=vmem, size = 0x20000, scoped, tag = 'input window, operand 0']
    loop: start=0, step=1, limit=14
    $region2: #{_sage_forward_impl.5} parent=1 // loop_pre_header
      _
    $region3: #{_sage_forward_impl.5} parent=1 // loop_header
      %s15 = sphi 0, %s19
      %p16 = scmp.ge.s32.totalorder %s15, 14
      %s22 = sphi 0, %s34
      %s23 = sphi 0, %s30
      %s24 = sphi 0, %s22
      %s25 = sphi 0, %s23
      %s26 = sphi 0, %s24
      %s27 = sphi 0, %s25
      %s39 = sphi 0, %s41
      %s42 = sphi 0, %s39
      %s43 = sphi 0, %s42
      %s59 = sphi 0, %s43
      %s65 = sphi 0, %s67
      %s68 = sphi 0, %s65
      %s69 = sphi 0, %s68
      %s85 = sphi 0, %s69
      %s91 = sphi 0, %s93
      %s94 = sphi 0, %s91
      %s95 = sphi 0, %s94
      %s111 = sphi 0, %s95
      %s115 = sphi 0, %s115
      %s117 = sphi 0, %s115
      %s118 = sphi 0, %s117
      %s132 = sphi 0, %s118
      %s136 = sphi 0, %s136
      %s138 = sphi 0, %s136
      %s139 = sphi 0, %s138
      %s153 = sphi 0, %s139
      %s159 = sphi 0, %s161
      %s162 = sphi 0, %s159
      %s163 = sphi 0, %s162
      %s179 = sphi 0, %s163
      %s183 = sphi 0, %s183
      %s185 = sphi 0, %s183
      %s186 = sphi 0, %s185
      %s200 = sphi 0, %s186
      %s206 = sphi 0, %s208
      %s209 = sphi 0, %s206
      %s210 = sphi 0, %s209
      %s226 = sphi 0, %s210
      %s232 = sphi 0, %s234
      %s235 = sphi 0, %s232
      %s236 = sphi 0, %s235
      %s252 = sphi 0, %s236
    $region4: #{_sage_forward_impl.5} parent=1 // loop_header_branch
      %18 = sbr.rel (%p16) target = $region8
    $region5: #{_sage_forward_impl.5} parent=1 // loop_body
      %s20 = ssub.s32 %s15, 1
      %s21 = ssub.s32 %s15, 2
      %s28 = sadd.s32 1, %s23
      %p29 = scmp.ge.s32.totalorder %s28, 3
      %s30 = scalar_select %p29, 0, %s28
      %s31 = sadd.s32 1, %s22
      %s32 = scalar_select %p29, %s31, %s22
      %p33 = scmp.ge.s32.totalorder %s32, 4
      %s34 = scalar_select %p33, 0, %s32
      %s35 = ssub.s32 %s22, %s34
      %s36 = ssub.s32 %s23, %s30
      %s37 = sor.u32 %s35, %s36
      %p38 = scmp.eq.s32.totalorder %s37, 0
      %s40 = sadd.s32 %s39, 1
      %s41 = scalar_select %p38, %s39, %s40
      %p44 = pneg %p38
      %p45 = scmp.eq.s32.totalorder %s15, 11
      %p46 = por %p44, %p45
      %p47 = scmp.ne.s32.totalorder %s39, %s42
      %p48 = scmp.eq.s32.totalorder %s15, 0
      %p49 = por %p47, %p48
      %p50 = scmp.ne.s32.totalorder %s39, %s42
      %p51 = scmp.eq.s32.totalorder %s20, 11
      %p52 = por %p50, %p51
      %p53 = scmp.ne.s32.totalorder %s42, %s43
      %p54 = scmp.eq.s32.totalorder %s20, 0
      %p55 = por %p53, %p54
      %p56 = scmp.ne.s32.totalorder %s42, %s43
      %p57 = scmp.eq.s32.totalorder %s21, 11
      %p58 = por %p56, %p57
      %p60 = scmp.ne.s32.totalorder %s43, %s59
      %p61 = scmp.eq.s32.totalorder %s21, 0
      %p62 = por %p60, %p61
      %s63 = ssub.s32 %s23, %s30
      %p64 = scmp.eq.s32.totalorder %s63, 0
      %s66 = sadd.s32 %s65, 1
      %s67 = scalar_select %p64, %s65, %s66
      %p70 = pneg %p64
      %p71 = scmp.eq.s32.totalorder %s15, 11
      %p72 = por %p70, %p71
      %p73 = scmp.ne.s32.totalorder %s65, %s68
      %p74 = scmp.eq.s32.totalorder %s15, 0
      %p75 = por %p73, %p74
      %p76 = scmp.ne.s32.totalorder %s65, %s68
      %p77 = scmp.eq.s32.totalorder %s20, 11
      %p78 = por %p76, %p77
      %p79 = scmp.ne.s32.totalorder %s68, %s69
      %p80 = scmp.eq.s32.totalorder %s20, 0
      %p81 = por %p79, %p80
      %p82 = scmp.ne.s32.totalorder %s68, %s69
      %p83 = scmp.eq.s32.totalorder %s21, 11
      %p84 = por %p82, %p83
      %p86 = scmp.ne.s32.totalorder %s69, %s85
      %p87 = scmp.eq.s32.totalorder %s21, 0
      %p88 = por %p86, %p87
      %s89 = ssub.s32 %s22, %s34
      %p90 = scmp.eq.s32.totalorder %s89, 0
      %s92 = sadd.s32 %s91, 1
      %s93 = scalar_select %p90, %s91, %s92
      %p96 = pneg %p90
      %p97 = scmp.eq.s32.totalorder %s15, 11
      %p98 = por %p96, %p97
      %p99 = scmp.ne.s32.totalorder %s91, %s94
      %p100 = scmp.eq.s32.totalorder %s15, 0
      %p101 = por %p99, %p100
      %p102 = scmp.ne.s32.totalorder %s91, %s94
      %p103 = scmp.eq.s32.totalorder %s20, 11
      %p104 = por %p102, %p103
      %p105 = scmp.ne.s32.totalorder %s94, %s95
      %p106 = scmp.eq.s32.totalorder %s20, 0
      %p107 = por %p105, %p106
      %p108 = scmp.ne.s32.totalorder %s94, %s95
      %p109 = scmp.eq.s32.totalorder %s21, 11
      %p110 = por %p108, %p109
      %p112 = scmp.ne.s32.totalorder %s95, %s111
      %p113 = scmp.eq.s32.totalorder %s21, 0
      %p114 = por %p112, %p113
      %s116 = sadd.s32 %s115, 1
      %p119 = scmp.eq.s32.totalorder %s15, 11
      %p120 = scmp.ne.s32.totalorder %s115, %s117
      %p121 = scmp.eq.s32.totalorder %s15, 0
      %p122 = por %p120, %p121
      %p123 = scmp.ne.s32.totalorder %s115, %s117
      %p124 = scmp.eq.s32.totalorder %s20, 11
      %p125 = por %p123, %p124
      %p126 = scmp.ne.s32.totalorder %s117, %s118
      %p127 = scmp.eq.s32.totalorder %s20, 0
      %p128 = por %p126, %p127
      %p129 = scmp.ne.s32.totalorder %s117, %s118
      %p130 = scmp.eq.s32.totalorder %s21, 11
      %p131 = por %p129, %p130
      %p133 = scmp.ne.s32.totalorder %s118, %s132
      %p134 = scmp.eq.s32.totalorder %s21, 0
      %p135 = por %p133, %p134
      %s137 = sadd.s32 %s136, 1
      %p140 = scmp.eq.s32.totalorder %s15, 11
      %p141 = scmp.ne.s32.totalorder %s136, %s138
      %p142 = scmp.eq.s32.totalorder %s15, 0
      %p143 = por %p141, %p142
      %p144 = scmp.ne.s32.totalorder %s136, %s138
      %p145 = scmp.eq.s32.totalorder %s20, 11
      %p146 = por %p144, %p145
      %p147 = scmp.ne.s32.totalorder %s138, %s139
      %p148 = scmp.eq.s32.totalorder %s20, 0
      %p149 = por %p147, %p148
      %p150 = scmp.ne.s32.totalorder %s138, %s139
      %p151 = scmp.eq.s32.totalorder %s21, 11
      %p152 = por %p150, %p151
      %p154 = scmp.ne.s32.totalorder %s139, %s153
      %p155 = scmp.eq.s32.totalorder %s21, 0
      %p156 = por %p154, %p155
      %s157 = ssub.s32 %s22, %s34
      %p158 = scmp.eq.s32.totalorder %s157, 0
      %s160 = sadd.s32 %s159, 1
      %s161 = scalar_select %p158, %s159, %s160
      %p164 = pneg %p158
      %p165 = scmp.eq.s32.totalorder %s15, 11
      %p166 = por %p164, %p165
      %p167 = scmp.ne.s32.totalorder %s159, %s162
      %p168 = scmp.eq.s32.totalorder %s15, 0
      %p169 = por %p167, %p168
      %p170 = scmp.ne.s32.totalorder %s159, %s162
      %p171 = scmp.eq.s32.totalorder %s20, 11
      %p172 = por %p170, %p171
      %p173 = scmp.ne.s32.totalorder %s162, %s163
      %p174 = scmp.eq.s32.totalorder %s20, 0
      %p175 = por %p173, %p174
      %p176 = scmp.ne.s32.totalorder %s162, %s163
      %p177 = scmp.eq.s32.totalorder %s21, 11
      %p178 = por %p176, %p177
      %p180 = scmp.ne.s32.totalorder %s163, %s179
      %p181 = scmp.eq.s32.totalorder %s21, 0
      %p182 = por %p180, %p181
      %s184 = sadd.s32 %s183, 1
      %p187 = scmp.eq.s32.totalorder %s15, 11
      %p188 = scmp.ne.s32.totalorder %s183, %s185
      %p189 = scmp.eq.s32.totalorder %s15, 0
      %p190 = por %p188, %p189
      %p191 = scmp.ne.s32.totalorder %s183, %s185
      %p192 = scmp.eq.s32.totalorder %s20, 11
      %p193 = por %p191, %p192
      %p194 = scmp.ne.s32.totalorder %s185, %s186
      %p195 = scmp.eq.s32.totalorder %s20, 0
      %p196 = por %p194, %p195
      %p197 = scmp.ne.s32.totalorder %s185, %s186
      %p198 = scmp.eq.s32.totalorder %s21, 11
      %p199 = por %p197, %p198
      %p201 = scmp.ne.s32.totalorder %s186, %s200
      %p202 = scmp.eq.s32.totalorder %s21, 0
      %p203 = por %p201, %p202
      %s204 = ssub.s32 %s22, %s34
      %p205 = scmp.eq.s32.totalorder %s204, 0
      %s207 = sadd.s32 %s206, 1
      %s208 = scalar_select %p205, %s206, %s207
      %p211 = pneg %p205
      %p212 = scmp.eq.s32.totalorder %s15, 11
      %p213 = por %p211, %p212
      %p214 = scmp.ne.s32.totalorder %s206, %s209
      %p215 = scmp.eq.s32.totalorder %s15, 0
      %p216 = por %p214, %p215
      %p217 = scmp.ne.s32.totalorder %s206, %s209
      %p218 = scmp.eq.s32.totalorder %s20, 11
      %p219 = por %p217, %p218
      %p220 = scmp.ne.s32.totalorder %s209, %s210
      %p221 = scmp.eq.s32.totalorder %s20, 0
      %p222 = por %p220, %p221
      %p223 = scmp.ne.s32.totalorder %s209, %s210
      %p224 = scmp.eq.s32.totalorder %s21, 11
      %p225 = por %p223, %p224
      %p227 = scmp.ne.s32.totalorder %s210, %s226
      %p228 = scmp.eq.s32.totalorder %s21, 0
      %p229 = por %p227, %p228
      %s230 = ssub.s32 %s22, %s34
      %p231 = scmp.eq.s32.totalorder %s230, 0
      %s233 = sadd.s32 %s232, 1
      %s234 = scalar_select %p231, %s232, %s233
      %p237 = pneg %p231
      %p238 = scmp.eq.s32.totalorder %s15, 11
      %p239 = por %p237, %p238
      %p240 = scmp.ne.s32.totalorder %s232, %s235
      %p241 = scmp.eq.s32.totalorder %s15, 0
      %p242 = por %p240, %p241
      %p243 = scmp.ne.s32.totalorder %s232, %s235
      %p244 = scmp.eq.s32.totalorder %s20, 11
      %p245 = por %p243, %p244
      %p246 = scmp.ne.s32.totalorder %s235, %s236
      %p247 = scmp.eq.s32.totalorder %s20, 0
      %p248 = por %p246, %p247
      %p249 = scmp.ne.s32.totalorder %s235, %s236
      %p250 = scmp.eq.s32.totalorder %s21, 11
      %p251 = por %p249, %p250
      %p253 = scmp.ne.s32.totalorder %s236, %s252
      %p254 = scmp.eq.s32.totalorder %s21, 0
      %p255 = por %p253, %p254
      %p256 = scmp.le.s32.totalorder 1, %s15
      %p257 = scmp.lt.s32.totalorder %s15, 13
      %p258 = pnand %p256, %p257
      %p259 = pneg %p258
      // Predicated region
      $region9: #{_sage_forward_impl.5} parent=5 // pred_check
        _
      $region10: #{_sage_forward_impl.5} parent=5 // pred_check_branch
        %261 = sbr.rel (%p258) target = $region12
      $region11: #{_sage_forward_impl.5} parent=5 // pred_region
        %s262 = ssub.s32 %s15, 1
        // Predicated region
        $region13: #{_sage_forward_impl.5} parent=11 // pred_check
          %p263 = pneg %p128
        $region14: #{_sage_forward_impl.5} parent=11 // pred_check_branch
          %265 = sbr.rel (%p263) target = $region16
        $region15: #{_sage_forward_impl.5} parent=11 // pred_region
          _
        $region16: #{_sage_forward_impl.5} parent=11 // pred_fallthru
          _
        // Predicated region
        $region17: #{_sage_forward_impl.5} parent=11 // pred_check
          %p266 = pneg %p149
        $region18: #{_sage_forward_impl.5} parent=11 // pred_check_branch
          %268 = sbr.rel (%p266) target = $region20
        $region19: #{_sage_forward_impl.5} parent=11 // pred_region
          _
        $region20: #{_sage_forward_impl.5} parent=11 // pred_fallthru
          _
        // Predicated region
        $region21: #{_sage_forward_impl.5} parent=11 // pred_check
          %p269 = pneg %p196
        $region22: #{_sage_forward_impl.5} parent=11 // pred_check_branch
          %271 = sbr.rel (%p269) target = $region24
        $region23: #{_sage_forward_impl.5} parent=11 // pred_region
          _
        $region24: #{_sage_forward_impl.5} parent=11 // pred_fallthru
          _
      $region12: #{_sage_forward_impl.5} parent=5 // pred_fallthru
        _
      %p272 = scmp.lt.s32.totalorder %s15, 12
      // Predicated region
      $region25: #{_sage_forward_impl.5} parent=5 // pred_check
        %p273 = pneg %p272
      $region26: #{_sage_forward_impl.5} parent=5 // pred_check_branch
        %275 = sbr.rel (%p273) target = $region28
      $region27: #{_sage_forward_impl.5} parent=5 // pred_region
        // Predicated region
        $region29: #{_sage_forward_impl.5} parent=27 // pred_check
          %p276 = pneg %p49
        $region30: #{_sage_forward_impl.5} parent=27 // pred_check_branch
          %278 = sbr.rel (%p276) target = $region32
        $region31: #{_sage_forward_impl.5} parent=27 // pred_region
          %s279 = sand.u32 %s39, 1
          %s280 = sand.u32 %s39, 1
          %s281 = smul.addr %s280, 128
          %s282 = scalar_lea.vmem [#allocation3], %s281
          %s283 = smul.u32 16, %s22
          %s284 = smul.u32 2, %s23
          %s285 = smul.addr %s283, 6
          %s286 = sadd.s32 %s284, %s285
          %s287 = smul.addr %s286, 4
          %s288 = scalar_lea.vmem %s0, %s287
          // Predicated region
          $region33: #{_sage_forward_impl.5} parent=31 // pred_check
            _
          $region34: #{_sage_forward_impl.5} parent=31 // pred_check_branch
            %290 = sbr.rel (0) target = $region36
          $region35: #{_sage_forward_impl.5} parent=31 // pred_region
            // Predicated region
            $region37: #{_sage_forward_impl.5} parent=35 // pred_check
              _
            $region38: #{_sage_forward_impl.5} parent=35 // pred_check_branch
              %292 = sbr.rel (0) target = $region40
            $region39: #{_sage_forward_impl.5} parent=35 // pred_region
              // Predicated region
              $region52: #{_sage_forward_impl.5} parent=39 // pred_check
                _
              $region53: #{_sage_forward_impl.5} parent=39 // pred_check_branch
                %337 = sbr.rel (0) target = $region55
              $region54: #{_sage_forward_impl.5} parent=39 // pred_region
                loop: start=0, step=1, limit=1
                $region56: #{_sage_forward_impl.5} parent=54 // loop_pre_header
                  _
                $region57: #{_sage_forward_impl.5} parent=54 // loop_header
                  %s339 = sphi 0, %s343
                  %p340 = scmp.ge.s32.totalorder %s339, 1
                  %s344 = sphi %s288, %s288
                  %s345 = sphi %s282, %s282
                $region58: #{_sage_forward_impl.5} parent=54 // loop_header_branch
                  %342 = sbr.rel (%p340) target = $region62
                $region59: #{_sage_forward_impl.5} parent=54 // loop_body
                  %v346 = vld [vmem:[%s344] sm:$0xff]
                  %347 = vst [vmem:[%s345] sm:$0xff] %v346
                  %v348 = vld [vmem:[%s344 + $0x18] sm:$0xff]
                  %349 = vst [vmem:[%s345 + $0x8] sm:$0xff] %v348
                  %v350 = vld [vmem:[%s344 + $0x30] sm:$0xff]
                  %351 = vst [vmem:[%s345 + $0x10] sm:$0xff] %v350
                  %v352 = vld [vmem:[%s344 + $0x48] sm:$0xff]
                  %353 = vst [vmem:[%s345 + $0x18] sm:$0xff] %v352
                  %v354 = vld [vmem:[%s344 + $0x60] sm:$0xff]
                  %355 = vst [vmem:[%s345 + $0x20] sm:$0xff] %v354
                  %v356 = vld [vmem:[%s344 + $0x78] sm:$0xff]
                  %357 = vst [vmem:[%s345 + $0x28] sm:$0xff] %v356
                  %v358 = vld [vmem:[%s344 + $0x90] sm:$0xff]
                  %359 = vst [vmem:[%s345 + $0x30] sm:$0xff] %v358
                  %v360 = vld [vmem:[%s344 + $0xa8] sm:$0xff]
                  %361 = vst [vmem:[%s345 + $0x38] sm:$0xff] %v360
                  %v362 = vld [vmem:[%s344 + $0xc0] sm:$0xff]
                  %363 = vst [vmem:[%s345 + $0x40] sm:$0xff] %v362
                  %v364 = vld [vmem:[%s344 + $0xd8] sm:$0xff]
                  %365 = vst [vmem:[%s345 + $0x48] sm:$0xff] %v364
                  %v366 = vld [vmem:[%s344 + $0xf0] sm:$0xff]
                  %367 = vst [vmem:[%s345 + $0x50] sm:$0xff] %v366
                  %v368 = vld [vmem:[%s344 + $0x108] sm:$0xff]
                  %369 = vst [vmem:[%s345 + $0x58] sm:$0xff] %v368
                  %v370 = vld [vmem:[%s344 + $0x120] sm:$0xff]
                  %371 = vst [vmem:[%s345 + $0x60] sm:$0xff] %v370
                  %v372 = vld [vmem:[%s344 + $0x138] sm:$0xff]
                  %373 = vst [vmem:[%s345 + $0x68] sm:$0xff] %v372
                  %v374 = vld [vmem:[%s344 + $0x150] sm:$0xff]
                  %375 = vst [vmem:[%s345 + $0x70] sm:$0xff] %v374
                  %v376 = vld [vmem:[%s344 + $0x168] sm:$0xff]
                  %377 = vst [vmem:[%s345 + $0x78] sm:$0xff] %v376
                $region60: #{_sage_forward_impl.5} parent=54 // loop_footer
                  %s343 = sadd.s32 1, %s339
                $region61: #{_sage_forward_impl.5} parent=54 // loop_footer_branch
                  %338 = sbr.rel target = $region57
                $region62: #{_sage_forward_impl.5} parent=54 // loop_exit
                  _
              $region55: #{_sage_forward_impl.5} parent=39 // pred_fallthru
                _
              // Predicated region
              $region63: #{_sage_forward_impl.5} parent=39 // pred_check
                _
              $region64: #{_sage_forward_impl.5} parent=39 // pred_check_branch
                %379 = sbr.rel target = $region66
              $region65: #{_sage_forward_impl.5} parent=39 // pred_region
                _
              $region66: #{_sage_forward_impl.5} parent=39 // pred_fallthru
                _
            $region40: #{_sage_forward_impl.5} parent=35 // pred_fallthru
              _
            // Predicated region
            $region41: #{_sage_forward_impl.5} parent=35 // pred_check
              _
            $region42: #{_sage_forward_impl.5} parent=35 // pred_check_branch
              %294 = sbr.rel target = $region44
            $region43: #{_sage_forward_impl.5} parent=35 // pred_region
              loop: start=0, step=1, limit=1
              $region45: #{_sage_forward_impl.5} parent=43 // loop_pre_header
                _
              $region46: #{_sage_forward_impl.5} parent=43 // loop_header
                %s297 = sphi 0, %s301
                %p298 = scmp.ge.s32.totalorder %s297, 1
                %s302 = sphi %s288, %s288
                %s303 = sphi %s282, %s282
              $region47: #{_sage_forward_impl.5} parent=43 // loop_header_branch
                %300 = sbr.rel (%p298) target = $region51
              $region48: #{_sage_forward_impl.5} parent=43 // loop_body
                %v304 = vld [vmem:[%s302] sm:$0xff]
                %305 = vst [vmem:[%s303] sm:$0xff] %v304
                %v306 = vld [vmem:[%s302 + $0x18] sm:$0xff]
                %307 = vst [vmem:[%s303 + $0x8] sm:$0xff] %v306
                %v308 = vld [vmem:[%s302 + $0x30] sm:$0xff]
                %309 = vst [vmem:[%s303 + $0x10] sm:$0xff] %v308
                %v310 = vld [vmem:[%s302 + $0x48] sm:$0xff]
                %311 = vst [vmem:[%s303 + $0x18] sm:$0xff] %v310
                %v312 = vld [vmem:[%s302 + $0x60] sm:$0xff]
                %313 = vst [vmem:[%s303 + $0x20] sm:$0xff] %v312
                %v314 = vld [vmem:[%s302 + $0x78] sm:$0xff]
                %315 = vst [vmem:[%s303 + $0x28] sm:$0xff] %v314
                %v316 = vld [vmem:[%s302 + $0x90] sm:$0xff]
                %317 = vst [vmem:[%s303 + $0x30] sm:$0xff] %v316
                %v318 = vld [vmem:[%s302 + $0xa8] sm:$0xff]
                %319 = vst [vmem:[%s303 + $0x38] sm:$0xff] %v318
                %v320 = vld [vmem:[%s302 + $0xc0] sm:$0xff]
                %321 = vst [vmem:[%s303 + $0x40] sm:$0xff] %v320
                %v322 = vld [vmem:[%s302 + $0xd8] sm:$0xff]
                %323 = vst [vmem:[%s303 + $0x48] sm:$0xff] %v322
                %v324 = vld [vmem:[%s302 + $0xf0] sm:$0xff]
                %325 = vst [vmem:[%s303 + $0x50] sm:$0xff] %v324
                %v326 = vld [vmem:[%s302 + $0x108] sm:$0xff]
                %327 = vst [vmem:[%s303 + $0x58] sm:$0xff] %v326
                %v328 = vld [vmem:[%s302 + $0x120] sm:$0xff]
                %329 = vst [vmem:[%s303 + $0x60] sm:$0xff] %v328
                %v330 = vld [vmem:[%s302 + $0x138] sm:$0xff]
                %331 = vst [vmem:[%s303 + $0x68] sm:$0xff] %v330
                %v332 = vld [vmem:[%s302 + $0x150] sm:$0xff]
                %333 = vst [vmem:[%s303 + $0x70] sm:$0xff] %v332
                %v334 = vld [vmem:[%s302 + $0x168] sm:$0xff]
                %335 = vst [vmem:[%s303 + $0x78] sm:$0xff] %v334
              $region49: #{_sage_forward_impl.5} parent=43 // loop_footer
                %s301 = sadd.s32 1, %s297
              $region50: #{_sage_forward_impl.5} parent=43 // loop_footer_branch
                %296 = sbr.rel target = $region46
              $region51: #{_sage_forward_impl.5} parent=43 // loop_exit
                _
            $region44: #{_sage_forward_impl.5} parent=35 // pred_fallthru
              _
          $region36: #{_sage_forward_impl.5} parent=31 // pred_fallthru
            _
          %380 = vnop
        $region32: #{_sage_forward_impl.5} parent=27 // pred_fallthru
          _
        // Predicated region
        $region67: #{_sage_forward_impl.5} parent=27 // pred_check
          %p381 = pneg %p75
        $region68: #{_sage_forward_impl.5} parent=27 // pred_check_branch
          %383 = sbr.rel (%p381) target = $region70
        $region69: #{_sage_forward_impl.5} parent=27 // pred_region
          %s384 = smul.u32 32, %s23
          %p385 = scmp.lt.s32.totalorder %s384, 95
          %s386 = scalar_select %p385, %s384, 95
          %s387 = smul.addr %s386, 2
          %s388 = smul.addr %s387, 4
          %s389 = scalar_lea.vmem %s1, %s388
          %s390 = smul.u32 32, %s23
        $region70: #{_sage_forward_impl.5} parent=27 // pred_fallthru
          _
        // Predicated region
        $region71: #{_sage_forward_impl.5} parent=27 // pred_check
          %p391 = pneg %p101
        $region72: #{_sage_forward_impl.5} parent=27 // pred_check_branch
          %393 = sbr.rel (%p391) target = $region74
        $region73: #{_sage_forward_impl.5} parent=27 // pred_region
          %s394 = smul.u32 16, %s22
          %p395 = scmp.lt.s32.totalorder %s394, 63
          %s396 = scalar_select %p395, %s394, 63
          %s397 = smul.addr %s396, 8
          %s398 = scalar_lea.vmem %s2, %s397
          %s399 = smul.u32 16, %s22
        $region74: #{_sage_forward_impl.5} parent=27 // pred_fallthru
          _
        // Predicated region
        $region75: #{_sage_forward_impl.5} parent=27 // pred_check
          %p400 = pneg %p169
        $region76: #{_sage_forward_impl.5} parent=27 // pred_check_branch
          %402 = sbr.rel (%p400) target = $region78
        $region77: #{_sage_forward_impl.5} parent=27 // pred_region
          %s403 = smul.u32 16, %s22
          %p404 = scmp.lt.s32.totalorder %s403, 63
          %s405 = scalar_select %p404, %s403, 63
          %s406 = smul.addr %s405, 2
          %s407 = smul.addr %s406, 4
          %s408 = scalar_lea.vmem %s5, %s407
          %s409 = smul.u32 16, %s22
        $region78: #{_sage_forward_impl.5} parent=27 // pred_fallthru
          _
      $region28: #{_sage_forward_impl.5} parent=5 // pred_fallthru
        _
      %p410 = scmp.le.s32.totalorder 1, %s15
      %p411 = scmp.lt.s32.totalorder %s15, 13
      %p412 = pnand %p410, %p411
      %p413 = pneg %p412
      // Predicated region
      $region79: #{_sage_forward_impl.5} parent=5 // pred_check
        _
      $region80: #{_sage_forward_impl.5} parent=5 // pred_check_branch
        %415 = sbr.rel (%p412) target = $region82
      $region81: #{_sage_forward_impl.5} parent=5 // pred_region
        %s416 = ssub.s32 %s15, 1
        %s417 = sand.u32 %s42, 1
        %s418 = sand.u32 %s42, 1
        %s419 = smul.addr %s418, 128
        %s420 = scalar_lea.vmem [#allocation3], %s419
        // Predicated region
        $region83: #{_sage_forward_impl.5} parent=81 // pred_check
          %p421 = pneg %p55
        $region84: #{_sage_forward_impl.5} parent=81 // pred_check_branch
          %423 = sbr.rel (%p421) target = $region86
        $region85: #{_sage_forward_impl.5} parent=81 // pred_region
          _
        $region86: #{_sage_forward_impl.5} parent=81 // pred_fallthru
          _
        %s424 = sand.u32 %s42, 1
        %s425 = sand.u32 %s42, 1
        %s426 = smul.addr %s425, 128
        %s427 = scalar_lea.vmem [#allocation3], %s426
        %p428 = pneg %p55
        %p429 = pneg %p52
        %s430 = smul.u32 32, %s25
        %p431 = scmp.lt.s32.totalorder %s430, 95
        %s432 = scalar_select %p431, %s430, 95
        %s433 = smul.addr %s432, 2
        %s434 = smul.addr %s433, 4
        %s435 = scalar_lea.vmem %s1, %s434
        %p436 = pneg %p81
        %p437 = pneg %p78
        %s438 = smul.u32 16, %s24
        %p439 = scmp.lt.s32.totalorder %s438, 63
        %s440 = scalar_select %p439, %s438, 63
        %s441 = smul.addr %s440, 8
        %s442 = scalar_lea.vmem %s2, %s441
        %p443 = pneg %p107
        %p444 = pneg %p104
        %p445 = pneg %p128
        %p446 = pneg %p125
        %p447 = pneg %p149
        %p448 = pneg %p146
        %s449 = smul.u32 16, %s24
        %p450 = scmp.lt.s32.totalorder %s449, 63
        %s451 = scalar_select %p450, %s449, 63
        %s452 = smul.addr %s451, 2
        %s453 = smul.addr %s452, 4
        %s454 = scalar_lea.vmem %s5, %s453
        %p455 = pneg %p175
        %p456 = pneg %p172
        %p457 = pneg %p196
        %p458 = pneg %p193
        %p459 = pneg %p222
        %p460 = pneg %p219
        %s461 = smul.u32 16, %s24
        %p462 = scmp.lt.s32.totalorder %s461, 63
        %s463 = scalar_select %p462, %s461, 63
        %s464 = smul.addr %s463, 2
        %s465 = smul.addr %s464, 8
        %s466 = scalar_lea.vmem %s7, %s465
        %p467 = pneg %p248
        %p468 = pneg %p245
        %s469 = smul.u32 16, %s24
        %p470 = scmp.lt.s32.totalorder %s469, 63
        %s471 = scalar_select %p470, %s469, 63
        %s472 = smul.addr %s471, 2
        %s473 = smul.addr %s472, 4
        %s474 = scalar_lea.vmem %s8, %s473
        %s475 = smul.u32 16, %s24
        %s476 = smul.u32 2, %s25
        %s477 = smul.u32 32, %s25
        %p478 = scmp.lt.s32.totalorder %s477, 95
        %s479 = scalar_select %p478, %s477, 95
        %s480 = smul.addr %s479, 2
        %s481 = smul.addr %s480, 4
        %s482 = scalar_lea.vmem %s1, %s481
        %s483 = smul.u32 32, %s25
        %s484 = smul.u32 16, %s24
        %p485 = scmp.lt.s32.totalorder %s484, 63
        %s486 = scalar_select %p485, %s484, 63
        %s487 = smul.addr %s486, 8
        %s488 = scalar_lea.vmem %s2, %s487
        %s489 = smul.u32 16, %s24
        %s490 = smul.u32 16, %s24
        %p491 = scmp.lt.s32.totalorder %s490, 63
        %s492 = scalar_select %p491, %s490, 63
        %s493 = smul.addr %s492, 2
        %s494 = smul.addr %s493, 4
        %s495 = scalar_lea.vmem %s5, %s494
        %s496 = smul.u32 16, %s24
        %s497 = smul.u32 16, %s24
        %p498 = scmp.lt.s32.totalorder %s497, 63
        %s499 = scalar_select %p498, %s497, 63
        %s500 = smul.addr %s499, 2
        %s501 = smul.addr %s500, 8
        %s502 = scalar_lea.vmem %s7, %s501
        %s503 = smul.u32 16, %s24
        %s504 = smul.u32 16, %s24
        %p505 = scmp.lt.s32.totalorder %s504, 63
        %s506 = scalar_select %p505, %s504, 63
        %s507 = smul.addr %s506, 2
        %s508 = smul.addr %s507, 4
        %s509 = scalar_lea.vmem %s8, %s508
        %s510 = smul.u32 16, %s24
        %p511 = scmp.eq.s32.totalorder %s25, 0
        // Predicated region
        $region87: #{_sage_forward_impl.5} parent=81 // pred_check
          %p512 = pneg %p511
        $region88: #{_sage_forward_impl.5} parent=81 // pred_check_branch
          %514 = sbr.rel (%p512) target = $region90
        $region89: #{_sage_forward_impl.5} parent=81 // pred_region
          %515 = vst [vmem:[#allocation2] sm:$0xff] 0.0
          %516 = vst [vmem:[#allocation2 + $0x8] sm:$0xff] 0.0
          %517 = vst [vmem:[#allocation2 + $0x10] sm:$0xff] 0.0
          %518 = vst [vmem:[#allocation2 + $0x18] sm:$0xff] 0.0
          %519 = vst [vmem:[#allocation2 + $0x20] sm:$0xff] 0.0
          %520 = vst [vmem:[#allocation2 + $0x28] sm:$0xff] 0.0
          %521 = vst [vmem:[#allocation2 + $0x30] sm:$0xff] 0.0
          %522 = vst [vmem:[#allocation2 + $0x38] sm:$0xff] 0.0
          %523 = vst [vmem:[#allocation2 + $0x40] sm:$0xff] 0.0
          %524 = vst [vmem:[#allocation2 + $0x48] sm:$0xff] 0.0
          %525 = vst [vmem:[#allocation2 + $0x50] sm:$0xff] 0.0
          %526 = vst [vmem:[#allocation2 + $0x58] sm:$0xff] 0.0
          %527 = vst [vmem:[#allocation2 + $0x60] sm:$0xff] 0.0
          %528 = vst [vmem:[#allocation2 + $0x68] sm:$0xff] 0.0
          %529 = vst [vmem:[#allocation2 + $0x70] sm:$0xff] 0.0
          %530 = vst [vmem:[#allocation2 + $0x78] sm:$0xff] 0.0
          %531 = vst [vmem:[#allocation2 + $0x80] sm:$0xff] 0.0
          %532 = vst [vmem:[#allocation2 + $0x88] sm:$0xff] 0.0
          %533 = vst [vmem:[#allocation2 + $0x90] sm:$0xff] 0.0
          %534 = vst [vmem:[#allocation2 + $0x98] sm:$0xff] 0.0
          %535 = vst [vmem:[#allocation2 + $0xa0] sm:$0xff] 0.0
          %536 = vst [vmem:[#allocation2 + $0xa8] sm:$0xff] 0.0
          %537 = vst [vmem:[#allocation2 + $0xb0] sm:$0xff] 0.0
          %538 = vst [vmem:[#allocation2 + $0xb8] sm:$0xff] 0.0
          %539 = vst [vmem:[#allocation2 + $0xc0] sm:$0xff] 0.0
          %540 = vst [vmem:[#allocation2 + $0xc8] sm:$0xff] 0.0
          %541 = vst [vmem:[#allocation2 + $0xd0] sm:$0xff] 0.0
          %542 = vst [vmem:[#allocation2 + $0xd8] sm:$0xff] 0.0
          %543 = vst [vmem:[#allocation2 + $0xe0] sm:$0xff] 0.0
          %544 = vst [vmem:[#allocation2 + $0xe8] sm:$0xff] 0.0
          %545 = vst [vmem:[#allocation2 + $0xf0] sm:$0xff] 0.0
          %546 = vst [vmem:[#allocation2 + $0xf8] sm:$0xff] 0.0
        $region90: #{_sage_forward_impl.5} parent=81 // pred_fallthru
          _
        %v547 = vld [vmem:[#allocation2] sm:$0xff]
        %v548 = vld [vmem:[#allocation2 + $0x8] sm:$0xff]
        %v549 = vld [vmem:[#allocation2 + $0x10] sm:$0xff]
        %v550 = vld [vmem:[#allocation2 + $0x18] sm:$0xff]
        %v551 = vld [vmem:[#allocation2 + $0x20] sm:$0xff]
        %v552 = vld [vmem:[#allocation2 + $0x28] sm:$0xff]
        %v553 = vld [vmem:[#allocation2 + $0x30] sm:$0xff]
        %v554 = vld [vmem:[#allocation2 + $0x38] sm:$0xff]
        %v555 = vld [vmem:[#allocation2 + $0x40] sm:$0xff]
        %v556 = vld [vmem:[#allocation2 + $0x48] sm:$0xff]
        %v557 = vld [vmem:[#allocation2 + $0x50] sm:$0xff]
        %v558 = vld [vmem:[#allocation2 + $0x58] sm:$0xff]
        %v559 = vld [vmem:[#allocation2 + $0x60] sm:$0xff]
        %v560 = vld [vmem:[#allocation2 + $0x68] sm:$0xff]
        %v561 = vld [vmem:[#allocation2 + $0x70] sm:$0xff]
        %v562 = vld [vmem:[#allocation2 + $0x78] sm:$0xff]
        %v563 = vld [vmem:[#allocation2 + $0x80] sm:$0xff]
        %v564 = vld [vmem:[#allocation2 + $0x88] sm:$0xff]
        %v565 = vld [vmem:[#allocation2 + $0x90] sm:$0xff]
        %v566 = vld [vmem:[#allocation2 + $0x98] sm:$0xff]
        %v567 = vld [vmem:[#allocation2 + $0xa0] sm:$0xff]
        %v568 = vld [vmem:[#allocation2 + $0xa8] sm:$0xff]
        %v569 = vld [vmem:[#allocation2 + $0xb0] sm:$0xff]
        %v570 = vld [vmem:[#allocation2 + $0xb8] sm:$0xff]
        %v571 = vld [vmem:[#allocation2 + $0xc0] sm:$0xff]
        %v572 = vld [vmem:[#allocation2 + $0xc8] sm:$0xff]
        %v573 = vld [vmem:[#allocation2 + $0xd0] sm:$0xff]
        %v574 = vld [vmem:[#allocation2 + $0xd8] sm:$0xff]
        %v575 = vld [vmem:[#allocation2 + $0xe0] sm:$0xff]
        %v576 = vld [vmem:[#allocation2 + $0xe8] sm:$0xff]
        %v577 = vld [vmem:[#allocation2 + $0xf0] sm:$0xff]
        %v578 = vld [vmem:[#allocation2 + $0xf8] sm:$0xff]
        %v579 = vld [vmem:[%s420] sm:$0xff]
        %v580 = vld [vmem:[%s420 + $0x8] sm:$0xff]
        %v581 = vld [vmem:[%s420 + $0x10] sm:$0xff]
        %v582 = vld [vmem:[%s420 + $0x18] sm:$0xff]
        %v583 = vld [vmem:[%s420 + $0x20] sm:$0xff]
        %v584 = vld [vmem:[%s420 + $0x28] sm:$0xff]
        %v585 = vld [vmem:[%s420 + $0x30] sm:$0xff]
        %v586 = vld [vmem:[%s420 + $0x38] sm:$0xff]
        %v587 = vld [vmem:[%s420 + $0x40] sm:$0xff]
        %v588 = vld [vmem:[%s420 + $0x48] sm:$0xff]
        %v589 = vld [vmem:[%s420 + $0x50] sm:$0xff]
        %v590 = vld [vmem:[%s420 + $0x58] sm:$0xff]
        %v591 = vld [vmem:[%s420 + $0x60] sm:$0xff]
        %v592 = vld [vmem:[%s420 + $0x68] sm:$0xff]
        %v593 = vld [vmem:[%s420 + $0x70] sm:$0xff]
        %v594 = vld [vmem:[%s420 + $0x78] sm:$0xff]
        %v595 = vld [vmem:[%s482] sm:$0xff]
        %v596 = vld [vmem:[%s482 + $0x8] sm:$0xff]
        %v597 = vld [vmem:[%s482 + $0x10] sm:$0xff]
        %v598 = vld [vmem:[%s482 + $0x18] sm:$0xff]
        %v599 = vld [vmem:[%s482 + $0x20] sm:$0xff]
        %v600 = vld [vmem:[%s482 + $0x28] sm:$0xff]
        %v601 = vld [vmem:[%s482 + $0x30] sm:$0xff]
        %v602 = vld [vmem:[%s482 + $0x38] sm:$0xff]
        %v603 = vld [vmem:[%s482 + $0x40] sm:$0xff]
        %v604 = vld [vmem:[%s482 + $0x48] sm:$0xff]
        %v605 = vld [vmem:[%s482 + $0x50] sm:$0xff]
        %v606 = vld [vmem:[%s482 + $0x58] sm:$0xff]
        %v607 = vld [vmem:[%s482 + $0x60] sm:$0xff]
        %v608 = vld [vmem:[%s482 + $0x68] sm:$0xff]
        %v609 = vld [vmem:[%s482 + $0x70] sm:$0xff]
        %v610 = vld [vmem:[%s482 + $0x78] sm:$0xff]
        %v611 = vld [vmem:[%s482 + $0x80] sm:$0xff]
        %v612 = vld [vmem:[%s482 + $0x88] sm:$0xff]
        %v613 = vld [vmem:[%s482 + $0x90] sm:$0xff]
        %v614 = vld [vmem:[%s482 + $0x98] sm:$0xff]
        %v615 = vld [vmem:[%s482 + $0xa0] sm:$0xff]
        %v616 = vld [vmem:[%s482 + $0xa8] sm:$0xff]
        %v617 = vld [vmem:[%s482 + $0xb0] sm:$0xff]
        %v618 = vld [vmem:[%s482 + $0xb8] sm:$0xff]
        %v619 = vld [vmem:[%s482 + $0xc0] sm:$0xff]
        %v620 = vld [vmem:[%s482 + $0xc8] sm:$0xff]
        %v621 = vld [vmem:[%s482 + $0xd0] sm:$0xff]
        %v622 = vld [vmem:[%s482 + $0xd8] sm:$0xff]
        %v623 = vld [vmem:[%s482 + $0xe0] sm:$0xff]
        %v624 = vld [vmem:[%s482 + $0xe8] sm:$0xff]
        %v625 = vld [vmem:[%s482 + $0xf0] sm:$0xff]
        %v626 = vld [vmem:[%s482 + $0xf8] sm:$0xff]
        %v643 = vunpack.c.l.b16 %v579
        %v644 = vunpack.c.h.b16 %v579
        %v645 = vunpack.c.l.b16 %v580
        %v646 = vunpack.c.h.b16 %v580
        %v647 = vunpack.c.l.b16 %v581
        %v648 = vunpack.c.h.b16 %v581
        %v649 = vunpack.c.l.b16 %v582
        %v650 = vunpack.c.h.b16 %v582
        %v651 = vunpack.c.l.b16 %v583
        %v652 = vunpack.c.h.b16 %v583
        %v653 = vunpack.c.l.b16 %v584
        %v654 = vunpack.c.h.b16 %v584
        %v655 = vunpack.c.l.b16 %v585
        %v656 = vunpack.c.h.b16 %v585
        %v657 = vunpack.c.l.b16 %v586
        %v658 = vunpack.c.h.b16 %v586
        %v659 = vunpack.c.l.b16 %v587
        %v660 = vunpack.c.h.b16 %v587
        %v661 = vunpack.c.l.b16 %v588
        %v662 = vunpack.c.h.b16 %v588
        %v663 = vunpack.c.l.b16 %v589
        %v664 = vunpack.c.h.b16 %v589
        %v665 = vunpack.c.l.b16 %v590
        %v666 = vunpack.c.h.b16 %v590
        %v667 = vunpack.c.l.b16 %v591
        %v668 = vunpack.c.h.b16 %v591
        %v669 = vunpack.c.l.b16 %v592
        %v670 = vunpack.c.h.b16 %v592
        %v671 = vunpack.c.l.b16 %v593
        %v672 = vunpack.c.h.b16 %v593
        %v673 = vunpack.c.l.b16 %v594
        %v674 = vunpack.c.h.b16 %v594
        %v675 = vpack.c.b16 %v645, %v643
        %v676 = vpack.c.b16 %v646, %v644
        %v677 = vpack.c.b16 %v649, %v647
        %v678 = vpack.c.b16 %v650, %v648
        %v679 = vpack.c.b16 %v653, %v651
        %v680 = vpack.c.b16 %v654, %v652
        %v681 = vpack.c.b16 %v657, %v655
        %v682 = vpack.c.b16 %v658, %v656
        %v683 = vpack.c.b16 %v661, %v659
        %v684 = vpack.c.b16 %v662, %v660
        %v685 = vpack.c.b16 %v665, %v663
        %v686 = vpack.c.b16 %v666, %v664
        %v687 = vpack.c.b16 %v669, %v667
        %v688 = vpack.c.b16 %v670, %v668
        %v689 = vpack.c.b16 %v673, %v671
        %v690 = vpack.c.b16 %v674, %v672
        %v739 = vunpack.c.l.b16 %v595
        %v740 = vunpack.c.h.b16 %v595
        %v741 = vunpack.c.l.b16 %v596
        %v742 = vunpack.c.h.b16 %v596
        %v743 = vunpack.c.l.b16 %v597
        %v744 = vunpack.c.h.b16 %v597
        %v745 = vunpack.c.l.b16 %v598
        %v746 = vunpack.c.h.b16 %v598
        %v747 = vunpack.c.l.b16 %v599
        %v748 = vunpack.c.h.b16 %v599
        %v749 = vunpack.c.l.b16 %v600
        %v750 = vunpack.c.h.b16 %v600
        %v751 = vunpack.c.l.b16 %v601
        %v752 = vunpack.c.h.b16 %v601
        %v753 = vunpack.c.l.b16 %v602
        %v754 = vunpack.c.h.b16 %v602
        %v755 = vunpack.c.l.b16 %v603
        %v756 = vunpack.c.h.b16 %v603
        %v757 = vunpack.c.l.b16 %v604
        %v758 = vunpack.c.h.b16 %v604
        %v759 = vunpack.c.l.b16 %v605
        %v760 = vunpack.c.h.b16 %v605
        %v761 = vunpack.c.l.b16 %v606
        %v762 = vunpack.c.h.b16 %v606
        %v763 = vunpack.c.l.b16 %v607
        %v764 = vunpack.c.h.b16 %v607
        %v765 = vunpack.c.l.b16 %v608
        %v766 = vunpack.c.h.b16 %v608
        %v767 = vunpack.c.l.b16 %v609
        %v768 = vunpack.c.h.b16 %v609
        %v769 = vunpack.c.l.b16 %v610
        %v770 = vunpack.c.h.b16 %v610
        %v771 = vunpack.c.l.b16 %v611
        %v772 = vunpack.c.h.b16 %v611
        %v773 = vunpack.c.l.b16 %v612
        %v774 = vunpack.c.h.b16 %v612
        %v775 = vunpack.c.l.b16 %v613
        %v776 = vunpack.c.h.b16 %v613
        %v777 = vunpack.c.l.b16 %v614
        %v778 = vunpack.c.h.b16 %v614
        %v779 = vunpack.c.l.b16 %v615
        %v780 = vunpack.c.h.b16 %v615
        %v781 = vunpack.c.l.b16 %v616
        %v782 = vunpack.c.h.b16 %v616
        %v783 = vunpack.c.l.b16 %v617
        %v784 = vunpack.c.h.b16 %v617
        %v785 = vunpack.c.l.b16 %v618
        %v786 = vunpack.c.h.b16 %v618
        %v787 = vunpack.c.l.b16 %v619
        %v788 = vunpack.c.h.b16 %v619
        %v789 = vunpack.c.l.b16 %v620
        %v790 = vunpack.c.h.b16 %v620
        %v791 = vunpack.c.l.b16 %v621
        %v792 = vunpack.c.h.b16 %v621
        %v793 = vunpack.c.l.b16 %v622
        %v794 = vunpack.c.h.b16 %v622
        %v795 = vunpack.c.l.b16 %v623
        %v796 = vunpack.c.h.b16 %v623
        %v797 = vunpack.c.l.b16 %v624
        %v798 = vunpack.c.h.b16 %v624
        %v799 = vunpack.c.l.b16 %v625
        %v800 = vunpack.c.h.b16 %v625
        %v801 = vunpack.c.l.b16 %v626
        %v802 = vunpack.c.h.b16 %v626
        %v803 = vpack.c.b16 %v741, %v739
        %v804 = vpack.c.b16 %v742, %v740
        %v805 = vpack.c.b16 %v745, %v743
        %v806 = vpack.c.b16 %v746, %v744
        %v807 = vpack.c.b16 %v749, %v747
        %v808 = vpack.c.b16 %v750, %v748
        %v809 = vpack.c.b16 %v753, %v751
        %v810 = vpack.c.b16 %v754, %v752
        %v811 = vpack.c.b16 %v757, %v755
        %v812 = vpack.c.b16 %v758, %v756
        %v813 = vpack.c.b16 %v761, %v759
        %v814 = vpack.c.b16 %v762, %v760
        %v815 = vpack.c.b16 %v765, %v763
        %v816 = vpack.c.b16 %v766, %v764
        %v817 = vpack.c.b16 %v769, %v767
        %v818 = vpack.c.b16 %v770, %v768
        %v819 = vpack.c.b16 %v773, %v771
        %v820 = vpack.c.b16 %v774, %v772
        %v821 = vpack.c.b16 %v777, %v775
        %v822 = vpack.c.b16 %v778, %v776
        %v823 = vpack.c.b16 %v781, %v779
        %v824 = vpack.c.b16 %v782, %v780
        %v825 = vpack.c.b16 %v785, %v783
        %v826 = vpack.c.b16 %v786, %v784
        %v827 = vpack.c.b16 %v789, %v787
        %v828 = vpack.c.b16 %v790, %v788
        %v829 = vpack.c.b16 %v793, %v791
        %v830 = vpack.c.b16 %v794, %v792
        %v831 = vpack.c.b16 %v797, %v795
        %v832 = vpack.c.b16 %v798, %v796
        %v833 = vpack.c.b16 %v801, %v799
        %v834 = vpack.c.b16 %v802, %v800
        %867 = vmatprep.subr.bf16.mxu0 %v804
        %868 = vmatpush1.bf16.msra.mxu0 %v803
        %869 = vmatprep.subr.bf16.mxu0 %v806
        %870 = vmatpush1.bf16.msra.mxu0 %v805
        %871 = vmatprep.subr.bf16.mxu0 %v808
        %872 = vmatpush1.bf16.msra.mxu0 %v807
        %873 = vmatprep.subr.bf16.mxu0 %v810
        %874 = vmatpush1.bf16.msra.mxu0 %v809
        %875 = vmatprep.subr.bf16.mxu0 %v812
        %876 = vmatpush1.bf16.msra.mxu0 %v811
        %877 = vmatprep.subr.bf16.mxu0 %v814
        %878 = vmatpush1.bf16.msra.mxu0 %v813
        %879 = vmatprep.subr.bf16.mxu0 %v816
        %880 = vmatpush1.bf16.msra.mxu0 %v815
        %881 = vmatprep.subr.bf16.mxu0 %v818
        %882 = vmatpush1.bf16.msra.mxu0 %v817
        %883 = vmatprep.subr.bf16.mxu0 %v820
        %884 = vmatpush1.bf16.msra.mxu0 %v819
        %885 = vmatprep.subr.bf16.mxu0 %v822
        %886 = vmatpush1.bf16.msra.mxu0 %v821
        %887 = vmatprep.subr.bf16.mxu0 %v824
        %888 = vmatpush1.bf16.msra.mxu0 %v823
        %889 = vmatprep.subr.bf16.mxu0 %v826
        %890 = vmatpush1.bf16.msra.mxu0 %v825
        %891 = vmatprep.subr.bf16.mxu0 %v828
        %892 = vmatpush1.bf16.msra.mxu0 %v827
        %893 = vmatprep.subr.bf16.mxu0 %v830
        %894 = vmatpush1.bf16.msra.mxu0 %v829
        %895 = vmatprep.subr.bf16.mxu0 %v832
        %896 = vmatpush1.bf16.msra.mxu0 %v831
        %897 = vmatprep.subr.bf16.mxu0 %v834
        %898 = vmatpush1.bf16.msra.mxu0 %v833
        %899 = vmatprep.mubr.bf16.mxu0 %v676
        %900 = vmatmul.mubr.bf16.gmra.mrb[0].mxu0 %v675
        %v901 = vpop.f32.mrb[0].mxu0
        %v902 = vadd.f32 0.0, %v901
        %v903 = vpop.f32.mrb[0].mxu0
        %v904 = vadd.f32 0.0, %v903
        %v905 = vpop.f32.mrb[0].mxu0
        %v906 = vadd.f32 0.0, %v905
        %v907 = vpop.f32.mrb[0].mxu0
        %v908 = vadd.f32 0.0, %v907
        %909 = vmatprep.mubr.bf16.mxu0 %v678
        %910 = vmatmul.mubr.bf16.gmra.mrb[0].mxu0 %v677
        %v911 = vpop.f32.mrb[0].mxu0
        %v912 = vadd.f32 0.0, %v911
        %v913 = vpop.f32.mrb[0].mxu0
        %v914 = vadd.f32 0.0, %v913
        %v915 = vpop.f32.mrb[0].mxu0
        %v916 = vadd.f32 0.0, %v915
        %v917 = vpop.f32.mrb[0].mxu0
        %v918 = vadd.f32 0.0, %v917
        %919 = vmatprep.mubr.bf16.mxu0 %v680
        %920 = vmatmul.mubr.bf16.gmra.mrb[0].mxu0 %v679
        %v921 = vpop.f32.mrb[0].mxu0
        %v922 = vadd.f32 0.0, %v921
        %v923 = vpop.f32.mrb[0].mxu0
        %v924 = vadd.f32 0.0, %v923
        %v925 = vpop.f32.mrb[0].mxu0
        %v926 = vadd.f32 0.0, %v925
        %v927 = vpop.f32.mrb[0].mxu0
        %v928 = vadd.f32 0.0, %v927
        %929 = vmatprep.mubr.bf16.mxu0 %v682
        %930 = vmatmul.mubr.bf16.gmra.mrb[0].mxu0 %v681
        %v931 = vpop.f32.mrb[0].mxu0
        %v932 = vadd.f32 0.0, %v931
        %v933 = vpop.f32.mrb[0].mxu0
        %v934 = vadd.f32 0.0, %v933
        %v935 = vpop.f32.mrb[0].mxu0
        %v936 = vadd.f32 0.0, %v935
        %v937 = vpop.f32.mrb[0].mxu0
        %v938 = vadd.f32 0.0, %v937
        %939 = vmatprep.mubr.bf16.mxu0 %v684
        %940 = vmatmul.mubr.bf16.gmra.mrb[0].mxu0 %v683
        %v941 = vpop.f32.mrb[0].mxu0
        %v942 = vadd.f32 0.0, %v941
        %v943 = vpop.f32.mrb[0].mxu0
        %v944 = vadd.f32 0.0, %v943
        %v945 = vpop.f32.mrb[0].mxu0
        %v946 = vadd.f32 0.0, %v945
        %v947 = vpop.f32.mrb[0].mxu0
        %v948 = vadd.f32 0.0, %v947
        %949 = vmatprep.mubr.bf16.mxu0 %v686
        %950 = vmatmul.mubr.bf16.gmra.mrb[0].mxu0 %v685
        %v951 = vpop.f32.mrb[0].mxu0
        %v952 = vadd.f32 0.0, %v951
        %v953 = vpop.f32.mrb[0].mxu0
        %v954 = vadd.f32 0.0, %v953
        %v955 = vpop.f32.mrb[0].mxu0
        %v956 = vadd.f32 0.0, %v955
        %v957 = vpop.f32.mrb[0].mxu0
        %v958 = vadd.f32 0.0, %v957
        %959 = vmatprep.mubr.bf16.mxu0 %v688
        %960 = vmatmul.mubr.bf16.gmra.mrb[0].mxu0 %v687
        %v961 = vpop.f32.mrb[0].mxu0
        %v962 = vadd.f32 0.0, %v961
        %v963 = vpop.f32.mrb[0].mxu0
        %v964 = vadd.f32 0.0, %v963
        %v965 = vpop.f32.mrb[0].mxu0
        %v966 = vadd.f32 0.0, %v965
        %v967 = vpop.f32.mrb[0].mxu0
        %v968 = vadd.f32 0.0, %v967
        %969 = vmatprep.mubr.bf16.mxu0 %v690
        %970 = vmatmul.mubr.bf16.gmra.mrb[0].mxu0 %v689
        %v971 = vpop.f32.mrb[0].mxu0
        %v972 = vadd.f32 0.0, %v971
        %v973 = vpop.f32.mrb[0].mxu0
        %v974 = vadd.f32 0.0, %v973
        %v975 = vpop.f32.mrb[0].mxu0
        %v976 = vadd.f32 0.0, %v975
        %v977 = vpop.f32.mrb[0].mxu0
        %v978 = vadd.f32 0.0, %v977
        %979 = vdwg.mxu0
        %v980 = vadd.f32 %v547, %v902
        %v981 = vadd.f32 %v548, %v904
        %v982 = vadd.f32 %v549, %v906
        %v983 = vadd.f32 %v550, %v908
        %v984 = vadd.f32 %v551, %v912
        %v985 = vadd.f32 %v552, %v914
        %v986 = vadd.f32 %v553, %v916
        %v987 = vadd.f32 %v554, %v918
        %v988 = vadd.f32 %v555, %v922
        %v989 = vadd.f32 %v556, %v924
        %v990 = vadd.f32 %v557, %v926
        %v991 = vadd.f32 %v558, %v928
        %v992 = vadd.f32 %v559, %v932
        %v993 = vadd.f32 %v560, %v934
        %v994 = vadd.f32 %v561, %v936
        %v995 = vadd.f32 %v562, %v938
        %v996 = vadd.f32 %v563, %v942
        %v997 = vadd.f32 %v564, %v944
        %v998 = vadd.f32 %v565, %v946
        %v999 = vadd.f32 %v566, %v948
        %v1000 = vadd.f32 %v567, %v952
        %v1001 = vadd.f32 %v568, %v954
        %v1002 = vadd.f32 %v569, %v956
        %v1003 = vadd.f32 %v570, %v958
        %v1004 = vadd.f32 %v571, %v962
        %v1005 = vadd.f32 %v572, %v964
        %v1006 = vadd.f32 %v573, %v966
        %v1007 = vadd.f32 %v574, %v968
        %v1008 = vadd.f32 %v575, %v972
        %v1009 = vadd.f32 %v576, %v974
        %v1010 = vadd.f32 %v577, %v976
        %v1011 = vadd.f32 %v578, %v978
        %1012 = vst [vmem:[#allocation2] sm:$0xff] %v980
        %1013 = vst [vmem:[#allocation2 + $0x8] sm:$0xff] %v981
        %1014 = vst [vmem:[#allocation2 + $0x10] sm:$0xff] %v982
        %1015 = vst [vmem:[#allocation2 + $0x18] sm:$0xff] %v983
        %1016 = vst [vmem:[#allocation2 + $0x20] sm:$0xff] %v984
        %1017 = vst [vmem:[#allocation2 + $0x28] sm:$0xff] %v985
        %1018 = vst [vmem:[#allocation2 + $0x30] sm:$0xff] %v986
        %1019 = vst [vmem:[#allocation2 + $0x38] sm:$0xff] %v987
        %1020 = vst [vmem:[#allocation2 + $0x40] sm:$0xff] %v988
        %1021 = vst [vmem:[#allocation2 + $0x48] sm:$0xff] %v989
        %1022 = vst [vmem:[#allocation2 + $0x50] sm:$0xff] %v990
        %1023 = vst [vmem:[#allocation2 + $0x58] sm:$0xff] %v991
        %1024 = vst [vmem:[#allocation2 + $0x60] sm:$0xff] %v992
        %1025 = vst [vmem:[#allocation2 + $0x68] sm:$0xff] %v993
        %1026 = vst [vmem:[#allocation2 + $0x70] sm:$0xff] %v994
        %1027 = vst [vmem:[#allocation2 + $0x78] sm:$0xff] %v995
        %1028 = vst [vmem:[#allocation2 + $0x80] sm:$0xff] %v996
        %1029 = vst [vmem:[#allocation2 + $0x88] sm:$0xff] %v997
        %1030 = vst [vmem:[#allocation2 + $0x90] sm:$0xff] %v998
        %1031 = vst [vmem:[#allocation2 + $0x98] sm:$0xff] %v999
        %1032 = vst [vmem:[#allocation2 + $0xa0] sm:$0xff] %v1000
        %1033 = vst [vmem:[#allocation2 + $0xa8] sm:$0xff] %v1001
        %1034 = vst [vmem:[#allocation2 + $0xb0] sm:$0xff] %v1002
        %1035 = vst [vmem:[#allocation2 + $0xb8] sm:$0xff] %v1003
        %1036 = vst [vmem:[#allocation2 + $0xc0] sm:$0xff] %v1004
        %1037 = vst [vmem:[#allocation2 + $0xc8] sm:$0xff] %v1005
        %1038 = vst [vmem:[#allocation2 + $0xd0] sm:$0xff] %v1006
        %1039 = vst [vmem:[#allocation2 + $0xd8] sm:$0xff] %v1007
        %1040 = vst [vmem:[#allocation2 + $0xe0] sm:$0xff] %v1008
        %1041 = vst [vmem:[#allocation2 + $0xe8] sm:$0xff] %v1009
        %1042 = vst [vmem:[#allocation2 + $0xf0] sm:$0xff] %v1010
        %1043 = vst [vmem:[#allocation2 + $0xf8] sm:$0xff] %v1011
        %p1044 = scmp.eq.s32.totalorder %s25, 2
        // Predicated region
        $region91: #{_sage_forward_impl.5} parent=81 // pred_check
          %p1045 = pneg %p1044
        $region92: #{_sage_forward_impl.5} parent=81 // pred_check_branch
          %1047 = sbr.rel (%p1045) target = $region94
        $region93: #{_sage_forward_impl.5} parent=81 // pred_region
          %v1048 = vld [vmem:[#allocation2] sm:$0xff]
          %v1049 = vld [vmem:[#allocation2 + $0x8] sm:$0xff]
          %v1050 = vld [vmem:[#allocation2 + $0x10] sm:$0xff]
          %v1051 = vld [vmem:[#allocation2 + $0x18] sm:$0xff]
          %v1052 = vld [vmem:[#allocation2 + $0x20] sm:$0xff]
          %v1053 = vld [vmem:[#allocation2 + $0x28] sm:$0xff]
          %v1054 = vld [vmem:[#allocation2 + $0x30] sm:$0xff]
          %v1055 = vld [vmem:[#allocation2 + $0x38] sm:$0xff]
          %v1056 = vld [vmem:[#allocation2 + $0x40] sm:$0xff]
          %v1057 = vld [vmem:[#allocation2 + $0x48] sm:$0xff]
          %v1058 = vld [vmem:[#allocation2 + $0x50] sm:$0xff]
          %v1059 = vld [vmem:[#allocation2 + $0x58] sm:$0xff]
          %v1060 = vld [vmem:[#allocation2 + $0x60] sm:$0xff]
          %v1061 = vld [vmem:[#allocation2 + $0x68] sm:$0xff]
          %v1062 = vld [vmem:[#allocation2 + $0x70] sm:$0xff]
          %v1063 = vld [vmem:[#allocation2 + $0x78] sm:$0xff]
          %v1064 = vld [vmem:[#allocation2 + $0x80] sm:$0xff]
          %v1065 = vld [vmem:[#allocation2 + $0x88] sm:$0xff]
          %v1066 = vld [vmem:[#allocation2 + $0x90] sm:$0xff]
          %v1067 = vld [vmem:[#allocation2 + $0x98] sm:$0xff]
          %v1068 = vld [vmem:[#allocation2 + $0xa0] sm:$0xff]
          %v1069 = vld [vmem:[#allocation2 + $0xa8] sm:$0xff]
          %v1070 = vld [vmem:[#allocation2 + $0xb0] sm:$0xff]
          %v1071 = vld [vmem:[#allocation2 + $0xb8] sm:$0xff]
          %v1072 = vld [vmem:[#allocation2 + $0xc0] sm:$0xff]
          %v1073 = vld [vmem:[#allocation2 + $0xc8] sm:$0xff]
          %v1074 = vld [vmem:[#allocation2 + $0xd0] sm:$0xff]
          %v1075 = vld [vmem:[#allocation2 + $0xd8] sm:$0xff]
          %v1076 = vld [vmem:[#allocation2 + $0xe0] sm:$0xff]
          %v1077 = vld [vmem:[#allocation2 + $0xe8] sm:$0xff]
          %v1078 = vld [vmem:[#allocation2 + $0xf0] sm:$0xff]
          %v1079 = vld [vmem:[#allocation2 + $0xf8] sm:$0xff]
          %v1080 = vld [vmem:[%s488] sm:$0xff]
          %v1081 = vld [vmem:[%s488 + $0x8] sm:$0xff]
          %v1082 = vld [vmem:[%s488 + $0x10] sm:$0xff]
          %v1083 = vld [vmem:[%s488 + $0x18] sm:$0xff]
          %v1084 = vld [vmem:[%s488 + $0x20] sm:$0xff]
          %v1085 = vld [vmem:[%s488 + $0x28] sm:$0xff]
          %v1086 = vld [vmem:[%s488 + $0x30] sm:$0xff]
          %v1087 = vld [vmem:[%s488 + $0x38] sm:$0xff]
          %v1088 = vld [vmem:[%s488 + $0x40] sm:$0xff]
          %v1089 = vld [vmem:[%s488 + $0x48] sm:$0xff]
          %v1090 = vld [vmem:[%s488 + $0x50] sm:$0xff]
          %v1091 = vld [vmem:[%s488 + $0x58] sm:$0xff]
          %v1092 = vld [vmem:[%s488 + $0x60] sm:$0xff]
          %v1093 = vld [vmem:[%s488 + $0x68] sm:$0xff]
          %v1094 = vld [vmem:[%s488 + $0x70] sm:$0xff]
          %v1095 = vld [vmem:[%s488 + $0x78] sm:$0xff]
          %1097 = vset.pattern.permute.xlu0 0
          %1098 = vperm.xlu0 %1097, %v1080
          %v1099 = vpop.permute.xlu0 %1098
          %1102 = vset.pattern.permute.xlu0 0
          %1103 = vperm.xlu0 %1102, %v1081
          %v1104 = vpop.permute.xlu0 %1103
          %1107 = vset.pattern.permute.xlu0 0
          %1108 = vperm.xlu0 %1107, %v1082
          %v1109 = vpop.permute.xlu0 %1108
          %1112 = vset.pattern.permute.xlu0 0
          %1113 = vperm.xlu0 %1112, %v1083
          %v1114 = vpop.permute.xlu0 %1113
          %1117 = vset.pattern.permute.xlu0 0
          %1118 = vperm.xlu0 %1117, %v1084
          %v1119 = vpop.permute.xlu0 %1118
          %1122 = vset.pattern.permute.xlu0 0
          %1123 = vperm.xlu0 %1122, %v1085
          %v1124 = vpop.permute.xlu0 %1123
          %1127 = vset.pattern.permute.xlu0 0
          %1128 = vperm.xlu0 %1127, %v1086
          %v1129 = vpop.permute.xlu0 %1128
          %1132 = vset.pattern.permute.xlu0 0
          %1133 = vperm.xlu0 %1132, %v1087
          %v1134 = vpop.permute.xlu0 %1133
          %1137 = vset.pattern.permute.xlu0 0
          %1138 = vperm.xlu0 %1137, %v1088
          %v1139 = vpop.permute.xlu0 %1138
          %1142 = vset.pattern.permute.xlu0 0
          %1143 = vperm.xlu0 %1142, %v1089
          %v1144 = vpop.permute.xlu0 %1143
          %1147 = vset.pattern.permute.xlu0 0
          %1148 = vperm.xlu0 %1147, %v1090
          %v1149 = vpop.permute.xlu0 %1148
          %1152 = vset.pattern.permute.xlu0 0
          %1153 = vperm.xlu0 %1152, %v1091
          %v1154 = vpop.permute.xlu0 %1153
          %1157 = vset.pattern.permute.xlu0 0
          %1158 = vperm.xlu0 %1157, %v1092
          %v1159 = vpop.permute.xlu0 %1158
          %1162 = vset.pattern.permute.xlu0 0
          %1163 = vperm.xlu0 %1162, %v1093
          %v1164 = vpop.permute.xlu0 %1163
          %1167 = vset.pattern.permute.xlu0 0
          %1168 = vperm.xlu0 %1167, %v1094
          %v1169 = vpop.permute.xlu0 %1168
          %1172 = vset.pattern.permute.xlu0 0
          %1173 = vperm.xlu0 %1172, %v1095
          %v1174 = vpop.permute.xlu0 %1173
          %v1176 = vmul.f32 %v1048, %v1099
          %v1177 = vmul.f32 %v1049, %v1099
          %v1178 = vmul.f32 %v1050, %v1104
          %v1179 = vmul.f32 %v1051, %v1104
          %v1180 = vmul.f32 %v1052, %v1109
          %v1181 = vmul.f32 %v1053, %v1109
          %v1182 = vmul.f32 %v1054, %v1114
          %v1183 = vmul.f32 %v1055, %v1114
          %v1184 = vmul.f32 %v1056, %v1119
          %v1185 = vmul.f32 %v1057, %v1119
          %v1186 = vmul.f32 %v1058, %v1124
          %v1187 = vmul.f32 %v1059, %v1124
          %v1188 = vmul.f32 %v1060, %v1129
          %v1189 = vmul.f32 %v1061, %v1129
          %v1190 = vmul.f32 %v1062, %v1134
          %v1191 = vmul.f32 %v1063, %v1134
          %v1192 = vmul.f32 %v1064, %v1139
          %v1193 = vmul.f32 %v1065, %v1139
          %v1194 = vmul.f32 %v1066, %v1144
          %v1195 = vmul.f32 %v1067, %v1144
          %v1196 = vmul.f32 %v1068, %v1149
          %v1197 = vmul.f32 %v1069, %v1149
          %v1198 = vmul.f32 %v1070, %v1154
          %v1199 = vmul.f32 %v1071, %v1154
          %v1200 = vmul.f32 %v1072, %v1159
          %v1201 = vmul.f32 %v1073, %v1159
          %v1202 = vmul.f32 %v1074, %v1164
          %v1203 = vmul.f32 %v1075, %v1164
          %v1204 = vmul.f32 %v1076, %v1169
          %v1205 = vmul.f32 %v1077, %v1169
          %v1206 = vmul.f32 %v1078, %v1174
          %v1207 = vmul.f32 %v1079, %v1174
          %v1208 = vpack.c.bf16 %v1178, %v1176
          %v1209 = vpack.c.bf16 %v1179, %v1177
          %v1210 = vpack.c.bf16 %v1182, %v1180
          %v1211 = vpack.c.bf16 %v1183, %v1181
          %v1212 = vpack.c.bf16 %v1186, %v1184
          %v1213 = vpack.c.bf16 %v1187, %v1185
          %v1214 = vpack.c.bf16 %v1190, %v1188
          %v1215 = vpack.c.bf16 %v1191, %v1189
          %v1216 = vpack.c.bf16 %v1194, %v1192
          %v1217 = vpack.c.bf16 %v1195, %v1193
          %v1218 = vpack.c.bf16 %v1198, %v1196
          %v1219 = vpack.c.bf16 %v1199, %v1197
          %v1220 = vpack.c.bf16 %v1202, %v1200
          %v1221 = vpack.c.bf16 %v1203, %v1201
          %v1222 = vpack.c.bf16 %v1206, %v1204
          %v1223 = vpack.c.bf16 %v1207, %v1205
          %v1224 = vld [vmem:[%s3] sm:$0xff]
          %v1225 = vld [vmem:[%s3 + $0x8] sm:$0xff]
          %v1226 = vld [vmem:[%s3 + $0x10] sm:$0xff]
          %v1227 = vld [vmem:[%s3 + $0x18] sm:$0xff]
          %v1228 = vld [vmem:[%s3 + $0x20] sm:$0xff]
          %v1229 = vld [vmem:[%s3 + $0x28] sm:$0xff]
          %v1230 = vld [vmem:[%s3 + $0x30] sm:$0xff]
          %v1231 = vld [vmem:[%s3 + $0x38] sm:$0xff]
          %v1232 = vld [vmem:[%s3 + $0x40] sm:$0xff]
          %v1233 = vld [vmem:[%s3 + $0x48] sm:$0xff]
          %v1234 = vld [vmem:[%s3 + $0x50] sm:$0xff]
          %v1235 = vld [vmem:[%s3 + $0x58] sm:$0xff]
          %v1236 = vld [vmem:[%s3 + $0x60] sm:$0xff]
          %v1237 = vld [vmem:[%s3 + $0x68] sm:$0xff]
          %v1238 = vld [vmem:[%s3 + $0x70] sm:$0xff]
          %v1239 = vld [vmem:[%s3 + $0x78] sm:$0xff]
          %v1240 = vld [vmem:[%s3 + $0x80] sm:$0xff]
          %v1241 = vld [vmem:[%s3 + $0x88] sm:$0xff]
          %v1242 = vld [vmem:[%s3 + $0x90] sm:$0xff]
          %v1243 = vld [vmem:[%s3 + $0x98] sm:$0xff]
          %v1244 = vld [vmem:[%s3 + $0xa0] sm:$0xff]
          %v1245 = vld [vmem:[%s3 + $0xa8] sm:$0xff]
          %v1246 = vld [vmem:[%s3 + $0xb0] sm:$0xff]
          %v1247 = vld [vmem:[%s3 + $0xb8] sm:$0xff]
          %v1248 = vld [vmem:[%s3 + $0xc0] sm:$0xff]
          %v1249 = vld [vmem:[%s3 + $0xc8] sm:$0xff]
          %v1250 = vld [vmem:[%s3 + $0xd0] sm:$0xff]
          %v1251 = vld [vmem:[%s3 + $0xd8] sm:$0xff]
          %v1252 = vld [vmem:[%s3 + $0xe0] sm:$0xff]
          %v1253 = vld [vmem:[%s3 + $0xe8] sm:$0xff]
          %v1254 = vld [vmem:[%s3 + $0xf0] sm:$0xff]
          %v1255 = vld [vmem:[%s3 + $0xf8] sm:$0xff]
          %v1256 = vld [vmem:[%s4] sm:$0x3]
          %v1258 = vlaneseq
          %v1259 = vshrl.u32 %v1258, 7
          %v1260 = vsub.s32 0, %v1259
          %v1261 = vrot.slane %v1256, %v1260
          %v1262 = vlaneseq
          %v1263 = vshrl.u32 %v1262, 7
          %v1264 = vsub.s32 1, %v1263
          %v1265 = vrot.slane %v1256, %v1264
          %v1300 = vunpack.c.l.b16 %v1224
          %v1301 = vunpack.c.h.b16 %v1224
          %v1302 = vunpack.c.l.b16 %v1225
          %v1303 = vunpack.c.h.b16 %v1225
          %v1304 = vunpack.c.l.b16 %v1226
          %v1305 = vunpack.c.h.b16 %v1226
          %v1306 = vunpack.c.l.b16 %v1227
          %v1307 = vunpack.c.h.b16 %v1227
          %v1308 = vunpack.c.l.b16 %v1228
          %v1309 = vunpack.c.h.b16 %v1228
          %v1310 = vunpack.c.l.b16 %v1229
          %v1311 = vunpack.c.h.b16 %v1229
          %v1312 = vunpack.c.l.b16 %v1230
          %v1313 = vunpack.c.h.b16 %v1230
          %v1314 = vunpack.c.l.b16 %v1231
          %v1315 = vunpack.c.h.b16 %v1231
          %v1316 = vunpack.c.l.b16 %v1232
          %v1317 = vunpack.c.h.b16 %v1232
          %v1318 = vunpack.c.l.b16 %v1233
          %v1319 = vunpack.c.h.b16 %v1233
          %v1320 = vunpack.c.l.b16 %v1234
          %v1321 = vunpack.c.h.b16 %v1234
          %v1322 = vunpack.c.l.b16 %v1235
          %v1323 = vunpack.c.h.b16 %v1235
          %v1324 = vunpack.c.l.b16 %v1236
          %v1325 = vunpack.c.h.b16 %v1236
          %v1326 = vunpack.c.l.b16 %v1237
          %v1327 = vunpack.c.h.b16 %v1237
          %v1328 = vunpack.c.l.b16 %v1238
          %v1329 = vunpack.c.h.b16 %v1238
          %v1330 = vunpack.c.l.b16 %v1239
          %v1331 = vunpack.c.h.b16 %v1239
          %v1332 = vunpack.c.l.b16 %v1240
          %v1333 = vunpack.c.h.b16 %v1240
          %v1334 = vunpack.c.l.b16 %v1241
          %v1335 = vunpack.c.h.b16 %v1241
          %v1336 = vunpack.c.l.b16 %v1242
          %v1337 = vunpack.c.h.b16 %v1242
          %v1338 = vunpack.c.l.b16 %v1243
          %v1339 = vunpack.c.h.b16 %v1243
          %v1340 = vunpack.c.l.b16 %v1244
          %v1341 = vunpack.c.h.b16 %v1244
          %v1342 = vunpack.c.l.b16 %v1245
          %v1343 = vunpack.c.h.b16 %v1245
          %v1344 = vunpack.c.l.b16 %v1246
          %v1345 = vunpack.c.h.b16 %v1246
          %v1346 = vunpack.c.l.b16 %v1247
          %v1347 = vunpack.c.h.b16 %v1247
          %v1348 = vunpack.c.l.b16 %v1248
          %v1349 = vunpack.c.h.b16 %v1248
          %v1350 = vunpack.c.l.b16 %v1249
          %v1351 = vunpack.c.h.b16 %v1249
          %v1352 = vunpack.c.l.b16 %v1250
          %v1353 = vunpack.c.h.b16 %v1250
          %v1354 = vunpack.c.l.b16 %v1251
          %v1355 = vunpack.c.h.b16 %v1251
          %v1356 = vunpack.c.l.b16 %v1252
          %v1357 = vunpack.c.h.b16 %v1252
          %v1358 = vunpack.c.l.b16 %v1253
          %v1359 = vunpack.c.h.b16 %v1253
          %v1360 = vunpack.c.l.b16 %v1254
          %v1361 = vunpack.c.h.b16 %v1254
          %v1362 = vunpack.c.l.b16 %v1255
          %v1363 = vunpack.c.h.b16 %v1255
          %v1364 = vpack.c.b16 %v1302, %v1300
          %v1365 = vpack.c.b16 %v1303, %v1301
          %v1366 = vpack.c.b16 %v1306, %v1304
          %v1367 = vpack.c.b16 %v1307, %v1305
          %v1368 = vpack.c.b16 %v1310, %v1308
          %v1369 = vpack.c.b16 %v1311, %v1309
          %v1370 = vpack.c.b16 %v1314, %v1312
          %v1371 = vpack.c.b16 %v1315, %v1313
          %v1372 = vpack.c.b16 %v1318, %v1316
          %v1373 = vpack.c.b16 %v1319, %v1317
          %v1374 = vpack.c.b16 %v1322, %v1320
          %v1375 = vpack.c.b16 %v1323, %v1321
          %v1376 = vpack.c.b16 %v1326, %v1324
          %v1377 = vpack.c.b16 %v1327, %v1325
          %v1378 = vpack.c.b16 %v1330, %v1328
          %v1379 = vpack.c.b16 %v1331, %v1329
          %v1380 = vpack.c.b16 %v1334, %v1332
          %v1381 = vpack.c.b16 %v1335, %v1333
          %v1382 = vpack.c.b16 %v1338, %v1336
          %v1383 = vpack.c.b16 %v1339, %v1337
          %v1384 = vpack.c.b16 %v1342, %v1340
          %v1385 = vpack.c.b16 %v1343, %v1341
          %v1386 = vpack.c.b16 %v1346, %v1344
          %v1387 = vpack.c.b16 %v1347, %v1345
          %v1388 = vpack.c.b16 %v1350, %v1348
          %v1389 = vpack.c.b16 %v1351, %v1349
          %v1390 = vpack.c.b16 %v1354, %v1352
          %v1391 = vpack.c.b16 %v1355, %v1353
          %v1392 = vpack.c.b16 %v1358, %v1356
          %v1393 = vpack.c.b16 %v1359, %v1357
          %v1394 = vpack.c.b16 %v1362, %v1360
          %v1395 = vpack.c.b16 %v1363, %v1361
          %1428 = vmatprep.subr.bf16.mxu0 %v1365
          %1429 = vmatpush1.bf16.msra.mxu0 %v1364
          %1430 = vmatprep.subr.bf16.mxu0 %v1367
          %1431 = vmatpush1.bf16.msra.mxu0 %v1366
          %1432 = vmatprep.subr.bf16.mxu0 %v1369
          %1433 = vmatpush1.bf16.msra.mxu0 %v1368
          %1434 = vmatprep.subr.bf16.mxu0 %v1371
          %1435 = vmatpush1.bf16.msra.mxu0 %v1370
          %1436 = vmatprep.subr.bf16.mxu0 %v1373
          %1437 = vmatpush1.bf16.msra.mxu0 %v1372
          %1438 = vmatprep.subr.bf16.mxu0 %v1375
          %1439 = vmatpush1.bf16.msra.mxu0 %v1374
          %1440 = vmatprep.subr.bf16.mxu0 %v1377
          %1441 = vmatpush1.bf16.msra.mxu0 %v1376
          %1442 = vmatprep.subr.bf16.mxu0 %v1379
          %1443 = vmatpush1.bf16.msra.mxu0 %v1378
          %1444 = vmatprep.subr.bf16.mxu0 %v1381
          %1445 = vmatpush1.bf16.msra.mxu0 %v1380
          %1446 = vmatprep.subr.bf16.mxu0 %v1383
          %1447 = vmatpush1.bf16.msra.mxu0 %v1382
          %1448 = vmatprep.subr.bf16.mxu0 %v1385
          %1449 = vmatpush1.bf16.msra.mxu0 %v1384
          %1450 = vmatprep.subr.bf16.mxu0 %v1387
          %1451 = vmatpush1.bf16.msra.mxu0 %v1386
          %1452 = vmatprep.subr.bf16.mxu0 %v1389
          %1453 = vmatpush1.bf16.msra.mxu0 %v1388
          %1454 = vmatprep.subr.bf16.mxu0 %v1391
          %1455 = vmatpush1.bf16.msra.mxu0 %v1390
          %1456 = vmatprep.subr.bf16.mxu0 %v1393
          %1457 = vmatpush1.bf16.msra.mxu0 %v1392
          %1458 = vmatprep.subr.bf16.mxu0 %v1395
          %1459 = vmatpush1.bf16.msra.mxu0 %v1394
          %1460 = vmatprep.mubr.bf16.mxu0 %v1209
          %1461 = vmatmul.mubr.bf16.gmra.mrb[0].mxu0 %v1208
          %v1462 = vpop.f32.mrb[0].mxu0
          %v1463 = vadd.f32 %v1261, %v1462
          %v1464 = vpop.f32.mrb[0].mxu0
          %v1465 = vadd.f32 %v1265, %v1464
          %v1466 = vpop.f32.mrb[0].mxu0
          %v1467 = vadd.f32 %v1261, %v1466
          %v1468 = vpop.f32.mrb[0].mxu0
          %v1469 = vadd.f32 %v1265, %v1468
          %1470 = vmatprep.mubr.bf16.mxu0 %v1211
          %1471 = vmatmul.mubr.bf16.gmra.mrb[0].mxu0 %v1210
          %v1472 = vpop.f32.mrb[0].mxu0
          %v1473 = vadd.f32 %v1261, %v1472
          %v1474 = vpop.f32.mrb[0].mxu0
          %v1475 = vadd.f32 %v1265, %v1474
          %v1476 = vpop.f32.mrb[0].mxu0
          %v1477 = vadd.f32 %v1261, %v1476
          %v1478 = vpop.f32.mrb[0].mxu0
          %v1479 = vadd.f32 %v1265, %v1478
          %1480 = vmatprep.mubr.bf16.mxu0 %v1213
          %1481 = vmatmul.mubr.bf16.gmra.mrb[0].mxu0 %v1212
          %v1482 = vpop.f32.mrb[0].mxu0
          %v1483 = vadd.f32 %v1261, %v1482
          %v1484 = vpop.f32.mrb[0].mxu0
          %v1485 = vadd.f32 %v1265, %v1484
          %v1486 = vpop.f32.mrb[0].mxu0
          %v1487 = vadd.f32 %v1261, %v1486
          %v1488 = vpop.f32.mrb[0].mxu0
          %v1489 = vadd.f32 %v1265, %v1488
          %1490 = vmatprep.mubr.bf16.mxu0 %v1215
          %1491 = vmatmul.mubr.bf16.gmra.mrb[0].mxu0 %v1214
          %v1492 = vpop.f32.mrb[0].mxu0
          %v1493 = vadd.f32 %v1261, %v1492
          %v1494 = vpop.f32.mrb[0].mxu0
          %v1495 = vadd.f32 %v1265, %v1494
          %v1496 = vpop.f32.mrb[0].mxu0
          %v1497 = vadd.f32 %v1261, %v1496
          %v1498 = vpop.f32.mrb[0].mxu0
          %v1499 = vadd.f32 %v1265, %v1498
          %1500 = vmatprep.mubr.bf16.mxu0 %v1217
          %1501 = vmatmul.mubr.bf16.gmra.mrb[0].mxu0 %v1216
          %v1502 = vpop.f32.mrb[0].mxu0
          %v1503 = vadd.f32 %v1261, %v1502
          %v1504 = vpop.f32.mrb[0].mxu0
          %v1505 = vadd.f32 %v1265, %v1504
          %v1506 = vpop.f32.mrb[0].mxu0
          %v1507 = vadd.f32 %v1261, %v1506
          %v1508 = vpop.f32.mrb[0].mxu0
          %v1509 = vadd.f32 %v1265, %v1508
          %1510 = vmatprep.mubr.bf16.mxu0 %v1219
          %1511 = vmatmul.mubr.bf16.gmra.mrb[0].mxu0 %v1218
          %v1512 = vpop.f32.mrb[0].mxu0
          %v1513 = vadd.f32 %v1261, %v1512
          %v1514 = vpop.f32.mrb[0].mxu0
          %v1515 = vadd.f32 %v1265, %v1514
          %v1516 = vpop.f32.mrb[0].mxu0
          %v1517 = vadd.f32 %v1261, %v1516
          %v1518 = vpop.f32.mrb[0].mxu0
          %v1519 = vadd.f32 %v1265, %v1518
          %1520 = vmatprep.mubr.bf16.mxu0 %v1221
          %1521 = vmatmul.mubr.bf16.gmra.mrb[0].mxu0 %v1220
          %v1522 = vpop.f32.mrb[0].mxu0
          %v1523 = vadd.f32 %v1261, %v1522
          %v1524 = vpop.f32.mrb[0].mxu0
          %v1525 = vadd.f32 %v1265, %v1524
          %v1526 = vpop.f32.mrb[0].mxu0
          %v1527 = vadd.f32 %v1261, %v1526
          %v1528 = vpop.f32.mrb[0].mxu0
          %v1529 = vadd.f32 %v1265, %v1528
          %1530 = vmatprep.mubr.bf16.mxu0 %v1223
          %1531 = vmatmul.mubr.bf16.gmra.mrb[0].mxu0 %v1222
          %v1532 = vpop.f32.mrb[0].mxu0
          %v1533 = vadd.f32 %v1261, %v1532
          %v1534 = vpop.f32.mrb[0].mxu0
          %v1535 = vadd.f32 %v1265, %v1534
          %v1536 = vpop.f32.mrb[0].mxu0
          %v1537 = vadd.f32 %v1261, %v1536
          %v1538 = vpop.f32.mrb[0].mxu0
          %v1539 = vadd.f32 %v1265, %v1538
          %1540 = vdwg.mxu0
          %v1541 = vld [vmem:[%s495] sm:$0xff]
          %v1542 = vld [vmem:[%s495 + $0x8] sm:$0xff]
          %v1543 = vld [vmem:[%s495 + $0x10] sm:$0xff]
          %v1544 = vld [vmem:[%s495 + $0x18] sm:$0xff]
          %v1545 = vld [vmem:[%s495 + $0x20] sm:$0xff]
          %v1546 = vld [vmem:[%s495 + $0x28] sm:$0xff]
          %v1547 = vld [vmem:[%s495 + $0x30] sm:$0xff]
          %v1548 = vld [vmem:[%s495 + $0x38] sm:$0xff]
          %v1549 = vld [vmem:[%s495 + $0x40] sm:$0xff]
          %v1550 = vld [vmem:[%s495 + $0x48] sm:$0xff]
          %v1551 = vld [vmem:[%s495 + $0x50] sm:$0xff]
          %v1552 = vld [vmem:[%s495 + $0x58] sm:$0xff]
          %v1553 = vld [vmem:[%s495 + $0x60] sm:$0xff]
          %v1554 = vld [vmem:[%s495 + $0x68] sm:$0xff]
          %v1555 = vld [vmem:[%s495 + $0x70] sm:$0xff]
          %v1556 = vld [vmem:[%s495 + $0x78] sm:$0xff]
          %v1557 = vld [vmem:[%s6] sm:$0xff]
          %v1558 = vld [vmem:[%s6 + $0x8] sm:$0xff]
          %v1559 = vld [vmem:[%s6 + $0x10] sm:$0xff]
          %v1560 = vld [vmem:[%s6 + $0x18] sm:$0xff]
          %v1561 = vld [vmem:[%s6 + $0x20] sm:$0xff]
          %v1562 = vld [vmem:[%s6 + $0x28] sm:$0xff]
          %v1563 = vld [vmem:[%s6 + $0x30] sm:$0xff]
          %v1564 = vld [vmem:[%s6 + $0x38] sm:$0xff]
          %v1565 = vld [vmem:[%s6 + $0x40] sm:$0xff]
          %v1566 = vld [vmem:[%s6 + $0x48] sm:$0xff]
          %v1567 = vld [vmem:[%s6 + $0x50] sm:$0xff]
          %v1568 = vld [vmem:[%s6 + $0x58] sm:$0xff]
          %v1569 = vld [vmem:[%s6 + $0x60] sm:$0xff]
          %v1570 = vld [vmem:[%s6 + $0x68] sm:$0xff]
          %v1571 = vld [vmem:[%s6 + $0x70] sm:$0xff]
          %v1572 = vld [vmem:[%s6 + $0x78] sm:$0xff]
          %v1573 = vld [vmem:[%s6 + $0x80] sm:$0xff]
          %v1574 = vld [vmem:[%s6 + $0x88] sm:$0xff]
          %v1575 = vld [vmem:[%s6 + $0x90] sm:$0xff]
          %v1576 = vld [vmem:[%s6 + $0x98] sm:$0xff]
          %v1577 = vld [vmem:[%s6 + $0xa0] sm:$0xff]
          %v1578 = vld [vmem:[%s6 + $0xa8] sm:$0xff]
          %v1579 = vld [vmem:[%s6 + $0xb0] sm:$0xff]
          %v1580 = vld [vmem:[%s6 + $0xb8] sm:$0xff]
          %v1581 = vld [vmem:[%s6 + $0xc0] sm:$0xff]
          %v1582 = vld [vmem:[%s6 + $0xc8] sm:$0xff]
          %v1583 = vld [vmem:[%s6 + $0xd0] sm:$0xff]
          %v1584 = vld [vmem:[%s6 + $0xd8] sm:$0xff]
          %v1585 = vld [vmem:[%s6 + $0xe0] sm:$0xff]
          %v1586 = vld [vmem:[%s6 + $0xe8] sm:$0xff]
          %v1587 = vld [vmem:[%s6 + $0xf0] sm:$0xff]
          %v1588 = vld [vmem:[%s6 + $0xf8] sm:$0xff]
          %v1605 = vunpack.c.l.b16 %v1541
          %v1606 = vunpack.c.h.b16 %v1541
          %v1607 = vunpack.c.l.b16 %v1542
          %v1608 = vunpack.c.h.b16 %v1542
          %v1609 = vunpack.c.l.b16 %v1543
          %v1610 = vunpack.c.h.b16 %v1543
          %v1611 = vunpack.c.l.b16 %v1544
          %v1612 = vunpack.c.h.b16 %v1544
          %v1613 = vunpack.c.l.b16 %v1545
          %v1614 = vunpack.c.h.b16 %v1545
          %v1615 = vunpack.c.l.b16 %v1546
          %v1616 = vunpack.c.h.b16 %v1546
          %v1617 = vunpack.c.l.b16 %v1547
          %v1618 = vunpack.c.h.b16 %v1547
          %v1619 = vunpack.c.l.b16 %v1548
          %v1620 = vunpack.c.h.b16 %v1548
          %v1621 = vunpack.c.l.b16 %v1549
          %v1622 = vunpack.c.h.b16 %v1549
          %v1623 = vunpack.c.l.b16 %v1550
          %v1624 = vunpack.c.h.b16 %v1550
          %v1625 = vunpack.c.l.b16 %v1551
          %v1626 = vunpack.c.h.b16 %v1551
          %v1627 = vunpack.c.l.b16 %v1552
          %v1628 = vunpack.c.h.b16 %v1552
          %v1629 = vunpack.c.l.b16 %v1553
          %v1630 = vunpack.c.h.b16 %v1553
          %v1631 = vunpack.c.l.b16 %v1554
          %v1632 = vunpack.c.h.b16 %v1554
          %v1633 = vunpack.c.l.b16 %v1555
          %v1634 = vunpack.c.h.b16 %v1555
          %v1635 = vunpack.c.l.b16 %v1556
          %v1636 = vunpack.c.h.b16 %v1556
          %v1637 = vpack.c.b16 %v1607, %v1605
          %v1638 = vpack.c.b16 %v1608, %v1606
          %v1639 = vpack.c.b16 %v1611, %v1609
          %v1640 = vpack.c.b16 %v1612, %v1610
          %v1641 = vpack.c.b16 %v1615, %v1613
          %v1642 = vpack.c.b16 %v1616, %v1614
          %v1643 = vpack.c.b16 %v1619, %v1617
          %v1644 = vpack.c.b16 %v1620, %v1618
          %v1645 = vpack.c.b16 %v1623, %v1621
          %v1646 = vpack.c.b16 %v1624, %v1622
          %v1647 = vpack.c.b16 %v1627, %v1625
          %v1648 = vpack.c.b16 %v1628, %v1626
          %v1649 = vpack.c.b16 %v1631, %v1629
          %v1650 = vpack.c.b16 %v1632, %v1630
          %v1651 = vpack.c.b16 %v1635, %v1633
          %v1652 = vpack.c.b16 %v1636, %v1634
          %v1701 = vunpack.c.l.b16 %v1557
          %v1702 = vunpack.c.h.b16 %v1557
          %v1703 = vunpack.c.l.b16 %v1558
          %v1704 = vunpack.c.h.b16 %v1558
          %v1705 = vunpack.c.l.b16 %v1559
          %v1706 = vunpack.c.h.b16 %v1559
          %v1707 = vunpack.c.l.b16 %v1560
          %v1708 = vunpack.c.h.b16 %v1560
          %v1709 = vunpack.c.l.b16 %v1561
          %v1710 = vunpack.c.h.b16 %v1561
          %v1711 = vunpack.c.l.b16 %v1562
          %v1712 = vunpack.c.h.b16 %v1562
          %v1713 = vunpack.c.l.b16 %v1563
          %v1714 = vunpack.c.h.b16 %v1563
          %v1715 = vunpack.c.l.b16 %v1564
          %v1716 = vunpack.c.h.b16 %v1564
          %v1717 = vunpack.c.l.b16 %v1565
          %v1718 = vunpack.c.h.b16 %v1565
          %v1719 = vunpack.c.l.b16 %v1566
          %v1720 = vunpack.c.h.b16 %v1566
          %v1721 = vunpack.c.l.b16 %v1567
          %v1722 = vunpack.c.h.b16 %v1567
          %v1723 = vunpack.c.l.b16 %v1568
          %v1724 = vunpack.c.h.b16 %v1568
          %v1725 = vunpack.c.l.b16 %v1569
          %v1726 = vunpack.c.h.b16 %v1569
          %v1727 = vunpack.c.l.b16 %v1570
          %v1728 = vunpack.c.h.b16 %v1570
          %v1729 = vunpack.c.l.b16 %v1571
          %v1730 = vunpack.c.h.b16 %v1571
          %v1731 = vunpack.c.l.b16 %v1572
          %v1732 = vunpack.c.h.b16 %v1572
          %v1733 = vunpack.c.l.b16 %v1573
          %v1734 = vunpack.c.h.b16 %v1573
          %v1735 = vunpack.c.l.b16 %v1574
          %v1736 = vunpack.c.h.b16 %v1574
          %v1737 = vunpack.c.l.b16 %v1575
          %v1738 = vunpack.c.h.b16 %v1575
          %v1739 = vunpack.c.l.b16 %v1576
          %v1740 = vunpack.c.h.b16 %v1576
          %v1741 = vunpack.c.l.b16 %v1577
          %v1742 = vunpack.c.h.b16 %v1577
          %v1743 = vunpack.c.l.b16 %v1578
          %v1744 = vunpack.c.h.b16 %v1578
          %v1745 = vunpack.c.l.b16 %v1579
          %v1746 = vunpack.c.h.b16 %v1579
          %v1747 = vunpack.c.l.b16 %v1580
          %v1748 = vunpack.c.h.b16 %v1580
          %v1749 = vunpack.c.l.b16 %v1581
          %v1750 = vunpack.c.h.b16 %v1581
          %v1751 = vunpack.c.l.b16 %v1582
          %v1752 = vunpack.c.h.b16 %v1582
          %v1753 = vunpack.c.l.b16 %v1583
          %v1754 = vunpack.c.h.b16 %v1583
          %v1755 = vunpack.c.l.b16 %v1584
          %v1756 = vunpack.c.h.b16 %v1584
          %v1757 = vunpack.c.l.b16 %v1585
          %v1758 = vunpack.c.h.b16 %v1585
          %v1759 = vunpack.c.l.b16 %v1586
          %v1760 = vunpack.c.h.b16 %v1586
          %v1761 = vunpack.c.l.b16 %v1587
          %v1762 = vunpack.c.h.b16 %v1587
          %v1763 = vunpack.c.l.b16 %v1588
          %v1764 = vunpack.c.h.b16 %v1588
          %v1765 = vpack.c.b16 %v1703, %v1701
          %v1766 = vpack.c.b16 %v1704, %v1702
          %v1767 = vpack.c.b16 %v1707, %v1705
          %v1768 = vpack.c.b16 %v1708, %v1706
          %v1769 = vpack.c.b16 %v1711, %v1709
          %v1770 = vpack.c.b16 %v1712, %v1710
          %v1771 = vpack.c.b16 %v1715, %v1713
          %v1772 = vpack.c.b16 %v1716, %v1714
          %v1773 = vpack.c.b16 %v1719, %v1717
          %v1774 = vpack.c.b16 %v1720, %v1718
          %v1775 = vpack.c.b16 %v1723, %v1721
          %v1776 = vpack.c.b16 %v1724, %v1722
          %v1777 = vpack.c.b16 %v1727, %v1725
          %v1778 = vpack.c.b16 %v1728, %v1726
          %v1779 = vpack.c.b16 %v1731, %v1729
          %v1780 = vpack.c.b16 %v1732, %v1730
          %v1781 = vpack.c.b16 %v1735, %v1733
          %v1782 = vpack.c.b16 %v1736, %v1734
          %v1783 = vpack.c.b16 %v1739, %v1737
          %v1784 = vpack.c.b16 %v1740, %v1738
          %v1785 = vpack.c.b16 %v1743, %v1741
          %v1786 = vpack.c.b16 %v1744, %v1742
          %v1787 = vpack.c.b16 %v1747, %v1745
          %v1788 = vpack.c.b16 %v1748, %v1746
          %v1789 = vpack.c.b16 %v1751, %v1749
          %v1790 = vpack.c.b16 %v1752, %v1750
          %v1791 = vpack.c.b16 %v1755, %v1753
          %v1792 = vpack.c.b16 %v1756, %v1754
          %v1793 = vpack.c.b16 %v1759, %v1757
          %v1794 = vpack.c.b16 %v1760, %v1758
          %v1795 = vpack.c.b16 %v1763, %v1761
          %v1796 = vpack.c.b16 %v1764, %v1762
          %1829 = vmatprep.subr.bf16.mxu0 %v1766
          %1830 = vmatpush1.bf16.msra.mxu0 %v1765
          %1831 = vmatprep.subr.bf16.mxu0 %v1768
          %1832 = vmatpush1.bf16.msra.mxu0 %v1767
          %1833 = vmatprep.subr.bf16.mxu0 %v1770
          %1834 = vmatpush1.bf16.msra.mxu0 %v1769
          %1835 = vmatprep.subr.bf16.mxu0 %v1772
          %1836 = vmatpush1.bf16.msra.mxu0 %v1771
          %1837 = vmatprep.subr.bf16.mxu0 %v1774
          %1838 = vmatpush1.bf16.msra.mxu0 %v1773
          %1839 = vmatprep.subr.bf16.mxu0 %v1776
          %1840 = vmatpush1.bf16.msra.mxu0 %v1775
          %1841 = vmatprep.subr.bf16.mxu0 %v1778
          %1842 = vmatpush1.bf16.msra.mxu0 %v1777
          %1843 = vmatprep.subr.bf16.mxu0 %v1780
          %1844 = vmatpush1.bf16.msra.mxu0 %v1779
          %1845 = vmatprep.subr.bf16.mxu0 %v1782
          %1846 = vmatpush1.bf16.msra.mxu0 %v1781
          %1847 = vmatprep.subr.bf16.mxu0 %v1784
          %1848 = vmatpush1.bf16.msra.mxu0 %v1783
          %1849 = vmatprep.subr.bf16.mxu0 %v1786
          %1850 = vmatpush1.bf16.msra.mxu0 %v1785
          %1851 = vmatprep.subr.bf16.mxu0 %v1788
          %1852 = vmatpush1.bf16.msra.mxu0 %v1787
          %1853 = vmatprep.subr.bf16.mxu0 %v1790
          %1854 = vmatpush1.bf16.msra.mxu0 %v1789
          %1855 = vmatprep.subr.bf16.mxu0 %v1792
          %1856 = vmatpush1.bf16.msra.mxu0 %v1791
          %1857 = vmatprep.subr.bf16.mxu0 %v1794
          %1858 = vmatpush1.bf16.msra.mxu0 %v1793
          %1859 = vmatprep.subr.bf16.mxu0 %v1796
          %1860 = vmatpush1.bf16.msra.mxu0 %v1795
          %1861 = vmatprep.mubr.bf16.mxu0 %v1638
          %1862 = vmatmul.mubr.bf16.gmra.mrb[0].mxu0 %v1637
          %v1863 = vpop.f32.mrb[0].mxu0
          %v1864 = vadd.f32 0.0, %v1863
          %v1865 = vpop.f32.mrb[0].mxu0
          %v1866 = vadd.f32 0.0, %v1865
          %v1867 = vpop.f32.mrb[0].mxu0
          %v1868 = vadd.f32 0.0, %v1867
          %v1869 = vpop.f32.mrb[0].mxu0
          %v1870 = vadd.f32 0.0, %v1869
          %1871 = vmatprep.mubr.bf16.mxu0 %v1640
          %1872 = vmatmul.mubr.bf16.gmra.mrb[0].mxu0 %v1639
          %v1873 = vpop.f32.mrb[0].mxu0
          %v1874 = vadd.f32 0.0, %v1873
          %v1875 = vpop.f32.mrb[0].mxu0
          %v1876 = vadd.f32 0.0, %v1875
          %v1877 = vpop.f32.mrb[0].mxu0
          %v1878 = vadd.f32 0.0, %v1877
          %v1879 = vpop.f32.mrb[0].mxu0
          %v1880 = vadd.f32 0.0, %v1879
          %1881 = vmatprep.mubr.bf16.mxu0 %v1642
          %1882 = vmatmul.mubr.bf16.gmra.mrb[0].mxu0 %v1641
          %v1883 = vpop.f32.mrb[0].mxu0
          %v1884 = vadd.f32 0.0, %v1883
          %v1885 = vpop.f32.mrb[0].mxu0
          %v1886 = vadd.f32 0.0, %v1885
          %v1887 = vpop.f32.mrb[0].mxu0
          %v1888 = vadd.f32 0.0, %v1887
          %v1889 = vpop.f32.mrb[0].mxu0
          %v1890 = vadd.f32 0.0, %v1889
          %1891 = vmatprep.mubr.bf16.mxu0 %v1644
          %1892 = vmatmul.mubr.bf16.gmra.mrb[0].mxu0 %v1643
          %v1893 = vpop.f32.mrb[0].mxu0
          %v1894 = vadd.f32 0.0, %v1893
          %v1895 = vpop.f32.mrb[0].mxu0
          %v1896 = vadd.f32 0.0, %v1895
          %v1897 = vpop.f32.mrb[0].mxu0
          %v1898 = vadd.f32 0.0, %v1897
          %v1899 = vpop.f32.mrb[0].mxu0
          %v1900 = vadd.f32 0.0, %v1899
          %1901 = vmatprep.mubr.bf16.mxu0 %v1646
          %1902 = vmatmul.mubr.bf16.gmra.mrb[0].mxu0 %v1645
          %v1903 = vpop.f32.mrb[0].mxu0
          %v1904 = vadd.f32 0.0, %v1903
          %v1905 = vpop.f32.mrb[0].mxu0
          %v1906 = vadd.f32 0.0, %v1905
          %v1907 = vpop.f32.mrb[0].mxu0
          %v1908 = vadd.f32 0.0, %v1907
          %v1909 = vpop.f32.mrb[0].mxu0
          %v1910 = vadd.f32 0.0, %v1909
          %1911 = vmatprep.mubr.bf16.mxu0 %v1648
          %1912 = vmatmul.mubr.bf16.gmra.mrb[0].mxu0 %v1647
          %v1913 = vpop.f32.mrb[0].mxu0
          %v1914 = vadd.f32 0.0, %v1913
          %v1915 = vpop.f32.mrb[0].mxu0
          %v1916 = vadd.f32 0.0, %v1915
          %v1917 = vpop.f32.mrb[0].mxu0
          %v1918 = vadd.f32 0.0, %v1917
          %v1919 = vpop.f32.mrb[0].mxu0
          %v1920 = vadd.f32 0.0, %v1919
          %1921 = vmatprep.mubr.bf16.mxu0 %v1650
          %1922 = vmatmul.mubr.bf16.gmra.mrb[0].mxu0 %v1649
          %v1923 = vpop.f32.mrb[0].mxu0
          %v1924 = vadd.f32 0.0, %v1923
          %v1925 = vpop.f32.mrb[0].mxu0
          %v1926 = vadd.f32 0.0, %v1925
          %v1927 = vpop.f32.mrb[0].mxu0
          %v1928 = vadd.f32 0.0, %v1927
          %v1929 = vpop.f32.mrb[0].mxu0
          %v1930 = vadd.f32 0.0, %v1929
          %1931 = vmatprep.mubr.bf16.mxu0 %v1652
          %1932 = vmatmul.mubr.bf16.gmra.mrb[0].mxu0 %v1651
          %v1933 = vpop.f32.mrb[0].mxu0
          %v1934 = vadd.f32 0.0, %v1933
          %v1935 = vpop.f32.mrb[0].mxu0
          %v1936 = vadd.f32 0.0, %v1935
          %v1937 = vpop.f32.mrb[0].mxu0
          %v1938 = vadd.f32 0.0, %v1937
          %v1939 = vpop.f32.mrb[0].mxu0
          %v1940 = vadd.f32 0.0, %v1939
          %1941 = vdwg.mxu0
          %v1942 = vadd.f32 %v1463, %v1864
          %v1943 = vadd.f32 %v1465, %v1866
          %v1944 = vadd.f32 %v1467, %v1868
          %v1945 = vadd.f32 %v1469, %v1870
          %v1946 = vadd.f32 %v1473, %v1874
          %v1947 = vadd.f32 %v1475, %v1876
          %v1948 = vadd.f32 %v1477, %v1878
          %v1949 = vadd.f32 %v1479, %v1880
          %v1950 = vadd.f32 %v1483, %v1884
          %v1951 = vadd.f32 %v1485, %v1886
          %v1952 = vadd.f32 %v1487, %v1888
          %v1953 = vadd.f32 %v1489, %v1890
          %v1954 = vadd.f32 %v1493, %v1894
          %v1955 = vadd.f32 %v1495, %v1896
          %v1956 = vadd.f32 %v1497, %v1898
          %v1957 = vadd.f32 %v1499, %v1900
          %v1958 = vadd.f32 %v1503, %v1904
          %v1959 = vadd.f32 %v1505, %v1906
          %v1960 = vadd.f32 %v1507, %v1908
          %v1961 = vadd.f32 %v1509, %v1910
          %v1962 = vadd.f32 %v1513, %v1914
          %v1963 = vadd.f32 %v1515, %v1916
          %v1964 = vadd.f32 %v1517, %v1918
          %v1965 = vadd.f32 %v1519, %v1920
          %v1966 = vadd.f32 %v1523, %v1924
          %v1967 = vadd.f32 %v1525, %v1926
          %v1968 = vadd.f32 %v1527, %v1928
          %v1969 = vadd.f32 %v1529, %v1930
          %v1970 = vadd.f32 %v1533, %v1934
          %v1971 = vadd.f32 %v1535, %v1936
          %v1972 = vadd.f32 %v1537, %v1938
          %v1973 = vadd.f32 %v1539, %v1940
          %v1974 = vmax.f32 %v1942, 0.0
          %v1975 = vmax.f32 %v1943, 0.0
          %v1976 = vmax.f32 %v1944, 0.0
          %v1977 = vmax.f32 %v1945, 0.0
          %v1978 = vmax.f32 %v1946, 0.0
          %v1979 = vmax.f32 %v1947, 0.0
          %v1980 = vmax.f32 %v1948, 0.0
          %v1981 = vmax.f32 %v1949, 0.0
          %v1982 = vmax.f32 %v1950, 0.0
          %v1983 = vmax.f32 %v1951, 0.0
          %v1984 = vmax.f32 %v1952, 0.0
          %v1985 = vmax.f32 %v1953, 0.0
          %v1986 = vmax.f32 %v1954, 0.0
          %v1987 = vmax.f32 %v1955, 0.0
          %v1988 = vmax.f32 %v1956, 0.0
          %v1989 = vmax.f32 %v1957, 0.0
          %v1990 = vmax.f32 %v1958, 0.0
          %v1991 = vmax.f32 %v1959, 0.0
          %v1992 = vmax.f32 %v1960, 0.0
          %v1993 = vmax.f32 %v1961, 0.0
          %v1994 = vmax.f32 %v1962, 0.0
          %v1995 = vmax.f32 %v1963, 0.0
          %v1996 = vmax.f32 %v1964, 0.0
          %v1997 = vmax.f32 %v1965, 0.0
          %v1998 = vmax.f32 %v1966, 0.0
          %v1999 = vmax.f32 %v1967, 0.0
          %v2000 = vmax.f32 %v1968, 0.0
          %v2001 = vmax.f32 %v1969, 0.0
          %v2002 = vmax.f32 %v1970, 0.0
          %v2003 = vmax.f32 %v1971, 0.0
          %v2004 = vmax.f32 %v1972, 0.0
          %v2005 = vmax.f32 %v1973, 0.0
          %2006 = vst [vmem:[%s502] sm:$0xff] %v1974
          %2007 = vst [vmem:[%s502 + $0x8] sm:$0xff] %v1975
          %2008 = vst [vmem:[%s502 + $0x10] sm:$0xff] %v1976
          %2009 = vst [vmem:[%s502 + $0x18] sm:$0xff] %v1977
          %2010 = vst [vmem:[%s502 + $0x20] sm:$0xff] %v1978
          %2011 = vst [vmem:[%s502 + $0x28] sm:$0xff] %v1979
          %2012 = vst [vmem:[%s502 + $0x30] sm:$0xff] %v1980
          %2013 = vst [vmem:[%s502 + $0x38] sm:$0xff] %v1981
          %2014 = vst [vmem:[%s502 + $0x40] sm:$0xff] %v1982
          %2015 = vst [vmem:[%s502 + $0x48] sm:$0xff] %v1983
          %2016 = vst [vmem:[%s502 + $0x50] sm:$0xff] %v1984
          %2017 = vst [vmem:[%s502 + $0x58] sm:$0xff] %v1985
          %2018 = vst [vmem:[%s502 + $0x60] sm:$0xff] %v1986
          %2019 = vst [vmem:[%s502 + $0x68] sm:$0xff] %v1987
          %2020 = vst [vmem:[%s502 + $0x70] sm:$0xff] %v1988
          %2021 = vst [vmem:[%s502 + $0x78] sm:$0xff] %v1989
          %2022 = vst [vmem:[%s502 + $0x80] sm:$0xff] %v1990
          %2023 = vst [vmem:[%s502 + $0x88] sm:$0xff] %v1991
          %2024 = vst [vmem:[%s502 + $0x90] sm:$0xff] %v1992
          %2025 = vst [vmem:[%s502 + $0x98] sm:$0xff] %v1993
          %2026 = vst [vmem:[%s502 + $0xa0] sm:$0xff] %v1994
          %2027 = vst [vmem:[%s502 + $0xa8] sm:$0xff] %v1995
          %2028 = vst [vmem:[%s502 + $0xb0] sm:$0xff] %v1996
          %2029 = vst [vmem:[%s502 + $0xb8] sm:$0xff] %v1997
          %2030 = vst [vmem:[%s502 + $0xc0] sm:$0xff] %v1998
          %2031 = vst [vmem:[%s502 + $0xc8] sm:$0xff] %v1999
          %2032 = vst [vmem:[%s502 + $0xd0] sm:$0xff] %v2000
          %2033 = vst [vmem:[%s502 + $0xd8] sm:$0xff] %v2001
          %2034 = vst [vmem:[%s502 + $0xe0] sm:$0xff] %v2002
          %2035 = vst [vmem:[%s502 + $0xe8] sm:$0xff] %v2003
          %2036 = vst [vmem:[%s502 + $0xf0] sm:$0xff] %v2004
          %2037 = vst [vmem:[%s502 + $0xf8] sm:$0xff] %v2005
          %v2038 = vpack.c.bf16 %v1944, %v1942
          %v2039 = vpack.c.bf16 %v1945, %v1943
          %v2040 = vpack.c.bf16 %v1948, %v1946
          %v2041 = vpack.c.bf16 %v1949, %v1947
          %v2042 = vpack.c.bf16 %v1952, %v1950
          %v2043 = vpack.c.bf16 %v1953, %v1951
          %v2044 = vpack.c.bf16 %v1956, %v1954
          %v2045 = vpack.c.bf16 %v1957, %v1955
          %v2046 = vpack.c.bf16 %v1960, %v1958
          %v2047 = vpack.c.bf16 %v1961, %v1959
          %v2048 = vpack.c.bf16 %v1964, %v1962
          %v2049 = vpack.c.bf16 %v1965, %v1963
          %v2050 = vpack.c.bf16 %v1968, %v1966
          %v2051 = vpack.c.bf16 %v1969, %v1967
          %v2052 = vpack.c.bf16 %v1972, %v1970
          %v2053 = vpack.c.bf16 %v1973, %v1971
          %v2070 = vunpack.c.l.b16 %v2038
          %v2071 = vunpack.c.l.b16 %v2039
          %v2072 = vunpack.c.h.b16 %v2038
          %v2073 = vunpack.c.h.b16 %v2039
          %v2074 = vunpack.c.l.b16 %v2040
          %v2075 = vunpack.c.l.b16 %v2041
          %v2076 = vunpack.c.h.b16 %v2040
          %v2077 = vunpack.c.h.b16 %v2041
          %v2078 = vunpack.c.l.b16 %v2042
          %v2079 = vunpack.c.l.b16 %v2043
          %v2080 = vunpack.c.h.b16 %v2042
          %v2081 = vunpack.c.h.b16 %v2043
          %v2082 = vunpack.c.l.b16 %v2044
          %v2083 = vunpack.c.l.b16 %v2045
          %v2084 = vunpack.c.h.b16 %v2044
          %v2085 = vunpack.c.h.b16 %v2045
          %v2086 = vunpack.c.l.b16 %v2046
          %v2087 = vunpack.c.l.b16 %v2047
          %v2088 = vunpack.c.h.b16 %v2046
          %v2089 = vunpack.c.h.b16 %v2047
          %v2090 = vunpack.c.l.b16 %v2048
          %v2091 = vunpack.c.l.b16 %v2049
          %v2092 = vunpack.c.h.b16 %v2048
          %v2093 = vunpack.c.h.b16 %v2049
          %v2094 = vunpack.c.l.b16 %v2050
          %v2095 = vunpack.c.l.b16 %v2051
          %v2096 = vunpack.c.h.b16 %v2050
          %v2097 = vunpack.c.h.b16 %v2051
          %v2098 = vunpack.c.l.b16 %v2052
          %v2099 = vunpack.c.l.b16 %v2053
          %v2100 = vunpack.c.h.b16 %v2052
          %v2101 = vunpack.c.h.b16 %v2053
          %v2102 = vpack.c.b16 %v2071, %v2070
          %v2103 = vpack.c.b16 %v2073, %v2072
          %v2104 = vpack.c.b16 %v2075, %v2074
          %v2105 = vpack.c.b16 %v2077, %v2076
          %v2106 = vpack.c.b16 %v2079, %v2078
          %v2107 = vpack.c.b16 %v2081, %v2080
          %v2108 = vpack.c.b16 %v2083, %v2082
          %v2109 = vpack.c.b16 %v2085, %v2084
          %v2110 = vpack.c.b16 %v2087, %v2086
          %v2111 = vpack.c.b16 %v2089, %v2088
          %v2112 = vpack.c.b16 %v2091, %v2090
          %v2113 = vpack.c.b16 %v2093, %v2092
          %v2114 = vpack.c.b16 %v2095, %v2094
          %v2115 = vpack.c.b16 %v2097, %v2096
          %v2116 = vpack.c.b16 %v2099, %v2098
          %v2117 = vpack.c.b16 %v2101, %v2100
          %2134 = vst [vmem:[%s509] sm:$0xff] %v2102
          %2135 = vst [vmem:[%s509 + $0x8] sm:$0xff] %v2103
          %2136 = vst [vmem:[%s509 + $0x10] sm:$0xff] %v2104
          %2137 = vst [vmem:[%s509 + $0x18] sm:$0xff] %v2105
          %2138 = vst [vmem:[%s509 + $0x20] sm:$0xff] %v2106
          %2139 = vst [vmem:[%s509 + $0x28] sm:$0xff] %v2107
          %2140 = vst [vmem:[%s509 + $0x30] sm:$0xff] %v2108
          %2141 = vst [vmem:[%s509 + $0x38] sm:$0xff] %v2109
          %2142 = vst [vmem:[%s509 + $0x40] sm:$0xff] %v2110
          %2143 = vst [vmem:[%s509 + $0x48] sm:$0xff] %v2111
          %2144 = vst [vmem:[%s509 + $0x50] sm:$0xff] %v2112
          %2145 = vst [vmem:[%s509 + $0x58] sm:$0xff] %v2113
          %2146 = vst [vmem:[%s509 + $0x60] sm:$0xff] %v2114
          %2147 = vst [vmem:[%s509 + $0x68] sm:$0xff] %v2115
          %2148 = vst [vmem:[%s509 + $0x70] sm:$0xff] %v2116
          %2149 = vst [vmem:[%s509 + $0x78] sm:$0xff] %v2117
        $region94: #{_sage_forward_impl.5} parent=81 // pred_fallthru
          _
        %s2150 = smul.u32 16, %s24
        %p2151 = scmp.lt.s32.totalorder %s2150, 63
        %s2152 = scalar_select %p2151, %s2150, 63
        %s2153 = smul.addr %s2152, 2
        %s2154 = smul.addr %s2153, 8
        %s2155 = scalar_lea.vmem %s7, %s2154
        %s2156 = smul.u32 16, %s24
        %p2157 = scmp.lt.s32.totalorder %s2156, 63
        %s2158 = scalar_select %p2157, %s2156, 63
        %s2159 = smul.addr %s2158, 2
        %s2160 = smul.addr %s2159, 4
        %s2161 = scalar_lea.vmem %s8, %s2160
        // Predicated region
        $region95: #{_sage_forward_impl.5} parent=81 // pred_check
          %p2162 = pneg %p219
        $region96: #{_sage_forward_impl.5} parent=81 // pred_check_branch
          %2164 = sbr.rel (%p2162) target = $region98
        $region97: #{_sage_forward_impl.5} parent=81 // pred_region
          %s2165 = smul.u32 16, %s24
        $region98: #{_sage_forward_impl.5} parent=81 // pred_fallthru
          _
        // Predicated region
        $region99: #{_sage_forward_impl.5} parent=81 // pred_check
          %p2166 = pneg %p245
        $region100: #{_sage_forward_impl.5} parent=81 // pred_check_branch
          %2168 = sbr.rel (%p2166) target = $region102
        $region101: #{_sage_forward_impl.5} parent=81 // pred_region
          %s2169 = smul.u32 16, %s24
        $region102: #{_sage_forward_impl.5} parent=81 // pred_fallthru
          _
      $region82: #{_sage_forward_impl.5} parent=5 // pred_fallthru
        _
      %p2170 = scmp.le.s32.totalorder 2, %s15
      // Predicated region
      $region103: #{_sage_forward_impl.5} parent=5 // pred_check
        %p2171 = pneg %p2170
      $region104: #{_sage_forward_impl.5} parent=5 // pred_check_branch
        %2173 = sbr.rel (%p2171) target = $region106
      $region105: #{_sage_forward_impl.5} parent=5 // pred_region
        %s2174 = ssub.s32 %s15, 2
        // Predicated region
        $region107: #{_sage_forward_impl.5} parent=105 // pred_check
          %p2175 = pneg %p225
        $region108: #{_sage_forward_impl.5} parent=105 // pred_check_branch
          %2177 = sbr.rel (%p2175) target = $region110
        $region109: #{_sage_forward_impl.5} parent=105 // pred_region
          %s2178 = smul.u32 16, %s26
          %p2179 = scmp.lt.s32.totalorder %s2178, 63
          %s2180 = scalar_select %p2179, %s2178, 63
          %s2181 = smul.addr %s2180, 2
          %s2182 = smul.addr %s2181, 8
          %s2183 = scalar_lea.vmem %s7, %s2182
        $region110: #{_sage_forward_impl.5} parent=105 // pred_fallthru
          _
        // Predicated region
        $region111: #{_sage_forward_impl.5} parent=105 // pred_check
          %p2184 = pneg %p251
        $region112: #{_sage_forward_impl.5} parent=105 // pred_check_branch
          %2186 = sbr.rel (%p2184) target = $region114
        $region113: #{_sage_forward_impl.5} parent=105 // pred_region
          %s2187 = smul.u32 16, %s26
          %p2188 = scmp.lt.s32.totalorder %s2187, 63
          %s2189 = scalar_select %p2188, %s2187, 63
          %s2190 = smul.addr %s2189, 2
          %s2191 = smul.addr %s2190, 4
          %s2192 = scalar_lea.vmem %s8, %s2191
        $region114: #{_sage_forward_impl.5} parent=105 // pred_fallthru
          _
      $region106: #{_sage_forward_impl.5} parent=5 // pred_fallthru
        _
    $region6: #{_sage_forward_impl.5} parent=1 // loop_footer
      %s19 = sadd.s32 1, %s15
    $region7: #{_sage_forward_impl.5} parent=1 // loop_footer_branch
      %14 = sbr.rel target = $region3
    $region8: #{_sage_forward_impl.5} parent=1 // loop_exit
      _

// kernel: _sage_forward_impl.7
$region0: #{_sage_forward_impl.7}
  #allocation0 [shape = 'u32[]', space=smem, size = 0x4, offset = 0x4, fixed_abs, tag = 'smem constant byte address 0x4 - core index']
  #allocation1 [shape = 'u32[144,128]{1,0:T(1,128)}', space=vmem, size = 0x12000, scoped, tag = 'internal scratch']
  #allocation2 [shape = 'f32[128,128]{1,0:T(8,128)}', space=vmem, size = 0x10000, scoped, tag = 'scratch operand']
  %s0 = inlined_call_operand.vmem [shape: bf16[256,512], index: 0, kind: input, shape index: {}]
  %s1 = inlined_call_operand.vmem [shape: bf16[512,128], index: 1, kind: input, shape index: {}]
  %s2 = inlined_call_operand.vmem [shape: f32[256,1], index: 2, kind: input, shape index: {}]
  %s3 = inlined_call_operand.vmem [shape: f32[1,128], index: 3, kind: input, shape index: {}]
  %s4 = inlined_call_operand.vmem [shape: bf16[256,256], index: 4, kind: input, shape index: {}]
  %s5 = inlined_call_operand.vmem [shape: bf16[256,128], index: 5, kind: input, shape index: {}]
  %s6 = inlined_call_operand.vmem [shape: f32[256,128], index: 6, kind: output, shape index: {0}]
  %s7 = inlined_call_operand.vmem [shape: f32[256,128], index: 7, kind: output, shape index: {1}]
  %8 = xla_tuple %s6, %s7
  %s9 = sld [smem:[#allocation0]]
  $region111: #{_sage_forward_impl.7} parent=0
    _
  %s11 = ssub.s32 1, %s9
  %s12 = scalar_select 0, %s11, %s9
  $region1: #{_sage_forward_impl.7} parent=0
    #allocation3 [shape = 'u8[131072]{0}', space=vmem, size = 0x20000, scoped, tag = 'input window, operand 0']
    loop: start=0, step=1, limit=6
    $region2: #{_sage_forward_impl.7} parent=1 // loop_pre_header
      _
    $region3: #{_sage_forward_impl.7} parent=1 // loop_header
      %s14 = sphi 0, %s18
      %p15 = scmp.ge.s32.totalorder %s14, 6
      %s21 = sphi 0, %s33
      %s22 = sphi 0, %s29
      %s23 = sphi 0, %s21
      %s24 = sphi 0, %s22
      %s25 = sphi 0, %s23
      %s26 = sphi 0, %s24
      %s38 = sphi 0, %s40
      %s41 = sphi 0, %s38
      %s42 = sphi 0, %s41
      %s58 = sphi 0, %s42
      %s64 = sphi 0, %s66
      %s67 = sphi 0, %s64
      %s68 = sphi 0, %s67
      %s84 = sphi 0, %s68
      %s90 = sphi 0, %s92
      %s93 = sphi 0, %s90
      %s94 = sphi 0, %s93
      %s110 = sphi 0, %s94
      %s114 = sphi 0, %s114
      %s116 = sphi 0, %s114
      %s117 = sphi 0, %s116
      %s131 = sphi 0, %s117
      %s137 = sphi 0, %s139
      %s140 = sphi 0, %s137
      %s141 = sphi 0, %s140
      %s157 = sphi 0, %s141
      %s161 = sphi 0, %s161
      %s163 = sphi 0, %s161
      %s164 = sphi 0, %s163
      %s178 = sphi 0, %s164
      %s184 = sphi 0, %s186
      %s187 = sphi 0, %s184
      %s188 = sphi 0, %s187
      %s204 = sphi 0, %s188
      %s210 = sphi 0, %s212
      %s213 = sphi 0, %s210
      %s214 = sphi 0, %s213
      %s230 = sphi 0, %s214
    $region4: #{_sage_forward_impl.7} parent=1 // loop_header_branch
      %17 = sbr.rel (%p15) target = $region8
    $region5: #{_sage_forward_impl.7} parent=1 // loop_body
      %s19 = ssub.s32 %s14, 1
      %s20 = ssub.s32 %s14, 2
      %s27 = sadd.s32 1, %s22
      %p28 = scmp.ge.s32.totalorder %s27, 2
      %s29 = scalar_select %p28, 0, %s27
      %s30 = sadd.s32 1, %s21
      %s31 = scalar_select %p28, %s30, %s21
      %p32 = scmp.ge.s32.totalorder %s31, 2
      %s33 = scalar_select %p32, 0, %s31
      %s34 = ssub.s32 %s21, %s33
      %s35 = ssub.s32 %s22, %s29
      %s36 = sor.u32 %s34, %s35
      %p37 = scmp.eq.s32.totalorder %s36, 0
      %s39 = sadd.s32 %s38, 1
      %s40 = scalar_select %p37, %s38, %s39
      %p43 = pneg %p37
      %p44 = scmp.eq.s32.totalorder %s14, 3
      %p45 = por %p43, %p44
      %p46 = scmp.ne.s32.totalorder %s38, %s41
      %p47 = scmp.eq.s32.totalorder %s14, 0
      %p48 = por %p46, %p47
      %p49 = scmp.ne.s32.totalorder %s38, %s41
      %p50 = scmp.eq.s32.totalorder %s19, 3
      %p51 = por %p49, %p50
      %p52 = scmp.ne.s32.totalorder %s41, %s42
      %p53 = scmp.eq.s32.totalorder %s19, 0
      %p54 = por %p52, %p53
      %p55 = scmp.ne.s32.totalorder %s41, %s42
      %p56 = scmp.eq.s32.totalorder %s20, 3
      %p57 = por %p55, %p56
      %p59 = scmp.ne.s32.totalorder %s42, %s58
      %p60 = scmp.eq.s32.totalorder %s20, 0
      %p61 = por %p59, %p60
      %s62 = ssub.s32 %s22, %s29
      %p63 = scmp.eq.s32.totalorder %s62, 0
      %s65 = sadd.s32 %s64, 1
      %s66 = scalar_select %p63, %s64, %s65
      %p69 = pneg %p63
      %p70 = scmp.eq.s32.totalorder %s14, 3
      %p71 = por %p69, %p70
      %p72 = scmp.ne.s32.totalorder %s64, %s67
      %p73 = scmp.eq.s32.totalorder %s14, 0
      %p74 = por %p72, %p73
      %p75 = scmp.ne.s32.totalorder %s64, %s67
      %p76 = scmp.eq.s32.totalorder %s19, 3
      %p77 = por %p75, %p76
      %p78 = scmp.ne.s32.totalorder %s67, %s68
      %p79 = scmp.eq.s32.totalorder %s19, 0
      %p80 = por %p78, %p79
      %p81 = scmp.ne.s32.totalorder %s67, %s68
      %p82 = scmp.eq.s32.totalorder %s20, 3
      %p83 = por %p81, %p82
      %p85 = scmp.ne.s32.totalorder %s68, %s84
      %p86 = scmp.eq.s32.totalorder %s20, 0
      %p87 = por %p85, %p86
      %s88 = ssub.s32 %s21, %s33
      %p89 = scmp.eq.s32.totalorder %s88, 0
      %s91 = sadd.s32 %s90, 1
      %s92 = scalar_select %p89, %s90, %s91
      %p95 = pneg %p89
      %p96 = scmp.eq.s32.totalorder %s14, 3
      %p97 = por %p95, %p96
      %p98 = scmp.ne.s32.totalorder %s90, %s93
      %p99 = scmp.eq.s32.totalorder %s14, 0
      %p100 = por %p98, %p99
      %p101 = scmp.ne.s32.totalorder %s90, %s93
      %p102 = scmp.eq.s32.totalorder %s19, 3
      %p103 = por %p101, %p102
      %p104 = scmp.ne.s32.totalorder %s93, %s94
      %p105 = scmp.eq.s32.totalorder %s19, 0
      %p106 = por %p104, %p105
      %p107 = scmp.ne.s32.totalorder %s93, %s94
      %p108 = scmp.eq.s32.totalorder %s20, 3
      %p109 = por %p107, %p108
      %p111 = scmp.ne.s32.totalorder %s94, %s110
      %p112 = scmp.eq.s32.totalorder %s20, 0
      %p113 = por %p111, %p112
      %s115 = sadd.s32 %s114, 1
      %p118 = scmp.eq.s32.totalorder %s14, 3
      %p119 = scmp.ne.s32.totalorder %s114, %s116
      %p120 = scmp.eq.s32.totalorder %s14, 0
      %p121 = por %p119, %p120
      %p122 = scmp.ne.s32.totalorder %s114, %s116
      %p123 = scmp.eq.s32.totalorder %s19, 3
      %p124 = por %p122, %p123
      %p125 = scmp.ne.s32.totalorder %s116, %s117
      %p126 = scmp.eq.s32.totalorder %s19, 0
      %p127 = por %p125, %p126
      %p128 = scmp.ne.s32.totalorder %s116, %s117
      %p129 = scmp.eq.s32.totalorder %s20, 3
      %p130 = por %p128, %p129
      %p132 = scmp.ne.s32.totalorder %s117, %s131
      %p133 = scmp.eq.s32.totalorder %s20, 0
      %p134 = por %p132, %p133
      %s135 = ssub.s32 %s21, %s33
      %p136 = scmp.eq.s32.totalorder %s135, 0
      %s138 = sadd.s32 %s137, 1
      %s139 = scalar_select %p136, %s137, %s138
      %p142 = pneg %p136
      %p143 = scmp.eq.s32.totalorder %s14, 3
      %p144 = por %p142, %p143
      %p145 = scmp.ne.s32.totalorder %s137, %s140
      %p146 = scmp.eq.s32.totalorder %s14, 0
      %p147 = por %p145, %p146
      %p148 = scmp.ne.s32.totalorder %s137, %s140
      %p149 = scmp.eq.s32.totalorder %s19, 3
      %p150 = por %p148, %p149
      %p151 = scmp.ne.s32.totalorder %s140, %s141
      %p152 = scmp.eq.s32.totalorder %s19, 0
      %p153 = por %p151, %p152
      %p154 = scmp.ne.s32.totalorder %s140, %s141
      %p155 = scmp.eq.s32.totalorder %s20, 3
      %p156 = por %p154, %p155
      %p158 = scmp.ne.s32.totalorder %s141, %s157
      %p159 = scmp.eq.s32.totalorder %s20, 0
      %p160 = por %p158, %p159
      %s162 = sadd.s32 %s161, 1
      %p165 = scmp.eq.s32.totalorder %s14, 3
      %p166 = scmp.ne.s32.totalorder %s161, %s163
      %p167 = scmp.eq.s32.totalorder %s14, 0
      %p168 = por %p166, %p167
      %p169 = scmp.ne.s32.totalorder %s161, %s163
      %p170 = scmp.eq.s32.totalorder %s19, 3
      %p171 = por %p169, %p170
      %p172 = scmp.ne.s32.totalorder %s163, %s164
      %p173 = scmp.eq.s32.totalorder %s19, 0
      %p174 = por %p172, %p173
      %p175 = scmp.ne.s32.totalorder %s163, %s164
      %p176 = scmp.eq.s32.totalorder %s20, 3
      %p177 = por %p175, %p176
      %p179 = scmp.ne.s32.totalorder %s164, %s178
      %p180 = scmp.eq.s32.totalorder %s20, 0
      %p181 = por %p179, %p180
      %s182 = ssub.s32 %s21, %s33
      %p183 = scmp.eq.s32.totalorder %s182, 0
      %s185 = sadd.s32 %s184, 1
      %s186 = scalar_select %p183, %s184, %s185
      %p189 = pneg %p183
      %p190 = scmp.eq.s32.totalorder %s14, 3
      %p191 = por %p189, %p190
      %p192 = scmp.ne.s32.totalorder %s184, %s187
      %p193 = scmp.eq.s32.totalorder %s14, 0
      %p194 = por %p192, %p193
      %p195 = scmp.ne.s32.totalorder %s184, %s187
      %p196 = scmp.eq.s32.totalorder %s19, 3
      %p197 = por %p195, %p196
      %p198 = scmp.ne.s32.totalorder %s187, %s188
      %p199 = scmp.eq.s32.totalorder %s19, 0
      %p200 = por %p198, %p199
      %p201 = scmp.ne.s32.totalorder %s187, %s188
      %p202 = scmp.eq.s32.totalorder %s20, 3
      %p203 = por %p201, %p202
      %p205 = scmp.ne.s32.totalorder %s188, %s204
      %p206 = scmp.eq.s32.totalorder %s20, 0
      %p207 = por %p205, %p206
      %s208 = ssub.s32 %s21, %s33
      %p209 = scmp.eq.s32.totalorder %s208, 0
      %s211 = sadd.s32 %s210, 1
      %s212 = scalar_select %p209, %s210, %s211
      %p215 = pneg %p209
      %p216 = scmp.eq.s32.totalorder %s14, 3
      %p217 = por %p215, %p216
      %p218 = scmp.ne.s32.totalorder %s210, %s213
      %p219 = scmp.eq.s32.totalorder %s14, 0
      %p220 = por %p218, %p219
      %p221 = scmp.ne.s32.totalorder %s210, %s213
      %p222 = scmp.eq.s32.totalorder %s19, 3
      %p223 = por %p221, %p222
      %p224 = scmp.ne.s32.totalorder %s213, %s214
      %p225 = scmp.eq.s32.totalorder %s19, 0
      %p226 = por %p224, %p225
      %p227 = scmp.ne.s32.totalorder %s213, %s214
      %p228 = scmp.eq.s32.totalorder %s20, 3
      %p229 = por %p227, %p228
      %p231 = scmp.ne.s32.totalorder %s214, %s230
      %p232 = scmp.eq.s32.totalorder %s20, 0
      %p233 = por %p231, %p232
      %p234 = scmp.le.s32.totalorder 1, %s14
      %p235 = scmp.lt.s32.totalorder %s14, 5
      %p236 = pnand %p234, %p235
      %p237 = pneg %p236
      // Predicated region
      $region9: #{_sage_forward_impl.7} parent=5 // pred_check
        _
      $region10: #{_sage_forward_impl.7} parent=5 // pred_check_branch
        %239 = sbr.rel (%p236) target = $region12
      $region11: #{_sage_forward_impl.7} parent=5 // pred_region
        %s240 = ssub.s32 %s14, 1
        // Predicated region
        $region13: #{_sage_forward_impl.7} parent=11 // pred_check
          %p241 = pneg %p127
        $region14: #{_sage_forward_impl.7} parent=11 // pred_check_branch
          %243 = sbr.rel (%p241) target = $region16
        $region15: #{_sage_forward_impl.7} parent=11 // pred_region
          _
        $region16: #{_sage_forward_impl.7} parent=11 // pred_fallthru
          _
        // Predicated region
        $region17: #{_sage_forward_impl.7} parent=11 // pred_check
          %p244 = pneg %p174
        $region18: #{_sage_forward_impl.7} parent=11 // pred_check_branch
          %246 = sbr.rel (%p244) target = $region20
        $region19: #{_sage_forward_impl.7} parent=11 // pred_region
          _
        $region20: #{_sage_forward_impl.7} parent=11 // pred_fallthru
          _
      $region12: #{_sage_forward_impl.7} parent=5 // pred_fallthru
        _
      %p247 = scmp.lt.s32.totalorder %s14, 4
      // Predicated region
      $region21: #{_sage_forward_impl.7} parent=5 // pred_check
        %p248 = pneg %p247
      $region22: #{_sage_forward_impl.7} parent=5 // pred_check_branch
        %250 = sbr.rel (%p248) target = $region24
      $region23: #{_sage_forward_impl.7} parent=5 // pred_region
        // Predicated region
        $region25: #{_sage_forward_impl.7} parent=23 // pred_check
          %p251 = pneg %p48
        $region26: #{_sage_forward_impl.7} parent=23 // pred_check_branch
          %253 = sbr.rel (%p251) target = $region28
        $region27: #{_sage_forward_impl.7} parent=23 // pred_region
          %s254 = sand.u32 %s38, 1
          %s255 = sand.u32 %s38, 1
          %s256 = smul.addr %s255, 128
          %s257 = scalar_lea.vmem [#allocation3], %s256
          %s258 = smul.u32 16, %s21
          %s259 = smul.u32 2, %s22
          %s260 = smul.addr %s258, 4
          %s261 = sadd.s32 %s259, %s260
          %s262 = smul.addr %s261, 4
          %s263 = scalar_lea.vmem %s0, %s262
          // Predicated region
          $region29: #{_sage_forward_impl.7} parent=27 // pred_check
            _
          $region30: #{_sage_forward_impl.7} parent=27 // pred_check_branch
            %265 = sbr.rel (0) target = $region32
          $region31: #{_sage_forward_impl.7} parent=27 // pred_region
            // Predicated region
            $region33: #{_sage_forward_impl.7} parent=31 // pred_check
              _
            $region34: #{_sage_forward_impl.7} parent=31 // pred_check_branch
              %267 = sbr.rel (0) target = $region36
            $region35: #{_sage_forward_impl.7} parent=31 // pred_region
              // Predicated region
              $region48: #{_sage_forward_impl.7} parent=35 // pred_check
                _
              $region49: #{_sage_forward_impl.7} parent=35 // pred_check_branch
                %312 = sbr.rel (0) target = $region51
              $region50: #{_sage_forward_impl.7} parent=35 // pred_region
                loop: start=0, step=1, limit=1
                $region52: #{_sage_forward_impl.7} parent=50 // loop_pre_header
                  _
                $region53: #{_sage_forward_impl.7} parent=50 // loop_header
                  %s314 = sphi 0, %s318
                  %p315 = scmp.ge.s32.totalorder %s314, 1
                  %s319 = sphi %s263, %s263
                  %s320 = sphi %s257, %s257
                $region54: #{_sage_forward_impl.7} parent=50 // loop_header_branch
                  %317 = sbr.rel (%p315) target = $region58
                $region55: #{_sage_forward_impl.7} parent=50 // loop_body
                  %v321 = vld [vmem:[%s319] sm:$0xff]
                  %322 = vst [vmem:[%s320] sm:$0xff] %v321
                  %v323 = vld [vmem:[%s319 + $0x10] sm:$0xff]
                  %324 = vst [vmem:[%s320 + $0x8] sm:$0xff] %v323
                  %v325 = vld [vmem:[%s319 + $0x20] sm:$0xff]
                  %326 = vst [vmem:[%s320 + $0x10] sm:$0xff] %v325
                  %v327 = vld [vmem:[%s319 + $0x30] sm:$0xff]
                  %328 = vst [vmem:[%s320 + $0x18] sm:$0xff] %v327
                  %v329 = vld [vmem:[%s319 + $0x40] sm:$0xff]
                  %330 = vst [vmem:[%s320 + $0x20] sm:$0xff] %v329
                  %v331 = vld [vmem:[%s319 + $0x50] sm:$0xff]
                  %332 = vst [vmem:[%s320 + $0x28] sm:$0xff] %v331
                  %v333 = vld [vmem:[%s319 + $0x60] sm:$0xff]
                  %334 = vst [vmem:[%s320 + $0x30] sm:$0xff] %v333
                  %v335 = vld [vmem:[%s319 + $0x70] sm:$0xff]
                  %336 = vst [vmem:[%s320 + $0x38] sm:$0xff] %v335
                  %v337 = vld [vmem:[%s319 + $0x80] sm:$0xff]
                  %338 = vst [vmem:[%s320 + $0x40] sm:$0xff] %v337
                  %v339 = vld [vmem:[%s319 + $0x90] sm:$0xff]
                  %340 = vst [vmem:[%s320 + $0x48] sm:$0xff] %v339
                  %v341 = vld [vmem:[%s319 + $0xa0] sm:$0xff]
                  %342 = vst [vmem:[%s320 + $0x50] sm:$0xff] %v341
                  %v343 = vld [vmem:[%s319 + $0xb0] sm:$0xff]
                  %344 = vst [vmem:[%s320 + $0x58] sm:$0xff] %v343
                  %v345 = vld [vmem:[%s319 + $0xc0] sm:$0xff]
                  %346 = vst [vmem:[%s320 + $0x60] sm:$0xff] %v345
                  %v347 = vld [vmem:[%s319 + $0xd0] sm:$0xff]
                  %348 = vst [vmem:[%s320 + $0x68] sm:$0xff] %v347
                  %v349 = vld [vmem:[%s319 + $0xe0] sm:$0xff]
                  %350 = vst [vmem:[%s320 + $0x70] sm:$0xff] %v349
                  %v351 = vld [vmem:[%s319 + $0xf0] sm:$0xff]
                  %352 = vst [vmem:[%s320 + $0x78] sm:$0xff] %v351
                $region56: #{_sage_forward_impl.7} parent=50 // loop_footer
                  %s318 = sadd.s32 1, %s314
                $region57: #{_sage_forward_impl.7} parent=50 // loop_footer_branch
                  %313 = sbr.rel target = $region53
                $region58: #{_sage_forward_impl.7} parent=50 // loop_exit
                  _
              $region51: #{_sage_forward_impl.7} parent=35 // pred_fallthru
                _
              // Predicated region
              $region59: #{_sage_forward_impl.7} parent=35 // pred_check
                _
              $region60: #{_sage_forward_impl.7} parent=35 // pred_check_branch
                %354 = sbr.rel target = $region62
              $region61: #{_sage_forward_impl.7} parent=35 // pred_region
                _
              $region62: #{_sage_forward_impl.7} parent=35 // pred_fallthru
                _
            $region36: #{_sage_forward_impl.7} parent=31 // pred_fallthru
              _
            // Predicated region
            $region37: #{_sage_forward_impl.7} parent=31 // pred_check
              _
            $region38: #{_sage_forward_impl.7} parent=31 // pred_check_branch
              %269 = sbr.rel target = $region40
            $region39: #{_sage_forward_impl.7} parent=31 // pred_region
              loop: start=0, step=1, limit=1
              $region41: #{_sage_forward_impl.7} parent=39 // loop_pre_header
                _
              $region42: #{_sage_forward_impl.7} parent=39 // loop_header
                %s272 = sphi 0, %s276
                %p273 = scmp.ge.s32.totalorder %s272, 1
                %s277 = sphi %s263, %s263
                %s278 = sphi %s257, %s257
              $region43: #{_sage_forward_impl.7} parent=39 // loop_header_branch
                %275 = sbr.rel (%p273) target = $region47
              $region44: #{_sage_forward_impl.7} parent=39 // loop_body
                %v279 = vld [vmem:[%s277] sm:$0xff]
                %280 = vst [vmem:[%s278] sm:$0xff] %v279
                %v281 = vld [vmem:[%s277 + $0x10] sm:$0xff]
                %282 = vst [vmem:[%s278 + $0x8] sm:$0xff] %v281
                %v283 = vld [vmem:[%s277 + $0x20] sm:$0xff]
                %284 = vst [vmem:[%s278 + $0x10] sm:$0xff] %v283
                %v285 = vld [vmem:[%s277 + $0x30] sm:$0xff]
                %286 = vst [vmem:[%s278 + $0x18] sm:$0xff] %v285
                %v287 = vld [vmem:[%s277 + $0x40] sm:$0xff]
                %288 = vst [vmem:[%s278 + $0x20] sm:$0xff] %v287
                %v289 = vld [vmem:[%s277 + $0x50] sm:$0xff]
                %290 = vst [vmem:[%s278 + $0x28] sm:$0xff] %v289
                %v291 = vld [vmem:[%s277 + $0x60] sm:$0xff]
                %292 = vst [vmem:[%s278 + $0x30] sm:$0xff] %v291
                %v293 = vld [vmem:[%s277 + $0x70] sm:$0xff]
                %294 = vst [vmem:[%s278 + $0x38] sm:$0xff] %v293
                %v295 = vld [vmem:[%s277 + $0x80] sm:$0xff]
                %296 = vst [vmem:[%s278 + $0x40] sm:$0xff] %v295
                %v297 = vld [vmem:[%s277 + $0x90] sm:$0xff]
                %298 = vst [vmem:[%s278 + $0x48] sm:$0xff] %v297
                %v299 = vld [vmem:[%s277 + $0xa0] sm:$0xff]
                %300 = vst [vmem:[%s278 + $0x50] sm:$0xff] %v299
                %v301 = vld [vmem:[%s277 + $0xb0] sm:$0xff]
                %302 = vst [vmem:[%s278 + $0x58] sm:$0xff] %v301
                %v303 = vld [vmem:[%s277 + $0xc0] sm:$0xff]
                %304 = vst [vmem:[%s278 + $0x60] sm:$0xff] %v303
                %v305 = vld [vmem:[%s277 + $0xd0] sm:$0xff]
                %306 = vst [vmem:[%s278 + $0x68] sm:$0xff] %v305
                %v307 = vld [vmem:[%s277 + $0xe0] sm:$0xff]
                %308 = vst [vmem:[%s278 + $0x70] sm:$0xff] %v307
                %v309 = vld [vmem:[%s277 + $0xf0] sm:$0xff]
                %310 = vst [vmem:[%s278 + $0x78] sm:$0xff] %v309
              $region45: #{_sage_forward_impl.7} parent=39 // loop_footer
                %s276 = sadd.s32 1, %s272
              $region46: #{_sage_forward_impl.7} parent=39 // loop_footer_branch
                %271 = sbr.rel target = $region42
              $region47: #{_sage_forward_impl.7} parent=39 // loop_exit
                _
            $region40: #{_sage_forward_impl.7} parent=31 // pred_fallthru
              _
          $region32: #{_sage_forward_impl.7} parent=27 // pred_fallthru
            _
          %355 = vnop
        $region28: #{_sage_forward_impl.7} parent=23 // pred_fallthru
          _
        // Predicated region
        $region63: #{_sage_forward_impl.7} parent=23 // pred_check
          %p356 = pneg %p74
        $region64: #{_sage_forward_impl.7} parent=23 // pred_check_branch
          %358 = sbr.rel (%p356) target = $region66
        $region65: #{_sage_forward_impl.7} parent=23 // pred_region
          %s359 = smul.u32 32, %s22
          %p360 = scmp.lt.s32.totalorder %s359, 63
          %s361 = scalar_select %p360, %s359, 63
          %s362 = smul.addr %s361, 4
          %s363 = scalar_lea.vmem %s1, %s362
          %s364 = smul.u32 32, %s22
        $region66: #{_sage_forward_impl.7} parent=23 // pred_fallthru
          _
        // Predicated region
        $region67: #{_sage_forward_impl.7} parent=23 // pred_check
          %p365 = pneg %p100
        $region68: #{_sage_forward_impl.7} parent=23 // pred_check_branch
          %367 = sbr.rel (%p365) target = $region70
        $region69: #{_sage_forward_impl.7} parent=23 // pred_region
          %s368 = smul.u32 16, %s21
          %p369 = scmp.lt.s32.totalorder %s368, 31
          %s370 = scalar_select %p369, %s368, 31
          %s371 = smul.addr %s370, 8
          %s372 = scalar_lea.vmem %s2, %s371
          %s373 = smul.u32 16, %s21
        $region70: #{_sage_forward_impl.7} parent=23 // pred_fallthru
          _
        // Predicated region
        $region71: #{_sage_forward_impl.7} parent=23 // pred_check
          %p374 = pneg %p147
        $region72: #{_sage_forward_impl.7} parent=23 // pred_check_branch
          %376 = sbr.rel (%p374) target = $region74
        $region73: #{_sage_forward_impl.7} parent=23 // pred_region
          %s377 = smul.u32 16, %s21
          %p378 = scmp.lt.s32.totalorder %s377, 31
          %s379 = scalar_select %p378, %s377, 31
          %s380 = smul.addr %s379, 2
          %s381 = smul.addr %s380, 4
          %s382 = scalar_lea.vmem %s4, %s381
          %s383 = smul.u32 16, %s21
        $region74: #{_sage_forward_impl.7} parent=23 // pred_fallthru
          _
      $region24: #{_sage_forward_impl.7} parent=5 // pred_fallthru
        _
      %p384 = scmp.le.s32.totalorder 1, %s14
      %p385 = scmp.lt.s32.totalorder %s14, 5
      %p386 = pnand %p384, %p385
      %p387 = pneg %p386
      // Predicated region
      $region75: #{_sage_forward_impl.7} parent=5 // pred_check
        _
      $region76: #{_sage_forward_impl.7} parent=5 // pred_check_branch
        %389 = sbr.rel (%p386) target = $region78
      $region77: #{_sage_forward_impl.7} parent=5 // pred_region
        %s390 = ssub.s32 %s14, 1
        %s391 = sand.u32 %s41, 1
        %s392 = sand.u32 %s41, 1
        %s393 = smul.addr %s392, 128
        %s394 = scalar_lea.vmem [#allocation3], %s393
        // Predicated region
        $region79: #{_sage_forward_impl.7} parent=77 // pred_check
          %p395 = pneg %p54
        $region80: #{_sage_forward_impl.7} parent=77 // pred_check_branch
          %397 = sbr.rel (%p395) target = $region82
        $region81: #{_sage_forward_impl.7} parent=77 // pred_region
          _
        $region82: #{_sage_forward_impl.7} parent=77 // pred_fallthru
          _
        %s398 = sand.u32 %s41, 1
        %s399 = sand.u32 %s41, 1
        %s400 = smul.addr %s399, 128
        %s401 = scalar_lea.vmem [#allocation3], %s400
        %p402 = pneg %p54
        %p403 = pneg %p51
        %s404 = smul.u32 32, %s24
        %p405 = scmp.lt.s32.totalorder %s404, 63
        %s406 = scalar_select %p405, %s404, 63
        %s407 = smul.addr %s406, 4
        %s408 = scalar_lea.vmem %s1, %s407
        %p409 = pneg %p80
        %p410 = pneg %p77
        %s411 = smul.u32 16, %s23
        %p412 = scmp.lt.s32.totalorder %s411, 31
        %s413 = scalar_select %p412, %s411, 31
        %s414 = smul.addr %s413, 8
        %s415 = scalar_lea.vmem %s2, %s414
        %p416 = pneg %p106
        %p417 = pneg %p103
        %p418 = pneg %p127
        %p419 = pneg %p124
        %s420 = smul.u32 16, %s23
        %p421 = scmp.lt.s32.totalorder %s420, 31
        %s422 = scalar_select %p421, %s420, 31
        %s423 = smul.addr %s422, 2
        %s424 = smul.addr %s423, 4
        %s425 = scalar_lea.vmem %s4, %s424
        %p426 = pneg %p153
        %p427 = pneg %p150
        %p428 = pneg %p174
        %p429 = pneg %p171
        %p430 = pneg %p200
        %p431 = pneg %p197
        %s432 = smul.u32 16, %s23
        %p433 = scmp.lt.s32.totalorder %s432, 31
        %s434 = scalar_select %p433, %s432, 31
        %s435 = smul.addr %s434, 8
        %s436 = scalar_lea.vmem %s6, %s435
        %p437 = pneg %p226
        %p438 = pneg %p223
        %s439 = smul.u32 16, %s23
        %p440 = scmp.lt.s32.totalorder %s439, 31
        %s441 = scalar_select %p440, %s439, 31
        %s442 = smul.addr %s441, 8
        %s443 = scalar_lea.vmem %s7, %s442
        %s444 = smul.u32 16, %s23
        %s445 = smul.u32 2, %s24
        %s446 = smul.u32 32, %s24
        %p447 = scmp.lt.s32.totalorder %s446, 63
        %s448 = scalar_select %p447, %s446, 63
        %s449 = smul.addr %s448, 4
        %s450 = scalar_lea.vmem %s1, %s449
        %s451 = smul.u32 32, %s24
        %s452 = smul.u32 16, %s23
        %p453 = scmp.lt.s32.totalorder %s452, 31
        %s454 = scalar_select %p453, %s452, 31
        %s455 = smul.addr %s454, 8
        %s456 = scalar_lea.vmem %s2, %s455
        %s457 = smul.u32 16, %s23
        %s458 = smul.u32 16, %s23
        %p459 = scmp.lt.s32.totalorder %s458, 31
        %s460 = scalar_select %p459, %s458, 31
        %s461 = smul.addr %s460, 2
        %s462 = smul.addr %s461, 4
        %s463 = scalar_lea.vmem %s4, %s462
        %s464 = smul.u32 16, %s23
        %s465 = smul.u32 16, %s23
        %p466 = scmp.lt.s32.totalorder %s465, 31
        %s467 = scalar_select %p466, %s465, 31
        %s468 = smul.addr %s467, 8
        %s469 = scalar_lea.vmem %s6, %s468
        %s470 = smul.u32 16, %s23
        %s471 = smul.u32 16, %s23
        %p472 = scmp.lt.s32.totalorder %s471, 31
        %s473 = scalar_select %p472, %s471, 31
        %s474 = smul.addr %s473, 8
        %s475 = scalar_lea.vmem %s7, %s474
        %s476 = smul.u32 16, %s23
        %p478 = scmp.eq.s32.totalorder %s24, 0
        // Predicated region
        $region83: #{_sage_forward_impl.7} parent=77 // pred_check
          %p479 = pneg %p478
        $region84: #{_sage_forward_impl.7} parent=77 // pred_check_branch
          %481 = sbr.rel (%p479) target = $region86
        $region85: #{_sage_forward_impl.7} parent=77 // pred_region
          %482 = vst [vmem:[#allocation2] sm:$0xff] 0.0
          %483 = vst [vmem:[#allocation2 + $0x8] sm:$0xff] 0.0
          %484 = vst [vmem:[#allocation2 + $0x10] sm:$0xff] 0.0
          %485 = vst [vmem:[#allocation2 + $0x18] sm:$0xff] 0.0
          %486 = vst [vmem:[#allocation2 + $0x20] sm:$0xff] 0.0
          %487 = vst [vmem:[#allocation2 + $0x28] sm:$0xff] 0.0
          %488 = vst [vmem:[#allocation2 + $0x30] sm:$0xff] 0.0
          %489 = vst [vmem:[#allocation2 + $0x38] sm:$0xff] 0.0
          %490 = vst [vmem:[#allocation2 + $0x40] sm:$0xff] 0.0
          %491 = vst [vmem:[#allocation2 + $0x48] sm:$0xff] 0.0
          %492 = vst [vmem:[#allocation2 + $0x50] sm:$0xff] 0.0
          %493 = vst [vmem:[#allocation2 + $0x58] sm:$0xff] 0.0
          %494 = vst [vmem:[#allocation2 + $0x60] sm:$0xff] 0.0
          %495 = vst [vmem:[#allocation2 + $0x68] sm:$0xff] 0.0
          %496 = vst [vmem:[#allocation2 + $0x70] sm:$0xff] 0.0
          %497 = vst [vmem:[#allocation2 + $0x78] sm:$0xff] 0.0
        $region86: #{_sage_forward_impl.7} parent=77 // pred_fallthru
          _
        %v498 = vld [vmem:[#allocation2] sm:$0xff]
        %v499 = vld [vmem:[#allocation2 + $0x8] sm:$0xff]
        %v500 = vld [vmem:[#allocation2 + $0x10] sm:$0xff]
        %v501 = vld [vmem:[#allocation2 + $0x18] sm:$0xff]
        %v502 = vld [vmem:[#allocation2 + $0x20] sm:$0xff]
        %v503 = vld [vmem:[#allocation2 + $0x28] sm:$0xff]
        %v504 = vld [vmem:[#allocation2 + $0x30] sm:$0xff]
        %v505 = vld [vmem:[#allocation2 + $0x38] sm:$0xff]
        %v506 = vld [vmem:[#allocation2 + $0x40] sm:$0xff]
        %v507 = vld [vmem:[#allocation2 + $0x48] sm:$0xff]
        %v508 = vld [vmem:[#allocation2 + $0x50] sm:$0xff]
        %v509 = vld [vmem:[#allocation2 + $0x58] sm:$0xff]
        %v510 = vld [vmem:[#allocation2 + $0x60] sm:$0xff]
        %v511 = vld [vmem:[#allocation2 + $0x68] sm:$0xff]
        %v512 = vld [vmem:[#allocation2 + $0x70] sm:$0xff]
        %v513 = vld [vmem:[#allocation2 + $0x78] sm:$0xff]
        %v514 = vld [vmem:[%s394] sm:$0xff]
        %v515 = vld [vmem:[%s394 + $0x8] sm:$0xff]
        %v516 = vld [vmem:[%s394 + $0x10] sm:$0xff]
        %v517 = vld [vmem:[%s394 + $0x18] sm:$0xff]
        %v518 = vld [vmem:[%s394 + $0x20] sm:$0xff]
        %v519 = vld [vmem:[%s394 + $0x28] sm:$0xff]
        %v520 = vld [vmem:[%s394 + $0x30] sm:$0xff]
        %v521 = vld [vmem:[%s394 + $0x38] sm:$0xff]
        %v522 = vld [vmem:[%s394 + $0x40] sm:$0xff]
        %v523 = vld [vmem:[%s394 + $0x48] sm:$0xff]
        %v524 = vld [vmem:[%s394 + $0x50] sm:$0xff]
        %v525 = vld [vmem:[%s394 + $0x58] sm:$0xff]
        %v526 = vld [vmem:[%s394 + $0x60] sm:$0xff]
        %v527 = vld [vmem:[%s394 + $0x68] sm:$0xff]
        %v528 = vld [vmem:[%s394 + $0x70] sm:$0xff]
        %v529 = vld [vmem:[%s394 + $0x78] sm:$0xff]
        %v530 = vld [vmem:[%s450] sm:$0xf]
        %v531 = vld [vmem:[%s450 + $0x4] sm:$0xf]
        %v532 = vld [vmem:[%s450 + $0x8] sm:$0xf]
        %v533 = vld [vmem:[%s450 + $0xc] sm:$0xf]
        %v534 = vld [vmem:[%s450 + $0x10] sm:$0xf]
        %v535 = vld [vmem:[%s450 + $0x14] sm:$0xf]
        %v536 = vld [vmem:[%s450 + $0x18] sm:$0xf]
        %v537 = vld [vmem:[%s450 + $0x1c] sm:$0xf]
        %v538 = vld [vmem:[%s450 + $0x20] sm:$0xf]
        %v539 = vld [vmem:[%s450 + $0x24] sm:$0xf]
        %v540 = vld [vmem:[%s450 + $0x28] sm:$0xf]
        %v541 = vld [vmem:[%s450 + $0x2c] sm:$0xf]
        %v542 = vld [vmem:[%s450 + $0x30] sm:$0xf]
        %v543 = vld [vmem:[%s450 + $0x34] sm:$0xf]
        %v544 = vld [vmem:[%s450 + $0x38] sm:$0xf]
        %v545 = vld [vmem:[%s450 + $0x3c] sm:$0xf]
        %v546 = vld [vmem:[%s450 + $0x40] sm:$0xf]
        %v547 = vld [vmem:[%s450 + $0x44] sm:$0xf]
        %v548 = vld [vmem:[%s450 + $0x48] sm:$0xf]
        %v549 = vld [vmem:[%s450 + $0x4c] sm:$0xf]
        %v550 = vld [vmem:[%s450 + $0x50] sm:$0xf]
        %v551 = vld [vmem:[%s450 + $0x54] sm:$0xf]
        %v552 = vld [vmem:[%s450 + $0x58] sm:$0xf]
        %v553 = vld [vmem:[%s450 + $0x5c] sm:$0xf]
        %v554 = vld [vmem:[%s450 + $0x60] sm:$0xf]
        %v555 = vld [vmem:[%s450 + $0x64] sm:$0xf]
        %v556 = vld [vmem:[%s450 + $0x68] sm:$0xf]
        %v557 = vld [vmem:[%s450 + $0x6c] sm:$0xf]
        %v558 = vld [vmem:[%s450 + $0x70] sm:$0xf]
        %v559 = vld [vmem:[%s450 + $0x74] sm:$0xf]
        %v560 = vld [vmem:[%s450 + $0x78] sm:$0xf]
        %v561 = vld [vmem:[%s450 + $0x7c] sm:$0xf]
        %v578 = vunpack.c.l.b16 %v514
        %v579 = vunpack.c.h.b16 %v514
        %v580 = vunpack.c.l.b16 %v515
        %v581 = vunpack.c.h.b16 %v515
        %v582 = vunpack.c.l.b16 %v516
        %v583 = vunpack.c.h.b16 %v516
        %v584 = vunpack.c.l.b16 %v517
        %v585 = vunpack.c.h.b16 %v517
        %v586 = vunpack.c.l.b16 %v518
        %v587 = vunpack.c.h.b16 %v518
        %v588 = vunpack.c.l.b16 %v519
        %v589 = vunpack.c.h.b16 %v519
        %v590 = vunpack.c.l.b16 %v520
        %v591 = vunpack.c.h.b16 %v520
        %v592 = vunpack.c.l.b16 %v521
        %v593 = vunpack.c.h.b16 %v521
        %v594 = vunpack.c.l.b16 %v522
        %v595 = vunpack.c.h.b16 %v522
        %v596 = vunpack.c.l.b16 %v523
        %v597 = vunpack.c.h.b16 %v523
        %v598 = vunpack.c.l.b16 %v524
        %v599 = vunpack.c.h.b16 %v524
        %v600 = vunpack.c.l.b16 %v525
        %v601 = vunpack.c.h.b16 %v525
        %v602 = vunpack.c.l.b16 %v526
        %v603 = vunpack.c.h.b16 %v526
        %v604 = vunpack.c.l.b16 %v527
        %v605 = vunpack.c.h.b16 %v527
        %v606 = vunpack.c.l.b16 %v528
        %v607 = vunpack.c.h.b16 %v528
        %v608 = vunpack.c.l.b16 %v529
        %v609 = vunpack.c.h.b16 %v529
        %v610 = vpack.c.b16 %v580, %v578
        %v611 = vpack.c.b16 %v581, %v579
        %v612 = vpack.c.b16 %v584, %v582
        %v613 = vpack.c.b16 %v585, %v583
        %v614 = vpack.c.b16 %v588, %v586
        %v615 = vpack.c.b16 %v589, %v587
        %v616 = vpack.c.b16 %v592, %v590
        %v617 = vpack.c.b16 %v593, %v591
        %v618 = vpack.c.b16 %v596, %v594
        %v619 = vpack.c.b16 %v597, %v595
        %v620 = vpack.c.b16 %v600, %v598
        %v621 = vpack.c.b16 %v601, %v599
        %v622 = vpack.c.b16 %v604, %v602
        %v623 = vpack.c.b16 %v605, %v603
        %v624 = vpack.c.b16 %v608, %v606
        %v625 = vpack.c.b16 %v609, %v607
        %v674 = vunpack.c.l.b16 %v530
        %v675 = vunpack.c.l.b16 %v531
        %v676 = vunpack.c.l.b16 %v532
        %v677 = vunpack.c.l.b16 %v533
        %v678 = vunpack.c.l.b16 %v534
        %v679 = vunpack.c.l.b16 %v535
        %v680 = vunpack.c.l.b16 %v536
        %v681 = vunpack.c.l.b16 %v537
        %v682 = vunpack.c.l.b16 %v538
        %v683 = vunpack.c.l.b16 %v539
        %v684 = vunpack.c.l.b16 %v540
        %v685 = vunpack.c.l.b16 %v541
        %v686 = vunpack.c.l.b16 %v542
        %v687 = vunpack.c.l.b16 %v543
        %v688 = vunpack.c.l.b16 %v544
        %v689 = vunpack.c.l.b16 %v545
        %v690 = vunpack.c.l.b16 %v546
        %v691 = vunpack.c.l.b16 %v547
        %v692 = vunpack.c.l.b16 %v548
        %v693 = vunpack.c.l.b16 %v549
        %v694 = vunpack.c.l.b16 %v550
        %v695 = vunpack.c.l.b16 %v551
        %v696 = vunpack.c.l.b16 %v552
        %v697 = vunpack.c.l.b16 %v553
        %v698 = vunpack.c.l.b16 %v554
        %v699 = vunpack.c.l.b16 %v555
        %v700 = vunpack.c.l.b16 %v556
        %v701 = vunpack.c.l.b16 %v557
        %v702 = vunpack.c.l.b16 %v558
        %v703 = vunpack.c.l.b16 %v559
        %v704 = vunpack.c.l.b16 %v560
        %v705 = vunpack.c.l.b16 %v561
        %v706 = vpack.c.b16 %v675, %v674
        %v707 = vpack.c.b16 %v677, %v676
        %v708 = vpack.c.b16 %v679, %v678
        %v709 = vpack.c.b16 %v681, %v680
        %v710 = vpack.c.b16 %v683, %v682
        %v711 = vpack.c.b16 %v685, %v684
        %v712 = vpack.c.b16 %v687, %v686
        %v713 = vpack.c.b16 %v689, %v688
        %v714 = vpack.c.b16 %v691, %v690
        %v715 = vpack.c.b16 %v693, %v692
        %v716 = vpack.c.b16 %v695, %v694
        %v717 = vpack.c.b16 %v697, %v696
        %v718 = vpack.c.b16 %v699, %v698
        %v719 = vpack.c.b16 %v701, %v700
        %v720 = vpack.c.b16 %v703, %v702
        %v721 = vpack.c.b16 %v705, %v704
        %738 = vmatprep.subr.bf16.mxu0 0
        %739 = vmatpush1.bf16.msra.mxu0 %v706
        %740 = vmatprep.subr.bf16.mxu0 0
        %741 = vmatpush1.bf16.msra.mxu0 %v707
        %742 = vmatprep.subr.bf16.mxu0 0
        %743 = vmatpush1.bf16.msra.mxu0 %v708
        %744 = vmatprep.subr.bf16.mxu0 0
        %745 = vmatpush1.bf16.msra.mxu0 %v709
        %746 = vmatprep.subr.bf16.mxu0 0
        %747 = vmatpush1.bf16.msra.mxu0 %v710
        %748 = vmatprep.subr.bf16.mxu0 0
        %749 = vmatpush1.bf16.msra.mxu0 %v711
        %750 = vmatprep.subr.bf16.mxu0 0
        %751 = vmatpush1.bf16.msra.mxu0 %v712
        %752 = vmatprep.subr.bf16.mxu0 0
        %753 = vmatpush1.bf16.msra.mxu0 %v713
        %754 = vmatprep.subr.bf16.mxu0 0
        %755 = vmatpush1.bf16.msra.mxu0 %v714
        %756 = vmatprep.subr.bf16.mxu0 0
        %757 = vmatpush1.bf16.msra.mxu0 %v715
        %758 = vmatprep.subr.bf16.mxu0 0
        %759 = vmatpush1.bf16.msra.mxu0 %v716
        %760 = vmatprep.subr.bf16.mxu0 0
        %761 = vmatpush1.bf16.msra.mxu0 %v717
        %762 = vmatprep.subr.bf16.mxu0 0
        %763 = vmatpush1.bf16.msra.mxu0 %v718
        %764 = vmatprep.subr.bf16.mxu0 0
        %765 = vmatpush1.bf16.msra.mxu0 %v719
        %766 = vmatprep.subr.bf16.mxu0 0
        %767 = vmatpush1.bf16.msra.mxu0 %v720
        %768 = vmatprep.subr.bf16.mxu0 0
        %769 = vmatpush1.bf16.msra.mxu0 %v721
        %770 = vmatprep.mubr.bf16.mxu0 %v611
        %771 = vmatmul.mubr.bf16.gmra.mrb[0].mxu0 %v610
        %v772 = vpop.f32.mrb[0].mxu0
        %v773 = vadd.f32 0.0, %v772
        %v774 = vpop.f32.mrb[0].mxu0
        %v775 = vpop.f32.mrb[0].mxu0
        %v776 = vadd.f32 0.0, %v775
        %v777 = vpop.f32.mrb[0].mxu0
        %778 = vmatprep.mubr.bf16.mxu0 %v613
        %779 = vmatmul.mubr.bf16.gmra.mrb[0].mxu0 %v612
        %v780 = vpop.f32.mrb[0].mxu0
        %v781 = vadd.f32 0.0, %v780
        %v782 = vpop.f32.mrb[0].mxu0
        %v783 = vpop.f32.mrb[0].mxu0
        %v784 = vadd.f32 0.0, %v783
        %v785 = vpop.f32.mrb[0].mxu0
        %786 = vmatprep.mubr.bf16.mxu0 %v615
        %787 = vmatmul.mubr.bf16.gmra.mrb[0].mxu0 %v614
        %v788 = vpop.f32.mrb[0].mxu0
        %v789 = vadd.f32 0.0, %v788
        %v790 = vpop.f32.mrb[0].mxu0
        %v791 = vpop.f32.mrb[0].mxu0
        %v792 = vadd.f32 0.0, %v791
        %v793 = vpop.f32.mrb[0].mxu0
        %794 = vmatprep.mubr.bf16.mxu0 %v617
        %795 = vmatmul.mubr.bf16.gmra.mrb[0].mxu0 %v616
        %v796 = vpop.f32.mrb[0].mxu0
        %v797 = vadd.f32 0.0, %v796
        %v798 = vpop.f32.mrb[0].mxu0
        %v799 = vpop.f32.mrb[0].mxu0
        %v800 = vadd.f32 0.0, %v799
        %v801 = vpop.f32.mrb[0].mxu0
        %802 = vmatprep.mubr.bf16.mxu0 %v619
        %803 = vmatmul.mubr.bf16.gmra.mrb[0].mxu0 %v618
        %v804 = vpop.f32.mrb[0].mxu0
        %v805 = vadd.f32 0.0, %v804
        %v806 = vpop.f32.mrb[0].mxu0
        %v807 = vpop.f32.mrb[0].mxu0
        %v808 = vadd.f32 0.0, %v807
        %v809 = vpop.f32.mrb[0].mxu0
        %810 = vmatprep.mubr.bf16.mxu0 %v621
        %811 = vmatmul.mubr.bf16.gmra.mrb[0].mxu0 %v620
        %v812 = vpop.f32.mrb[0].mxu0
        %v813 = vadd.f32 0.0, %v812
        %v814 = vpop.f32.mrb[0].mxu0
        %v815 = vpop.f32.mrb[0].mxu0
        %v816 = vadd.f32 0.0, %v815
        %v817 = vpop.f32.mrb[0].mxu0
        %818 = vmatprep.mubr.bf16.mxu0 %v623
        %819 = vmatmul.mubr.bf16.gmra.mrb[0].mxu0 %v622
        %v820 = vpop.f32.mrb[0].mxu0
        %v821 = vadd.f32 0.0, %v820
        %v822 = vpop.f32.mrb[0].mxu0
        %v823 = vpop.f32.mrb[0].mxu0
        %v824 = vadd.f32 0.0, %v823
        %v825 = vpop.f32.mrb[0].mxu0
        %826 = vmatprep.mubr.bf16.mxu0 %v625
        %827 = vmatmul.mubr.bf16.gmra.mrb[0].mxu0 %v624
        %v828 = vpop.f32.mrb[0].mxu0
        %v829 = vadd.f32 0.0, %v828
        %v830 = vpop.f32.mrb[0].mxu0
        %v831 = vpop.f32.mrb[0].mxu0
        %v832 = vadd.f32 0.0, %v831
        %v833 = vpop.f32.mrb[0].mxu0
        %834 = vdwg.mxu0
        %v835 = vadd.f32 %v498, %v773
        %v836 = vadd.f32 %v499, %v776
        %v837 = vadd.f32 %v500, %v781
        %v838 = vadd.f32 %v501, %v784
        %v839 = vadd.f32 %v502, %v789
        %v840 = vadd.f32 %v503, %v792
        %v841 = vadd.f32 %v504, %v797
        %v842 = vadd.f32 %v505, %v800
        %v843 = vadd.f32 %v506, %v805
        %v844 = vadd.f32 %v507, %v808
        %v845 = vadd.f32 %v508, %v813
        %v846 = vadd.f32 %v509, %v816
        %v847 = vadd.f32 %v510, %v821
        %v848 = vadd.f32 %v511, %v824
        %v849 = vadd.f32 %v512, %v829
        %v850 = vadd.f32 %v513, %v832
        %851 = vst [vmem:[#allocation2] sm:$0xff] %v835
        %852 = vst [vmem:[#allocation2 + $0x8] sm:$0xff] %v836
        %853 = vst [vmem:[#allocation2 + $0x10] sm:$0xff] %v837
        %854 = vst [vmem:[#allocation2 + $0x18] sm:$0xff] %v838
        %855 = vst [vmem:[#allocation2 + $0x20] sm:$0xff] %v839
        %856 = vst [vmem:[#allocation2 + $0x28] sm:$0xff] %v840
        %857 = vst [vmem:[#allocation2 + $0x30] sm:$0xff] %v841
        %858 = vst [vmem:[#allocation2 + $0x38] sm:$0xff] %v842
        %859 = vst [vmem:[#allocation2 + $0x40] sm:$0xff] %v843
        %860 = vst [vmem:[#allocation2 + $0x48] sm:$0xff] %v844
        %861 = vst [vmem:[#allocation2 + $0x50] sm:$0xff] %v845
        %862 = vst [vmem:[#allocation2 + $0x58] sm:$0xff] %v846
        %863 = vst [vmem:[#allocation2 + $0x60] sm:$0xff] %v847
        %864 = vst [vmem:[#allocation2 + $0x68] sm:$0xff] %v848
        %865 = vst [vmem:[#allocation2 + $0x70] sm:$0xff] %v849
        %866 = vst [vmem:[#allocation2 + $0x78] sm:$0xff] %v850
        %p867 = scmp.eq.s32.totalorder %s24, 1
        // Predicated region
        $region87: #{_sage_forward_impl.7} parent=77 // pred_check
          %p868 = pneg %p867
        $region88: #{_sage_forward_impl.7} parent=77 // pred_check_branch
          %870 = sbr.rel (%p868) target = $region90
        $region89: #{_sage_forward_impl.7} parent=77 // pred_region
          %v871 = vld [vmem:[#allocation2] sm:$0xff]
          %v872 = vld [vmem:[#allocation2 + $0x8] sm:$0xff]
          %v873 = vld [vmem:[#allocation2 + $0x10] sm:$0xff]
          %v874 = vld [vmem:[#allocation2 + $0x18] sm:$0xff]
          %v875 = vld [vmem:[#allocation2 + $0x20] sm:$0xff]
          %v876 = vld [vmem:[#allocation2 + $0x28] sm:$0xff]
          %v877 = vld [vmem:[#allocation2 + $0x30] sm:$0xff]
          %v878 = vld [vmem:[#allocation2 + $0x38] sm:$0xff]
          %v879 = vld [vmem:[#allocation2 + $0x40] sm:$0xff]
          %v880 = vld [vmem:[#allocation2 + $0x48] sm:$0xff]
          %v881 = vld [vmem:[#allocation2 + $0x50] sm:$0xff]
          %v882 = vld [vmem:[#allocation2 + $0x58] sm:$0xff]
          %v883 = vld [vmem:[#allocation2 + $0x60] sm:$0xff]
          %v884 = vld [vmem:[#allocation2 + $0x68] sm:$0xff]
          %v885 = vld [vmem:[#allocation2 + $0x70] sm:$0xff]
          %v886 = vld [vmem:[#allocation2 + $0x78] sm:$0xff]
          %v887 = vld [vmem:[%s456] sm:$0xff]
          %v888 = vld [vmem:[%s456 + $0x8] sm:$0xff]
          %v889 = vld [vmem:[%s456 + $0x10] sm:$0xff]
          %v890 = vld [vmem:[%s456 + $0x18] sm:$0xff]
          %v891 = vld [vmem:[%s456 + $0x20] sm:$0xff]
          %v892 = vld [vmem:[%s456 + $0x28] sm:$0xff]
          %v893 = vld [vmem:[%s456 + $0x30] sm:$0xff]
          %v894 = vld [vmem:[%s456 + $0x38] sm:$0xff]
          %v895 = vld [vmem:[%s456 + $0x40] sm:$0xff]
          %v896 = vld [vmem:[%s456 + $0x48] sm:$0xff]
          %v897 = vld [vmem:[%s456 + $0x50] sm:$0xff]
          %v898 = vld [vmem:[%s456 + $0x58] sm:$0xff]
          %v899 = vld [vmem:[%s456 + $0x60] sm:$0xff]
          %v900 = vld [vmem:[%s456 + $0x68] sm:$0xff]
          %v901 = vld [vmem:[%s456 + $0x70] sm:$0xff]
          %v902 = vld [vmem:[%s456 + $0x78] sm:$0xff]
          %904 = vset.pattern.permute.xlu0 0
          %905 = vperm.xlu0 %904, %v887
          %v906 = vpop.permute.xlu0 %905
          %909 = vset.pattern.permute.xlu0 0
          %910 = vperm.xlu0 %909, %v888
          %v911 = vpop.permute.xlu0 %910
          %914 = vset.pattern.permute.xlu0 0
          %915 = vperm.xlu0 %914, %v889
          %v916 = vpop.permute.xlu0 %915
          %919 = vset.pattern.permute.xlu0 0
          %920 = vperm.xlu0 %919, %v890
          %v921 = vpop.permute.xlu0 %920
          %924 = vset.pattern.permute.xlu0 0
          %925 = vperm.xlu0 %924, %v891
          %v926 = vpop.permute.xlu0 %925
          %929 = vset.pattern.permute.xlu0 0
          %930 = vperm.xlu0 %929, %v892
          %v931 = vpop.permute.xlu0 %930
          %934 = vset.pattern.permute.xlu0 0
          %935 = vperm.xlu0 %934, %v893
          %v936 = vpop.permute.xlu0 %935
          %939 = vset.pattern.permute.xlu0 0
          %940 = vperm.xlu0 %939, %v894
          %v941 = vpop.permute.xlu0 %940
          %944 = vset.pattern.permute.xlu0 0
          %945 = vperm.xlu0 %944, %v895
          %v946 = vpop.permute.xlu0 %945
          %949 = vset.pattern.permute.xlu0 0
          %950 = vperm.xlu0 %949, %v896
          %v951 = vpop.permute.xlu0 %950
          %954 = vset.pattern.permute.xlu0 0
          %955 = vperm.xlu0 %954, %v897
          %v956 = vpop.permute.xlu0 %955
          %959 = vset.pattern.permute.xlu0 0
          %960 = vperm.xlu0 %959, %v898
          %v961 = vpop.permute.xlu0 %960
          %964 = vset.pattern.permute.xlu0 0
          %965 = vperm.xlu0 %964, %v899
          %v966 = vpop.permute.xlu0 %965
          %969 = vset.pattern.permute.xlu0 0
          %970 = vperm.xlu0 %969, %v900
          %v971 = vpop.permute.xlu0 %970
          %974 = vset.pattern.permute.xlu0 0
          %975 = vperm.xlu0 %974, %v901
          %v976 = vpop.permute.xlu0 %975
          %979 = vset.pattern.permute.xlu0 0
          %980 = vperm.xlu0 %979, %v902
          %v981 = vpop.permute.xlu0 %980
          %v983 = vmul.f32 %v871, %v906
          %v984 = vmul.f32 %v872, %v911
          %v985 = vmul.f32 %v873, %v916
          %v986 = vmul.f32 %v874, %v921
          %v987 = vmul.f32 %v875, %v926
          %v988 = vmul.f32 %v876, %v931
          %v989 = vmul.f32 %v877, %v936
          %v990 = vmul.f32 %v878, %v941
          %v991 = vmul.f32 %v879, %v946
          %v992 = vmul.f32 %v880, %v951
          %v993 = vmul.f32 %v881, %v956
          %v994 = vmul.f32 %v882, %v961
          %v995 = vmul.f32 %v883, %v966
          %v996 = vmul.f32 %v884, %v971
          %v997 = vmul.f32 %v885, %v976
          %v998 = vmul.f32 %v886, %v981
          %v999 = vld [vmem:[%s3] sm:$0x1]
          %v1001 = vlaneseq
          %v1002 = vshrl.u32 %v1001, 7
          %v1003 = vsub.s32 0, %v1002
          %v1004 = vrot.slane %v999, %v1003
          %v1006 = vadd.f32 %v983, %v1004
          %v1007 = vadd.f32 %v984, %v1004
          %v1008 = vadd.f32 %v985, %v1004
          %v1009 = vadd.f32 %v986, %v1004
          %v1010 = vadd.f32 %v987, %v1004
          %v1011 = vadd.f32 %v988, %v1004
          %v1012 = vadd.f32 %v989, %v1004
          %v1013 = vadd.f32 %v990, %v1004
          %v1014 = vadd.f32 %v991, %v1004
          %v1015 = vadd.f32 %v992, %v1004
          %v1016 = vadd.f32 %v993, %v1004
          %v1017 = vadd.f32 %v994, %v1004
          %v1018 = vadd.f32 %v995, %v1004
          %v1019 = vadd.f32 %v996, %v1004
          %v1020 = vadd.f32 %v997, %v1004
          %v1021 = vadd.f32 %v998, %v1004
          %v1022 = vld [vmem:[%s463] sm:$0xff]
          %v1023 = vld [vmem:[%s463 + $0x8] sm:$0xff]
          %v1024 = vld [vmem:[%s463 + $0x10] sm:$0xff]
          %v1025 = vld [vmem:[%s463 + $0x18] sm:$0xff]
          %v1026 = vld [vmem:[%s463 + $0x20] sm:$0xff]
          %v1027 = vld [vmem:[%s463 + $0x28] sm:$0xff]
          %v1028 = vld [vmem:[%s463 + $0x30] sm:$0xff]
          %v1029 = vld [vmem:[%s463 + $0x38] sm:$0xff]
          %v1030 = vld [vmem:[%s463 + $0x40] sm:$0xff]
          %v1031 = vld [vmem:[%s463 + $0x48] sm:$0xff]
          %v1032 = vld [vmem:[%s463 + $0x50] sm:$0xff]
          %v1033 = vld [vmem:[%s463 + $0x58] sm:$0xff]
          %v1034 = vld [vmem:[%s463 + $0x60] sm:$0xff]
          %v1035 = vld [vmem:[%s463 + $0x68] sm:$0xff]
          %v1036 = vld [vmem:[%s463 + $0x70] sm:$0xff]
          %v1037 = vld [vmem:[%s463 + $0x78] sm:$0xff]
          %v1038 = vld [vmem:[%s5] sm:$0xf]
          %v1039 = vld [vmem:[%s5 + $0x4] sm:$0xf]
          %v1040 = vld [vmem:[%s5 + $0x8] sm:$0xf]
          %v1041 = vld [vmem:[%s5 + $0xc] sm:$0xf]
          %v1042 = vld [vmem:[%s5 + $0x10] sm:$0xf]
          %v1043 = vld [vmem:[%s5 + $0x14] sm:$0xf]
          %v1044 = vld [vmem:[%s5 + $0x18] sm:$0xf]
          %v1045 = vld [vmem:[%s5 + $0x1c] sm:$0xf]
          %v1046 = vld [vmem:[%s5 + $0x20] sm:$0xf]
          %v1047 = vld [vmem:[%s5 + $0x24] sm:$0xf]
          %v1048 = vld [vmem:[%s5 + $0x28] sm:$0xf]
          %v1049 = vld [vmem:[%s5 + $0x2c] sm:$0xf]
          %v1050 = vld [vmem:[%s5 + $0x30] sm:$0xf]
          %v1051 = vld [vmem:[%s5 + $0x34] sm:$0xf]
          %v1052 = vld [vmem:[%s5 + $0x38] sm:$0xf]
          %v1053 = vld [vmem:[%s5 + $0x3c] sm:$0xf]
          %v1054 = vld [vmem:[%s5 + $0x40] sm:$0xf]
          %v1055 = vld [vmem:[%s5 + $0x44] sm:$0xf]
          %v1056 = vld [vmem:[%s5 + $0x48] sm:$0xf]
          %v1057 = vld [vmem:[%s5 + $0x4c] sm:$0xf]
          %v1058 = vld [vmem:[%s5 + $0x50] sm:$0xf]
          %v1059 = vld [vmem:[%s5 + $0x54] sm:$0xf]
          %v1060 = vld [vmem:[%s5 + $0x58] sm:$0xf]
          %v1061 = vld [vmem:[%s5 + $0x5c] sm:$0xf]
          %v1062 = vld [vmem:[%s5 + $0x60] sm:$0xf]
          %v1063 = vld [vmem:[%s5 + $0x64] sm:$0xf]
          %v1064 = vld [vmem:[%s5 + $0x68] sm:$0xf]
          %v1065 = vld [vmem:[%s5 + $0x6c] sm:$0xf]
          %v1066 = vld [vmem:[%s5 + $0x70] sm:$0xf]
          %v1067 = vld [vmem:[%s5 + $0x74] sm:$0xf]
          %v1068 = vld [vmem:[%s5 + $0x78] sm:$0xf]
          %v1069 = vld [vmem:[%s5 + $0x7c] sm:$0xf]
          %v1086 = vunpack.c.l.b16 %v1022
          %v1087 = vunpack.c.h.b16 %v1022
          %v1088 = vunpack.c.l.b16 %v1023
          %v1089 = vunpack.c.h.b16 %v1023
          %v1090 = vunpack.c.l.b16 %v1024
          %v1091 = vunpack.c.h.b16 %v1024
          %v1092 = vunpack.c.l.b16 %v1025
          %v1093 = vunpack.c.h.b16 %v1025
          %v1094 = vunpack.c.l.b16 %v1026
          %v1095 = vunpack.c.h.b16 %v1026
          %v1096 = vunpack.c.l.b16 %v1027
          %v1097 = vunpack.c.h.b16 %v1027
          %v1098 = vunpack.c.l.b16 %v1028
          %v1099 = vunpack.c.h.b16 %v1028
          %v1100 = vunpack.c.l.b16 %v1029
          %v1101 = vunpack.c.h.b16 %v1029
          %v1102 = vunpack.c.l.b16 %v1030
          %v1103 = vunpack.c.h.b16 %v1030
          %v1104 = vunpack.c.l.b16 %v1031
          %v1105 = vunpack.c.h.b16 %v1031
          %v1106 = vunpack.c.l.b16 %v1032
          %v1107 = vunpack.c.h.b16 %v1032
          %v1108 = vunpack.c.l.b16 %v1033
          %v1109 = vunpack.c.h.b16 %v1033
          %v1110 = vunpack.c.l.b16 %v1034
          %v1111 = vunpack.c.h.b16 %v1034
          %v1112 = vunpack.c.l.b16 %v1035
          %v1113 = vunpack.c.h.b16 %v1035
          %v1114 = vunpack.c.l.b16 %v1036
          %v1115 = vunpack.c.h.b16 %v1036
          %v1116 = vunpack.c.l.b16 %v1037
          %v1117 = vunpack.c.h.b16 %v1037
          %v1118 = vpack.c.b16 %v1088, %v1086
          %v1119 = vpack.c.b16 %v1089, %v1087
          %v1120 = vpack.c.b16 %v1092, %v1090
          %v1121 = vpack.c.b16 %v1093, %v1091
          %v1122 = vpack.c.b16 %v1096, %v1094
          %v1123 = vpack.c.b16 %v1097, %v1095
          %v1124 = vpack.c.b16 %v1100, %v1098
          %v1125 = vpack.c.b16 %v1101, %v1099
          %v1126 = vpack.c.b16 %v1104, %v1102
          %v1127 = vpack.c.b16 %v1105, %v1103
          %v1128 = vpack.c.b16 %v1108, %v1106
          %v1129 = vpack.c.b16 %v1109, %v1107
          %v1130 = vpack.c.b16 %v1112, %v1110
          %v1131 = vpack.c.b16 %v1113, %v1111
          %v1132 = vpack.c.b16 %v1116, %v1114
          %v1133 = vpack.c.b16 %v1117, %v1115
          %v1182 = vunpack.c.l.b16 %v1038
          %v1183 = vunpack.c.l.b16 %v1039
          %v1184 = vunpack.c.l.b16 %v1040
          %v1185 = vunpack.c.l.b16 %v1041
          %v1186 = vunpack.c.l.b16 %v1042
          %v1187 = vunpack.c.l.b16 %v1043
          %v1188 = vunpack.c.l.b16 %v1044
          %v1189 = vunpack.c.l.b16 %v1045
          %v1190 = vunpack.c.l.b16 %v1046
          %v1191 = vunpack.c.l.b16 %v1047
          %v1192 = vunpack.c.l.b16 %v1048
          %v1193 = vunpack.c.l.b16 %v1049
          %v1194 = vunpack.c.l.b16 %v1050
          %v1195 = vunpack.c.l.b16 %v1051
          %v1196 = vunpack.c.l.b16 %v1052
          %v1197 = vunpack.c.l.b16 %v1053
          %v1198 = vunpack.c.l.b16 %v1054
          %v1199 = vunpack.c.l.b16 %v1055
          %v1200 = vunpack.c.l.b16 %v1056
          %v1201 = vunpack.c.l.b16 %v1057
          %v1202 = vunpack.c.l.b16 %v1058
          %v1203 = vunpack.c.l.b16 %v1059
          %v1204 = vunpack.c.l.b16 %v1060
          %v1205 = vunpack.c.l.b16 %v1061
          %v1206 = vunpack.c.l.b16 %v1062
          %v1207 = vunpack.c.l.b16 %v1063
          %v1208 = vunpack.c.l.b16 %v1064
          %v1209 = vunpack.c.l.b16 %v1065
          %v1210 = vunpack.c.l.b16 %v1066
          %v1211 = vunpack.c.l.b16 %v1067
          %v1212 = vunpack.c.l.b16 %v1068
          %v1213 = vunpack.c.l.b16 %v1069
          %v1214 = vpack.c.b16 %v1183, %v1182
          %v1215 = vpack.c.b16 %v1185, %v1184
          %v1216 = vpack.c.b16 %v1187, %v1186
          %v1217 = vpack.c.b16 %v1189, %v1188
          %v1218 = vpack.c.b16 %v1191, %v1190
          %v1219 = vpack.c.b16 %v1193, %v1192
          %v1220 = vpack.c.b16 %v1195, %v1194
          %v1221 = vpack.c.b16 %v1197, %v1196
          %v1222 = vpack.c.b16 %v1199, %v1198
          %v1223 = vpack.c.b16 %v1201, %v1200
          %v1224 = vpack.c.b16 %v1203, %v1202
          %v1225 = vpack.c.b16 %v1205, %v1204
          %v1226 = vpack.c.b16 %v1207, %v1206
          %v1227 = vpack.c.b16 %v1209, %v1208
          %v1228 = vpack.c.b16 %v1211, %v1210
          %v1229 = vpack.c.b16 %v1213, %v1212
          %1246 = vmatprep.subr.bf16.mxu0 0
          %1247 = vmatpush1.bf16.msra.mxu0 %v1214
          %1248 = vmatprep.subr.bf16.mxu0 0
          %1249 = vmatpush1.bf16.msra.mxu0 %v1215
          %1250 = vmatprep.subr.bf16.mxu0 0
          %1251 = vmatpush1.bf16.msra.mxu0 %v1216
          %1252 = vmatprep.subr.bf16.mxu0 0
          %1253 = vmatpush1.bf16.msra.mxu0 %v1217
          %1254 = vmatprep.subr.bf16.mxu0 0
          %1255 = vmatpush1.bf16.msra.mxu0 %v1218
          %1256 = vmatprep.subr.bf16.mxu0 0
          %1257 = vmatpush1.bf16.msra.mxu0 %v1219
          %1258 = vmatprep.subr.bf16.mxu0 0
          %1259 = vmatpush1.bf16.msra.mxu0 %v1220
          %1260 = vmatprep.subr.bf16.mxu0 0
          %1261 = vmatpush1.bf16.msra.mxu0 %v1221
          %1262 = vmatprep.subr.bf16.mxu0 0
          %1263 = vmatpush1.bf16.msra.mxu0 %v1222
          %1264 = vmatprep.subr.bf16.mxu0 0
          %1265 = vmatpush1.bf16.msra.mxu0 %v1223
          %1266 = vmatprep.subr.bf16.mxu0 0
          %1267 = vmatpush1.bf16.msra.mxu0 %v1224
          %1268 = vmatprep.subr.bf16.mxu0 0
          %1269 = vmatpush1.bf16.msra.mxu0 %v1225
          %1270 = vmatprep.subr.bf16.mxu0 0
          %1271 = vmatpush1.bf16.msra.mxu0 %v1226
          %1272 = vmatprep.subr.bf16.mxu0 0
          %1273 = vmatpush1.bf16.msra.mxu0 %v1227
          %1274 = vmatprep.subr.bf16.mxu0 0
          %1275 = vmatpush1.bf16.msra.mxu0 %v1228
          %1276 = vmatprep.subr.bf16.mxu0 0
          %1277 = vmatpush1.bf16.msra.mxu0 %v1229
          %1278 = vmatprep.mubr.bf16.mxu0 %v1119
          %1279 = vmatmul.mubr.bf16.gmra.mrb[0].mxu0 %v1118
          %v1280 = vpop.f32.mrb[0].mxu0
          %v1281 = vadd.f32 0.0, %v1280
          %v1282 = vpop.f32.mrb[0].mxu0
          %v1283 = vpop.f32.mrb[0].mxu0
          %v1284 = vadd.f32 0.0, %v1283
          %v1285 = vpop.f32.mrb[0].mxu0
          %1286 = vmatprep.mubr.bf16.mxu0 %v1121
          %1287 = vmatmul.mubr.bf16.gmra.mrb[0].mxu0 %v1120
          %v1288 = vpop.f32.mrb[0].mxu0
          %v1289 = vadd.f32 0.0, %v1288
          %v1290 = vpop.f32.mrb[0].mxu0
          %v1291 = vpop.f32.mrb[0].mxu0
          %v1292 = vadd.f32 0.0, %v1291
          %v1293 = vpop.f32.mrb[0].mxu0
          %1294 = vmatprep.mubr.bf16.mxu0 %v1123
          %1295 = vmatmul.mubr.bf16.gmra.mrb[0].mxu0 %v1122
          %v1296 = vpop.f32.mrb[0].mxu0
          %v1297 = vadd.f32 0.0, %v1296
          %v1298 = vpop.f32.mrb[0].mxu0
          %v1299 = vpop.f32.mrb[0].mxu0
          %v1300 = vadd.f32 0.0, %v1299
          %v1301 = vpop.f32.mrb[0].mxu0
          %1302 = vmatprep.mubr.bf16.mxu0 %v1125
          %1303 = vmatmul.mubr.bf16.gmra.mrb[0].mxu0 %v1124
          %v1304 = vpop.f32.mrb[0].mxu0
          %v1305 = vadd.f32 0.0, %v1304
          %v1306 = vpop.f32.mrb[0].mxu0
          %v1307 = vpop.f32.mrb[0].mxu0
          %v1308 = vadd.f32 0.0, %v1307
          %v1309 = vpop.f32.mrb[0].mxu0
          %1310 = vmatprep.mubr.bf16.mxu0 %v1127
          %1311 = vmatmul.mubr.bf16.gmra.mrb[0].mxu0 %v1126
          %v1312 = vpop.f32.mrb[0].mxu0
          %v1313 = vadd.f32 0.0, %v1312
          %v1314 = vpop.f32.mrb[0].mxu0
          %v1315 = vpop.f32.mrb[0].mxu0
          %v1316 = vadd.f32 0.0, %v1315
          %v1317 = vpop.f32.mrb[0].mxu0
          %1318 = vmatprep.mubr.bf16.mxu0 %v1129
          %1319 = vmatmul.mubr.bf16.gmra.mrb[0].mxu0 %v1128
          %v1320 = vpop.f32.mrb[0].mxu0
          %v1321 = vadd.f32 0.0, %v1320
          %v1322 = vpop.f32.mrb[0].mxu0
          %v1323 = vpop.f32.mrb[0].mxu0
          %v1324 = vadd.f32 0.0, %v1323
          %v1325 = vpop.f32.mrb[0].mxu0
          %1326 = vmatprep.mubr.bf16.mxu0 %v1131
          %1327 = vmatmul.mubr.bf16.gmra.mrb[0].mxu0 %v1130
          %v1328 = vpop.f32.mrb[0].mxu0
          %v1329 = vadd.f32 0.0, %v1328
          %v1330 = vpop.f32.mrb[0].mxu0
          %v1331 = vpop.f32.mrb[0].mxu0
          %v1332 = vadd.f32 0.0, %v1331
          %v1333 = vpop.f32.mrb[0].mxu0
          %1334 = vmatprep.mubr.bf16.mxu0 %v1133
          %1335 = vmatmul.mubr.bf16.gmra.mrb[0].mxu0 %v1132
          %v1336 = vpop.f32.mrb[0].mxu0
          %v1337 = vadd.f32 0.0, %v1336
          %v1338 = vpop.f32.mrb[0].mxu0
          %v1339 = vpop.f32.mrb[0].mxu0
          %v1340 = vadd.f32 0.0, %v1339
          %v1341 = vpop.f32.mrb[0].mxu0
          %1342 = vdwg.mxu0
          %v1343 = vadd.f32 %v1006, %v1281
          %v1344 = vadd.f32 %v1007, %v1284
          %v1345 = vadd.f32 %v1008, %v1289
          %v1346 = vadd.f32 %v1009, %v1292
          %v1347 = vadd.f32 %v1010, %v1297
          %v1348 = vadd.f32 %v1011, %v1300
          %v1349 = vadd.f32 %v1012, %v1305
          %v1350 = vadd.f32 %v1013, %v1308
          %v1351 = vadd.f32 %v1014, %v1313
          %v1352 = vadd.f32 %v1015, %v1316
          %v1353 = vadd.f32 %v1016, %v1321
          %v1354 = vadd.f32 %v1017, %v1324
          %v1355 = vadd.f32 %v1018, %v1329
          %v1356 = vadd.f32 %v1019, %v1332
          %v1357 = vadd.f32 %v1020, %v1337
          %v1358 = vadd.f32 %v1021, %v1340
          %1359 = vst [vmem:[%s469] sm:$0xff] %v1343
          %1360 = vst [vmem:[%s469 + $0x8] sm:$0xff] %v1344
          %1361 = vst [vmem:[%s469 + $0x10] sm:$0xff] %v1345
          %1362 = vst [vmem:[%s469 + $0x18] sm:$0xff] %v1346
          %1363 = vst [vmem:[%s469 + $0x20] sm:$0xff] %v1347
          %1364 = vst [vmem:[%s469 + $0x28] sm:$0xff] %v1348
          %1365 = vst [vmem:[%s469 + $0x30] sm:$0xff] %v1349
          %1366 = vst [vmem:[%s469 + $0x38] sm:$0xff] %v1350
          %1367 = vst [vmem:[%s469 + $0x40] sm:$0xff] %v1351
          %1368 = vst [vmem:[%s469 + $0x48] sm:$0xff] %v1352
          %1369 = vst [vmem:[%s469 + $0x50] sm:$0xff] %v1353
          %1370 = vst [vmem:[%s469 + $0x58] sm:$0xff] %v1354
          %1371 = vst [vmem:[%s469 + $0x60] sm:$0xff] %v1355
          %1372 = vst [vmem:[%s469 + $0x68] sm:$0xff] %v1356
          %1373 = vst [vmem:[%s469 + $0x70] sm:$0xff] %v1357
          %1374 = vst [vmem:[%s469 + $0x78] sm:$0xff] %v1358
          %v1375 = vlaneseq
          %v1376 = vand.u32 %v1375, 127
          %vm1377 = vcmp.lt.s32.totalorder %v1376, 8
          %v1378 = vsel %vm1377, %v1343, -1e+30
          %v1379 = vsel %vm1377, %v1344, -1e+30
          %v1380 = vsel %vm1377, %v1345, -1e+30
          %v1381 = vsel %vm1377, %v1346, -1e+30
          %v1382 = vsel %vm1377, %v1347, -1e+30
          %v1383 = vsel %vm1377, %v1348, -1e+30
          %v1384 = vsel %vm1377, %v1349, -1e+30
          %v1385 = vsel %vm1377, %v1350, -1e+30
          %v1386 = vsel %vm1377, %v1351, -1e+30
          %v1387 = vsel %vm1377, %v1352, -1e+30
          %v1388 = vsel %vm1377, %v1353, -1e+30
          %v1389 = vsel %vm1377, %v1354, -1e+30
          %v1390 = vsel %vm1377, %v1355, -1e+30
          %v1391 = vsel %vm1377, %v1356, -1e+30
          %v1392 = vsel %vm1377, %v1357, -1e+30
          %v1393 = vsel %vm1377, %v1358, -1e+30
          %1394 = vmax.xlane.f32.xlu0 %v1378
          %v1395 = vpop.xlane.xlu0 %1394
          %1396 = vmax.xlane.f32.xlu0 %v1379
          %v1397 = vpop.xlane.xlu0 %1396
          %1398 = vmax.xlane.f32.xlu0 %v1380
          %v1399 = vpop.xlane.xlu0 %1398
          %1400 = vmax.xlane.f32.xlu0 %v1381
          %v1401 = vpop.xlane.xlu0 %1400
          %1402 = vmax.xlane.f32.xlu0 %v1382
          %v1403 = vpop.xlane.xlu0 %1402
          %1404 = vmax.xlane.f32.xlu0 %v1383
          %v1405 = vpop.xlane.xlu0 %1404
          %1406 = vmax.xlane.f32.xlu0 %v1384
          %v1407 = vpop.xlane.xlu0 %1406
          %1408 = vmax.xlane.f32.xlu0 %v1385
          %v1409 = vpop.xlane.xlu0 %1408
          %1410 = vmax.xlane.f32.xlu0 %v1386
          %v1411 = vpop.xlane.xlu0 %1410
          %1412 = vmax.xlane.f32.xlu0 %v1387
          %v1413 = vpop.xlane.xlu0 %1412
          %1414 = vmax.xlane.f32.xlu0 %v1388
          %v1415 = vpop.xlane.xlu0 %1414
          %1416 = vmax.xlane.f32.xlu0 %v1389
          %v1417 = vpop.xlane.xlu0 %1416
          %1418 = vmax.xlane.f32.xlu0 %v1390
          %v1419 = vpop.xlane.xlu0 %1418
          %1420 = vmax.xlane.f32.xlu0 %v1391
          %v1421 = vpop.xlane.xlu0 %1420
          %1422 = vmax.xlane.f32.xlu0 %v1392
          %v1423 = vpop.xlane.xlu0 %1422
          %1424 = vmax.xlane.f32.xlu0 %v1393
          %v1425 = vpop.xlane.xlu0 %1424
          %v1426 = vsub.f32 %v1378, %v1395
          %v1427 = vsub.f32 %v1379, %v1397
          %v1428 = vsub.f32 %v1380, %v1399
          %v1429 = vsub.f32 %v1381, %v1401
          %v1430 = vsub.f32 %v1382, %v1403
          %v1431 = vsub.f32 %v1383, %v1405
          %v1432 = vsub.f32 %v1384, %v1407
          %v1433 = vsub.f32 %v1385, %v1409
          %v1434 = vsub.f32 %v1386, %v1411
          %v1435 = vsub.f32 %v1387, %v1413
          %v1436 = vsub.f32 %v1388, %v1415
          %v1437 = vsub.f32 %v1389, %v1417
          %v1438 = vsub.f32 %v1390, %v1419
          %v1439 = vsub.f32 %v1391, %v1421
          %v1440 = vsub.f32 %v1392, %v1423
          %v1441 = vsub.f32 %v1393, %v1425
          %v1442 = vmul.f32 %v1426, 1.442695
          %v1443 = vpow.pop %v1442
          %v1444 = vmul.f32 %v1427, 1.442695
          %v1445 = vpow.pop %v1444
          %v1446 = vmul.f32 %v1428, 1.442695
          %v1447 = vpow.pop %v1446
          %v1448 = vmul.f32 %v1429, 1.442695
          %v1449 = vpow.pop %v1448
          %v1450 = vmul.f32 %v1430, 1.442695
          %v1451 = vpow.pop %v1450
          %v1452 = vmul.f32 %v1431, 1.442695
          %v1453 = vpow.pop %v1452
          %v1454 = vmul.f32 %v1432, 1.442695
          %v1455 = vpow.pop %v1454
          %v1456 = vmul.f32 %v1433, 1.442695
          %v1457 = vpow.pop %v1456
          %v1458 = vmul.f32 %v1434, 1.442695
          %v1459 = vpow.pop %v1458
          %v1460 = vmul.f32 %v1435, 1.442695
          %v1461 = vpow.pop %v1460
          %v1462 = vmul.f32 %v1436, 1.442695
          %v1463 = vpow.pop %v1462
          %v1464 = vmul.f32 %v1437, 1.442695
          %v1465 = vpow.pop %v1464
          %v1466 = vmul.f32 %v1438, 1.442695
          %v1467 = vpow.pop %v1466
          %v1468 = vmul.f32 %v1439, 1.442695
          %v1469 = vpow.pop %v1468
          %v1470 = vmul.f32 %v1440, 1.442695
          %v1471 = vpow.pop %v1470
          %v1472 = vmul.f32 %v1441, 1.442695
          %v1473 = vpow.pop %v1472
          %v1474 = vsel %vm1377, %v1443, 0.0
          %v1475 = vsel %vm1377, %v1445, 0.0
          %v1476 = vsel %vm1377, %v1447, 0.0
          %v1477 = vsel %vm1377, %v1449, 0.0
          %v1478 = vsel %vm1377, %v1451, 0.0
          %v1479 = vsel %vm1377, %v1453, 0.0
          %v1480 = vsel %vm1377, %v1455, 0.0
          %v1481 = vsel %vm1377, %v1457, 0.0
          %v1482 = vsel %vm1377, %v1459, 0.0
          %v1483 = vsel %vm1377, %v1461, 0.0
          %v1484 = vsel %vm1377, %v1463, 0.0
          %v1485 = vsel %vm1377, %v1465, 0.0
          %v1486 = vsel %vm1377, %v1467, 0.0
          %v1487 = vsel %vm1377, %v1469, 0.0
          %v1488 = vsel %vm1377, %v1471, 0.0
          %v1489 = vsel %vm1377, %v1473, 0.0
          %1490 = vadd.xlane.f32.xlu0 %v1474
          %v1491 = vpop.xlane.xlu0 %1490
          %1492 = vadd.xlane.f32.xlu0 %v1475
          %v1493 = vpop.xlane.xlu0 %1492
          %1494 = vadd.xlane.f32.xlu0 %v1476
          %v1495 = vpop.xlane.xlu0 %1494
          %1496 = vadd.xlane.f32.xlu0 %v1477
          %v1497 = vpop.xlane.xlu0 %1496
          %1498 = vadd.xlane.f32.xlu0 %v1478
          %v1499 = vpop.xlane.xlu0 %1498
          %1500 = vadd.xlane.f32.xlu0 %v1479
          %v1501 = vpop.xlane.xlu0 %1500
          %1502 = vadd.xlane.f32.xlu0 %v1480
          %v1503 = vpop.xlane.xlu0 %1502
          %1504 = vadd.xlane.f32.xlu0 %v1481
          %v1505 = vpop.xlane.xlu0 %1504
          %1506 = vadd.xlane.f32.xlu0 %v1482
          %v1507 = vpop.xlane.xlu0 %1506
          %1508 = vadd.xlane.f32.xlu0 %v1483
          %v1509 = vpop.xlane.xlu0 %1508
          %1510 = vadd.xlane.f32.xlu0 %v1484
          %v1511 = vpop.xlane.xlu0 %1510
          %1512 = vadd.xlane.f32.xlu0 %v1485
          %v1513 = vpop.xlane.xlu0 %1512
          %1514 = vadd.xlane.f32.xlu0 %v1486
          %v1515 = vpop.xlane.xlu0 %1514
          %1516 = vadd.xlane.f32.xlu0 %v1487
          %v1517 = vpop.xlane.xlu0 %1516
          %1518 = vadd.xlane.f32.xlu0 %v1488
          %v1519 = vpop.xlane.xlu0 %1518
          %1520 = vadd.xlane.f32.xlu0 %v1489
          %v1521 = vpop.xlane.xlu0 %1520
          %v1522 = vlog2.pop %v1491
          %v1523 = vmul.f32 %v1522, 0.6931472
          %v1524 = vlog2.pop %v1493
          %v1525 = vmul.f32 %v1524, 0.6931472
          %v1526 = vlog2.pop %v1495
          %v1527 = vmul.f32 %v1526, 0.6931472
          %v1528 = vlog2.pop %v1497
          %v1529 = vmul.f32 %v1528, 0.6931472
          %v1530 = vlog2.pop %v1499
          %v1531 = vmul.f32 %v1530, 0.6931472
          %v1532 = vlog2.pop %v1501
          %v1533 = vmul.f32 %v1532, 0.6931472
          %v1534 = vlog2.pop %v1503
          %v1535 = vmul.f32 %v1534, 0.6931472
          %v1536 = vlog2.pop %v1505
          %v1537 = vmul.f32 %v1536, 0.6931472
          %v1538 = vlog2.pop %v1507
          %v1539 = vmul.f32 %v1538, 0.6931472
          %v1540 = vlog2.pop %v1509
          %v1541 = vmul.f32 %v1540, 0.6931472
          %v1542 = vlog2.pop %v1511
          %v1543 = vmul.f32 %v1542, 0.6931472
          %v1544 = vlog2.pop %v1513
          %v1545 = vmul.f32 %v1544, 0.6931472
          %v1546 = vlog2.pop %v1515
          %v1547 = vmul.f32 %v1546, 0.6931472
          %v1548 = vlog2.pop %v1517
          %v1549 = vmul.f32 %v1548, 0.6931472
          %v1550 = vlog2.pop %v1519
          %v1551 = vmul.f32 %v1550, 0.6931472
          %v1552 = vlog2.pop %v1521
          %v1553 = vmul.f32 %v1552, 0.6931472
          %v1554 = vsub.f32 %v1426, %v1523
          %v1555 = vsub.f32 %v1427, %v1525
          %v1556 = vsub.f32 %v1428, %v1527
          %v1557 = vsub.f32 %v1429, %v1529
          %v1558 = vsub.f32 %v1430, %v1531
          %v1559 = vsub.f32 %v1431, %v1533
          %v1560 = vsub.f32 %v1432, %v1535
          %v1561 = vsub.f32 %v1433, %v1537
          %v1562 = vsub.f32 %v1434, %v1539
          %v1563 = vsub.f32 %v1435, %v1541
          %v1564 = vsub.f32 %v1436, %v1543
          %v1565 = vsub.f32 %v1437, %v1545
          %v1566 = vsub.f32 %v1438, %v1547
          %v1567 = vsub.f32 %v1439, %v1549
          %v1568 = vsub.f32 %v1440, %v1551
          %v1569 = vsub.f32 %v1441, %v1553
          %1570 = vst [vmem:[%s475] sm:$0xff] %v1554
          %1571 = vst [vmem:[%s475 + $0x8] sm:$0xff] %v1555
          %1572 = vst [vmem:[%s475 + $0x10] sm:$0xff] %v1556
          %1573 = vst [vmem:[%s475 + $0x18] sm:$0xff] %v1557
          %1574 = vst [vmem:[%s475 + $0x20] sm:$0xff] %v1558
          %1575 = vst [vmem:[%s475 + $0x28] sm:$0xff] %v1559
          %1576 = vst [vmem:[%s475 + $0x30] sm:$0xff] %v1560
          %1577 = vst [vmem:[%s475 + $0x38] sm:$0xff] %v1561
          %1578 = vst [vmem:[%s475 + $0x40] sm:$0xff] %v1562
          %1579 = vst [vmem:[%s475 + $0x48] sm:$0xff] %v1563
          %1580 = vst [vmem:[%s475 + $0x50] sm:$0xff] %v1564
          %1581 = vst [vmem:[%s475 + $0x58] sm:$0xff] %v1565
          %1582 = vst [vmem:[%s475 + $0x60] sm:$0xff] %v1566
          %1583 = vst [vmem:[%s475 + $0x68] sm:$0xff] %v1567
          %1584 = vst [vmem:[%s475 + $0x70] sm:$0xff] %v1568
          %1585 = vst [vmem:[%s475 + $0x78] sm:$0xff] %v1569
        $region90: #{_sage_forward_impl.7} parent=77 // pred_fallthru
          _
        %s1586 = smul.u32 16, %s23
        %p1587 = scmp.lt.s32.totalorder %s1586, 31
        %s1588 = scalar_select %p1587, %s1586, 31
        %s1589 = smul.addr %s1588, 8
        %s1590 = scalar_lea.vmem %s6, %s1589
        %s1591 = smul.u32 16, %s23
        %p1592 = scmp.lt.s32.totalorder %s1591, 31
        %s1593 = scalar_select %p1592, %s1591, 31
        %s1594 = smul.addr %s1593, 8
        %s1595 = scalar_lea.vmem %s7, %s1594
        // Predicated region
        $region91: #{_sage_forward_impl.7} parent=77 // pred_check
          %p1596 = pneg %p197
        $region92: #{_sage_forward_impl.7} parent=77 // pred_check_branch
          %1598 = sbr.rel (%p1596) target = $region94
        $region93: #{_sage_forward_impl.7} parent=77 // pred_region
          %s1599 = smul.u32 16, %s23
        $region94: #{_sage_forward_impl.7} parent=77 // pred_fallthru
          _
        // Predicated region
        $region95: #{_sage_forward_impl.7} parent=77 // pred_check
          %p1600 = pneg %p223
        $region96: #{_sage_forward_impl.7} parent=77 // pred_check_branch
          %1602 = sbr.rel (%p1600) target = $region98
        $region97: #{_sage_forward_impl.7} parent=77 // pred_region
          %s1603 = smul.u32 16, %s23
        $region98: #{_sage_forward_impl.7} parent=77 // pred_fallthru
          _
      $region78: #{_sage_forward_impl.7} parent=5 // pred_fallthru
        _
      %p1604 = scmp.le.s32.totalorder 2, %s14
      // Predicated region
      $region99: #{_sage_forward_impl.7} parent=5 // pred_check
        %p1605 = pneg %p1604
      $region100: #{_sage_forward_impl.7} parent=5 // pred_check_branch
        %1607 = sbr.rel (%p1605) target = $region102
      $region101: #{_sage_forward_impl.7} parent=5 // pred_region
        %s1608 = ssub.s32 %s14, 2
        // Predicated region
        $region103: #{_sage_forward_impl.7} parent=101 // pred_check
          %p1609 = pneg %p203
        $region104: #{_sage_forward_impl.7} parent=101 // pred_check_branch
          %1611 = sbr.rel (%p1609) target = $region106
        $region105: #{_sage_forward_impl.7} parent=101 // pred_region
          %s1612 = smul.u32 16, %s25
          %p1613 = scmp.lt.s32.totalorder %s1612, 31
          %s1614 = scalar_select %p1613, %s1612, 31
          %s1615 = smul.addr %s1614, 8
          %s1616 = scalar_lea.vmem %s6, %s1615
        $region106: #{_sage_forward_impl.7} parent=101 // pred_fallthru
          _
        // Predicated region
        $region107: #{_sage_forward_impl.7} parent=101 // pred_check
          %p1617 = pneg %p229
        $region108: #{_sage_forward_impl.7} parent=101 // pred_check_branch
          %1619 = sbr.rel (%p1617) target = $region110
        $region109: #{_sage_forward_impl.7} parent=101 // pred_region
          %s1620 = smul.u32 16, %s25
          %p1621 = scmp.lt.s32.totalorder %s1620, 31
          %s1622 = scalar_select %p1621, %s1620, 31
          %s1623 = smul.addr %s1622, 8
          %s1624 = scalar_lea.vmem %s7, %s1623
        $region110: #{_sage_forward_impl.7} parent=101 // pred_fallthru
          _
      $region102: #{_sage_forward_impl.7} parent=5 // pred_fallthru
        _
    $region6: #{_sage_forward_impl.7} parent=1 // loop_footer
      %s18 = sadd.s32 1, %s14
    $region7: #{_sage_forward_impl.7} parent=1 // loop_footer_branch
      %13 = sbr.rel target = $region3
    $region8: #{_sage_forward_impl.7} parent=1 // loop_exit
      _

</llo_original>
